<compile_context>
chip_gen: v7x
topology: tpu7x:2x2x1
jax: 0.10.0
libtpu: 0.0.40
codegen_flags: <defaults>
</compile_context>

<pallas_src>
import functools

import jax
import jax.numpy as jnp
from jax.experimental import pallas as pl
from jax.experimental.pallas import tpu as pltpu


def _round_up(x, m):
    return ((x + m - 1) // m) * m


def _pad_cols(v, n, fill):
    """Pad the last dim of a 2-D array to n with a constant."""
    c = v.shape[-1]
    if c == n:
        return v
    return jnp.pad(v, ((0, 0), (0, n - c)), constant_values=fill)


# ----------------------------------------------------------------------------
# Fused matmul + BatchNorm-statistics kernel
#   grid = (phase, N-tiles, M-tiles)   with M innermost ("arbitrary")
#   out  : (P, Mp, Np)  bf16/f32      stats : (P, 2, Np) f32  [sum ; sumsq]
# ----------------------------------------------------------------------------
def _matmul_stats_kernel(a_ref, b_ref, o_ref, s_ref):
    acc = jnp.dot(a_ref[...], b_ref[...], preferred_element_type=jnp.float32)

    @pl.when(pl.program_id(2) == 0)
    def _():
        s_ref[...] = jnp.zeros_like(s_ref)

    s_ref[...] += jnp.concatenate(
        [jnp.sum(acc, axis=0, keepdims=True),
         jnp.sum(acc * acc, axis=0, keepdims=True)], axis=0)
    o_ref[...] = acc.astype(o_ref.dtype)


def fused_matmul_stats(a3, b3, out_dtype=jnp.bfloat16, tm_pref=256):
    """a3: (P, M, K) float.  b3: (P, K, Np) bf16, Np a multiple of 128 (K unpadded).

    Returns (out, stats): out (P, Mp, Np) out_dtype and stats (P, 2, Np) f32,
    where stats holds the per-column [sum; sum-of-squares] over the M rows
    (zero-padded rows contribute zero, so they are harmless)."""
    P, M, K = a3.shape
    Pb, Kb, Np = b3.shape
    assert (Pb, Kb) == (P, K) and Np % 128 == 0

    tm = tm_pref if M >= tm_pref else _round_up(max(M, 16), 16)
    Mp = _round_up(M, tm)
    tn = 256 if Np % 256 == 0 else 128     # feed the full 256-wide MXU on v6e/v7x

    a3 = a3.astype(jnp.bfloat16)
    if Mp != M:
        a3 = jnp.pad(a3, ((0, 0), (0, Mp - M), (0, 0)))

    return pl.pallas_call(
        _matmul_stats_kernel,
        out_shape=(jax.ShapeDtypeStruct((P, Mp, Np), out_dtype),
                   jax.ShapeDtypeStruct((P, 2, Np), jnp.float32)),
        grid=(P, Np // tn, Mp // tm),
        in_specs=[pl.BlockSpec((None, tm, K), lambda p, j, i: (p, i, 0)),
                  pl.BlockSpec((None, K, tn), lambda p, j, i: (p, 0, j))],
        out_specs=(pl.BlockSpec((None, tm, tn), lambda p, j, i: (p, i, j)),
                   pl.BlockSpec((None, 2, tn), lambda p, j, i: (p, 0, j))),
        compiler_params=pltpu.CompilerParams(
            dimension_semantics=("parallel", "parallel", "arbitrary")),
    )(a3, b3)


# ----------------------------------------------------------------------------
# BatchNorm (training-mode batch statistics) + ReLU  : single normalize pass
# (the statistics pass was fused into the producing matmul above)
# ----------------------------------------------------------------------------
def _bn_relu_kernel(x_ref, s_ref, g_ref, b_ref, o_ref, *, eps, inv_m):
    x = x_ref[...].astype(jnp.float32)
    s = s_ref[...]
    mean = s[0:1, :] * inv_m
    var = jnp.maximum(s[1:2, :] * inv_m - mean * mean, 0.0)
    scale = jax.lax.rsqrt(var + eps) * g_ref[...]
    shift = b_ref[...] - mean * scale
    o_ref[...] = jnp.maximum(x * scale + shift, 0.0).astype(o_ref.dtype)


def pallas_bn_relu(x3, stats, gamma_row, beta_row, inv_m, eps=1e-5,
                   tb_pref=512):
    """x3: (P, Mp, C) bf16.  stats: (2, C) f32 raw [sum; sumsq].  inv_m = 1/count.
    Returns the normalized + ReLU'd activation as (P, Mp, C) bf16."""
    P, Mp, C = x3.shape
    tb = tb_pref if Mp % tb_pref == 0 else Mp
    return pl.pallas_call(
        functools.partial(_bn_relu_kernel, eps=eps, inv_m=inv_m),
        out_shape=jax.ShapeDtypeStruct((P, Mp, C), jnp.bfloat16),
        grid=(P, Mp // tb),
        in_specs=[pl.BlockSpec((None, tb, C), lambda p, i: (p, i, 0)),
                  pl.BlockSpec((2, C), lambda p, i: (0, 0)),
                  pl.BlockSpec((1, C), lambda p, i: (0, 0)),
                  pl.BlockSpec((1, C), lambda p, i: (0, 0))],
        out_specs=pl.BlockSpec((None, tb, C), lambda p, i: (p, i, 0)),
        compiler_params=pltpu.CompilerParams(
            dimension_semantics=("parallel", "parallel")),
    )(x3, stats, gamma_row, beta_row)


# ----------------------------------------------------------------------------
# Final layer: channel-major matmul (Cout on sublanes, M on lanes) + fused tanh
# ----------------------------------------------------------------------------
def _matmul_t_tanh_kernel(w_ref, x_ref, o_ref):
    o_ref[...] = jnp.tanh(jnp.dot(w_ref[...], x_ref[...],
                                  preferred_element_type=jnp.float32))


# ----------------------------------------------------------------------------
# ConvTranspose2d(k=4, s=2, p=1) via sub-pixel phase decomposition
#   output row oh = 2m+ph : ph=0 -> taps (kh=3 @ ih=m-1, kh=1 @ ih=m)
#                           ph=1 -> taps (kh=2 @ ih=m,   kh=0 @ ih=m+1)
# ----------------------------------------------------------------------------
_TAPS = {0: (3, 1), 1: (2, 0)}
_PHASES = ((0, 0), (0, 1), (1, 0), (1, 1))


def conv_transpose_s2_fused(x_nhwc, wmats, out_dtype=jnp.bfloat16):
    """x_nhwc: (N,H,W,Cin).  wmats: (4, 4*Cin, Np) bf16 (phase-stacked).
    Returns (out (4, Mp, Np) out_dtype, stats (4, 2, Np) f32), phase-major."""
    N, H, W, Cin = x_nhwc.shape
    M, K = N * H * W, 4 * Cin
    xp = jnp.pad(x_nhwc, ((0, 0), (1, 1), (1, 1), (0, 0)))
    # TODO(synk): gather these overlapping 2x2 windows in-kernel (halo DMA)
    # instead of materializing a (4, M, 4*Cin) slab in HBM.
    phase_patches = []
    for ph, pw in _PHASES:
        slabs = [xp[:, ph + dh:ph + dh + H, pw + dw:pw + dw + W, :]
                 for dh in (0, 1) for dw in (0, 1)]
        phase_patches.append(jnp.stack(slabs, axis=3).reshape(M, K))
    patches = jnp.stack(phase_patches, axis=0)                   # (4, M, K)
    return fused_matmul_stats(patches, wmats, out_dtype=out_dtype)


def conv_transpose_s2_tanh_cmajor(x_nhwc, wmats_t, cout, tm_pref=512):
    """Final deconv with fused tanh, computed channel-major; returns NCHW."""
    N, H, W, Cin = x_nhwc.shape
    M, K = N * H * W, 4 * Cin
    Cp = wmats_t.shape[1]
    xp = jnp.pad(x_nhwc, ((0, 0), (1, 1), (1, 1), (0, 0)))
    ptb = []
    for ph, pw in _PHASES:
        slabs = jnp.stack([xp[:, ph + dh:ph + dh + H, pw + dw:pw + dw + W, :]
                           for dh in (0, 1) for dw in (0, 1)], axis=0)
        ptb.append(jnp.transpose(slabs, (0, 4, 1, 2, 3)).reshape(K, M))
    patches_t = jnp.stack(ptb, axis=0).astype(jnp.bfloat16)      # (4, K, M)

    tm = tm_pref if M >= tm_pref else _round_up(M, 128)
    Mp = _round_up(M, tm)
    if Mp != M:
        patches_t = jnp.pad(patches_t, ((0, 0), (0, 0), (0, Mp - M)))

    out = pl.pallas_call(
        _matmul_t_tanh_kernel,
        out_shape=jax.ShapeDtypeStruct((4, Cp, Mp), jnp.float32),
        grid=(4, Mp // tm),
        in_specs=[pl.BlockSpec((None, Cp, K), lambda p, i: (p, 0, 0)),
                  pl.BlockSpec((None, K, tm), lambda p, i: (p, 0, i))],
        out_specs=pl.BlockSpec((None, Cp, tm), lambda p, i: (p, 0, i)),
        compiler_params=pltpu.CompilerParams(
            dimension_semantics=("parallel", "parallel")),
    )(wmats_t, patches_t)

    out = out[:, :cout, :M].reshape(2, 2, cout, N, H, W)         # (ph,pw,c,n,h,w)
    return jnp.transpose(out, (3, 2, 4, 0, 5, 1)).reshape(N, cout, 2 * H, 2 * W)


# ----------------------------------------------------------------------------
# Parameter init (PyTorch layout) and one-time weight preparation
# ----------------------------------------------------------------------------
def init_generator_params(key, latent_dim, img_channels, fm):
    chans = [latent_dim, fm * 8, fm * 4, fm * 2, fm, img_channels]
    raw = []
    for i in range(5):
        key, kw, kg, kb = jax.random.split(key, 4)
        w = 0.05 * jax.random.normal(kw, (chans[i], chans[i + 1], 4, 4),
                                     jnp.float32)
        if i < 4:
            gamma = 1.0 + 0.05 * jax.random.normal(kg, (chans[i + 1],),
                                                   jnp.float32)
            beta = 0.05 * jax.random.normal(kb, (chans[i + 1],), jnp.float32)
        else:
            gamma, beta = None, None
        raw.append((w, gamma, beta))
    return raw


def _phase_weight(w, ph, pw):
    """(Cin,Cout,4,4) -> (Cin,Cout,2,2) taps for output phase (ph,pw), ordered
    to match the 2x2 padded-input window (dh, dw)."""
    wsub = w[:, :, jnp.array(_TAPS[ph]), :]
    return wsub[:, :, :, jnp.array(_TAPS[pw])]


def prepare_generator_params(raw):
    """One-time reshape/cast: bf16 MXU matrices, Cout padded to 128 lanes
    (8 sublanes, channel-major, for the final layer); K left unpadded."""
    prepared = []

    # Layer 1: ConvTranspose(4,1,0) on a 1x1 input == (latent)x(16*Cout) matmul,
    # column index = (kh*4+kw)*Cout + cout.
    w, gamma, beta = raw[0]
    cin, cout = w.shape[0], w.shape[1]
    wmat = jnp.transpose(w, (0, 2, 3, 1)).reshape(cin, 16 * cout)
    np_ = _round_up(16 * cout, 128)
    wmat = _pad_cols(wmat, np_, 0.0).astype(jnp.bfloat16)
    prepared.append({"wmat": wmat[None], "gamma": gamma, "beta": beta})

    # Layers 2-4: (4 phases, 4*Cin, Np), row index = (dh*2+dw)*Cin + cin.
    for i in (1, 2, 3):
        w, gamma, beta = raw[i]
        cin, cout = w.shape[0], w.shape[1]
        np_ = _round_up(cout, 128)
        mats = [_pad_cols(jnp.transpose(_phase_weight(w, ph, pw),
                                        (2, 3, 0, 1)).reshape(4 * cin, cout),
                          np_, 0.0)
                for ph, pw in _PHASES]
        prepared.append({"wmats": jnp.stack(mats, 0).astype(jnp.bfloat16),
                         "gamma": gamma, "beta": beta})

    # Layer 5 (channel-major): (4 phases, Cp, 4*Cin), col = (dh*2+dw)*Cin + cin.
    w, _, _ = raw[4]
    cin, cout = w.shape[0], w.shape[1]
    cp = _round_up(cout, 8)
    mats = [jnp.pad(jnp.transpose(_phase_weight(w, ph, pw),
                                  (1, 2, 3, 0)).reshape(cout, 4 * cin),
                    ((0, cp - cout), (0, 0)))
            for ph, pw in _PHASES]
    prepared.append({"wmats_t": jnp.stack(mats, 0).astype(jnp.bfloat16)})
    return prepared


# ----------------------------------------------------------------------------
# Generator forward (NCHW in / NCHW out, matching the PyTorch module)
# ----------------------------------------------------------------------------
@functools.partial(jax.jit, static_argnums=0)
def generator_forward(couts, params, x_nchw):
    N, Cl, H, W = x_nchw.shape
    assert H == 1 and W == 1, "DCGAN generator expects a (N, latent, 1, 1) input"
    x = x_nchw.reshape(N, Cl)

    # ---- Layer 1: 1x1 -> 4x4 projection; BN stats fused into the matmul. ----
    c0 = couts[0]
    out1, st1 = fused_matmul_stats(x[None], params[0]["wmat"])
    np0 = out1.shape[-1]
    st_c = st1[0, :, :16 * c0].reshape(2, 16, c0).sum(axis=1)    # per-channel
    st_cols = _pad_cols(jnp.tile(st_c, (1, 16)), np0, 0.0)
    g_cols = _pad_cols(jnp.tile(params[0]["gamma"], 16)[None], np0, 1.0)
    b_cols = _pad_cols(jnp.tile(params[0]["beta"], 16)[None], np0, 0.0)
    a1 = pallas_bn_relu(out1, st_cols, g_cols, b_cols, inv_m=1.0 / (N * 16))
    act = a1[0, :N, :16 * c0].reshape(N, 4, 4, c0)               # NHWC, bf16

    # ---- Layers 2-4: phase-fused stride-2 deconv + fused stats, BN + ReLU. --
    for li in (1, 2, 3):
        c = couts[li]
        n, h, w, _ = act.shape
        m = n * h * w
        out, st = conv_transpose_s2_fused(act, params[li]["wmats"])
        npl = out.shape[-1]
        g = _pad_cols(params[li]["gamma"][None], npl, 1.0)
        b = _pad_cols(params[li]["beta"][None], npl, 0.0)
        a = pallas_bn_relu(out, st.sum(axis=0), g, b, inv_m=1.0 / (4 * m))
        act = jnp.transpose(a[:, :m, :c].reshape(2, 2, n, h, w, c),
                            (2, 3, 0, 4, 1, 5)).reshape(n, 2 * h, 2 * w, c)

    # ---- Layer 5: channel-major matmul + fused tanh; already NCHW. ----------
    return conv_transpose_s2_tanh_cmajor(act, params[4]["wmats_t"], couts[4])


# ----------------------------------------------------------------------------
# Pure-JAX f32 reference (ConvTranspose2d / BatchNorm2d train-mode / ReLU / Tanh)
# ----------------------------------------------------------------------------
def _conv_transpose_ref(x, w, stride, padding):
    k = w.shape[2]
    w_conv = jnp.transpose(w[:, :, ::-1, ::-1], (1, 0, 2, 3))
    pad = k - 1 - padding
    return jax.lax.conv_general_dilated(
        x, w_conv, window_strides=(1, 1), padding=((pad, pad), (pad, pad)),
        lhs_dilation=(stride, stride),
        dimension_numbers=("NCHW", "OIHW", "NCHW"))


def generator_reference(raw, x, eps=1e-5):
    act = x
    for i, (w, gamma, beta) in enumerate(raw):
        stride, padding = (1, 0) if i == 0 else (2, 1)
        act = _conv_transpose_ref(act, w, stride, padding)
        if i < 4:
            mean = act.mean(axis=(0, 2, 3), keepdims=True)
            var = jnp.mean((act - mean) ** 2, axis=(0, 2, 3), keepdims=True)
            act = (act - mean) * jax.lax.rsqrt(var + eps)
            act = act * gamma.reshape(1, -1, 1, 1) + beta.reshape(1, -1, 1, 1)
            act = jnp.maximum(act, 0.0)
        else:
            act = jnp.tanh(act)
    return act


if __name__ == "__main__":
    # Small, structure-preserving config: latent=16, feature_map_size=8,
    # img_channels=3, batch=2  ->  output (2, 3, 64, 64).
    latent_dim, img_channels, feature_map_size = 16, 3, 8
    batch = 2

    key = jax.random.PRNGKey(0)
    pkey, xkey = jax.random.split(key)
    raw_params = init_generator_params(pkey, latent_dim, img_channels,
                                       feature_map_size)
    params = prepare_generator_params(raw_params)
    couts = (feature_map_size * 8, feature_map_size * 4, feature_map_size * 2,
             feature_map_size, img_channels)

    x = jax.random.normal(xkey, (batch, latent_dim, 1, 1), jnp.float32)

    out = jax.block_until_ready(generator_forward(couts, params, x))

    assert out.shape == (batch, img_channels, 64, 64), out.shape
    assert bool(jnp.all(jnp.isfinite(out)))

    # Value check vs. the pure-JAX f32 reference (bf16 MXU operands -> loose tol).
    ref = generator_reference(raw_params, x)
    max_err = float(jnp.max(jnp.abs(out - ref)))
    assert max_err < 0.3, f"max |err| vs f32 reference = {max_err}"

    print("KERNEL_OK")
</pallas_src>

<mosaic_0001>
module attributes {stable_mosaic.version = 11 : i64} {
  func.func @_matmul_stats_kernel(%arg0: i32, %arg1: i32, %arg2: i32, %arg3: memref<1x16x16xbf16, #tpu.memory_space<vmem>>, %arg4: memref<1x16x256xbf16, #tpu.memory_space<vmem>>, %arg5: memref<1x16x256xbf16, #tpu.memory_space<vmem>>, %arg6: memref<1x2x256xf32, #tpu.memory_space<vmem>>) attributes {dimension_semantics = [#tpu.dimension_semantics<parallel>, #tpu.dimension_semantics<parallel>, #tpu.dimension_semantics<arbitrary>], iteration_bounds = array<i64: 1, 4, 1>, scalar_prefetch = 0 : i64, scratch_operands = 0 : i64, tpu.core_type = #tpu.core_type<tc>, window_params = [{transform_indices = @transform_0, window_bounds = array<i64: 1, 16, 16>}, {transform_indices = @transform_1, window_bounds = array<i64: 1, 16, 256>}, {transform_indices = @transform_2, window_bounds = array<i64: 1, 16, 256>}, {transform_indices = @transform_3, window_bounds = array<i64: 1, 2, 256>}]} {
    %c0 = arith.constant 0 : index
    %c0_0 = arith.constant 0 : index
    %c0_1 = arith.constant 0 : index
    %0 = vector.load %arg3[%c0, %c0_0, %c0_1] : memref<1x16x16xbf16, #tpu.memory_space<vmem>>, vector<1x16x16xbf16>
    %1 = vector.shape_cast %0 : vector<1x16x16xbf16> to vector<16x16xbf16>
    %c0_2 = arith.constant 0 : index
    %c0_3 = arith.constant 0 : index
    %c0_4 = arith.constant 0 : index
    %2 = vector.load %arg4[%c0_2, %c0_3, %c0_4] : memref<1x16x256xbf16, #tpu.memory_space<vmem>>, vector<1x16x256xbf16>
    %3 = vector.shape_cast %2 : vector<1x16x256xbf16> to vector<16x256xbf16>
    %cst = arith.constant dense<0.000000e+00> : vector<16x256xf32>
    %4 = tpu.matmul %1, %3, %cst {dimension_numbers = #tpu.dot_dimension_numbers<[1], [0], [0], [1], [0, 0, 1, 1], [], []>} : vector<16x16xbf16>, vector<16x256xbf16>, vector<16x256xf32> -> vector<16x256xf32>
    %c0_i32 = arith.constant 0 : i32
    %5 = arith.cmpi eq, %arg2, %c0_i32 : i32
    %6 = arith.extui %5 : i1 to i32
    %c0_i32_5 = arith.constant 0 : i32
    %7 = arith.cmpi ne, %6, %c0_i32_5 : i32
    scf.if %7 {
      %cst_17 = arith.constant 0.000000e+00 : f32
      %24 = vector.broadcast %cst_17 : f32 to vector<2x256xf32>
      %c0_18 = arith.constant 0 : index
      %c0_19 = arith.constant 0 : index
      %c0_20 = arith.constant 0 : index
      %25 = vector.load %arg6[%c0_18, %c0_19, %c0_20] : memref<1x2x256xf32, #tpu.memory_space<vmem>>, vector<1x2x256xf32>
      %26 = vector.shape_cast %25 : vector<1x2x256xf32> to vector<2x256xf32>
      %27 = vector.shape_cast %24 : vector<2x256xf32> to vector<1x2x256xf32>
      tpu.vector_store %arg6[%c0_18, %c0_19, %c0_20], %27 {strides = array<i32>} : memref<1x2x256xf32, #tpu.memory_space<vmem>>, vector<1x2x256xf32>,
    } else {
    }
    %c0_6 = arith.constant 0 : index
    %c0_7 = arith.constant 0 : index
    %c0_8 = arith.constant 0 : index
    %8 = vector.load %arg6[%c0_6, %c0_7, %c0_8] : memref<1x2x256xf32, #tpu.memory_space<vmem>>, vector<1x2x256xf32>
    %9 = vector.shape_cast %8 : vector<1x2x256xf32> to vector<2x256xf32>
    %cst_9 = arith.constant dense<0.000000e+00> : vector<256xf32>
    %10 = vector.multi_reduction <add>, %4, %cst_9 [0] : vector<16x256xf32> to vector<256xf32>
    %11 = vector.shape_cast %10 : vector<256xf32> to vector<1x256xf32>
    %12 = arith.mulf %4, %4 : vector<16x256xf32>
    %cst_10 = arith.constant dense<0.000000e+00> : vector<256xf32>
    %13 = vector.multi_reduction <add>, %12, %cst_10 [0] : vector<16x256xf32> to vector<256xf32>
    %14 = vector.shape_cast %13 : vector<256xf32> to vector<1x256xf32>
    %15 = tpu.concatenate %11, %14 in 0 : vector<1x256xf32>, vector<1x256xf32> -> vector<2x256xf32>
    %16 = arith.addf %9, %15 : vector<2x256xf32>
    %c0_11 = arith.constant 0 : index
    %c0_12 = arith.constant 0 : index
    %c0_13 = arith.constant 0 : index
    %17 = vector.load %arg6[%c0_11, %c0_12, %c0_13] : memref<1x2x256xf32, #tpu.memory_space<vmem>>, vector<1x2x256xf32>
    %18 = vector.shape_cast %17 : vector<1x2x256xf32> to vector<2x256xf32>
    %19 = vector.shape_cast %16 : vector<2x256xf32> to vector<1x2x256xf32>
    tpu.vector_store %arg6[%c0_11, %c0_12, %c0_13], %19 {strides = array<i32>} : memref<1x2x256xf32, #tpu.memory_space<vmem>>, vector<1x2x256xf32>,
    %20 = arith.truncf %4 : vector<16x256xf32> to vector<16x256xbf16>
    %c0_14 = arith.constant 0 : index
    %c0_15 = arith.constant 0 : index
    %c0_16 = arith.constant 0 : index
    %21 = vector.load %arg5[%c0_14, %c0_15, %c0_16] : memref<1x16x256xbf16, #tpu.memory_space<vmem>>, vector<1x16x256xbf16>
    %22 = vector.shape_cast %21 : vector<1x16x256xbf16> to vector<16x256xbf16>
    %23 = vector.shape_cast %20 : vector<16x256xbf16> to vector<1x16x256xbf16>
    tpu.vector_store %arg5[%c0_14, %c0_15, %c0_16], %23 {strides = array<i32>} : memref<1x16x256xbf16, #tpu.memory_space<vmem>>, vector<1x16x256xbf16>,
    return
  }
  func.func @transform_0(%arg0: i32, %arg1: i32, %arg2: i32) -> (i32, i32, i32) {
    %c0_i32 = arith.constant 0 : i32
    %c0_i32_0 = arith.constant 0 : i32
    return %arg0, %arg2, %c0_i32 : i32, i32, i32
  }
  func.func @transform_1(%arg0: i32, %arg1: i32, %arg2: i32) -> (i32, i32, i32) {
    %c0_i32 = arith.constant 0 : i32
    %c0_i32_0 = arith.constant 0 : i32
    return %arg0, %c0_i32, %arg1 : i32, i32, i32
  }
  func.func @transform_2(%arg0: i32, %arg1: i32, %arg2: i32) -> (i32, i32, i32) {
    %c0_i32 = arith.constant 0 : i32
    return %arg0, %arg2, %arg1 : i32, i32, i32
  }
  func.func @transform_3(%arg0: i32, %arg1: i32, %arg2: i32) -> (i32, i32, i32) {
    %c0_i32 = arith.constant 0 : i32
    %c0_i32_0 = arith.constant 0 : i32
    return %arg0, %c0_i32, %arg1 : i32, i32, i32
  }
}

module attributes {stable_mosaic.version = 11 : i64} {
  func.func @_bn_relu_kernel(%arg0: i32, %arg1: i32, %arg2: memref<1x16x1024xbf16, #tpu.memory_space<vmem>>, %arg3: memref<2x1024xf32, #tpu.memory_space<vmem>>, %arg4: memref<1x1024xf32, #tpu.memory_space<vmem>>, %arg5: memref<1x1024xf32, #tpu.memory_space<vmem>>, %arg6: memref<1x16x1024xbf16, #tpu.memory_space<vmem>>) attributes {dimension_semantics = [#tpu.dimension_semantics<parallel>, #tpu.dimension_semantics<parallel>], iteration_bounds = array<i64: 1, 1>, scalar_prefetch = 0 : i64, scratch_operands = 0 : i64, tpu.core_type = #tpu.core_type<tc>, window_params = [{transform_indices = @transform_0, window_bounds = array<i64: 1, 16, 1024>}, {pipeline_mode = #tpu.pipeline_mode<synchronous>, transform_indices = @transform_1, window_bounds = array<i64: 2, 1024>}, {pipeline_mode = #tpu.pipeline_mode<synchronous>, transform_indices = @transform_2, window_bounds = array<i64: 1, 1024>}, {pipeline_mode = #tpu.pipeline_mode<synchronous>, transform_indices = @transform_3, window_bounds = array<i64: 1, 1024>}, {transform_indices = @transform_4, window_bounds = array<i64: 1, 16, 1024>}]} {
    %c0 = arith.constant 0 : index
    %c0_0 = arith.constant 0 : index
    %c0_1 = arith.constant 0 : index
    %0 = vector.load %arg2[%c0, %c0_0, %c0_1] : memref<1x16x1024xbf16, #tpu.memory_space<vmem>>, vector<1x16x1024xbf16>
    %1 = vector.shape_cast %0 : vector<1x16x1024xbf16> to vector<16x1024xbf16>
    %2 = arith.extf %1 : vector<16x1024xbf16> to vector<16x1024xf32>
    %c0_2 = arith.constant 0 : index
    %c0_3 = arith.constant 0 : index
    %3 = vector.load %arg3[%c0_2, %c0_3] : memref<2x1024xf32, #tpu.memory_space<vmem>>, vector<2x1024xf32>
    %4 = vector.extract_strided_slice %3 {offsets = [0, 0], sizes = [1, 1024], strides = [1, 1]} : vector<2x1024xf32> to vector<1x1024xf32>
    %cst = arith.constant 3.125000e-02 : f32
    %5 = vector.broadcast %cst : f32 to vector<1x1024xf32>
    %6 = arith.mulf %4, %5 : vector<1x1024xf32>
    %7 = vector.extract_strided_slice %3 {offsets = [1, 0], sizes = [1, 1024], strides = [1, 1]} : vector<2x1024xf32> to vector<1x1024xf32>
    %cst_4 = arith.constant 3.125000e-02 : f32
    %8 = vector.broadcast %cst_4 : f32 to vector<1x1024xf32>
    %9 = arith.mulf %7, %8 : vector<1x1024xf32>
    %10 = arith.mulf %6, %6 : vector<1x1024xf32>
    %11 = arith.subf %9, %10 : vector<1x1024xf32>
    %cst_5 = arith.constant 0.000000e+00 : f32
    %12 = vector.broadcast %cst_5 : f32 to vector<1x1024xf32>
    %13 = arith.maximumf %11, %12 : vector<1x1024xf32>
    %cst_6 = arith.constant 9.99999974E-6 : f32
    %14 = vector.broadcast %cst_6 : f32 to vector<1x1024xf32>
    %15 = arith.addf %13, %14 : vector<1x1024xf32>
    %16 = math.rsqrt %15 : vector<1x1024xf32>
    %c0_7 = arith.constant 0 : index
    %c0_8 = arith.constant 0 : index
    %17 = vector.load %arg4[%c0_7, %c0_8] : memref<1x1024xf32, #tpu.memory_space<vmem>>, vector<1x1024xf32>
    %18 = arith.mulf %16, %17 : vector<1x1024xf32>
    %c0_9 = arith.constant 0 : index
    %c0_10 = arith.constant 0 : index
    %19 = vector.load %arg5[%c0_9, %c0_10] : memref<1x1024xf32, #tpu.memory_space<vmem>>, vector<1x1024xf32>
    %20 = arith.mulf %6, %18 : vector<1x1024xf32>
    %21 = arith.subf %19, %20 : vector<1x1024xf32>
    %22 = vector.broadcast %18 : vector<1x1024xf32> to vector<16x1024xf32>
    %23 = arith.mulf %2, %22 : vector<16x1024xf32>
    %24 = vector.broadcast %21 : vector<1x1024xf32> to vector<16x1024xf32>
    %25 = arith.addf %23, %24 : vector<16x1024xf32>
    %cst_11 = arith.constant 0.000000e+00 : f32
    %26 = vector.broadcast %cst_11 : f32 to vector<16x1024xf32>
    %27 = arith.maximumf %25, %26 : vector<16x1024xf32>
    %28 = arith.truncf %27 : vector<16x1024xf32> to vector<16x1024xbf16>
    %c0_12 = arith.constant 0 : index
    %c0_13 = arith.constant 0 : index
    %c0_14 = arith.constant 0 : index
    %29 = vector.load %arg6[%c0_12, %c0_13, %c0_14] : memref<1x16x1024xbf16, #tpu.memory_space<vmem>>, vector<1x16x1024xbf16>
    %30 = vector.shape_cast %29 : vector<1x16x1024xbf16> to vector<16x1024xbf16>
    %31 = vector.shape_cast %28 : vector<16x1024xbf16> to vector<1x16x1024xbf16>
    tpu.vector_store %arg6[%c0_12, %c0_13, %c0_14], %31 {strides = array<i32>} : memref<1x16x1024xbf16, #tpu.memory_space<vmem>>, vector<1x16x1024xbf16>,
    return
  }
  func.func @transform_0(%arg0: i32, %arg1: i32) -> (i32, i32, i32) {
    %c0_i32 = arith.constant 0 : i32
    %c0_i32_0 = arith.constant 0 : i32
    return %arg0, %arg1, %c0_i32 : i32, i32, i32
  }
  func.func @transform_1(%arg0: i32, %arg1: i32) -> (i32, i32) {
    %c0_i32 = arith.constant 0 : i32
    %c0_i32_0 = arith.constant 0 : i32
    %c0_i32_1 = arith.constant 0 : i32
    return %c0_i32, %c0_i32_0 : i32, i32
  }
  func.func @transform_2(%arg0: i32, %arg1: i32) -> (i32, i32) {
    %c0_i32 = arith.constant 0 : i32
    %c0_i32_0 = arith.constant 0 : i32
    %c0_i32_1 = arith.constant 0 : i32
    return %c0_i32, %c0_i32_0 : i32, i32
  }
  func.func @transform_3(%arg0: i32, %arg1: i32) -> (i32, i32) {
    %c0_i32 = arith.constant 0 : i32
    %c0_i32_0 = arith.constant 0 : i32
    %c0_i32_1 = arith.constant 0 : i32
    return %c0_i32, %c0_i32_0 : i32, i32
  }
  func.func @transform_4(%arg0: i32, %arg1: i32) -> (i32, i32, i32) {
    %c0_i32 = arith.constant 0 : i32
    %c0_i32_0 = arith.constant 0 : i32
    return %arg0, %arg1, %c0_i32 : i32, i32, i32
  }
}

module attributes {stable_mosaic.version = 11 : i64} {
  func.func @_matmul_stats_kernel(%arg0: i32, %arg1: i32, %arg2: i32, %arg3: memref<1x32x256xbf16, #tpu.memory_space<vmem>>, %arg4: memref<1x256x128xbf16, #tpu.memory_space<vmem>>, %arg5: memref<1x32x128xbf16, #tpu.memory_space<vmem>>, %arg6: memref<1x2x128xf32, #tpu.memory_space<vmem>>) attributes {dimension_semantics = [#tpu.dimension_semantics<parallel>, #tpu.dimension_semantics<parallel>, #tpu.dimension_semantics<arbitrary>], iteration_bounds = array<i64: 4, 1, 1>, scalar_prefetch = 0 : i64, scratch_operands = 0 : i64, tpu.core_type = #tpu.core_type<tc>, window_params = [{transform_indices = @transform_0, window_bounds = array<i64: 1, 32, 256>}, {transform_indices = @transform_1, window_bounds = array<i64: 1, 256, 128>}, {transform_indices = @transform_2, window_bounds = array<i64: 1, 32, 128>}, {transform_indices = @transform_3, window_bounds = array<i64: 1, 2, 128>}]} {
    %c0 = arith.constant 0 : index
    %c0_0 = arith.constant 0 : index
    %c0_1 = arith.constant 0 : index
    %0 = vector.load %arg3[%c0, %c0_0, %c0_1] : memref<1x32x256xbf16, #tpu.memory_space<vmem>>, vector<1x32x256xbf16>
    %1 = vector.shape_cast %0 : vector<1x32x256xbf16> to vector<32x256xbf16>
    %c0_2 = arith.constant 0 : index
    %c0_3 = arith.constant 0 : index
    %c0_4 = arith.constant 0 : index
    %2 = vector.load %arg4[%c0_2, %c0_3, %c0_4] : memref<1x256x128xbf16, #tpu.memory_space<vmem>>, vector<1x256x128xbf16>
    %3 = vector.shape_cast %2 : vector<1x256x128xbf16> to vector<256x128xbf16>
    %cst = arith.constant dense<0.000000e+00> : vector<32x128xf32>
    %4 = tpu.matmul %1, %3, %cst {dimension_numbers = #tpu.dot_dimension_numbers<[1], [0], [0], [1], [0, 0, 1, 1], [], []>} : vector<32x256xbf16>, vector<256x128xbf16>, vector<32x128xf32> -> vector<32x128xf32>
    %c0_i32 = arith.constant 0 : i32
    %5 = arith.cmpi eq, %arg2, %c0_i32 : i32
    %6 = arith.extui %5 : i1 to i32
    %c0_i32_5 = arith.constant 0 : i32
    %7 = arith.cmpi ne, %6, %c0_i32_5 : i32
    scf.if %7 {
      %cst_17 = arith.constant 0.000000e+00 : f32
      %24 = vector.broadcast %cst_17 : f32 to vector<2x128xf32>
      %c0_18 = arith.constant 0 : index
      %c0_19 = arith.constant 0 : index
      %c0_20 = arith.constant 0 : index
      %25 = vector.load %arg6[%c0_18, %c0_19, %c0_20] : memref<1x2x128xf32, #tpu.memory_space<vmem>>, vector<1x2x128xf32>
      %26 = vector.shape_cast %25 : vector<1x2x128xf32> to vector<2x128xf32>
      %27 = vector.shape_cast %24 : vector<2x128xf32> to vector<1x2x128xf32>
      tpu.vector_store %arg6[%c0_18, %c0_19, %c0_20], %27 {strides = array<i32>} : memref<1x2x128xf32, #tpu.memory_space<vmem>>, vector<1x2x128xf32>,
    } else {
    }
    %c0_6 = arith.constant 0 : index
    %c0_7 = arith.constant 0 : index
    %c0_8 = arith.constant 0 : index
    %8 = vector.load %arg6[%c0_6, %c0_7, %c0_8] : memref<1x2x128xf32, #tpu.memory_space<vmem>>, vector<1x2x128xf32>
    %9 = vector.shape_cast %8 : vector<1x2x128xf32> to vector<2x128xf32>
    %cst_9 = arith.constant dense<0.000000e+00> : vector<128xf32>
    %10 = vector.multi_reduction <add>, %4, %cst_9 [0] : vector<32x128xf32> to vector<128xf32>
    %11 = vector.shape_cast %10 : vector<128xf32> to vector<1x128xf32>
    %12 = arith.mulf %4, %4 : vector<32x128xf32>
    %cst_10 = arith.constant dense<0.000000e+00> : vector<128xf32>
    %13 = vector.multi_reduction <add>, %12, %cst_10 [0] : vector<32x128xf32> to vector<128xf32>
    %14 = vector.shape_cast %13 : vector<128xf32> to vector<1x128xf32>
    %15 = tpu.concatenate %11, %14 in 0 : vector<1x128xf32>, vector<1x128xf32> -> vector<2x128xf32>
    %16 = arith.addf %9, %15 : vector<2x128xf32>
    %c0_11 = arith.constant 0 : index
    %c0_12 = arith.constant 0 : index
    %c0_13 = arith.constant 0 : index
    %17 = vector.load %arg6[%c0_11, %c0_12, %c0_13] : memref<1x2x128xf32, #tpu.memory_space<vmem>>, vector<1x2x128xf32>
    %18 = vector.shape_cast %17 : vector<1x2x128xf32> to vector<2x128xf32>
    %19 = vector.shape_cast %16 : vector<2x128xf32> to vector<1x2x128xf32>
    tpu.vector_store %arg6[%c0_11, %c0_12, %c0_13], %19 {strides = array<i32>} : memref<1x2x128xf32, #tpu.memory_space<vmem>>, vector<1x2x128xf32>,
    %20 = arith.truncf %4 : vector<32x128xf32> to vector<32x128xbf16>
    %c0_14 = arith.constant 0 : index
    %c0_15 = arith.constant 0 : index
    %c0_16 = arith.constant 0 : index
    %21 = vector.load %arg5[%c0_14, %c0_15, %c0_16] : memref<1x32x128xbf16, #tpu.memory_space<vmem>>, vector<1x32x128xbf16>
    %22 = vector.shape_cast %21 : vector<1x32x128xbf16> to vector<32x128xbf16>
    %23 = vector.shape_cast %20 : vector<32x128xbf16> to vector<1x32x128xbf16>
    tpu.vector_store %arg5[%c0_14, %c0_15, %c0_16], %23 {strides = array<i32>} : memref<1x32x128xbf16, #tpu.memory_space<vmem>>, vector<1x32x128xbf16>,
    return
  }
  func.func @transform_0(%arg0: i32, %arg1: i32, %arg2: i32) -> (i32, i32, i32) {
    %c0_i32 = arith.constant 0 : i32
    %c0_i32_0 = arith.constant 0 : i32
    return %arg0, %arg2, %c0_i32 : i32, i32, i32
  }
  func.func @transform_1(%arg0: i32, %arg1: i32, %arg2: i32) -> (i32, i32, i32) {
    %c0_i32 = arith.constant 0 : i32
    %c0_i32_0 = arith.constant 0 : i32
    return %arg0, %c0_i32, %arg1 : i32, i32, i32
  }
  func.func @transform_2(%arg0: i32, %arg1: i32, %arg2: i32) -> (i32, i32, i32) {
    %c0_i32 = arith.constant 0 : i32
    return %arg0, %arg2, %arg1 : i32, i32, i32
  }
  func.func @transform_3(%arg0: i32, %arg1: i32, %arg2: i32) -> (i32, i32, i32) {
    %c0_i32 = arith.constant 0 : i32
    %c0_i32_0 = arith.constant 0 : i32
    return %arg0, %c0_i32, %arg1 : i32, i32, i32
  }
}

module attributes {stable_mosaic.version = 11 : i64} {
  func.func @_bn_relu_kernel(%arg0: i32, %arg1: i32, %arg2: memref<1x32x128xbf16, #tpu.memory_space<vmem>>, %arg3: memref<2x128xf32, #tpu.memory_space<vmem>>, %arg4: memref<1x128xf32, #tpu.memory_space<vmem>>, %arg5: memref<1x128xf32, #tpu.memory_space<vmem>>, %arg6: memref<1x32x128xbf16, #tpu.memory_space<vmem>>) attributes {dimension_semantics = [#tpu.dimension_semantics<parallel>, #tpu.dimension_semantics<parallel>], iteration_bounds = array<i64: 4, 1>, scalar_prefetch = 0 : i64, scratch_operands = 0 : i64, tpu.core_type = #tpu.core_type<tc>, window_params = [{transform_indices = @transform_0, window_bounds = array<i64: 1, 32, 128>}, {pipeline_mode = #tpu.pipeline_mode<synchronous>, transform_indices = @transform_1, window_bounds = array<i64: 2, 128>}, {pipeline_mode = #tpu.pipeline_mode<synchronous>, transform_indices = @transform_2, window_bounds = array<i64: 1, 128>}, {pipeline_mode = #tpu.pipeline_mode<synchronous>, transform_indices = @transform_3, window_bounds = array<i64: 1, 128>}, {transform_indices = @transform_4, window_bounds = array<i64: 1, 32, 128>}]} {
    %c0 = arith.constant 0 : index
    %c0_0 = arith.constant 0 : index
    %c0_1 = arith.constant 0 : index
    %0 = vector.load %arg2[%c0, %c0_0, %c0_1] : memref<1x32x128xbf16, #tpu.memory_space<vmem>>, vector<1x32x128xbf16>
    %1 = vector.shape_cast %0 : vector<1x32x128xbf16> to vector<32x128xbf16>
    %2 = arith.extf %1 : vector<32x128xbf16> to vector<32x128xf32>
    %c0_2 = arith.constant 0 : index
    %c0_3 = arith.constant 0 : index
    %3 = vector.load %arg3[%c0_2, %c0_3] : memref<2x128xf32, #tpu.memory_space<vmem>>, vector<2x128xf32>
    %4 = vector.extract_strided_slice %3 {offsets = [0, 0], sizes = [1, 128], strides = [1, 1]} : vector<2x128xf32> to vector<1x128xf32>
    %cst = arith.constant 7.812500e-03 : f32
    %5 = vector.broadcast %cst : f32 to vector<1x128xf32>
    %6 = arith.mulf %4, %5 : vector<1x128xf32>
    %7 = vector.extract_strided_slice %3 {offsets = [1, 0], sizes = [1, 128], strides = [1, 1]} : vector<2x128xf32> to vector<1x128xf32>
    %cst_4 = arith.constant 7.812500e-03 : f32
    %8 = vector.broadcast %cst_4 : f32 to vector<1x128xf32>
    %9 = arith.mulf %7, %8 : vector<1x128xf32>
    %10 = arith.mulf %6, %6 : vector<1x128xf32>
    %11 = arith.subf %9, %10 : vector<1x128xf32>
    %cst_5 = arith.constant 0.000000e+00 : f32
    %12 = vector.broadcast %cst_5 : f32 to vector<1x128xf32>
    %13 = arith.maximumf %11, %12 : vector<1x128xf32>
    %cst_6 = arith.constant 9.99999974E-6 : f32
    %14 = vector.broadcast %cst_6 : f32 to vector<1x128xf32>
    %15 = arith.addf %13, %14 : vector<1x128xf32>
    %16 = math.rsqrt %15 : vector<1x128xf32>
    %c0_7 = arith.constant 0 : index
    %c0_8 = arith.constant 0 : index
    %17 = vector.load %arg4[%c0_7, %c0_8] : memref<1x128xf32, #tpu.memory_space<vmem>>, vector<1x128xf32>
    %18 = arith.mulf %16, %17 : vector<1x128xf32>
    %c0_9 = arith.constant 0 : index
    %c0_10 = arith.constant 0 : index
    %19 = vector.load %arg5[%c0_9, %c0_10] : memref<1x128xf32, #tpu.memory_space<vmem>>, vector<1x128xf32>
    %20 = arith.mulf %6, %18 : vector<1x128xf32>
    %21 = arith.subf %19, %20 : vector<1x128xf32>
    %22 = vector.broadcast %18 : vector<1x128xf32> to vector<32x128xf32>
    %23 = arith.mulf %2, %22 : vector<32x128xf32>
    %24 = vector.broadcast %21 : vector<1x128xf32> to vector<32x128xf32>
    %25 = arith.addf %23, %24 : vector<32x128xf32>
    %cst_11 = arith.constant 0.000000e+00 : f32
    %26 = vector.broadcast %cst_11 : f32 to vector<32x128xf32>
    %27 = arith.maximumf %25, %26 : vector<32x128xf32>
    %28 = arith.truncf %27 : vector<32x128xf32> to vector<32x128xbf16>
    %c0_12 = arith.constant 0 : index
    %c0_13 = arith.constant 0 : index
    %c0_14 = arith.constant 0 : index
    %29 = vector.load %arg6[%c0_12, %c0_13, %c0_14] : memref<1x32x128xbf16, #tpu.memory_space<vmem>>, vector<1x32x128xbf16>
    %30 = vector.shape_cast %29 : vector<1x32x128xbf16> to vector<32x128xbf16>
    %31 = vector.shape_cast %28 : vector<32x128xbf16> to vector<1x32x128xbf16>
    tpu.vector_store %arg6[%c0_12, %c0_13, %c0_14], %31 {strides = array<i32>} : memref<1x32x128xbf16, #tpu.memory_space<vmem>>, vector<1x32x128xbf16>,
    return
  }
  func.func @transform_0(%arg0: i32, %arg1: i32) -> (i32, i32, i32) {
    %c0_i32 = arith.constant 0 : i32
    %c0_i32_0 = arith.constant 0 : i32
    return %arg0, %arg1, %c0_i32 : i32, i32, i32
  }
  func.func @transform_1(%arg0: i32, %arg1: i32) -> (i32, i32) {
    %c0_i32 = arith.constant 0 : i32
    %c0_i32_0 = arith.constant 0 : i32
    %c0_i32_1 = arith.constant 0 : i32
    return %c0_i32, %c0_i32_0 : i32, i32
  }
  func.func @transform_2(%arg0: i32, %arg1: i32) -> (i32, i32) {
    %c0_i32 = arith.constant 0 : i32
    %c0_i32_0 = arith.constant 0 : i32
    %c0_i32_1 = arith.constant 0 : i32
    return %c0_i32, %c0_i32_0 : i32, i32
  }
  func.func @transform_3(%arg0: i32, %arg1: i32) -> (i32, i32) {
    %c0_i32 = arith.constant 0 : i32
    %c0_i32_0 = arith.constant 0 : i32
    %c0_i32_1 = arith.constant 0 : i32
    return %c0_i32, %c0_i32_0 : i32, i32
  }
  func.func @transform_4(%arg0: i32, %arg1: i32) -> (i32, i32, i32) {
    %c0_i32 = arith.constant 0 : i32
    %c0_i32_0 = arith.constant 0 : i32
    return %arg0, %arg1, %c0_i32 : i32, i32, i32
  }
}

module attributes {stable_mosaic.version = 11 : i64} {
  func.func @_matmul_stats_kernel(%arg0: i32, %arg1: i32, %arg2: i32, %arg3: memref<1x128x128xbf16, #tpu.memory_space<vmem>>, %arg4: memref<1x128x128xbf16, #tpu.memory_space<vmem>>, %arg5: memref<1x128x128xbf16, #tpu.memory_space<vmem>>, %arg6: memref<1x2x128xf32, #tpu.memory_space<vmem>>) attributes {dimension_semantics = [#tpu.dimension_semantics<parallel>, #tpu.dimension_semantics<parallel>, #tpu.dimension_semantics<arbitrary>], iteration_bounds = array<i64: 4, 1, 1>, scalar_prefetch = 0 : i64, scratch_operands = 0 : i64, tpu.core_type = #tpu.core_type<tc>, window_params = [{transform_indices = @transform_0, window_bounds = array<i64: 1, 128, 128>}, {transform_indices = @transform_1, window_bounds = array<i64: 1, 128, 128>}, {transform_indices = @transform_2, window_bounds = array<i64: 1, 128, 128>}, {transform_indices = @transform_3, window_bounds = array<i64: 1, 2, 128>}]} {
    %c0 = arith.constant 0 : index
    %c0_0 = arith.constant 0 : index
    %c0_1 = arith.constant 0 : index
    %0 = vector.load %arg3[%c0, %c0_0, %c0_1] : memref<1x128x128xbf16, #tpu.memory_space<vmem>>, vector<1x128x128xbf16>
    %1 = vector.shape_cast %0 : vector<1x128x128xbf16> to vector<128x128xbf16>
    %c0_2 = arith.constant 0 : index
    %c0_3 = arith.constant 0 : index
    %c0_4 = arith.constant 0 : index
    %2 = vector.load %arg4[%c0_2, %c0_3, %c0_4] : memref<1x128x128xbf16, #tpu.memory_space<vmem>>, vector<1x128x128xbf16>
    %3 = vector.shape_cast %2 : vector<1x128x128xbf16> to vector<128x128xbf16>
    %cst = arith.constant dense<0.000000e+00> : vector<128x128xf32>
    %4 = tpu.matmul %1, %3, %cst {dimension_numbers = #tpu.dot_dimension_numbers<[1], [0], [0], [1], [0, 0, 1, 1], [], []>} : vector<128x128xbf16>, vector<128x128xbf16>, vector<128x128xf32> -> vector<128x128xf32>
    %c0_i32 = arith.constant 0 : i32
    %5 = arith.cmpi eq, %arg2, %c0_i32 : i32
    %6 = arith.extui %5 : i1 to i32
    %c0_i32_5 = arith.constant 0 : i32
    %7 = arith.cmpi ne, %6, %c0_i32_5 : i32
    scf.if %7 {
      %cst_17 = arith.constant 0.000000e+00 : f32
      %24 = vector.broadcast %cst_17 : f32 to vector<2x128xf32>
      %c0_18 = arith.constant 0 : index
      %c0_19 = arith.constant 0 : index
      %c0_20 = arith.constant 0 : index
      %25 = vector.load %arg6[%c0_18, %c0_19, %c0_20] : memref<1x2x128xf32, #tpu.memory_space<vmem>>, vector<1x2x128xf32>
      %26 = vector.shape_cast %25 : vector<1x2x128xf32> to vector<2x128xf32>
      %27 = vector.shape_cast %24 : vector<2x128xf32> to vector<1x2x128xf32>
      tpu.vector_store %arg6[%c0_18, %c0_19, %c0_20], %27 {strides = array<i32>} : memref<1x2x128xf32, #tpu.memory_space<vmem>>, vector<1x2x128xf32>,
    } else {
    }
    %c0_6 = arith.constant 0 : index
    %c0_7 = arith.constant 0 : index
    %c0_8 = arith.constant 0 : index
    %8 = vector.load %arg6[%c0_6, %c0_7, %c0_8] : memref<1x2x128xf32, #tpu.memory_space<vmem>>, vector<1x2x128xf32>
    %9 = vector.shape_cast %8 : vector<1x2x128xf32> to vector<2x128xf32>
    %cst_9 = arith.constant dense<0.000000e+00> : vector<128xf32>
    %10 = vector.multi_reduction <add>, %4, %cst_9 [0] : vector<128x128xf32> to vector<128xf32>
    %11 = vector.shape_cast %10 : vector<128xf32> to vector<1x128xf32>
    %12 = arith.mulf %4, %4 : vector<128x128xf32>
    %cst_10 = arith.constant dense<0.000000e+00> : vector<128xf32>
    %13 = vector.multi_reduction <add>, %12, %cst_10 [0] : vector<128x128xf32> to vector<128xf32>
    %14 = vector.shape_cast %13 : vector<128xf32> to vector<1x128xf32>
    %15 = tpu.concatenate %11, %14 in 0 : vector<1x128xf32>, vector<1x128xf32> -> vector<2x128xf32>
    %16 = arith.addf %9, %15 : vector<2x128xf32>
    %c0_11 = arith.constant 0 : index
    %c0_12 = arith.constant 0 : index
    %c0_13 = arith.constant 0 : index
    %17 = vector.load %arg6[%c0_11, %c0_12, %c0_13] : memref<1x2x128xf32, #tpu.memory_space<vmem>>, vector<1x2x128xf32>
    %18 = vector.shape_cast %17 : vector<1x2x128xf32> to vector<2x128xf32>
    %19 = vector.shape_cast %16 : vector<2x128xf32> to vector<1x2x128xf32>
    tpu.vector_store %arg6[%c0_11, %c0_12, %c0_13], %19 {strides = array<i32>} : memref<1x2x128xf32, #tpu.memory_space<vmem>>, vector<1x2x128xf32>,
    %20 = arith.truncf %4 : vector<128x128xf32> to vector<128x128xbf16>
    %c0_14 = arith.constant 0 : index
    %c0_15 = arith.constant 0 : index
    %c0_16 = arith.constant 0 : index
    %21 = vector.load %arg5[%c0_14, %c0_15, %c0_16] : memref<1x128x128xbf16, #tpu.memory_space<vmem>>, vector<1x128x128xbf16>
    %22 = vector.shape_cast %21 : vector<1x128x128xbf16> to vector<128x128xbf16>
    %23 = vector.shape_cast %20 : vector<128x128xbf16> to vector<1x128x128xbf16>
    tpu.vector_store %arg5[%c0_14, %c0_15, %c0_16], %23 {strides = array<i32>} : memref<1x128x128xbf16, #tpu.memory_space<vmem>>, vector<1x128x128xbf16>,
    return
  }
  func.func @transform_0(%arg0: i32, %arg1: i32, %arg2: i32) -> (i32, i32, i32) {
    %c0_i32 = arith.constant 0 : i32
    %c0_i32_0 = arith.constant 0 : i32
    return %arg0, %arg2, %c0_i32 : i32, i32, i32
  }
  func.func @transform_1(%arg0: i32, %arg1: i32, %arg2: i32) -> (i32, i32, i32) {
    %c0_i32 = arith.constant 0 : i32
    %c0_i32_0 = arith.constant 0 : i32
    return %arg0, %c0_i32, %arg1 : i32, i32, i32
  }
  func.func @transform_2(%arg0: i32, %arg1: i32, %arg2: i32) -> (i32, i32, i32) {
    %c0_i32 = arith.constant 0 : i32
    return %arg0, %arg2, %arg1 : i32, i32, i32
  }
  func.func @transform_3(%arg0: i32, %arg1: i32, %arg2: i32) -> (i32, i32, i32) {
    %c0_i32 = arith.constant 0 : i32
    %c0_i32_0 = arith.constant 0 : i32
    return %arg0, %c0_i32, %arg1 : i32, i32, i32
  }
}

module attributes {stable_mosaic.version = 11 : i64} {
  func.func @_bn_relu_kernel(%arg0: i32, %arg1: i32, %arg2: memref<1x128x128xbf16, #tpu.memory_space<vmem>>, %arg3: memref<2x128xf32, #tpu.memory_space<vmem>>, %arg4: memref<1x128xf32, #tpu.memory_space<vmem>>, %arg5: memref<1x128xf32, #tpu.memory_space<vmem>>, %arg6: memref<1x128x128xbf16, #tpu.memory_space<vmem>>) attributes {dimension_semantics = [#tpu.dimension_semantics<parallel>, #tpu.dimension_semantics<parallel>], iteration_bounds = array<i64: 4, 1>, scalar_prefetch = 0 : i64, scratch_operands = 0 : i64, tpu.core_type = #tpu.core_type<tc>, window_params = [{transform_indices = @transform_0, window_bounds = array<i64: 1, 128, 128>}, {pipeline_mode = #tpu.pipeline_mode<synchronous>, transform_indices = @transform_1, window_bounds = array<i64: 2, 128>}, {pipeline_mode = #tpu.pipeline_mode<synchronous>, transform_indices = @transform_2, window_bounds = array<i64: 1, 128>}, {pipeline_mode = #tpu.pipeline_mode<synchronous>, transform_indices = @transform_3, window_bounds = array<i64: 1, 128>}, {transform_indices = @transform_4, window_bounds = array<i64: 1, 128, 128>}]} {
    %c0 = arith.constant 0 : index
    %c0_0 = arith.constant 0 : index
    %c0_1 = arith.constant 0 : index
    %0 = vector.load %arg2[%c0, %c0_0, %c0_1] : memref<1x128x128xbf16, #tpu.memory_space<vmem>>, vector<1x128x128xbf16>
    %1 = vector.shape_cast %0 : vector<1x128x128xbf16> to vector<128x128xbf16>
    %2 = arith.extf %1 : vector<128x128xbf16> to vector<128x128xf32>
    %c0_2 = arith.constant 0 : index
    %c0_3 = arith.constant 0 : index
    %3 = vector.load %arg3[%c0_2, %c0_3] : memref<2x128xf32, #tpu.memory_space<vmem>>, vector<2x128xf32>
    %4 = vector.extract_strided_slice %3 {offsets = [0, 0], sizes = [1, 128], strides = [1, 1]} : vector<2x128xf32> to vector<1x128xf32>
    %cst = arith.constant 0.001953125 : f32
    %5 = vector.broadcast %cst : f32 to vector<1x128xf32>
    %6 = arith.mulf %4, %5 : vector<1x128xf32>
    %7 = vector.extract_strided_slice %3 {offsets = [1, 0], sizes = [1, 128], strides = [1, 1]} : vector<2x128xf32> to vector<1x128xf32>
    %cst_4 = arith.constant 0.001953125 : f32
    %8 = vector.broadcast %cst_4 : f32 to vector<1x128xf32>
    %9 = arith.mulf %7, %8 : vector<1x128xf32>
    %10 = arith.mulf %6, %6 : vector<1x128xf32>
    %11 = arith.subf %9, %10 : vector<1x128xf32>
    %cst_5 = arith.constant 0.000000e+00 : f32
    %12 = vector.broadcast %cst_5 : f32 to vector<1x128xf32>
    %13 = arith.maximumf %11, %12 : vector<1x128xf32>
    %cst_6 = arith.constant 9.99999974E-6 : f32
    %14 = vector.broadcast %cst_6 : f32 to vector<1x128xf32>
    %15 = arith.addf %13, %14 : vector<1x128xf32>
    %16 = math.rsqrt %15 : vector<1x128xf32>
    %c0_7 = arith.constant 0 : index
    %c0_8 = arith.constant 0 : index
    %17 = vector.load %arg4[%c0_7, %c0_8] : memref<1x128xf32, #tpu.memory_space<vmem>>, vector<1x128xf32>
    %18 = arith.mulf %16, %17 : vector<1x128xf32>
    %c0_9 = arith.constant 0 : index
    %c0_10 = arith.constant 0 : index
    %19 = vector.load %arg5[%c0_9, %c0_10] : memref<1x128xf32, #tpu.memory_space<vmem>>, vector<1x128xf32>
    %20 = arith.mulf %6, %18 : vector<1x128xf32>
    %21 = arith.subf %19, %20 : vector<1x128xf32>
    %22 = vector.broadcast %18 : vector<1x128xf32> to vector<128x128xf32>
    %23 = arith.mulf %2, %22 : vector<128x128xf32>
    %24 = vector.broadcast %21 : vector<1x128xf32> to vector<128x128xf32>
    %25 = arith.addf %23, %24 : vector<128x128xf32>
    %cst_11 = arith.constant 0.000000e+00 : f32
    %26 = vector.broadcast %cst_11 : f32 to vector<128x128xf32>
    %27 = arith.maximumf %25, %26 : vector<128x128xf32>
    %28 = arith.truncf %27 : vector<128x128xf32> to vector<128x128xbf16>
    %c0_12 = arith.constant 0 : index
    %c0_13 = arith.constant 0 : index
    %c0_14 = arith.constant 0 : index
    %29 = vector.load %arg6[%c0_12, %c0_13, %c0_14] : memref<1x128x128xbf16, #tpu.memory_space<vmem>>, vector<1x128x128xbf16>
    %30 = vector.shape_cast %29 : vector<1x128x128xbf16> to vector<128x128xbf16>
    %31 = vector.shape_cast %28 : vector<128x128xbf16> to vector<1x128x128xbf16>
    tpu.vector_store %arg6[%c0_12, %c0_13, %c0_14], %31 {strides = array<i32>} : memref<1x128x128xbf16, #tpu.memory_space<vmem>>, vector<1x128x128xbf16>,
    return
  }
  func.func @transform_0(%arg0: i32, %arg1: i32) -> (i32, i32, i32) {
    %c0_i32 = arith.constant 0 : i32
    %c0_i32_0 = arith.constant 0 : i32
    return %arg0, %arg1, %c0_i32 : i32, i32, i32
  }
  func.func @transform_1(%arg0: i32, %arg1: i32) -> (i32, i32) {
    %c0_i32 = arith.constant 0 : i32
    %c0_i32_0 = arith.constant 0 : i32
    %c0_i32_1 = arith.constant 0 : i32
    return %c0_i32, %c0_i32_0 : i32, i32
  }
  func.func @transform_2(%arg0: i32, %arg1: i32) -> (i32, i32) {
    %c0_i32 = arith.constant 0 : i32
    %c0_i32_0 = arith.constant 0 : i32
    %c0_i32_1 = arith.constant 0 : i32
    return %c0_i32, %c0_i32_0 : i32, i32
  }
  func.func @transform_3(%arg0: i32, %arg1: i32) -> (i32, i32) {
    %c0_i32 = arith.constant 0 : i32
    %c0_i32_0 = arith.constant 0 : i32
    %c0_i32_1 = arith.constant 0 : i32
    return %c0_i32, %c0_i32_0 : i32, i32
  }
  func.func @transform_4(%arg0: i32, %arg1: i32) -> (i32, i32, i32) {
    %c0_i32 = arith.constant 0 : i32
    %c0_i32_0 = arith.constant 0 : i32
    return %arg0, %arg1, %c0_i32 : i32, i32, i32
  }
}

module attributes {stable_mosaic.version = 11 : i64} {
  func.func @_matmul_stats_kernel(%arg0: i32, %arg1: i32, %arg2: i32, %arg3: memref<1x256x64xbf16, #tpu.memory_space<vmem>>, %arg4: memref<1x64x128xbf16, #tpu.memory_space<vmem>>, %arg5: memref<1x256x128xbf16, #tpu.memory_space<vmem>>, %arg6: memref<1x2x128xf32, #tpu.memory_space<vmem>>) attributes {dimension_semantics = [#tpu.dimension_semantics<parallel>, #tpu.dimension_semantics<parallel>, #tpu.dimension_semantics<arbitrary>], iteration_bounds = array<i64: 4, 1, 2>, scalar_prefetch = 0 : i64, scratch_operands = 0 : i64, tpu.core_type = #tpu.core_type<tc>, window_params = [{transform_indices = @transform_0, window_bounds = array<i64: 1, 256, 64>}, {transform_indices = @transform_1, window_bounds = array<i64: 1, 64, 128>}, {transform_indices = @transform_2, window_bounds = array<i64: 1, 256, 128>}, {transform_indices = @transform_3, window_bounds = array<i64: 1, 2, 128>}]} {
    %c0 = arith.constant 0 : index
    %c0_0 = arith.constant 0 : index
    %c0_1 = arith.constant 0 : index
    %0 = vector.load %arg3[%c0, %c0_0, %c0_1] : memref<1x256x64xbf16, #tpu.memory_space<vmem>>, vector<1x256x64xbf16>
    %1 = vector.shape_cast %0 : vector<1x256x64xbf16> to vector<256x64xbf16>
    %c0_2 = arith.constant 0 : index
    %c0_3 = arith.constant 0 : index
    %c0_4 = arith.constant 0 : index
    %2 = vector.load %arg4[%c0_2, %c0_3, %c0_4] : memref<1x64x128xbf16, #tpu.memory_space<vmem>>, vector<1x64x128xbf16>
    %3 = vector.shape_cast %2 : vector<1x64x128xbf16> to vector<64x128xbf16>
    %cst = arith.constant dense<0.000000e+00> : vector<256x128xf32>
    %4 = tpu.matmul %1, %3, %cst {dimension_numbers = #tpu.dot_dimension_numbers<[1], [0], [0], [1], [0, 0, 1, 1], [], []>} : vector<256x64xbf16>, vector<64x128xbf16>, vector<256x128xf32> -> vector<256x128xf32>
    %c0_i32 = arith.constant 0 : i32
    %5 = arith.cmpi eq, %arg2, %c0_i32 : i32
    %6 = arith.extui %5 : i1 to i32
    %c0_i32_5 = arith.constant 0 : i32
    %7 = arith.cmpi ne, %6, %c0_i32_5 : i32
    scf.if %7 {
      %cst_17 = arith.constant 0.000000e+00 : f32
      %24 = vector.broadcast %cst_17 : f32 to vector<2x128xf32>
      %c0_18 = arith.constant 0 : index
      %c0_19 = arith.constant 0 : index
      %c0_20 = arith.constant 0 : index
      %25 = vector.load %arg6[%c0_18, %c0_19, %c0_20] : memref<1x2x128xf32, #tpu.memory_space<vmem>>, vector<1x2x128xf32>
      %26 = vector.shape_cast %25 : vector<1x2x128xf32> to vector<2x128xf32>
      %27 = vector.shape_cast %24 : vector<2x128xf32> to vector<1x2x128xf32>
      tpu.vector_store %arg6[%c0_18, %c0_19, %c0_20], %27 {strides = array<i32>} : memref<1x2x128xf32, #tpu.memory_space<vmem>>, vector<1x2x128xf32>,
    } else {
    }
    %c0_6 = arith.constant 0 : index
    %c0_7 = arith.constant 0 : index
    %c0_8 = arith.constant 0 : index
    %8 = vector.load %arg6[%c0_6, %c0_7, %c0_8] : memref<1x2x128xf32, #tpu.memory_space<vmem>>, vector<1x2x128xf32>
    %9 = vector.shape_cast %8 : vector<1x2x128xf32> to vector<2x128xf32>
    %cst_9 = arith.constant dense<0.000000e+00> : vector<128xf32>
    %10 = vector.multi_reduction <add>, %4, %cst_9 [0] : vector<256x128xf32> to vector<128xf32>
    %11 = vector.shape_cast %10 : vector<128xf32> to vector<1x128xf32>
    %12 = arith.mulf %4, %4 : vector<256x128xf32>
    %cst_10 = arith.constant dense<0.000000e+00> : vector<128xf32>
    %13 = vector.multi_reduction <add>, %12, %cst_10 [0] : vector<256x128xf32> to vector<128xf32>
    %14 = vector.shape_cast %13 : vector<128xf32> to vector<1x128xf32>
    %15 = tpu.concatenate %11, %14 in 0 : vector<1x128xf32>, vector<1x128xf32> -> vector<2x128xf32>
    %16 = arith.addf %9, %15 : vector<2x128xf32>
    %c0_11 = arith.constant 0 : index
    %c0_12 = arith.constant 0 : index
    %c0_13 = arith.constant 0 : index
    %17 = vector.load %arg6[%c0_11, %c0_12, %c0_13] : memref<1x2x128xf32, #tpu.memory_space<vmem>>, vector<1x2x128xf32>
    %18 = vector.shape_cast %17 : vector<1x2x128xf32> to vector<2x128xf32>
    %19 = vector.shape_cast %16 : vector<2x128xf32> to vector<1x2x128xf32>
    tpu.vector_store %arg6[%c0_11, %c0_12, %c0_13], %19 {strides = array<i32>} : memref<1x2x128xf32, #tpu.memory_space<vmem>>, vector<1x2x128xf32>,
    %20 = arith.truncf %4 : vector<256x128xf32> to vector<256x128xbf16>
    %c0_14 = arith.constant 0 : index
    %c0_15 = arith.constant 0 : index
    %c0_16 = arith.constant 0 : index
    %21 = vector.load %arg5[%c0_14, %c0_15, %c0_16] : memref<1x256x128xbf16, #tpu.memory_space<vmem>>, vector<1x256x128xbf16>
    %22 = vector.shape_cast %21 : vector<1x256x128xbf16> to vector<256x128xbf16>
    %23 = vector.shape_cast %20 : vector<256x128xbf16> to vector<1x256x128xbf16>
    tpu.vector_store %arg5[%c0_14, %c0_15, %c0_16], %23 {strides = array<i32>} : memref<1x256x128xbf16, #tpu.memory_space<vmem>>, vector<1x256x128xbf16>,
    return
  }
  func.func @transform_0(%arg0: i32, %arg1: i32, %arg2: i32) -> (i32, i32, i32) {
    %c0_i32 = arith.constant 0 : i32
    %c0_i32_0 = arith.constant 0 : i32
    return %arg0, %arg2, %c0_i32 : i32, i32, i32
  }
  func.func @transform_1(%arg0: i32, %arg1: i32, %arg2: i32) -> (i32, i32, i32) {
    %c0_i32 = arith.constant 0 : i32
    %c0_i32_0 = arith.constant 0 : i32
    return %arg0, %c0_i32, %arg1 : i32, i32, i32
  }
  func.func @transform_2(%arg0: i32, %arg1: i32, %arg2: i32) -> (i32, i32, i32) {
    %c0_i32 = arith.constant 0 : i32
    return %arg0, %arg2, %arg1 : i32, i32, i32
  }
  func.func @transform_3(%arg0: i32, %arg1: i32, %arg2: i32) -> (i32, i32, i32) {
    %c0_i32 = arith.constant 0 : i32
    %c0_i32_0 = arith.constant 0 : i32
    return %arg0, %c0_i32, %arg1 : i32, i32, i32
  }
}

module attributes {stable_mosaic.version = 11 : i64} {
  func.func @_bn_relu_kernel(%arg0: i32, %arg1: i32, %arg2: memref<1x512x128xbf16, #tpu.memory_space<vmem>>, %arg3: memref<2x128xf32, #tpu.memory_space<vmem>>, %arg4: memref<1x128xf32, #tpu.memory_space<vmem>>, %arg5: memref<1x128xf32, #tpu.memory_space<vmem>>, %arg6: memref<1x512x128xbf16, #tpu.memory_space<vmem>>) attributes {dimension_semantics = [#tpu.dimension_semantics<parallel>, #tpu.dimension_semantics<parallel>], iteration_bounds = array<i64: 4, 1>, scalar_prefetch = 0 : i64, scratch_operands = 0 : i64, tpu.core_type = #tpu.core_type<tc>, window_params = [{transform_indices = @transform_0, window_bounds = array<i64: 1, 512, 128>}, {pipeline_mode = #tpu.pipeline_mode<synchronous>, transform_indices = @transform_1, window_bounds = array<i64: 2, 128>}, {pipeline_mode = #tpu.pipeline_mode<synchronous>, transform_indices = @transform_2, window_bounds = array<i64: 1, 128>}, {pipeline_mode = #tpu.pipeline_mode<synchronous>, transform_indices = @transform_3, window_bounds = array<i64: 1, 128>}, {transform_indices = @transform_4, window_bounds = array<i64: 1, 512, 128>}]} {
    %c0 = arith.constant 0 : index
    %c0_0 = arith.constant 0 : index
    %c0_1 = arith.constant 0 : index
    %0 = vector.load %arg2[%c0, %c0_0, %c0_1] : memref<1x512x128xbf16, #tpu.memory_space<vmem>>, vector<1x512x128xbf16>
    %1 = vector.shape_cast %0 : vector<1x512x128xbf16> to vector<512x128xbf16>
    %2 = arith.extf %1 : vector<512x128xbf16> to vector<512x128xf32>
    %c0_2 = arith.constant 0 : index
    %c0_3 = arith.constant 0 : index
    %3 = vector.load %arg3[%c0_2, %c0_3] : memref<2x128xf32, #tpu.memory_space<vmem>>, vector<2x128xf32>
    %4 = vector.extract_strided_slice %3 {offsets = [0, 0], sizes = [1, 128], strides = [1, 1]} : vector<2x128xf32> to vector<1x128xf32>
    %cst = arith.constant 4.8828125E-4 : f32
    %5 = vector.broadcast %cst : f32 to vector<1x128xf32>
    %6 = arith.mulf %4, %5 : vector<1x128xf32>
    %7 = vector.extract_strided_slice %3 {offsets = [1, 0], sizes = [1, 128], strides = [1, 1]} : vector<2x128xf32> to vector<1x128xf32>
    %cst_4 = arith.constant 4.8828125E-4 : f32
    %8 = vector.broadcast %cst_4 : f32 to vector<1x128xf32>
    %9 = arith.mulf %7, %8 : vector<1x128xf32>
    %10 = arith.mulf %6, %6 : vector<1x128xf32>
    %11 = arith.subf %9, %10 : vector<1x128xf32>
    %cst_5 = arith.constant 0.000000e+00 : f32
    %12 = vector.broadcast %cst_5 : f32 to vector<1x128xf32>
    %13 = arith.maximumf %11, %12 : vector<1x128xf32>
    %cst_6 = arith.constant 9.99999974E-6 : f32
    %14 = vector.broadcast %cst_6 : f32 to vector<1x128xf32>
    %15 = arith.addf %13, %14 : vector<1x128xf32>
    %16 = math.rsqrt %15 : vector<1x128xf32>
    %c0_7 = arith.constant 0 : index
    %c0_8 = arith.constant 0 : index
    %17 = vector.load %arg4[%c0_7, %c0_8] : memref<1x128xf32, #tpu.memory_space<vmem>>, vector<1x128xf32>
    %18 = arith.mulf %16, %17 : vector<1x128xf32>
    %c0_9 = arith.constant 0 : index
    %c0_10 = arith.constant 0 : index
    %19 = vector.load %arg5[%c0_9, %c0_10] : memref<1x128xf32, #tpu.memory_space<vmem>>, vector<1x128xf32>
    %20 = arith.mulf %6, %18 : vector<1x128xf32>
    %21 = arith.subf %19, %20 : vector<1x128xf32>
    %22 = vector.broadcast %18 : vector<1x128xf32> to vector<512x128xf32>
    %23 = arith.mulf %2, %22 : vector<512x128xf32>
    %24 = vector.broadcast %21 : vector<1x128xf32> to vector<512x128xf32>
    %25 = arith.addf %23, %24 : vector<512x128xf32>
    %cst_11 = arith.constant 0.000000e+00 : f32
    %26 = vector.broadcast %cst_11 : f32 to vector<512x128xf32>
    %27 = arith.maximumf %25, %26 : vector<512x128xf32>
    %28 = arith.truncf %27 : vector<512x128xf32> to vector<512x128xbf16>
    %c0_12 = arith.constant 0 : index
    %c0_13 = arith.constant 0 : index
    %c0_14 = arith.constant 0 : index
    %29 = vector.load %arg6[%c0_12, %c0_13, %c0_14] : memref<1x512x128xbf16, #tpu.memory_space<vmem>>, vector<1x512x128xbf16>
    %30 = vector.shape_cast %29 : vector<1x512x128xbf16> to vector<512x128xbf16>
    %31 = vector.shape_cast %28 : vector<512x128xbf16> to vector<1x512x128xbf16>
    tpu.vector_store %arg6[%c0_12, %c0_13, %c0_14], %31 {strides = array<i32>} : memref<1x512x128xbf16, #tpu.memory_space<vmem>>, vector<1x512x128xbf16>,
    return
  }
  func.func @transform_0(%arg0: i32, %arg1: i32) -> (i32, i32, i32) {
    %c0_i32 = arith.constant 0 : i32
    %c0_i32_0 = arith.constant 0 : i32
    return %arg0, %arg1, %c0_i32 : i32, i32, i32
  }
  func.func @transform_1(%arg0: i32, %arg1: i32) -> (i32, i32) {
    %c0_i32 = arith.constant 0 : i32
    %c0_i32_0 = arith.constant 0 : i32
    %c0_i32_1 = arith.constant 0 : i32
    return %c0_i32, %c0_i32_0 : i32, i32
  }
  func.func @transform_2(%arg0: i32, %arg1: i32) -> (i32, i32) {
    %c0_i32 = arith.constant 0 : i32
    %c0_i32_0 = arith.constant 0 : i32
    %c0_i32_1 = arith.constant 0 : i32
    return %c0_i32, %c0_i32_0 : i32, i32
  }
  func.func @transform_3(%arg0: i32, %arg1: i32) -> (i32, i32) {
    %c0_i32 = arith.constant 0 : i32
    %c0_i32_0 = arith.constant 0 : i32
    %c0_i32_1 = arith.constant 0 : i32
    return %c0_i32, %c0_i32_0 : i32, i32
  }
  func.func @transform_4(%arg0: i32, %arg1: i32) -> (i32, i32, i32) {
    %c0_i32 = arith.constant 0 : i32
    %c0_i32_0 = arith.constant 0 : i32
    return %arg0, %arg1, %c0_i32 : i32, i32, i32
  }
}

module attributes {stable_mosaic.version = 11 : i64} {
  func.func @_matmul_t_tanh_kernel(%arg0: i32, %arg1: i32, %arg2: memref<1x8x32xbf16, #tpu.memory_space<vmem>>, %arg3: memref<1x32x512xbf16, #tpu.memory_space<vmem>>, %arg4: memref<1x8x512xf32, #tpu.memory_space<vmem>>) attributes {dimension_semantics = [#tpu.dimension_semantics<parallel>, #tpu.dimension_semantics<parallel>], iteration_bounds = array<i64: 4, 4>, scalar_prefetch = 0 : i64, scratch_operands = 0 : i64, tpu.core_type = #tpu.core_type<tc>, window_params = [{transform_indices = @transform_0, window_bounds = array<i64: 1, 8, 32>}, {transform_indices = @transform_1, window_bounds = array<i64: 1, 32, 512>}, {transform_indices = @transform_2, window_bounds = array<i64: 1, 8, 512>}]} {
    %c0 = arith.constant 0 : index
    %c0_0 = arith.constant 0 : index
    %c0_1 = arith.constant 0 : index
    %0 = vector.load %arg2[%c0, %c0_0, %c0_1] : memref<1x8x32xbf16, #tpu.memory_space<vmem>>, vector<1x8x32xbf16>
    %1 = vector.shape_cast %0 : vector<1x8x32xbf16> to vector<8x32xbf16>
    %c0_2 = arith.constant 0 : index
    %c0_3 = arith.constant 0 : index
    %c0_4 = arith.constant 0 : index
    %2 = vector.load %arg3[%c0_2, %c0_3, %c0_4] : memref<1x32x512xbf16, #tpu.memory_space<vmem>>, vector<1x32x512xbf16>
    %3 = vector.shape_cast %2 : vector<1x32x512xbf16> to vector<32x512xbf16>
    %cst = arith.constant dense<0.000000e+00> : vector<8x512xf32>
    %4 = tpu.matmul %1, %3, %cst {dimension_numbers = #tpu.dot_dimension_numbers<[1], [0], [0], [1], [0, 0, 1, 1], [], []>} : vector<8x32xbf16>, vector<32x512xbf16>, vector<8x512xf32> -> vector<8x512xf32>
    %5 = math.tanh %4 : vector<8x512xf32>
    %c0_5 = arith.constant 0 : index
    %c0_6 = arith.constant 0 : index
    %c0_7 = arith.constant 0 : index
    %6 = vector.load %arg4[%c0_5, %c0_6, %c0_7] : memref<1x8x512xf32, #tpu.memory_space<vmem>>, vector<1x8x512xf32>
    %7 = vector.shape_cast %6 : vector<1x8x512xf32> to vector<8x512xf32>
    %8 = vector.shape_cast %5 : vector<8x512xf32> to vector<1x8x512xf32>
    tpu.vector_store %arg4[%c0_5, %c0_6, %c0_7], %8 {strides = array<i32>} : memref<1x8x512xf32, #tpu.memory_space<vmem>>, vector<1x8x512xf32>,
    return
  }
  func.func @transform_0(%arg0: i32, %arg1: i32) -> (i32, i32, i32) {
    %c0_i32 = arith.constant 0 : i32
    %c0_i32_0 = arith.constant 0 : i32
    %c0_i32_1 = arith.constant 0 : i32
    return %arg0, %c0_i32, %c0_i32_0 : i32, i32, i32
  }
  func.func @transform_1(%arg0: i32, %arg1: i32) -> (i32, i32, i32) {
    %c0_i32 = arith.constant 0 : i32
    %c0_i32_0 = arith.constant 0 : i32
    return %arg0, %c0_i32, %arg1 : i32, i32, i32
  }
  func.func @transform_2(%arg0: i32, %arg1: i32) -> (i32, i32, i32) {
    %c0_i32 = arith.constant 0 : i32
    %c0_i32_0 = arith.constant 0 : i32
    return %arg0, %c0_i32, %arg1 : i32, i32, i32
  }
}

</mosaic_0001>

<llo_original>
// kernel: tile.28
$region0: #{tile.28}
  #allocation2 [shape = 's32[1]{0}', space=sflag, size = 0x4, scoped, tag = 'scoped memory for tile.28']
  %s0 = inlined_call_operand.hbm [shape: f32[64], index: 0, kind: input, shape index: {}]
  %s1 = inlined_call_operand.vmem [shape: f32[16,64], index: 1, kind: output, shape index: {}]
  $region1: #{tile.28} parent=0
    #allocation0 [shape = 'u8[512]{0}', space=vmem, size = 0x400, scoped, tag = 'operand span for operand 0']
    #allocation1 [shape = 's32[1]{0}', space=sflag, size = 0x4, scoped, tag = 'scoped memory for tile.28']
    %2 = vsyncpa [#allocation1], 0
    // Predicated region
    $region2: #{tile.28} parent=1 // pred_check
      _
    $region3: #{tile.28} parent=1 // pred_check_branch
      %4 = sbr.rel (0) target = $region5
    $region4: #{tile.28} parent=1 // pred_region
      %s6 = ssub.s32 16, 16
      %7 = vsyncadd [#allocation1], %s6
      %s9 = sshll.u32 [#allocation0], 4
      %s10 = int_to_ptr.vmem [resolvable:$true] %s9
      %12 = dma.hbm_to_vmem [thread:$0]  %s0, 16, %s10, [#allocation1]
    $region5: #{tile.28} parent=1 // pred_fallthru
      _
    // Predicated region
    $region6: #{tile.28} parent=1 // pred_check
      _
    $region7: #{tile.28} parent=1 // pred_check_branch
      %14 = sbr.rel (0) target = $region9
    $region8: #{tile.28} parent=1 // pred_region
      %15 = dma.done [#allocation1], 16
    $region9: #{tile.28} parent=1 // pred_fallthru
      _
    %v16 = vld [vmem:[#allocation0] ss:$0 sm:$0xff]
    %17 = vst [vmem:[%s1] sm:$0xff] %v16
    %s18 = scalar_lea.vmem %s1, 8
    %19 = vst [vmem:[%s18] sm:$0xff] %v16
    %20 = vsyncpa [#allocation1], 1

// kernel: tile.29
$region0: #{tile.29}
  %s0 = inlined_call_operand.vmem [shape: f32[16,64], index: 0, kind: input, shape index: {}]
  %s1 = inlined_call_operand.vmem [shape: f32[1,1024], index: 1, kind: output, shape index: {}]
  $region1: #{tile.29} parent=0
    #allocation0 [shape = 'u8[32768]{0}', space=vmem, size = 0x8000, scoped, tag = 'scoped mem for output reshape']
    %v2 = vld [vmem:[%s0] ss:$2 sm:$0xff]
    %vm3 = vcmask 523264
    %4 = vst.msk [vmem:[#allocation0] ss:$8 sm:$0xf] %vm3, %v2
    %5 = vst.msk [vmem:[#allocation0] ss:$8 sm:$0xf0] %vm3, %v2
    %s6 = scalar_lea.vmem %s0, 1
    %v7 = vld [vmem:[%s6] ss:$2 sm:$0xff]
    %8 = vrot.lane.b32.xlu0 %v7, 64
    %v9 = vpop.permute.xlu0 %8
    %vm10 = vcmask 1048064
    %11 = vst.msk [vmem:[#allocation0] ss:$8 sm:$0xf] %vm10, %v9
    %12 = vst.msk [vmem:[#allocation0] ss:$8 sm:$0xf0] %vm10, %v9
    %s14 = sshllo.u32 0, 1
    %v16 = vld [vmem:[#allocation0] sm:%s14]
    %s17 = sshllo.u32 0, 1
    %18 = vst [vmem:[%s1] sm:%s17] %v16
    %s19 = scalar_lea.vmem [#allocation0], 8
    %v20 = vld [vmem:[%s19] sm:%s14]
    %s21 = sshllo.u32 0, 1
    %s22 = scalar_lea.vmem %s1, 1
    %23 = vst [vmem:[%s22] sm:%s21] %v20
    %s24 = scalar_lea.vmem [#allocation0], 16
    %v25 = vld [vmem:[%s24] sm:%s14]
    %s26 = sshllo.u32 0, 1
    %s27 = smul.addr 1, 2
    %s28 = scalar_lea.vmem %s1, %s27
    %29 = vst [vmem:[%s28] sm:%s26] %v25
    %s30 = scalar_lea.vmem [#allocation0], 24
    %v31 = vld [vmem:[%s30] sm:%s14]
    %s32 = sshllo.u32 0, 1
    %s33 = smul.addr 1, 3
    %s34 = scalar_lea.vmem %s1, %s33
    %35 = vst [vmem:[%s34] sm:%s32] %v31
    %s36 = scalar_lea.vmem [#allocation0], 32
    %v37 = vld [vmem:[%s36] sm:%s14]
    %s38 = sshllo.u32 0, 1
    %s39 = smul.addr 1, 4
    %s40 = scalar_lea.vmem %s1, %s39
    %41 = vst [vmem:[%s40] sm:%s38] %v37
    %s42 = scalar_lea.vmem [#allocation0], 40
    %v43 = vld [vmem:[%s42] sm:%s14]
    %s44 = sshllo.u32 0, 1
    %s45 = smul.addr 1, 5
    %s46 = scalar_lea.vmem %s1, %s45
    %47 = vst [vmem:[%s46] sm:%s44] %v43
    %s48 = scalar_lea.vmem [#allocation0], 48
    %v49 = vld [vmem:[%s48] sm:%s14]
    %s50 = sshllo.u32 0, 1
    %s51 = smul.addr 1, 6
    %s52 = scalar_lea.vmem %s1, %s51
    %53 = vst [vmem:[%s52] sm:%s50] %v49
    %s54 = scalar_lea.vmem [#allocation0], 56
    %v55 = vld [vmem:[%s54] sm:%s14]
    %s56 = sshllo.u32 0, 1
    %s57 = smul.addr 1, 7
    %s58 = scalar_lea.vmem %s1, %s57
    %59 = vst [vmem:[%s58] sm:%s56] %v55

// kernel: squeeze.2
$region0: #{squeeze.2}
  %s0 = inlined_call_operand.vmem [shape: f32[1,2,1024], index: 0, kind: input, shape index: {}]
  %s1 = inlined_call_operand.vmem [shape: f32[2,16,64], index: 1, kind: output, shape index: {}]
  $region1: #{squeeze.2} parent=0
    #allocation0 [shape = 'u8[32768]{0}', space=vmem, size = 0x8000, scoped, tag = 'scoped mem for input reshape']
    %s3 = sshllo.u32 0, 2
    %s4 = smul.addr 2, 7
    %s5 = scalar_lea.vmem %s0, %s4
    %v6 = vld [vmem:[%s5] sm:%s3]
    %s7 = scalar_lea.vmem [#allocation0], 56
    %8 = vst [vmem:[%s7] sm:%s3] %v6
    %s9 = smul.addr 2, 6
    %s10 = scalar_lea.vmem %s0, %s9
    %v11 = vld [vmem:[%s10] sm:%s3]
    %s12 = scalar_lea.vmem [#allocation0], 48
    %13 = vst [vmem:[%s12] sm:%s3] %v11
    %s14 = smul.addr 2, 5
    %s15 = scalar_lea.vmem %s0, %s14
    %v16 = vld [vmem:[%s15] sm:%s3]
    %s17 = scalar_lea.vmem [#allocation0], 40
    %18 = vst [vmem:[%s17] sm:%s3] %v16
    %s19 = smul.addr 2, 4
    %s20 = scalar_lea.vmem %s0, %s19
    %v21 = vld [vmem:[%s20] sm:%s3]
    %s22 = scalar_lea.vmem [#allocation0], 32
    %23 = vst [vmem:[%s22] sm:%s3] %v21
    %s24 = smul.addr 2, 3
    %s25 = scalar_lea.vmem %s0, %s24
    %v26 = vld [vmem:[%s25] sm:%s3]
    %s27 = scalar_lea.vmem [#allocation0], 24
    %28 = vst [vmem:[%s27] sm:%s3] %v26
    %s29 = smul.addr 2, 2
    %s30 = scalar_lea.vmem %s0, %s29
    %v31 = vld [vmem:[%s30] sm:%s3]
    %s32 = scalar_lea.vmem [#allocation0], 16
    %33 = vst [vmem:[%s32] sm:%s3] %v31
    %s34 = scalar_lea.vmem %s0, 2
    %v35 = vld [vmem:[%s34] sm:%s3]
    %s36 = scalar_lea.vmem [#allocation0], 8
    %37 = vst [vmem:[%s36] sm:%s3] %v35
    %v38 = vld [vmem:[%s0] sm:%s3]
    %39 = vst [vmem:[#allocation0] sm:%s3] %v38
    %v40 = vld [vmem:[#allocation0] sm:$0x3]
    %vm41 = vcmask 523264
    %42 = vst.msk [vmem:[%s1] ss:$16 sm:$0x3] %vm41, %v40
    %s43 = scalar_lea.vmem [#allocation0], 8
    %v44 = vld [vmem:[%s43] sm:$0x3]
    %vm45 = vcmask 523264
    %s46 = scalar_lea.vmem %s1, 2
    %47 = vst.msk [vmem:[%s46] ss:$16 sm:$0x3] %vm45, %v44
    %s48 = scalar_lea.vmem [#allocation0], 16
    %v49 = vld [vmem:[%s48] sm:$0x3]
    %vm50 = vcmask 523264
    %s51 = scalar_lea.vmem %s1, 4
    %52 = vst.msk [vmem:[%s51] ss:$16 sm:$0x3] %vm50, %v49
    %s53 = scalar_lea.vmem [#allocation0], 24
    %v54 = vld [vmem:[%s53] sm:$0x3]
    %vm55 = vcmask 523264
    %s56 = scalar_lea.vmem %s1, 6
    %57 = vst.msk [vmem:[%s56] ss:$16 sm:$0x3] %vm55, %v54
    %s58 = scalar_lea.vmem [#allocation0], 32
    %v59 = vld [vmem:[%s58] sm:$0x3]
    %vm60 = vcmask 523264
    %s61 = scalar_lea.vmem %s1, 8
    %62 = vst.msk [vmem:[%s61] ss:$16 sm:$0x3] %vm60, %v59
    %s63 = scalar_lea.vmem [#allocation0], 40
    %v64 = vld [vmem:[%s63] sm:$0x3]
    %vm65 = vcmask 523264
    %s66 = scalar_lea.vmem %s1, 10
    %67 = vst.msk [vmem:[%s66] ss:$16 sm:$0x3] %vm65, %v64
    %s68 = scalar_lea.vmem [#allocation0], 48
    %v69 = vld [vmem:[%s68] sm:$0x3]
    %vm70 = vcmask 523264
    %s71 = scalar_lea.vmem %s1, 12
    %72 = vst.msk [vmem:[%s71] ss:$16 sm:$0x3] %vm70, %v69
    %s73 = scalar_lea.vmem [#allocation0], 56
    %v74 = vld [vmem:[%s73] sm:$0x3]
    %vm75 = vcmask 523264
    %s76 = scalar_lea.vmem %s1, 14
    %77 = vst.msk [vmem:[%s76] ss:$16 sm:$0x3] %vm75, %v74
    %v78 = vld [vmem:[#allocation0] ss:$8 sm:$0xf]
    %v79 = vld [vmem:[#allocation0] ss:$8 sm:$0xf0]
    %vm80 = vcmask 1047556
    %v81 = vsel %vm80, %v79, %v78
    %82 = vrot.lane.b32.xlu0 %v81, 64
    %v83 = vpop.permute.xlu0 %82
    %vm84 = vcmask 523264
    %s85 = scalar_lea.vmem %s1, 1
    %86 = vst.msk [vmem:[%s85] ss:$2 sm:$0xff] %vm84, %v83
    %s87 = scalar_lea.vmem [#allocation0], 1
    %v88 = vld [vmem:[%s87] ss:$8 sm:$0xf]
    %s89 = scalar_lea.vmem [#allocation0], 1
    %v90 = vld [vmem:[%s89] ss:$8 sm:$0xf0]
    %vm91 = vcmask 1047556
    %v92 = vsel %vm91, %v90, %v88
    %93 = vrot.lane.b32.xlu0 %v92, 64
    %v94 = vpop.permute.xlu0 %93
    %vm95 = vcmask 523264
    %s96 = scalar_lea.vmem %s1, 17
    %97 = vst.msk [vmem:[%s96] ss:$2 sm:$0xff] %vm95, %v94

// kernel: tile.19
$region0: #{tile.19}
  %s0 = inlined_call_operand.vmem [shape: f32[2,16,64], index: 0, kind: input, shape index: {}]
  %s1 = inlined_call_operand.vmem [shape: f32[2,1024], index: 1, kind: output, shape index: {}]
  $region1: #{tile.19} parent=0
    #allocation0 [shape = 'u8[32768]{0}', space=vmem, size = 0x8000, scoped, tag = 'scoped mem for output reshape']
    %v2 = vld [vmem:[%s0] ss:$2 sm:$0xff]
    %vm3 = vcmask 523264
    %4 = vst.msk [vmem:[#allocation0] ss:$8 sm:$0xf] %vm3, %v2
    %5 = vst.msk [vmem:[#allocation0] ss:$8 sm:$0xf0] %vm3, %v2
    %s6 = scalar_lea.vmem %s0, 16
    %v7 = vld [vmem:[%s6] ss:$2 sm:$0xff]
    %vm8 = vcmask 523264
    %s9 = scalar_lea.vmem [#allocation0], 1
    %10 = vst.msk [vmem:[%s9] ss:$8 sm:$0xf] %vm8, %v7
    %s11 = scalar_lea.vmem [#allocation0], 1
    %12 = vst.msk [vmem:[%s11] ss:$8 sm:$0xf0] %vm8, %v7
    %s13 = scalar_lea.vmem %s0, 1
    %s14 = smov 3
    %v15 = vld [vmem:[%s13] ss:$16 sm:%s14]
    %s16 = scalar_lea.vmem %s0, 4294967267
    %s17 = smov 12
    %v18 = vld [vmem:[%s16] ss:$16 sm:%s17]
    %vm19 = vcmask 1043458
    %v20 = vsel %vm19, %v18, %v15
    %s21 = scalar_lea.vmem %s0, 4294967237
    %s22 = smov 48
    %v23 = vld [vmem:[%s21] ss:$16 sm:%s22]
    %vm24 = vcmask 1045508
    %v25 = vsel %vm24, %v23, %v20
    %s26 = scalar_lea.vmem %s0, 4294967207
    %s27 = smov 192
    %v28 = vld [vmem:[%s26] ss:$16 sm:%s27]
    %vm29 = vcmask 1047558
    %v30 = vsel %vm29, %v28, %v25
    %31 = vrot.lane.b32.xlu0 %v30, 64
    %v32 = vpop.permute.xlu0 %31
    %vm33 = vcmask 1048064
    %34 = vst.msk [vmem:[#allocation0] sm:$0x3] %vm33, %v32
    %s35 = scalar_lea.vmem [#allocation0], 6
    %36 = vst.msk [vmem:[%s35] sm:$0xc] %vm33, %v32
    %s37 = scalar_lea.vmem [#allocation0], 12
    %38 = vst.msk [vmem:[%s37] sm:$0x30] %vm33, %v32
    %s39 = scalar_lea.vmem [#allocation0], 18
    %40 = vst.msk [vmem:[%s39] sm:$0xc0] %vm33, %v32
    %s41 = scalar_lea.vmem %s0, 9
    %s42 = smov 3
    %v43 = vld [vmem:[%s41] ss:$16 sm:%s42]
    %s44 = scalar_lea.vmem %s0, 4294967275
    %s45 = smov 12
    %v46 = vld [vmem:[%s44] ss:$16 sm:%s45]
    %vm47 = vcmask 1043458
    %v48 = vsel %vm47, %v46, %v43
    %s49 = scalar_lea.vmem %s0, 4294967245
    %s50 = smov 48
    %v51 = vld [vmem:[%s49] ss:$16 sm:%s50]
    %vm52 = vcmask 1045508
    %v53 = vsel %vm52, %v51, %v48
    %s54 = scalar_lea.vmem %s0, 4294967215
    %s55 = smov 192
    %v56 = vld [vmem:[%s54] ss:$16 sm:%s55]
    %vm57 = vcmask 1047558
    %v58 = vsel %vm57, %v56, %v53
    %59 = vrot.lane.b32.xlu0 %v58, 64
    %v60 = vpop.permute.xlu0 %59
    %vm61 = vcmask 1048064
    %s62 = scalar_lea.vmem [#allocation0], 32
    %63 = vst.msk [vmem:[%s62] sm:$0x3] %vm61, %v60
    %s64 = scalar_lea.vmem [#allocation0], 38
    %65 = vst.msk [vmem:[%s64] sm:$0xc] %vm61, %v60
    %s66 = scalar_lea.vmem [#allocation0], 44
    %67 = vst.msk [vmem:[%s66] sm:$0x30] %vm61, %v60
    %s68 = scalar_lea.vmem [#allocation0], 50
    %69 = vst.msk [vmem:[%s68] sm:$0xc0] %vm61, %v60
    %s71 = sshllo.u32 0, 2
    %v73 = vld [vmem:[#allocation0] sm:%s71]
    %s74 = sshllo.u32 0, 2
    %75 = vst [vmem:[%s1] sm:%s74] %v73
    %s76 = scalar_lea.vmem [#allocation0], 8
    %v77 = vld [vmem:[%s76] sm:%s71]
    %s78 = sshllo.u32 0, 2
    %s79 = scalar_lea.vmem %s1, 2
    %80 = vst [vmem:[%s79] sm:%s78] %v77
    %s81 = scalar_lea.vmem [#allocation0], 16
    %v82 = vld [vmem:[%s81] sm:%s71]
    %s83 = sshllo.u32 0, 2
    %s84 = smul.addr 2, 2
    %s85 = scalar_lea.vmem %s1, %s84
    %86 = vst [vmem:[%s85] sm:%s83] %v82
    %s87 = scalar_lea.vmem [#allocation0], 24
    %v88 = vld [vmem:[%s87] sm:%s71]
    %s89 = sshllo.u32 0, 2
    %s90 = smul.addr 2, 3
    %s91 = scalar_lea.vmem %s1, %s90
    %92 = vst [vmem:[%s91] sm:%s89] %v88
    %s93 = scalar_lea.vmem [#allocation0], 32
    %v94 = vld [vmem:[%s93] sm:%s71]
    %s95 = sshllo.u32 0, 2
    %s96 = smul.addr 2, 4
    %s97 = scalar_lea.vmem %s1, %s96
    %98 = vst [vmem:[%s97] sm:%s95] %v94
    %s99 = scalar_lea.vmem [#allocation0], 40
    %v100 = vld [vmem:[%s99] sm:%s71]
    %s101 = sshllo.u32 0, 2
    %s102 = smul.addr 2, 5
    %s103 = scalar_lea.vmem %s1, %s102
    %104 = vst [vmem:[%s103] sm:%s101] %v100
    %s105 = scalar_lea.vmem [#allocation0], 48
    %v106 = vld [vmem:[%s105] sm:%s71]
    %s107 = sshllo.u32 0, 2
    %s108 = smul.addr 2, 6
    %s109 = scalar_lea.vmem %s1, %s108
    %110 = vst [vmem:[%s109] sm:%s107] %v106
    %s111 = scalar_lea.vmem [#allocation0], 56
    %v112 = vld [vmem:[%s111] sm:%s71]
    %s113 = sshllo.u32 0, 2
    %s114 = smul.addr 2, 7
    %s115 = scalar_lea.vmem %s1, %s114
    %116 = vst [vmem:[%s115] sm:%s113] %v112

// kernel: squeeze.3
$region0: #{squeeze.3}
  %s0 = inlined_call_operand.vmem [shape: bf16[1,2,1024], index: 0, kind: input, shape index: {}]
  %s1 = inlined_call_operand.vmem [shape: bf16[2,4,4,64], index: 1, kind: output, shape index: {}]
  $region1: #{squeeze.3} parent=0
    #allocation0 [shape = 'u8[32768]{0}', space=vmem, size = 0x8000, scoped, tag = 'scoped mem for output reshape']
    #allocation1 [shape = 'u8[32768]{0}', space=vmem, size = 0x8000, scoped, tag = 'scoped mem for input reshape']
    %s3 = smul.u32 1, 2
    %s4 = sshllo.u32 0, %s3
    %s5 = smul.addr 1, 7
    %s6 = scalar_lea.vmem %s0, %s5
    %s7 = sshrl.u32 %s4, 1
    %s8 = sor.u32 %s4, %s7
    %s9 = sand.u32 %s8, 85
    %s10 = sshrl.u32 %s9, 1
    %s11 = sor.u32 %s9, %s10
    %s12 = sand.u32 51, %s11
    %s13 = sshrl.u32 %s12, 2
    %s14 = sor.u32 %s12, %s13
    %s15 = sand.u32 15, %s14
    %v16 = vld [vmem:[%s6] sm:%s15]
    %v17 = vunpack.c.l.bf16 %v16
    %v18 = vunpack.c.h.bf16 %v16
    %s19 = scalar_lea.vmem [#allocation1], 56
    %20 = vst [vmem:[%s19] sm:%s4] %v17
    %s21 = smul.addr 1, 6
    %s22 = scalar_lea.vmem %s0, %s21
    %s23 = sshrl.u32 %s4, 1
    %s24 = sor.u32 %s4, %s23
    %s25 = sand.u32 %s24, 85
    %s26 = sshrl.u32 %s25, 1
    %s27 = sor.u32 %s25, %s26
    %s28 = sand.u32 51, %s27
    %s29 = sshrl.u32 %s28, 2
    %s30 = sor.u32 %s28, %s29
    %s31 = sand.u32 15, %s30
    %v32 = vld [vmem:[%s22] sm:%s31]
    %v33 = vunpack.c.l.bf16 %v32
    %v34 = vunpack.c.h.bf16 %v32
    %s35 = scalar_lea.vmem [#allocation1], 48
    %36 = vst [vmem:[%s35] sm:%s4] %v33
    %s37 = smul.addr 1, 5
    %s38 = scalar_lea.vmem %s0, %s37
    %s39 = sshrl.u32 %s4, 1
    %s40 = sor.u32 %s4, %s39
    %s41 = sand.u32 %s40, 85
    %s42 = sshrl.u32 %s41, 1
    %s43 = sor.u32 %s41, %s42
    %s44 = sand.u32 51, %s43
    %s45 = sshrl.u32 %s44, 2
    %s46 = sor.u32 %s44, %s45
    %s47 = sand.u32 15, %s46
    %v48 = vld [vmem:[%s38] sm:%s47]
    %v49 = vunpack.c.l.bf16 %v48
    %v50 = vunpack.c.h.bf16 %v48
    %s51 = scalar_lea.vmem [#allocation1], 40
    %52 = vst [vmem:[%s51] sm:%s4] %v49
    %s53 = smul.addr 1, 4
    %s54 = scalar_lea.vmem %s0, %s53
    %s55 = sshrl.u32 %s4, 1
    %s56 = sor.u32 %s4, %s55
    %s57 = sand.u32 %s56, 85
    %s58 = sshrl.u32 %s57, 1
    %s59 = sor.u32 %s57, %s58
    %s60 = sand.u32 51, %s59
    %s61 = sshrl.u32 %s60, 2
    %s62 = sor.u32 %s60, %s61
    %s63 = sand.u32 15, %s62
    %v64 = vld [vmem:[%s54] sm:%s63]
    %v65 = vunpack.c.l.bf16 %v64
    %v66 = vunpack.c.h.bf16 %v64
    %s67 = scalar_lea.vmem [#allocation1], 32
    %68 = vst [vmem:[%s67] sm:%s4] %v65
    %s69 = smul.addr 1, 3
    %s70 = scalar_lea.vmem %s0, %s69
    %s71 = sshrl.u32 %s4, 1
    %s72 = sor.u32 %s4, %s71
    %s73 = sand.u32 %s72, 85
    %s74 = sshrl.u32 %s73, 1
    %s75 = sor.u32 %s73, %s74
    %s76 = sand.u32 51, %s75
    %s77 = sshrl.u32 %s76, 2
    %s78 = sor.u32 %s76, %s77
    %s79 = sand.u32 15, %s78
    %v80 = vld [vmem:[%s70] sm:%s79]
    %v81 = vunpack.c.l.bf16 %v80
    %v82 = vunpack.c.h.bf16 %v80
    %s83 = scalar_lea.vmem [#allocation1], 24
    %84 = vst [vmem:[%s83] sm:%s4] %v81
    %s85 = smul.addr 1, 2
    %s86 = scalar_lea.vmem %s0, %s85
    %s87 = sshrl.u32 %s4, 1
    %s88 = sor.u32 %s4, %s87
    %s89 = sand.u32 %s88, 85
    %s90 = sshrl.u32 %s89, 1
    %s91 = sor.u32 %s89, %s90
    %s92 = sand.u32 51, %s91
    %s93 = sshrl.u32 %s92, 2
    %s94 = sor.u32 %s92, %s93
    %s95 = sand.u32 15, %s94
    %v96 = vld [vmem:[%s86] sm:%s95]
    %v97 = vunpack.c.l.bf16 %v96
    %v98 = vunpack.c.h.bf16 %v96
    %s99 = scalar_lea.vmem [#allocation1], 16
    %100 = vst [vmem:[%s99] sm:%s4] %v97
    %s101 = scalar_lea.vmem %s0, 1
    %s102 = sshrl.u32 %s4, 1
    %s103 = sor.u32 %s4, %s102
    %s104 = sand.u32 %s103, 85
    %s105 = sshrl.u32 %s104, 1
    %s106 = sor.u32 %s104, %s105
    %s107 = sand.u32 51, %s106
    %s108 = sshrl.u32 %s107, 2
    %s109 = sor.u32 %s107, %s108
    %s110 = sand.u32 15, %s109
    %v111 = vld [vmem:[%s101] sm:%s110]
    %v112 = vunpack.c.l.bf16 %v111
    %v113 = vunpack.c.h.bf16 %v111
    %s114 = scalar_lea.vmem [#allocation1], 8
    %115 = vst [vmem:[%s114] sm:%s4] %v112
    %s116 = sshrl.u32 %s4, 1
    %s117 = sor.u32 %s4, %s116
    %s118 = sand.u32 %s117, 85
    %s119 = sshrl.u32 %s118, 1
    %s120 = sor.u32 %s118, %s119
    %s121 = sand.u32 51, %s120
    %s122 = sshrl.u32 %s121, 2
    %s123 = sor.u32 %s121, %s122
    %s124 = sand.u32 15, %s123
    %v125 = vld [vmem:[%s0] sm:%s124]
    %v126 = vunpack.c.l.bf16 %v125
    %v127 = vunpack.c.h.bf16 %v125
    %128 = vst [vmem:[#allocation1] sm:%s4] %v126
    %v129 = vld [vmem:[#allocation1] sm:$0x3]
    %vm130 = vcmask 523264
    %131 = vst.msk [vmem:[#allocation0] sm:$0x1] %vm130, %v129
    %s132 = scalar_lea.vmem [#allocation0], 31
    %133 = vst.msk [vmem:[%s132] sm:$0x2] %vm130, %v129
    %s134 = scalar_lea.vmem [#allocation1], 8
    %v135 = vld [vmem:[%s134] sm:$0x3]
    %vm136 = vcmask 523264
    %s137 = scalar_lea.vmem [#allocation0], 2
    %138 = vst.msk [vmem:[%s137] sm:$0x1] %vm136, %v135
    %s139 = scalar_lea.vmem [#allocation0], 33
    %140 = vst.msk [vmem:[%s139] sm:$0x2] %vm136, %v135
    %s141 = scalar_lea.vmem [#allocation1], 16
    %v142 = vld [vmem:[%s141] sm:$0x3]
    %vm143 = vcmask 523264
    %s144 = scalar_lea.vmem [#allocation0], 8
    %145 = vst.msk [vmem:[%s144] sm:$0x1] %vm143, %v142
    %s146 = scalar_lea.vmem [#allocation0], 39
    %147 = vst.msk [vmem:[%s146] sm:$0x2] %vm143, %v142
    %s148 = scalar_lea.vmem [#allocation1], 24
    %v149 = vld [vmem:[%s148] sm:$0x3]
    %vm150 = vcmask 523264
    %s151 = scalar_lea.vmem [#allocation0], 10
    %152 = vst.msk [vmem:[%s151] sm:$0x1] %vm150, %v149
    %s153 = scalar_lea.vmem [#allocation0], 41
    %154 = vst.msk [vmem:[%s153] sm:$0x2] %vm150, %v149
    %s155 = scalar_lea.vmem [#allocation1], 32
    %v156 = vld [vmem:[%s155] sm:$0x3]
    %vm157 = vcmask 523264
    %s158 = scalar_lea.vmem [#allocation0], 16
    %159 = vst.msk [vmem:[%s158] sm:$0x1] %vm157, %v156
    %s160 = scalar_lea.vmem [#allocation0], 47
    %161 = vst.msk [vmem:[%s160] sm:$0x2] %vm157, %v156
    %s162 = scalar_lea.vmem [#allocation1], 40
    %v163 = vld [vmem:[%s162] sm:$0x3]
    %vm164 = vcmask 523264
    %s165 = scalar_lea.vmem [#allocation0], 18
    %166 = vst.msk [vmem:[%s165] sm:$0x1] %vm164, %v163
    %s167 = scalar_lea.vmem [#allocation0], 49
    %168 = vst.msk [vmem:[%s167] sm:$0x2] %vm164, %v163
    %s169 = scalar_lea.vmem [#allocation1], 48
    %v170 = vld [vmem:[%s169] sm:$0x3]
    %vm171 = vcmask 523264
    %s172 = scalar_lea.vmem [#allocation0], 24
    %173 = vst.msk [vmem:[%s172] sm:$0x1] %vm171, %v170
    %s174 = scalar_lea.vmem [#allocation0], 55
    %175 = vst.msk [vmem:[%s174] sm:$0x2] %vm171, %v170
    %s176 = scalar_lea.vmem [#allocation1], 56
    %v177 = vld [vmem:[%s176] sm:$0x3]
    %vm178 = vcmask 523264
    %s179 = scalar_lea.vmem [#allocation0], 26
    %180 = vst.msk [vmem:[%s179] sm:$0x1] %vm178, %v177
    %s181 = scalar_lea.vmem [#allocation0], 57
    %182 = vst.msk [vmem:[%s181] sm:$0x2] %vm178, %v177
    %v183 = vld [vmem:[#allocation1] ss:$8 sm:$0xf]
    %v184 = vld [vmem:[#allocation1] ss:$8 sm:$0xf0]
    %vm185 = vcmask 1047556
    %v186 = vsel %vm185, %v184, %v183
    %187 = vrot.lane.b32.xlu0 %v186, 64
    %v188 = vpop.permute.xlu0 %187
    %vm189 = vcmask 523264
    %s190 = scalar_lea.vmem [#allocation0], 1
    %191 = vst.msk [vmem:[%s190] ss:$2 sm:$0x3] %vm189, %v188
    %s192 = scalar_lea.vmem [#allocation0], 5
    %193 = vst.msk [vmem:[%s192] ss:$2 sm:$0xc] %vm189, %v188
    %s194 = scalar_lea.vmem [#allocation0], 9
    %195 = vst.msk [vmem:[%s194] ss:$2 sm:$0x30] %vm189, %v188
    %s196 = scalar_lea.vmem [#allocation0], 13
    %197 = vst.msk [vmem:[%s196] ss:$2 sm:$0xc0] %vm189, %v188
    %s198 = scalar_lea.vmem [#allocation1], 1
    %v199 = vld [vmem:[%s198] ss:$8 sm:$0xf]
    %s200 = scalar_lea.vmem [#allocation1], 1
    %v201 = vld [vmem:[%s200] ss:$8 sm:$0xf0]
    %vm202 = vcmask 1047556
    %v203 = vsel %vm202, %v201, %v199
    %204 = vrot.lane.b32.xlu0 %v203, 64
    %v205 = vpop.permute.xlu0 %204
    %vm206 = vcmask 523264
    %s207 = scalar_lea.vmem [#allocation0], 33
    %208 = vst.msk [vmem:[%s207] ss:$2 sm:$0x3] %vm206, %v205
    %s209 = scalar_lea.vmem [#allocation0], 37
    %210 = vst.msk [vmem:[%s209] ss:$2 sm:$0xc] %vm206, %v205
    %s211 = scalar_lea.vmem [#allocation0], 41
    %212 = vst.msk [vmem:[%s211] ss:$2 sm:$0x30] %vm206, %v205
    %s213 = scalar_lea.vmem [#allocation0], 45
    %214 = vst.msk [vmem:[%s213] ss:$2 sm:$0xc0] %vm206, %v205
    %s216 = smul.u32 2, 2
    %s217 = sshllo.u32 0, %s216
    %s218 = sshrl.u32 %s216, 1
    %v219 = vld [vmem:[#allocation0] sm:%s217]
    %v220 = vpack.c.bf16 0.0, %v219
    %s221 = sshllo.u32 0, %s218
    %222 = vst [vmem:[%s1] sm:%s221] %v220
    %s223 = scalar_lea.vmem [#allocation0], 8
    %v224 = vld [vmem:[%s223] sm:%s217]
    %v225 = vpack.c.bf16 0.0, %v224
    %s226 = sshllo.u32 0, %s218
    %s227 = scalar_lea.vmem %s1, 2
    %228 = vst [vmem:[%s227] sm:%s226] %v225
    %s229 = scalar_lea.vmem [#allocation0], 16
    %v230 = vld [vmem:[%s229] sm:%s217]
    %v231 = vpack.c.bf16 0.0, %v230
    %s232 = sshllo.u32 0, %s218
    %s233 = smul.addr 2, 2
    %s234 = scalar_lea.vmem %s1, %s233
    %235 = vst [vmem:[%s234] sm:%s232] %v231
    %s236 = scalar_lea.vmem [#allocation0], 24
    %v237 = vld [vmem:[%s236] sm:%s217]
    %v238 = vpack.c.bf16 0.0, %v237
    %s239 = sshllo.u32 0, %s218
    %s240 = smul.addr 2, 3
    %s241 = scalar_lea.vmem %s1, %s240
    %242 = vst [vmem:[%s241] sm:%s239] %v238
    %s243 = scalar_lea.vmem [#allocation0], 32
    %v244 = vld [vmem:[%s243] sm:%s217]
    %v245 = vpack.c.bf16 0.0, %v244
    %s246 = sshllo.u32 0, %s218
    %s247 = smul.addr 2, 4
    %s248 = scalar_lea.vmem %s1, %s247
    %249 = vst [vmem:[%s248] sm:%s246] %v245
    %s250 = scalar_lea.vmem [#allocation0], 40
    %v251 = vld [vmem:[%s250] sm:%s217]
    %v252 = vpack.c.bf16 0.0, %v251
    %s253 = sshllo.u32 0, %s218
    %s254 = smul.addr 2, 5
    %s255 = scalar_lea.vmem %s1, %s254
    %256 = vst [vmem:[%s255] sm:%s253] %v252
    %s257 = scalar_lea.vmem [#allocation0], 48
    %v258 = vld [vmem:[%s257] sm:%s217]
    %v259 = vpack.c.bf16 0.0, %v258
    %s260 = sshllo.u32 0, %s218
    %s261 = smul.addr 2, 6
    %s262 = scalar_lea.vmem %s1, %s261
    %263 = vst [vmem:[%s262] sm:%s260] %v259
    %s264 = scalar_lea.vmem [#allocation0], 56
    %v265 = vld [vmem:[%s264] sm:%s217]
    %v266 = vpack.c.bf16 0.0, %v265
    %s267 = sshllo.u32 0, %s218
    %s268 = smul.addr 2, 7
    %s269 = scalar_lea.vmem %s1, %s268
    %270 = vst [vmem:[%s269] sm:%s267] %v266

// kernel: generator_forward.9
$region0: #{generator_forward.9}
  #allocation0 [shape = 'u32[]', space=smem, size = 0x4, offset = 0x4, fixed_abs, tag = 'smem constant byte address 0x4 - core index']
  #allocation1 [shape = 'u32[144,128]{1,0:T(1,128)}', space=vmem, size = 0x12000, scoped, tag = 'internal scratch']
  %s0 = inlined_call_operand.vmem [shape: bf16[1,16,16], index: 0, kind: input, shape index: {}]
  %s1 = inlined_call_operand.hbm [shape: bf16[1,16,1024], index: 1, kind: input, shape index: {}]
  %s2 = inlined_call_operand.vmem [shape: bf16[1,16,1024], index: 2, kind: output, shape index: {0}]
  %s3 = inlined_call_operand.vmem [shape: f32[1,2,1024], index: 3, kind: output, shape index: {1}]
  %4 = xla_tuple %s2, %s3
  %s5 = sld [smem:[#allocation0]]
  $region91: #{generator_forward.9} parent=0
    _
  %s7 = ssub.s32 1, %s5
  %s8 = scalar_select 0, %s7, %s5
  $region1: #{generator_forward.9} parent=0
    #allocation2 [shape = 'u8[16384]{0}', space=vmem, size = 0x4000, scoped, tag = 'input window, operand 1']
    #allocation3 [shape = 's32[2]{0}', space=sflag, size = 0x8, scoped, tag = 'scoped memory for generator_forward.9']
    #allocation4 [shape = 'u8[16384]{0}', space=vmem, size = 0x4000, scoped, tag = 'output window, operand 0']
    %9 = vsyncpa [#allocation3], 0
    %s10 = scalar_lea.sflag [#allocation3], 1
    %11 = vsyncpa %s10, 0
    loop: start=0, step=1, limit=6
    $region2: #{generator_forward.9} parent=1 // loop_pre_header
      _
    $region3: #{generator_forward.9} parent=1 // loop_header
      %s13 = sphi 0, %s17
      %p14 = scmp.ge.s32.totalorder %s13, 6
      %s20 = sphi 0, %s39
      %s21 = sphi 0, %s35
      %s22 = sphi 0, %s31
      %s23 = sphi 0, %s20
      %s24 = sphi 0, %s21
      %s25 = sphi 0, %s22
      %s26 = sphi 0, %s23
      %s27 = sphi 0, %s24
      %s28 = sphi 0, %s25
      %s44 = sphi 0, %s46
      %s47 = sphi 0, %s44
      %s48 = sphi 0, %s47
      %s64 = sphi 0, %s48
      %s72 = sphi 0, %s74
      %s75 = sphi 0, %s72
      %s76 = sphi 0, %s75
      %s92 = sphi 0, %s76
      %s102 = sphi 0, %s104
      %s105 = sphi 0, %s102
      %s106 = sphi 0, %s105
      %s122 = sphi 0, %s106
      %s130 = sphi 0, %s132
      %s133 = sphi 0, %s130
      %s134 = sphi 0, %s133
      %s150 = sphi 0, %s134
    $region4: #{generator_forward.9} parent=1 // loop_header_branch
      %16 = sbr.rel (%p14) target = $region8
    $region5: #{generator_forward.9} parent=1 // loop_body
      %s18 = ssub.s32 %s13, 1
      %s19 = ssub.s32 %s13, 2
      %s29 = sadd.s32 1, %s22
      %p30 = scmp.ge.s32.totalorder %s29, 1
      %s31 = scalar_select %p30, 0, %s29
      %s32 = sadd.s32 1, %s21
      %s33 = scalar_select %p30, %s32, %s21
      %p34 = scmp.ge.s32.totalorder %s33, 4
      %s35 = scalar_select %p34, 0, %s33
      %s36 = sadd.s32 1, %s20
      %s37 = scalar_select %p34, %s36, %s20
      %p38 = scmp.ge.s32.totalorder %s37, 1
      %s39 = scalar_select %p38, 0, %s37
      %s40 = ssub.s32 %s20, %s39
      %s41 = ssub.s32 %s22, %s31
      %s42 = sor.u32 %s40, %s41
      %p43 = scmp.eq.s32.totalorder %s42, 0
      %s45 = sadd.s32 %s44, 1
      %s46 = scalar_select %p43, %s44, %s45
      %p49 = pneg %p43
      %p50 = scmp.eq.s32.totalorder %s13, 3
      %p51 = por %p49, %p50
      %p52 = scmp.ne.s32.totalorder %s44, %s47
      %p53 = scmp.eq.s32.totalorder %s13, 0
      %p54 = por %p52, %p53
      %p55 = scmp.ne.s32.totalorder %s44, %s47
      %p56 = scmp.eq.s32.totalorder %s18, 3
      %p57 = por %p55, %p56
      %p58 = scmp.ne.s32.totalorder %s47, %s48
      %p59 = scmp.eq.s32.totalorder %s18, 0
      %p60 = por %p58, %p59
      %p61 = scmp.ne.s32.totalorder %s47, %s48
      %p62 = scmp.eq.s32.totalorder %s19, 3
      %p63 = por %p61, %p62
      %p65 = scmp.ne.s32.totalorder %s48, %s64
      %p66 = scmp.eq.s32.totalorder %s19, 0
      %p67 = por %p65, %p66
      %s68 = ssub.s32 %s20, %s39
      %s69 = ssub.s32 %s21, %s35
      %s70 = sor.u32 %s68, %s69
      %p71 = scmp.eq.s32.totalorder %s70, 0
      %s73 = sadd.s32 %s72, 1
      %s74 = scalar_select %p71, %s72, %s73
      %p77 = pneg %p71
      %p78 = scmp.eq.s32.totalorder %s13, 3
      %p79 = por %p77, %p78
      %p80 = scmp.ne.s32.totalorder %s72, %s75
      %p81 = scmp.eq.s32.totalorder %s13, 0
      %p82 = por %p80, %p81
      %p83 = scmp.ne.s32.totalorder %s72, %s75
      %p84 = scmp.eq.s32.totalorder %s18, 3
      %p85 = por %p83, %p84
      %p86 = scmp.ne.s32.totalorder %s75, %s76
      %p87 = scmp.eq.s32.totalorder %s18, 0
      %p88 = por %p86, %p87
      %p89 = scmp.ne.s32.totalorder %s75, %s76
      %p90 = scmp.eq.s32.totalorder %s19, 3
      %p91 = por %p89, %p90
      %p93 = scmp.ne.s32.totalorder %s76, %s92
      %p94 = scmp.eq.s32.totalorder %s19, 0
      %p95 = por %p93, %p94
      %s96 = ssub.s32 %s20, %s39
      %s97 = ssub.s32 %s22, %s31
      %s98 = sor.u32 %s96, %s97
      %s99 = ssub.s32 %s21, %s35
      %s100 = sor.u32 %s98, %s99
      %p101 = scmp.eq.s32.totalorder %s100, 0
      %s103 = sadd.s32 %s102, 1
      %s104 = scalar_select %p101, %s102, %s103
      %p107 = pneg %p101
      %p108 = scmp.eq.s32.totalorder %s13, 3
      %p109 = por %p107, %p108
      %p110 = scmp.ne.s32.totalorder %s102, %s105
      %p111 = scmp.eq.s32.totalorder %s13, 0
      %p112 = por %p110, %p111
      %p113 = scmp.ne.s32.totalorder %s102, %s105
      %p114 = scmp.eq.s32.totalorder %s18, 3
      %p115 = por %p113, %p114
      %p116 = scmp.ne.s32.totalorder %s105, %s106
      %p117 = scmp.eq.s32.totalorder %s18, 0
      %p118 = por %p116, %p117
      %p119 = scmp.ne.s32.totalorder %s105, %s106
      %p120 = scmp.eq.s32.totalorder %s19, 3
      %p121 = por %p119, %p120
      %p123 = scmp.ne.s32.totalorder %s106, %s122
      %p124 = scmp.eq.s32.totalorder %s19, 0
      %p125 = por %p123, %p124
      %s126 = ssub.s32 %s20, %s39
      %s127 = ssub.s32 %s21, %s35
      %s128 = sor.u32 %s126, %s127
      %p129 = scmp.eq.s32.totalorder %s128, 0
      %s131 = sadd.s32 %s130, 1
      %s132 = scalar_select %p129, %s130, %s131
      %p135 = pneg %p129
      %p136 = scmp.eq.s32.totalorder %s13, 3
      %p137 = por %p135, %p136
      %p138 = scmp.ne.s32.totalorder %s130, %s133
      %p139 = scmp.eq.s32.totalorder %s13, 0
      %p140 = por %p138, %p139
      %p141 = scmp.ne.s32.totalorder %s130, %s133
      %p142 = scmp.eq.s32.totalorder %s18, 3
      %p143 = por %p141, %p142
      %p144 = scmp.ne.s32.totalorder %s133, %s134
      %p145 = scmp.eq.s32.totalorder %s18, 0
      %p146 = por %p144, %p145
      %p147 = scmp.ne.s32.totalorder %s133, %s134
      %p148 = scmp.eq.s32.totalorder %s19, 3
      %p149 = por %p147, %p148
      %p151 = scmp.ne.s32.totalorder %s134, %s150
      %p152 = scmp.eq.s32.totalorder %s19, 0
      %p153 = por %p151, %p152
      %p154 = scmp.le.s32.totalorder 1, %s13
      %p155 = scmp.lt.s32.totalorder %s13, 5
      %p156 = pnand %p154, %p155
      %p157 = pneg %p156
      // Predicated region
      $region9: #{generator_forward.9} parent=5 // pred_check
        _
      $region10: #{generator_forward.9} parent=5 // pred_check_branch
        %159 = sbr.rel (%p156) target = $region12
      $region11: #{generator_forward.9} parent=5 // pred_region
        %s160 = ssub.s32 %s13, 1
        // Predicated region
        $region13: #{generator_forward.9} parent=11 // pred_check
          %p161 = pneg %p60
        $region14: #{generator_forward.9} parent=11 // pred_check_branch
          %163 = sbr.rel (%p161) target = $region16
        $region15: #{generator_forward.9} parent=11 // pred_region
          %s164 = smul.u32 2, %s25
          %p165 = scmp.lt.s32.totalorder %s23, 0
          %s166 = scalar_select %p165, %s23, 0
          %p167 = scmp.lt.s32.totalorder %s164, 1
          %s168 = scalar_select %p167, %s164, 1
          %s169 = smul.addr %s166, 2
          %s170 = sadd.s32 %s168, %s169
          %s171 = smul.addr %s170, 4
          %s172 = scalar_lea.vmem %s0, %s171
          %s173 = smul.u32 2, %s25
        $region16: #{generator_forward.9} parent=11 // pred_fallthru
          _
      $region12: #{generator_forward.9} parent=5 // pred_fallthru
        _
      %p174 = scmp.lt.s32.totalorder %s13, 4
      // Predicated region
      $region17: #{generator_forward.9} parent=5 // pred_check
        %p175 = pneg %p174
      $region18: #{generator_forward.9} parent=5 // pred_check_branch
        %177 = sbr.rel (%p175) target = $region20
      $region19: #{generator_forward.9} parent=5 // pred_region
        // Predicated region
        $region21: #{generator_forward.9} parent=19 // pred_check
          %p178 = pneg %p82
        $region22: #{generator_forward.9} parent=19 // pred_check_branch
          %180 = sbr.rel (%p178) target = $region24
        $region23: #{generator_forward.9} parent=19 // pred_region
          %s181 = sand.u32 %s72, 1
          %s182 = scalar_lea.sflag [#allocation3], %s181
          %s183 = sand.u32 %s72, 1
          %s184 = smul.addr %s183, 16
          %s185 = scalar_lea.vmem [#allocation2], %s184
          %s186 = smul.u32 2, %s21
          %s188 = ssub.s32 256, 256
          %189 = vsyncadd %s182, %s188
          %s190 = smul.addr %s20, 16
          %s191 = sadd.s32 %s186, %s190
          %s192 = smul.addr %s191, 64
          %s193 = scalar_lea.hbm %s1, %s192
          %s194 = sshll.u32 %s185, 4
          %s195 = int_to_ptr.vmem [resolvable:$true] %s194
          %200 = dma.hbm_to_vmem [thread:$0]  %s193, 256, %s195, %s182, 512, 128, 8
        $region24: #{generator_forward.9} parent=19 // pred_fallthru
          _
      $region20: #{generator_forward.9} parent=5 // pred_fallthru
        _
      %p201 = scmp.le.s32.totalorder 1, %s13
      %p202 = scmp.lt.s32.totalorder %s13, 5
      %p203 = pnand %p201, %p202
      %p204 = pneg %p203
      // Predicated region
      $region25: #{generator_forward.9} parent=5 // pred_check
        _
      $region26: #{generator_forward.9} parent=5 // pred_check_branch
        %206 = sbr.rel (%p203) target = $region28
      $region27: #{generator_forward.9} parent=5 // pred_region
        %s207 = ssub.s32 %s13, 1
        %s208 = sand.u32 %s75, 1
        %s209 = scalar_lea.sflag [#allocation3], %s208
        %s210 = sand.u32 %s75, 1
        %s211 = smul.addr %s210, 16
        %s212 = scalar_lea.vmem [#allocation2], %s211
        // Predicated region
        $region29: #{generator_forward.9} parent=27 // pred_check
          %p213 = pneg %p88
        $region30: #{generator_forward.9} parent=27 // pred_check_branch
          %215 = sbr.rel (%p213) target = $region32
        $region31: #{generator_forward.9} parent=27 // pred_region
          %216 = dma.done %s209, 256
        $region32: #{generator_forward.9} parent=27 // pred_fallthru
          _
        %s217 = smul.u32 2, %s25
        %p218 = scmp.lt.s32.totalorder %s23, 0
        %s219 = scalar_select %p218, %s23, 0
        %p220 = scmp.lt.s32.totalorder %s217, 1
        %s221 = scalar_select %p220, %s217, 1
        %s222 = smul.addr %s219, 2
        %s223 = sadd.s32 %s221, %s222
        %s224 = smul.addr %s223, 4
        %s225 = scalar_lea.vmem %s0, %s224
        %p226 = pneg %p60
        %p227 = pneg %p57
        %s228 = sand.u32 %s75, 1
        %s229 = scalar_lea.sflag [#allocation3], %s228
        %s230 = sand.u32 %s75, 1
        %s231 = smul.addr %s230, 16
        %s232 = scalar_lea.vmem [#allocation2], %s231
        %p233 = pneg %p88
        %p234 = pneg %p85
        %p235 = pneg %p118
        %p236 = pneg %p115
        %s237 = sand.u32 %s105, 1
        %s238 = sand.u32 %s105, 1
        %s239 = smul.addr %s238, 16
        %s240 = scalar_lea.vmem [#allocation4], %s239
        %p241 = pneg %p146
        %p242 = pneg %p143
        %s243 = smul.u32 2, %s24
        %p244 = scmp.lt.s32.totalorder %s23, 0
        %s245 = scalar_select %p244, %s23, 0
        %p246 = scmp.lt.s32.totalorder %s243, 7
        %s247 = scalar_select %p246, %s243, 7
        %s248 = smul.addr %s245, 8
        %s249 = sadd.s32 %s247, %s248
        %s250 = smul.addr %s249, 2
        %s251 = scalar_lea.vmem %s3, %s250
        %s252 = smul.u32 2, %s25
        %p253 = scmp.lt.s32.totalorder %s23, 0
        %s254 = scalar_select %p253, %s23, 0
        %p255 = scmp.lt.s32.totalorder %s252, 1
        %s256 = scalar_select %p255, %s252, 1
        %s257 = smul.addr %s254, 2
        %s258 = sadd.s32 %s256, %s257
        %s259 = smul.addr %s258, 4
        %s260 = scalar_lea.vmem %s0, %s259
        %s261 = smul.u32 2, %s25
        %s262 = smul.u32 2, %s24
        %s263 = smul.u32 2, %s25
        %s264 = smul.u32 2, %s24
        %s265 = smul.u32 2, %s24
        %p266 = scmp.lt.s32.totalorder %s23, 0
        %s267 = scalar_select %p266, %s23, 0
        %p268 = scmp.lt.s32.totalorder %s265, 7
        %s269 = scalar_select %p268, %s265, 7
        %s270 = smul.addr %s267, 8
        %s271 = sadd.s32 %s269, %s270
        %s272 = smul.addr %s271, 2
        %s273 = scalar_lea.vmem %s3, %s272
        %s274 = smul.u32 2, %s24
        %v276 = vld [vmem:[%s260] sm:$0xf]
        %v277 = vld [vmem:[%s260 + $0x4] sm:$0xf]
        %v278 = vld [vmem:[%s212] sm:$0xff]
        %v279 = vld [vmem:[%s212 + $0x8] sm:$0xff]
        %v282 = vunpack.c.l.b16 %v276
        %v283 = vunpack.c.l.b16 %v277
        %v284 = vpack.c.b16 %v283, %v282
        %v287 = vunpack.c.l.b16 %v278
        %v288 = vunpack.c.h.b16 %v278
        %v289 = vunpack.c.l.b16 %v279
        %v290 = vunpack.c.h.b16 %v279
        %v291 = vpack.c.b16 %v289, %v287
        %v292 = vpack.c.b16 %v290, %v288
        %vm295 = vcmask 130048
        %v297 = vsel %vm295, %v284, 0
        %299 = vmatprep.subr.bf16.mxu0 %v292
        %300 = vmatpush1.bf16.msra.mxu0 %v291
        %301 = vmatprep.subr.bf16.mxu0 0
        %302 = vmatpush1.bf16.msra.mxu0 0
        %303 = vmatprep.subr.bf16.mxu0 0
        %304 = vmatpush1.bf16.msra.mxu0 0
        %305 = vmatprep.subr.bf16.mxu0 0
        %306 = vmatpush1.bf16.msra.mxu0 0
        %307 = vmatprep.subr.bf16.mxu0 0
        %308 = vmatpush1.bf16.msra.mxu0 0
        %309 = vmatprep.subr.bf16.mxu0 0
        %310 = vmatpush1.bf16.msra.mxu0 0
        %311 = vmatprep.subr.bf16.mxu0 0
        %312 = vmatpush1.bf16.msra.mxu0 0
        %313 = vmatprep.subr.bf16.mxu0 0
        %314 = vmatpush1.bf16.msra.mxu0 0
        %315 = vmatprep.subr.bf16.mxu0 0
        %316 = vmatpush1.bf16.msra.mxu0 0
        %317 = vmatprep.subr.bf16.mxu0 0
        %318 = vmatpush1.bf16.msra.mxu0 0
        %319 = vmatprep.subr.bf16.mxu0 0
        %320 = vmatpush1.bf16.msra.mxu0 0
        %321 = vmatprep.subr.bf16.mxu0 0
        %322 = vmatpush1.bf16.msra.mxu0 0
        %323 = vmatprep.subr.bf16.mxu0 0
        %324 = vmatpush1.bf16.msra.mxu0 0
        %325 = vmatprep.subr.bf16.mxu0 0
        %326 = vmatpush1.bf16.msra.mxu0 0
        %327 = vmatprep.subr.bf16.mxu0 0
        %328 = vmatpush1.bf16.msra.mxu0 0
        %329 = vmatprep.subr.bf16.mxu0 0
        %330 = vmatpush1.bf16.msra.mxu0 0
        %331 = vmatprep.mubr.bf16.mxu0 0
        %332 = vmatmul.mubr.bf16.gmra.mrb[0].mxu0 %v297
        %v333 = vpop.f32.mrb[0].mxu0
        %v334 = vadd.f32 0.0, %v333
        %v335 = vpop.f32.mrb[0].mxu0
        %v336 = vadd.f32 0.0, %v335
        %v337 = vpop.f32.mrb[0].mxu0
        %v338 = vadd.f32 0.0, %v337
        %v339 = vpop.f32.mrb[0].mxu0
        %v340 = vadd.f32 0.0, %v339
        %341 = vdwg.mxu0
        %p342 = scmp.eq.s32.totalorder %s25, 0
        // Predicated region
        $region33: #{generator_forward.9} parent=27 // pred_check
          %p343 = pneg %p342
        $region34: #{generator_forward.9} parent=27 // pred_check_branch
          %345 = sbr.rel (%p343) target = $region36
        $region35: #{generator_forward.9} parent=27 // pred_region
          %346 = vst [vmem:[%s273] sm:$0xf] 0.0
        $region36: #{generator_forward.9} parent=27 // pred_fallthru
          _
        %v347 = vld [vmem:[%s273] sm:$0xf]
        %v348 = vadd.f32 %v334, %v338
        %v349 = vrot.slane %v348, 4
        %v350 = vadd.f32 %v348, %v349
        %v351 = vrot.slane %v350, 2
        %v352 = vadd.f32 %v350, %v351
        %v353 = vrot.slane %v352, 1
        %v354 = vadd.f32 %v352, %v353
        %v355 = vadd.f32 %v336, %v340
        %v356 = vrot.slane %v355, 4
        %v357 = vadd.f32 %v355, %v356
        %v358 = vrot.slane %v357, 2
        %v359 = vadd.f32 %v357, %v358
        %v360 = vrot.slane %v359, 1
        %v361 = vadd.f32 %v359, %v360
        %v362 = vmul.f32 %v334, %v334
        %v363 = vmul.f32 %v336, %v336
        %v364 = vmul.f32 %v338, %v338
        %v365 = vmul.f32 %v340, %v340
        %v366 = vadd.f32 %v362, %v364
        %v367 = vrot.slane %v366, 4
        %v368 = vadd.f32 %v366, %v367
        %v369 = vrot.slane %v368, 2
        %v370 = vadd.f32 %v368, %v369
        %v371 = vrot.slane %v370, 1
        %v372 = vadd.f32 %v370, %v371
        %v373 = vadd.f32 %v363, %v365
        %v374 = vrot.slane %v373, 4
        %v375 = vadd.f32 %v373, %v374
        %v376 = vrot.slane %v375, 2
        %v377 = vadd.f32 %v375, %v376
        %v378 = vrot.slane %v377, 1
        %v379 = vadd.f32 %v377, %v378
        %vm380 = vcmask 1040384
        %v381 = vsel %vm380, %v354, %v372
        %v382 = vsel %vm380, %v361, %v379
        %v385 = vcombine.low %v381, %v382
        %v387 = vunpack.c.l.s4 1983009808
        %v388 = vunpack.c.0.s8 %v387
        %v389 = vlaneseq
        %v390 = vshrl.u32 %v389, 7
        %v391 = vsub.s32 %v388, %v390
        %v392 = vrot.slane %v385, %v391
        %v394 = vadd.f32 %v347, %v392
        %395 = vst [vmem:[%s273] sm:$0xf] %v394
        %v396 = vpack.c.bf16 %v338, %v334
        %v397 = vpack.c.bf16 %v340, %v336
        %v400 = vunpack.c.l.b16 %v396
        %v401 = vunpack.c.l.b16 %v397
        %v402 = vunpack.c.h.b16 %v396
        %v403 = vunpack.c.h.b16 %v397
        %v404 = vpack.c.b16 %v401, %v400
        %v405 = vpack.c.b16 %v403, %v402
        %408 = vst [vmem:[%s240] sm:$0xff] %v404
        %409 = vst [vmem:[%s240 + $0x8] sm:$0xff] %v405
        %s410 = sand.u32 %s105, 1
        %s411 = sand.u32 %s105, 1
        %s412 = smul.addr %s411, 16
        %s413 = scalar_lea.vmem [#allocation4], %s412
        %s414 = smul.u32 2, %s24
        %p415 = scmp.lt.s32.totalorder %s23, 0
        %s416 = scalar_select %p415, %s23, 0
        %p417 = scmp.lt.s32.totalorder %s414, 7
        %s418 = scalar_select %p417, %s414, 7
        %s419 = smul.addr %s416, 8
        %s420 = sadd.s32 %s418, %s419
        %s421 = smul.addr %s420, 2
        %s422 = scalar_lea.vmem %s3, %s421
        // Predicated region
        $region37: #{generator_forward.9} parent=27 // pred_check
          %p423 = pneg %p115
        $region38: #{generator_forward.9} parent=27 // pred_check_branch
          %425 = sbr.rel (%p423) target = $region40
        $region39: #{generator_forward.9} parent=27 // pred_region
          %s426 = smul.u32 2, %s25
          %s427 = smul.u32 2, %s24
          %s428 = smul.addr %s426, 8
          %s429 = sadd.s32 %s427, %s428
          %s430 = smul.addr %s23, 16
          %s431 = sadd.s32 %s429, %s430
          %s432 = smul.addr %s431, 4
          %s433 = scalar_lea.vmem %s2, %s432
          // Predicated region
          $region41: #{generator_forward.9} parent=39 // pred_check
            _
          $region42: #{generator_forward.9} parent=39 // pred_check_branch
            %435 = sbr.rel (0) target = $region44
          $region43: #{generator_forward.9} parent=39 // pred_region
            // Predicated region
            $region45: #{generator_forward.9} parent=43 // pred_check
              _
            $region46: #{generator_forward.9} parent=43 // pred_check_branch
              %437 = sbr.rel (0) target = $region48
            $region47: #{generator_forward.9} parent=43 // pred_region
              // Predicated region
              $region60: #{generator_forward.9} parent=47 // pred_check
                _
              $region61: #{generator_forward.9} parent=47 // pred_check_branch
                %454 = sbr.rel (0) target = $region63
              $region62: #{generator_forward.9} parent=47 // pred_region
                loop: start=0, step=1, limit=1
                $region64: #{generator_forward.9} parent=62 // loop_pre_header
                  _
                $region65: #{generator_forward.9} parent=62 // loop_header
                  %s456 = sphi 0, %s460
                  %p457 = scmp.ge.s32.totalorder %s456, 1
                  %s461 = sphi %s413, %s413
                  %s462 = sphi %s433, %s433
                $region66: #{generator_forward.9} parent=62 // loop_header_branch
                  %459 = sbr.rel (%p457) target = $region70
                $region67: #{generator_forward.9} parent=62 // loop_body
                  %v463 = vld [vmem:[%s461] sm:$0xff]
                  %464 = vst [vmem:[%s462] sm:$0xff] %v463
                  %v465 = vld [vmem:[%s461 + $0x8] sm:$0xff]
                  %466 = vst [vmem:[%s462 + $0x20] sm:$0xff] %v465
                $region68: #{generator_forward.9} parent=62 // loop_footer
                  %s460 = sadd.s32 1, %s456
                $region69: #{generator_forward.9} parent=62 // loop_footer_branch
                  %455 = sbr.rel target = $region65
                $region70: #{generator_forward.9} parent=62 // loop_exit
                  _
              $region63: #{generator_forward.9} parent=47 // pred_fallthru
                _
              // Predicated region
              $region71: #{generator_forward.9} parent=47 // pred_check
                _
              $region72: #{generator_forward.9} parent=47 // pred_check_branch
                %468 = sbr.rel target = $region74
              $region73: #{generator_forward.9} parent=47 // pred_region
                _
              $region74: #{generator_forward.9} parent=47 // pred_fallthru
                _
            $region48: #{generator_forward.9} parent=43 // pred_fallthru
              _
            // Predicated region
            $region49: #{generator_forward.9} parent=43 // pred_check
              _
            $region50: #{generator_forward.9} parent=43 // pred_check_branch
              %439 = sbr.rel target = $region52
            $region51: #{generator_forward.9} parent=43 // pred_region
              loop: start=0, step=1, limit=1
              $region53: #{generator_forward.9} parent=51 // loop_pre_header
                _
              $region54: #{generator_forward.9} parent=51 // loop_header
                %s442 = sphi 0, %s446
                %p443 = scmp.ge.s32.totalorder %s442, 1
                %s447 = sphi %s413, %s413
                %s448 = sphi %s433, %s433
              $region55: #{generator_forward.9} parent=51 // loop_header_branch
                %445 = sbr.rel (%p443) target = $region59
              $region56: #{generator_forward.9} parent=51 // loop_body
                %v449 = vld [vmem:[%s447] sm:$0xff]
                %450 = vst [vmem:[%s448] sm:$0xff] %v449
                %v451 = vld [vmem:[%s447 + $0x8] sm:$0xff]
                %452 = vst [vmem:[%s448 + $0x20] sm:$0xff] %v451
              $region57: #{generator_forward.9} parent=51 // loop_footer
                %s446 = sadd.s32 1, %s442
              $region58: #{generator_forward.9} parent=51 // loop_footer_branch
                %441 = sbr.rel target = $region54
              $region59: #{generator_forward.9} parent=51 // loop_exit
                _
            $region52: #{generator_forward.9} parent=43 // pred_fallthru
              _
          $region44: #{generator_forward.9} parent=39 // pred_fallthru
            _
          %469 = vnop
        $region40: #{generator_forward.9} parent=27 // pred_fallthru
          _
        // Predicated region
        $region75: #{generator_forward.9} parent=27 // pred_check
          %p470 = pneg %p143
        $region76: #{generator_forward.9} parent=27 // pred_check_branch
          %472 = sbr.rel (%p470) target = $region78
        $region77: #{generator_forward.9} parent=27 // pred_region
          %s473 = smul.u32 2, %s24
        $region78: #{generator_forward.9} parent=27 // pred_fallthru
          _
      $region28: #{generator_forward.9} parent=5 // pred_fallthru
        _
      %p474 = scmp.le.s32.totalorder 2, %s13
      // Predicated region
      $region79: #{generator_forward.9} parent=5 // pred_check
        %p475 = pneg %p474
      $region80: #{generator_forward.9} parent=5 // pred_check_branch
        %477 = sbr.rel (%p475) target = $region82
      $region81: #{generator_forward.9} parent=5 // pred_region
        %s478 = ssub.s32 %s13, 2
        // Predicated region
        $region83: #{generator_forward.9} parent=81 // pred_check
          %p479 = pneg %p121
        $region84: #{generator_forward.9} parent=81 // pred_check_branch
          %481 = sbr.rel (%p479) target = $region86
        $region85: #{generator_forward.9} parent=81 // pred_region
          %s482 = sand.u32 %s106, 1
          %s483 = sand.u32 %s106, 1
          %s484 = smul.addr %s483, 16
          %s485 = scalar_lea.vmem [#allocation4], %s484
        $region86: #{generator_forward.9} parent=81 // pred_fallthru
          _
        // Predicated region
        $region87: #{generator_forward.9} parent=81 // pred_check
          %p486 = pneg %p149
        $region88: #{generator_forward.9} parent=81 // pred_check_branch
          %488 = sbr.rel (%p486) target = $region90
        $region89: #{generator_forward.9} parent=81 // pred_region
          %s489 = smul.u32 2, %s27
          %p490 = scmp.lt.s32.totalorder %s26, 0
          %s491 = scalar_select %p490, %s26, 0
          %p492 = scmp.lt.s32.totalorder %s489, 7
          %s493 = scalar_select %p492, %s489, 7
          %s494 = smul.addr %s491, 8
          %s495 = sadd.s32 %s493, %s494
          %s496 = smul.addr %s495, 2
          %s497 = scalar_lea.vmem %s3, %s496
        $region90: #{generator_forward.9} parent=81 // pred_fallthru
          _
      $region82: #{generator_forward.9} parent=5 // pred_fallthru
        _
    $region6: #{generator_forward.9} parent=1 // loop_footer
      %s17 = sadd.s32 1, %s13
    $region7: #{generator_forward.9} parent=1 // loop_footer_branch
      %12 = sbr.rel target = $region3
    $region8: #{generator_forward.9} parent=1 // loop_exit
      _
    %498 = vsyncpa [#allocation3], 1
    %s499 = scalar_lea.sflag [#allocation3], 1
    %500 = vsyncpa %s499, 1

// kernel: generator_forward.10
$region0: #{generator_forward.10}
  #allocation0 [shape = 'u32[]', space=smem, size = 0x4, offset = 0x4, fixed_abs, tag = 'smem constant byte address 0x4 - core index']
  #allocation1 [shape = 'u32[144,128]{1,0:T(1,128)}', space=vmem, size = 0x12000, scoped, tag = 'internal scratch']
  %s0 = inlined_call_operand.vmem [shape: bf16[1,16,1024], index: 0, kind: input, shape index: {}]
  %s1 = inlined_call_operand.vmem [shape: f32[2,1024], index: 1, kind: input, shape index: {}]
  %s2 = inlined_call_operand.vmem [shape: f32[1,1024], index: 2, kind: input, shape index: {}]
  %s3 = inlined_call_operand.vmem [shape: f32[1,1024], index: 3, kind: input, shape index: {}]
  %s4 = inlined_call_operand.vmem [shape: bf16[1,16,1024], index: 4, kind: output, shape index: {}]
  %s5 = sld [smem:[#allocation0]]
  $region26: #{generator_forward.10} parent=0
    _
  %s7 = ssub.s32 1, %s5
  %s8 = scalar_select 0, %s7, %s5
  // Predicated region
  $region2: #{generator_forward.10} parent=0 // pred_check
    _
  $region3: #{generator_forward.10} parent=0 // pred_check_branch
    %10 = sbr.rel (0) target = $region5
  $region4: #{generator_forward.10} parent=0 // pred_region
    _
  $region5: #{generator_forward.10} parent=0 // pred_fallthru
    _
  // Predicated region
  $region6: #{generator_forward.10} parent=0 // pred_check
    _
  $region7: #{generator_forward.10} parent=0 // pred_check_branch
    %12 = sbr.rel (0) target = $region9
  $region8: #{generator_forward.10} parent=0 // pred_region
    _
  $region9: #{generator_forward.10} parent=0 // pred_fallthru
    _
  // Predicated region
  $region10: #{generator_forward.10} parent=0 // pred_check
    _
  $region11: #{generator_forward.10} parent=0 // pred_check_branch
    %14 = sbr.rel (0) target = $region13
  $region12: #{generator_forward.10} parent=0 // pred_region
    _
  $region13: #{generator_forward.10} parent=0 // pred_fallthru
    _
  // Predicated region
  $region14: #{generator_forward.10} parent=0 // pred_check
    _
  $region15: #{generator_forward.10} parent=0 // pred_check_branch
    %16 = sbr.rel (0) target = $region17
  $region16: #{generator_forward.10} parent=0 // pred_region
    _
  $region17: #{generator_forward.10} parent=0 // pred_fallthru
    _
  %v17 = vld [vmem:[%s0] sm:$0xff]
  %v18 = vld [vmem:[%s0 + $0x8] sm:$0xff]
  %v19 = vld [vmem:[%s0 + $0x10] sm:$0xff]
  %v20 = vld [vmem:[%s0 + $0x18] sm:$0xff]
  %v21 = vld [vmem:[%s0 + $0x20] sm:$0xff]
  %v22 = vld [vmem:[%s0 + $0x28] sm:$0xff]
  %v23 = vld [vmem:[%s0 + $0x30] sm:$0xff]
  %v24 = vld [vmem:[%s0 + $0x38] sm:$0xff]
  %v25 = vunpack.c.l.bf16 %v17
  %v26 = vunpack.c.h.bf16 %v17
  %v27 = vunpack.c.l.bf16 %v18
  %v28 = vunpack.c.h.bf16 %v18
  %v29 = vunpack.c.l.bf16 %v19
  %v30 = vunpack.c.h.bf16 %v19
  %v31 = vunpack.c.l.bf16 %v20
  %v32 = vunpack.c.h.bf16 %v20
  %v33 = vunpack.c.l.bf16 %v21
  %v34 = vunpack.c.h.bf16 %v21
  %v35 = vunpack.c.l.bf16 %v22
  %v36 = vunpack.c.h.bf16 %v22
  %v37 = vunpack.c.l.bf16 %v23
  %v38 = vunpack.c.h.bf16 %v23
  %v39 = vunpack.c.l.bf16 %v24
  %v40 = vunpack.c.h.bf16 %v24
  %v41 = vld [vmem:[%s1] sm:$0xff]
  %v42 = vld [vmem:[%s1 + $0x8] sm:$0xff]
  %v43 = vmul.f32 %v41, 0.03125
  %v44 = vmul.f32 %v42, 0.03125
  %v45 = vmul.f32 %v43, %v43
  %v46 = vmul.f32 %v44, %v44
  %v49 = vrot.slane %v45, 7
  %v50 = vrot.slane %v46, 7
  %v53 = vsub.f32 %v43, %v49
  %v54 = vsub.f32 %v44, %v50
  %v55 = vmax.f32 %v53, 0.0
  %v56 = vmax.f32 %v54, 0.0
  %v57 = vadd.f32 %v55, 1e-05
  %v58 = vadd.f32 %v56, 1e-05
  %v59 = vrsqrt.pop %v57
  %v60 = vrsqrt.pop %v58
  %v61 = vld [vmem:[%s2] sm:$0xff]
  %v64 = vunpack.c.l.s4 857870592
  %v65 = vunpack.c.0.s8 %v64
  %v66 = vlaneseq
  %v67 = vshrl.u32 %v66, 7
  %v68 = vsub.s32 %v65, %v67
  %v69 = vrot.slane %v61, %v68
  %v71 = vunpack.c.l.s4 2003195204
  %v72 = vunpack.c.0.s8 %v71
  %v73 = vlaneseq
  %v74 = vshrl.u32 %v73, 7
  %v75 = vsub.s32 %v72, %v74
  %v76 = vrot.slane %v61, %v75
  %v79 = vmul.f32 %v59, %v69
  %v80 = vmul.f32 %v60, %v76
  %v81 = vld [vmem:[%s3] sm:$0xff]
  %v84 = vrot.slane %v79, 7
  %v85 = vrot.slane %v84, 2
  %v86 = vrot.slane %v80, 7
  %v87 = vrot.slane %v86, 2
  %v90 = vmul.f32 %v43, %v85
  %v91 = vmul.f32 %v44, %v87
  %v95 = vunpack.c.l.s4 1966171168
  %v96 = vunpack.c.0.s8 %v95
  %v97 = vlaneseq
  %v98 = vshrl.u32 %v97, 7
  %v99 = vsub.s32 %v96, %v98
  %v100 = vrot.slane %v90, %v99
  %v102 = vunpack.c.l.s4 1966171168
  %v103 = vunpack.c.0.s8 %v102
  %v104 = vlaneseq
  %v105 = vshrl.u32 %v104, 7
  %v106 = vsub.s32 %v103, %v105
  %v107 = vrot.slane %v91, %v106
  %v108 = vcombine.low %v100, %v107
  %v110 = vsub.f32 %v81, %v108
  %v111 = vlaneseq
  %v112 = vshrl.u32 %v111, 7
  %v113 = vsub.s32 1, %v112
  %v114 = vrot.slane %v79, %v113
  %v115 = vlaneseq
  %v116 = vshrl.u32 %v115, 7
  %v117 = vsub.s32 3, %v116
  %v118 = vrot.slane %v79, %v117
  %v119 = vlaneseq
  %v120 = vshrl.u32 %v119, 7
  %v121 = vsub.s32 5, %v120
  %v122 = vrot.slane %v79, %v121
  %v123 = vlaneseq
  %v124 = vshrl.u32 %v123, 7
  %v125 = vsub.s32 7, %v124
  %v126 = vrot.slane %v79, %v125
  %v127 = vlaneseq
  %v128 = vshrl.u32 %v127, 7
  %v129 = vsub.s32 1, %v128
  %v130 = vrot.slane %v80, %v129
  %v131 = vlaneseq
  %v132 = vshrl.u32 %v131, 7
  %v133 = vsub.s32 3, %v132
  %v134 = vrot.slane %v80, %v133
  %v135 = vlaneseq
  %v136 = vshrl.u32 %v135, 7
  %v137 = vsub.s32 5, %v136
  %v138 = vrot.slane %v80, %v137
  %v139 = vlaneseq
  %v140 = vshrl.u32 %v139, 7
  %v141 = vsub.s32 7, %v140
  %v142 = vrot.slane %v80, %v141
  %v151 = vlaneseq
  %v152 = vshrl.u32 %v151, 7
  %v153 = vsub.s32 1, %v152
  %v154 = vrot.slane %v114, %v153
  %v155 = vlaneseq
  %v156 = vshrl.u32 %v155, 7
  %v157 = vsub.s32 1, %v156
  %v158 = vrot.slane %v118, %v157
  %v159 = vlaneseq
  %v160 = vshrl.u32 %v159, 7
  %v161 = vsub.s32 1, %v160
  %v162 = vrot.slane %v122, %v161
  %v163 = vlaneseq
  %v164 = vshrl.u32 %v163, 7
  %v165 = vsub.s32 1, %v164
  %v166 = vrot.slane %v126, %v165
  %v167 = vlaneseq
  %v168 = vshrl.u32 %v167, 7
  %v169 = vsub.s32 1, %v168
  %v170 = vrot.slane %v130, %v169
  %v171 = vlaneseq
  %v172 = vshrl.u32 %v171, 7
  %v173 = vsub.s32 1, %v172
  %v174 = vrot.slane %v134, %v173
  %v175 = vlaneseq
  %v176 = vshrl.u32 %v175, 7
  %v177 = vsub.s32 1, %v176
  %v178 = vrot.slane %v138, %v177
  %v179 = vlaneseq
  %v180 = vshrl.u32 %v179, 7
  %v181 = vsub.s32 1, %v180
  %v182 = vrot.slane %v142, %v181
  %v183 = vmul.f32 %v25, %v154
  %v184 = vmul.f32 %v26, %v158
  %v185 = vmul.f32 %v27, %v162
  %v186 = vmul.f32 %v28, %v166
  %v187 = vmul.f32 %v29, %v170
  %v188 = vmul.f32 %v30, %v174
  %v189 = vmul.f32 %v31, %v178
  %v190 = vmul.f32 %v32, %v182
  %v191 = vmul.f32 %v33, %v154
  %v192 = vmul.f32 %v34, %v158
  %v193 = vmul.f32 %v35, %v162
  %v194 = vmul.f32 %v36, %v166
  %v195 = vmul.f32 %v37, %v170
  %v196 = vmul.f32 %v38, %v174
  %v197 = vmul.f32 %v39, %v178
  %v198 = vmul.f32 %v40, %v182
  %v200 = vlaneseq
  %v201 = vshrl.u32 %v200, 7
  %v202 = vsub.s32 0, %v201
  %v203 = vrot.slane %v110, %v202
  %v204 = vlaneseq
  %v205 = vshrl.u32 %v204, 7
  %v206 = vsub.s32 1, %v205
  %v207 = vrot.slane %v110, %v206
  %v208 = vlaneseq
  %v209 = vshrl.u32 %v208, 7
  %v210 = vsub.s32 2, %v209
  %v211 = vrot.slane %v110, %v210
  %v212 = vlaneseq
  %v213 = vshrl.u32 %v212, 7
  %v214 = vsub.s32 3, %v213
  %v215 = vrot.slane %v110, %v214
  %v216 = vlaneseq
  %v217 = vshrl.u32 %v216, 7
  %v218 = vsub.s32 4, %v217
  %v219 = vrot.slane %v110, %v218
  %v220 = vlaneseq
  %v221 = vshrl.u32 %v220, 7
  %v222 = vsub.s32 5, %v221
  %v223 = vrot.slane %v110, %v222
  %v224 = vlaneseq
  %v225 = vshrl.u32 %v224, 7
  %v226 = vsub.s32 6, %v225
  %v227 = vrot.slane %v110, %v226
  %v228 = vlaneseq
  %v229 = vshrl.u32 %v228, 7
  %v230 = vsub.s32 7, %v229
  %v231 = vrot.slane %v110, %v230
  %v240 = vadd.f32 %v183, %v203
  %v241 = vadd.f32 %v184, %v207
  %v242 = vadd.f32 %v185, %v211
  %v243 = vadd.f32 %v186, %v215
  %v244 = vadd.f32 %v187, %v219
  %v245 = vadd.f32 %v188, %v223
  %v246 = vadd.f32 %v189, %v227
  %v247 = vadd.f32 %v190, %v231
  %v248 = vadd.f32 %v191, %v203
  %v249 = vadd.f32 %v192, %v207
  %v250 = vadd.f32 %v193, %v211
  %v251 = vadd.f32 %v194, %v215
  %v252 = vadd.f32 %v195, %v219
  %v253 = vadd.f32 %v196, %v223
  %v254 = vadd.f32 %v197, %v227
  %v255 = vadd.f32 %v198, %v231
  %v256 = vmax.f32 %v240, 0.0
  %v257 = vmax.f32 %v241, 0.0
  %v258 = vmax.f32 %v242, 0.0
  %v259 = vmax.f32 %v243, 0.0
  %v260 = vmax.f32 %v244, 0.0
  %v261 = vmax.f32 %v245, 0.0
  %v262 = vmax.f32 %v246, 0.0
  %v263 = vmax.f32 %v247, 0.0
  %v264 = vmax.f32 %v248, 0.0
  %v265 = vmax.f32 %v249, 0.0
  %v266 = vmax.f32 %v250, 0.0
  %v267 = vmax.f32 %v251, 0.0
  %v268 = vmax.f32 %v252, 0.0
  %v269 = vmax.f32 %v253, 0.0
  %v270 = vmax.f32 %v254, 0.0
  %v271 = vmax.f32 %v255, 0.0
  %v272 = vpack.c.bf16 %v264, %v256
  %v273 = vpack.c.bf16 %v265, %v257
  %v274 = vpack.c.bf16 %v266, %v258
  %v275 = vpack.c.bf16 %v267, %v259
  %v276 = vpack.c.bf16 %v268, %v260
  %v277 = vpack.c.bf16 %v269, %v261
  %v278 = vpack.c.bf16 %v270, %v262
  %v279 = vpack.c.bf16 %v271, %v263
  %v288 = vunpack.c.l.b16 %v272
  %v289 = vunpack.c.l.b16 %v273
  %v290 = vunpack.c.l.b16 %v274
  %v291 = vunpack.c.l.b16 %v275
  %v292 = vunpack.c.l.b16 %v276
  %v293 = vunpack.c.l.b16 %v277
  %v294 = vunpack.c.l.b16 %v278
  %v295 = vunpack.c.l.b16 %v279
  %v296 = vunpack.c.h.b16 %v272
  %v297 = vunpack.c.h.b16 %v273
  %v298 = vunpack.c.h.b16 %v274
  %v299 = vunpack.c.h.b16 %v275
  %v300 = vunpack.c.h.b16 %v276
  %v301 = vunpack.c.h.b16 %v277
  %v302 = vunpack.c.h.b16 %v278
  %v303 = vunpack.c.h.b16 %v279
  %v304 = vpack.c.b16 %v289, %v288
  %v305 = vpack.c.b16 %v291, %v290
  %v306 = vpack.c.b16 %v293, %v292
  %v307 = vpack.c.b16 %v295, %v294
  %v308 = vpack.c.b16 %v297, %v296
  %v309 = vpack.c.b16 %v299, %v298
  %v310 = vpack.c.b16 %v301, %v300
  %v311 = vpack.c.b16 %v303, %v302
  %320 = vst [vmem:[%s4] sm:$0xff] %v304
  %321 = vst [vmem:[%s4 + $0x8] sm:$0xff] %v305
  %322 = vst [vmem:[%s4 + $0x10] sm:$0xff] %v306
  %323 = vst [vmem:[%s4 + $0x18] sm:$0xff] %v307
  %324 = vst [vmem:[%s4 + $0x20] sm:$0xff] %v308
  %325 = vst [vmem:[%s4 + $0x28] sm:$0xff] %v309
  %326 = vst [vmem:[%s4 + $0x30] sm:$0xff] %v310
  %327 = vst [vmem:[%s4 + $0x38] sm:$0xff] %v311
  // Predicated region
  $region18: #{generator_forward.10} parent=0 // pred_check
    _
  $region19: #{generator_forward.10} parent=0 // pred_check_branch
    %329 = sbr.rel (0) target = $region21
  $region20: #{generator_forward.10} parent=0 // pred_region
    _
  $region21: #{generator_forward.10} parent=0 // pred_fallthru
    _
  // Predicated region
  $region22: #{generator_forward.10} parent=0 // pred_check
    _
  $region23: #{generator_forward.10} parent=0 // pred_check_branch
    %331 = sbr.rel (0) target = $region25
  $region24: #{generator_forward.10} parent=0 // pred_region
    _
  $region25: #{generator_forward.10} parent=0 // pred_fallthru
    _

// kernel: generator_forward.11
$region0: #{generator_forward.11}
  #allocation0 [shape = 'u32[]', space=smem, size = 0x4, offset = 0x4, fixed_abs, tag = 'smem constant byte address 0x4 - core index']
  #allocation1 [shape = 'u32[144,128]{1,0:T(1,128)}', space=vmem, size = 0x12000, scoped, tag = 'internal scratch']
  %s0 = inlined_call_operand.vmem [shape: bf16[4,32,256], index: 0, kind: input, shape index: {}]
  %s1 = inlined_call_operand.hbm [shape: bf16[4,256,128], index: 1, kind: input, shape index: {}]
  %s2 = inlined_call_operand.vmem [shape: bf16[4,32,128], index: 2, kind: output, shape index: {0}]
  %s3 = inlined_call_operand.vmem [shape: f32[4,2,128], index: 3, kind: output, shape index: {1}]
  %4 = xla_tuple %s2, %s3
  %s5 = sld [smem:[#allocation0]]
  $region57: #{generator_forward.11} parent=0
    _
  %s7 = ssub.s32 1, %s5
  %s8 = scalar_select 0, %s7, %s5
  $region1: #{generator_forward.11} parent=0
    #allocation2 [shape = 'u8[131072]{0}', space=vmem, size = 0x20000, scoped, tag = 'input window, operand 1']
    #allocation3 [shape = 's32[2]{0}', space=sflag, size = 0x8, scoped, tag = 'scoped memory for generator_forward.11']
    %9 = vsyncpa [#allocation3], 0
    %s10 = scalar_lea.sflag [#allocation3], 1
    %11 = vsyncpa %s10, 0
    loop: start=0, step=1, limit=6
    $region2: #{generator_forward.11} parent=1 // loop_pre_header
      _
    $region3: #{generator_forward.11} parent=1 // loop_header
      %s13 = sphi 0, %s17
      %p14 = scmp.ge.s32.totalorder %s13, 6
      %s20 = sphi 0, %s39
      %s21 = sphi 0, %s35
      %s22 = sphi 0, %s31
      %s23 = sphi 0, %s20
      %s24 = sphi 0, %s21
      %s25 = sphi 0, %s22
      %s26 = sphi 0, %s23
      %s27 = sphi 0, %s24
      %s28 = sphi 0, %s25
      %s44 = sphi 0, %s46
      %s47 = sphi 0, %s44
      %s48 = sphi 0, %s47
      %s64 = sphi 0, %s48
      %s72 = sphi 0, %s74
      %s75 = sphi 0, %s72
      %s76 = sphi 0, %s75
      %s92 = sphi 0, %s76
      %s102 = sphi 0, %s104
      %s105 = sphi 0, %s102
      %s106 = sphi 0, %s105
      %s122 = sphi 0, %s106
      %s130 = sphi 0, %s132
      %s133 = sphi 0, %s130
      %s134 = sphi 0, %s133
      %s150 = sphi 0, %s134
    $region4: #{generator_forward.11} parent=1 // loop_header_branch
      %16 = sbr.rel (%p14) target = $region8
    $region5: #{generator_forward.11} parent=1 // loop_body
      %s18 = ssub.s32 %s13, 1
      %s19 = ssub.s32 %s13, 2
      %s29 = sadd.s32 1, %s22
      %p30 = scmp.ge.s32.totalorder %s29, 1
      %s31 = scalar_select %p30, 0, %s29
      %s32 = sadd.s32 1, %s21
      %s33 = scalar_select %p30, %s32, %s21
      %p34 = scmp.ge.s32.totalorder %s33, 1
      %s35 = scalar_select %p34, 0, %s33
      %s36 = sadd.s32 1, %s20
      %s37 = scalar_select %p34, %s36, %s20
      %p38 = scmp.ge.s32.totalorder %s37, 4
      %s39 = scalar_select %p38, 0, %s37
      %s40 = ssub.s32 %s20, %s39
      %s41 = ssub.s32 %s22, %s31
      %s42 = sor.u32 %s40, %s41
      %p43 = scmp.eq.s32.totalorder %s42, 0
      %s45 = sadd.s32 %s44, 1
      %s46 = scalar_select %p43, %s44, %s45
      %p49 = pneg %p43
      %p50 = scmp.eq.s32.totalorder %s13, 3
      %p51 = por %p49, %p50
      %p52 = scmp.ne.s32.totalorder %s44, %s47
      %p53 = scmp.eq.s32.totalorder %s13, 0
      %p54 = por %p52, %p53
      %p55 = scmp.ne.s32.totalorder %s44, %s47
      %p56 = scmp.eq.s32.totalorder %s18, 3
      %p57 = por %p55, %p56
      %p58 = scmp.ne.s32.totalorder %s47, %s48
      %p59 = scmp.eq.s32.totalorder %s18, 0
      %p60 = por %p58, %p59
      %p61 = scmp.ne.s32.totalorder %s47, %s48
      %p62 = scmp.eq.s32.totalorder %s19, 3
      %p63 = por %p61, %p62
      %p65 = scmp.ne.s32.totalorder %s48, %s64
      %p66 = scmp.eq.s32.totalorder %s19, 0
      %p67 = por %p65, %p66
      %s68 = ssub.s32 %s20, %s39
      %s69 = ssub.s32 %s21, %s35
      %s70 = sor.u32 %s68, %s69
      %p71 = scmp.eq.s32.totalorder %s70, 0
      %s73 = sadd.s32 %s72, 1
      %s74 = scalar_select %p71, %s72, %s73
      %p77 = pneg %p71
      %p78 = scmp.eq.s32.totalorder %s13, 3
      %p79 = por %p77, %p78
      %p80 = scmp.ne.s32.totalorder %s72, %s75
      %p81 = scmp.eq.s32.totalorder %s13, 0
      %p82 = por %p80, %p81
      %p83 = scmp.ne.s32.totalorder %s72, %s75
      %p84 = scmp.eq.s32.totalorder %s18, 3
      %p85 = por %p83, %p84
      %p86 = scmp.ne.s32.totalorder %s75, %s76
      %p87 = scmp.eq.s32.totalorder %s18, 0
      %p88 = por %p86, %p87
      %p89 = scmp.ne.s32.totalorder %s75, %s76
      %p90 = scmp.eq.s32.totalorder %s19, 3
      %p91 = por %p89, %p90
      %p93 = scmp.ne.s32.totalorder %s76, %s92
      %p94 = scmp.eq.s32.totalorder %s19, 0
      %p95 = por %p93, %p94
      %s96 = ssub.s32 %s20, %s39
      %s97 = ssub.s32 %s22, %s31
      %s98 = sor.u32 %s96, %s97
      %s99 = ssub.s32 %s21, %s35
      %s100 = sor.u32 %s98, %s99
      %p101 = scmp.eq.s32.totalorder %s100, 0
      %s103 = sadd.s32 %s102, 1
      %s104 = scalar_select %p101, %s102, %s103
      %p107 = pneg %p101
      %p108 = scmp.eq.s32.totalorder %s13, 3
      %p109 = por %p107, %p108
      %p110 = scmp.ne.s32.totalorder %s102, %s105
      %p111 = scmp.eq.s32.totalorder %s13, 0
      %p112 = por %p110, %p111
      %p113 = scmp.ne.s32.totalorder %s102, %s105
      %p114 = scmp.eq.s32.totalorder %s18, 3
      %p115 = por %p113, %p114
      %p116 = scmp.ne.s32.totalorder %s105, %s106
      %p117 = scmp.eq.s32.totalorder %s18, 0
      %p118 = por %p116, %p117
      %p119 = scmp.ne.s32.totalorder %s105, %s106
      %p120 = scmp.eq.s32.totalorder %s19, 3
      %p121 = por %p119, %p120
      %p123 = scmp.ne.s32.totalorder %s106, %s122
      %p124 = scmp.eq.s32.totalorder %s19, 0
      %p125 = por %p123, %p124
      %s126 = ssub.s32 %s20, %s39
      %s127 = ssub.s32 %s21, %s35
      %s128 = sor.u32 %s126, %s127
      %p129 = scmp.eq.s32.totalorder %s128, 0
      %s131 = sadd.s32 %s130, 1
      %s132 = scalar_select %p129, %s130, %s131
      %p135 = pneg %p129
      %p136 = scmp.eq.s32.totalorder %s13, 3
      %p137 = por %p135, %p136
      %p138 = scmp.ne.s32.totalorder %s130, %s133
      %p139 = scmp.eq.s32.totalorder %s13, 0
      %p140 = por %p138, %p139
      %p141 = scmp.ne.s32.totalorder %s130, %s133
      %p142 = scmp.eq.s32.totalorder %s18, 3
      %p143 = por %p141, %p142
      %p144 = scmp.ne.s32.totalorder %s133, %s134
      %p145 = scmp.eq.s32.totalorder %s18, 0
      %p146 = por %p144, %p145
      %p147 = scmp.ne.s32.totalorder %s133, %s134
      %p148 = scmp.eq.s32.totalorder %s19, 3
      %p149 = por %p147, %p148
      %p151 = scmp.ne.s32.totalorder %s134, %s150
      %p152 = scmp.eq.s32.totalorder %s19, 0
      %p153 = por %p151, %p152
      %p154 = scmp.le.s32.totalorder 1, %s13
      %p155 = scmp.lt.s32.totalorder %s13, 5
      %p156 = pnand %p154, %p155
      %p157 = pneg %p156
      // Predicated region
      $region9: #{generator_forward.11} parent=5 // pred_check
        _
      $region10: #{generator_forward.11} parent=5 // pred_check_branch
        %159 = sbr.rel (%p156) target = $region12
      $region11: #{generator_forward.11} parent=5 // pred_region
        %s160 = ssub.s32 %s13, 1
      $region12: #{generator_forward.11} parent=5 // pred_fallthru
        _
      %p161 = scmp.lt.s32.totalorder %s13, 4
      // Predicated region
      $region13: #{generator_forward.11} parent=5 // pred_check
        %p162 = pneg %p161
      $region14: #{generator_forward.11} parent=5 // pred_check_branch
        %164 = sbr.rel (%p162) target = $region16
      $region15: #{generator_forward.11} parent=5 // pred_region
        // Predicated region
        $region17: #{generator_forward.11} parent=15 // pred_check
          %p165 = pneg %p54
        $region18: #{generator_forward.11} parent=15 // pred_check_branch
          %167 = sbr.rel (%p165) target = $region20
        $region19: #{generator_forward.11} parent=15 // pred_region
          %s168 = smul.u32 4, %s22
          %p169 = scmp.lt.s32.totalorder %s20, 3
          %s170 = scalar_select %p169, %s20, 3
          %p171 = scmp.lt.s32.totalorder %s168, 3
          %s172 = scalar_select %p171, %s168, 3
          %s173 = smul.addr %s172, 2
          %s174 = smul.addr %s170, 8
          %s175 = sadd.s32 %s173, %s174
          %s176 = smul.addr %s175, 4
          %s177 = scalar_lea.vmem %s0, %s176
          %s178 = smul.u32 4, %s22
        $region20: #{generator_forward.11} parent=15 // pred_fallthru
          _
        // Predicated region
        $region21: #{generator_forward.11} parent=15 // pred_check
          %p179 = pneg %p82
        $region22: #{generator_forward.11} parent=15 // pred_check_branch
          %181 = sbr.rel (%p179) target = $region24
        $region23: #{generator_forward.11} parent=15 // pred_region
          %s182 = sand.u32 %s72, 1
          %s183 = scalar_lea.sflag [#allocation3], %s182
          %s184 = sand.u32 %s72, 1
          %s185 = smul.addr %s184, 128
          %s186 = scalar_lea.vmem [#allocation2], %s185
          %s188 = ssub.s32 2048, 2048
          %189 = vsyncadd %s183, %s188
          %s190 = smul.addr %s20, 32
          %s191 = sadd.s32 %s21, %s190
          %s192 = smul.addr %s191, 64
          %s193 = scalar_lea.hbm %s1, %s192
          %s194 = sshll.u32 %s186, 4
          %s195 = int_to_ptr.vmem [resolvable:$true] %s194
          %200 = dma.hbm_to_vmem [thread:$0]  %s193, 2048, %s195, %s183, 64, 64, 4
        $region24: #{generator_forward.11} parent=15 // pred_fallthru
          _
      $region16: #{generator_forward.11} parent=5 // pred_fallthru
        _
      %p201 = scmp.le.s32.totalorder 1, %s13
      %p202 = scmp.lt.s32.totalorder %s13, 5
      %p203 = pnand %p201, %p202
      %p204 = pneg %p203
      // Predicated region
      $region25: #{generator_forward.11} parent=5 // pred_check
        _
      $region26: #{generator_forward.11} parent=5 // pred_check_branch
        %206 = sbr.rel (%p203) target = $region28
      $region27: #{generator_forward.11} parent=5 // pred_region
        %s207 = ssub.s32 %s13, 1
        %s208 = sand.u32 %s75, 1
        %s209 = scalar_lea.sflag [#allocation3], %s208
        %s210 = sand.u32 %s75, 1
        %s211 = smul.addr %s210, 128
        %s212 = scalar_lea.vmem [#allocation2], %s211
        // Predicated region
        $region29: #{generator_forward.11} parent=27 // pred_check
          %p213 = pneg %p88
        $region30: #{generator_forward.11} parent=27 // pred_check_branch
          %215 = sbr.rel (%p213) target = $region32
        $region31: #{generator_forward.11} parent=27 // pred_region
          %216 = dma.done %s209, 2048
        $region32: #{generator_forward.11} parent=27 // pred_fallthru
          _
        %s217 = smul.u32 4, %s25
        %p218 = scmp.lt.s32.totalorder %s23, 3
        %s219 = scalar_select %p218, %s23, 3
        %p220 = scmp.lt.s32.totalorder %s217, 3
        %s221 = scalar_select %p220, %s217, 3
        %s222 = smul.addr %s221, 2
        %s223 = smul.addr %s219, 8
        %s224 = sadd.s32 %s222, %s223
        %s225 = smul.addr %s224, 4
        %s226 = scalar_lea.vmem %s0, %s225
        %p227 = pneg %p60
        %p228 = pneg %p57
        %s229 = sand.u32 %s75, 1
        %s230 = scalar_lea.sflag [#allocation3], %s229
        %s231 = sand.u32 %s75, 1
        %s232 = smul.addr %s231, 128
        %s233 = scalar_lea.vmem [#allocation2], %s232
        %p234 = pneg %p88
        %p235 = pneg %p85
        %p236 = pneg %p118
        %p237 = pneg %p115
        %s238 = smul.u32 4, %s25
        %p239 = scmp.lt.s32.totalorder %s23, 3
        %s240 = scalar_select %p239, %s23, 3
        %p241 = scmp.lt.s32.totalorder %s238, 3
        %s242 = scalar_select %p241, %s238, 3
        %p243 = scmp.lt.s32.totalorder %s24, 0
        %s244 = scalar_select %p243, %s24, 0
        %s245 = sadd.s32 %s244, %s242
        %s246 = smul.addr %s240, 4
        %s247 = sadd.s32 %s245, %s246
        %s248 = smul.addr %s247, 4
        %s249 = scalar_lea.vmem %s2, %s248
        %p250 = pneg %p146
        %p251 = pneg %p143
        %p252 = scmp.lt.s32.totalorder %s23, 3
        %s253 = scalar_select %p252, %s23, 3
        %p254 = scmp.lt.s32.totalorder %s24, 0
        %s255 = scalar_select %p254, %s24, 0
        %s256 = sadd.s32 %s255, %s253
        %s257 = smul.addr %s256, 2
        %s258 = scalar_lea.vmem %s3, %s257
        %s259 = smul.u32 4, %s25
        %p260 = scmp.lt.s32.totalorder %s23, 3
        %s261 = scalar_select %p260, %s23, 3
        %p262 = scmp.lt.s32.totalorder %s259, 3
        %s263 = scalar_select %p262, %s259, 3
        %s264 = smul.addr %s263, 2
        %s265 = smul.addr %s261, 8
        %s266 = sadd.s32 %s264, %s265
        %s267 = smul.addr %s266, 4
        %s268 = scalar_lea.vmem %s0, %s267
        %s269 = smul.u32 4, %s25
        %s270 = smul.u32 4, %s25
        %p271 = scmp.lt.s32.totalorder %s23, 3
        %s272 = scalar_select %p271, %s23, 3
        %p273 = scmp.lt.s32.totalorder %s270, 3
        %s274 = scalar_select %p273, %s270, 3
        %p275 = scmp.lt.s32.totalorder %s24, 0
        %s276 = scalar_select %p275, %s24, 0
        %s277 = sadd.s32 %s276, %s274
        %s278 = smul.addr %s272, 4
        %s279 = sadd.s32 %s277, %s278
        %s280 = smul.addr %s279, 4
        %s281 = scalar_lea.vmem %s2, %s280
        %s282 = smul.u32 4, %s25
        %p283 = scmp.lt.s32.totalorder %s23, 3
        %s284 = scalar_select %p283, %s23, 3
        %p285 = scmp.lt.s32.totalorder %s24, 0
        %s286 = scalar_select %p285, %s24, 0
        %s287 = sadd.s32 %s286, %s284
        %s288 = smul.addr %s287, 2
        %s289 = scalar_lea.vmem %s3, %s288
        %v291 = vld [vmem:[%s268] sm:$0xff]
        %v292 = vld [vmem:[%s268 + $0x8] sm:$0xff]
        %v293 = vld [vmem:[%s268 + $0x10] sm:$0xff]
        %v294 = vld [vmem:[%s268 + $0x18] sm:$0xff]
        %v295 = vld [vmem:[%s212] sm:$0xf]
        %v296 = vld [vmem:[%s212 + $0x4] sm:$0xf]
        %v297 = vld [vmem:[%s212 + $0x8] sm:$0xf]
        %v298 = vld [vmem:[%s212 + $0xc] sm:$0xf]
        %v299 = vld [vmem:[%s212 + $0x10] sm:$0xf]
        %v300 = vld [vmem:[%s212 + $0x14] sm:$0xf]
        %v301 = vld [vmem:[%s212 + $0x18] sm:$0xf]
        %v302 = vld [vmem:[%s212 + $0x1c] sm:$0xf]
        %v303 = vld [vmem:[%s212 + $0x20] sm:$0xf]
        %v304 = vld [vmem:[%s212 + $0x24] sm:$0xf]
        %v305 = vld [vmem:[%s212 + $0x28] sm:$0xf]
        %v306 = vld [vmem:[%s212 + $0x2c] sm:$0xf]
        %v307 = vld [vmem:[%s212 + $0x30] sm:$0xf]
        %v308 = vld [vmem:[%s212 + $0x34] sm:$0xf]
        %v309 = vld [vmem:[%s212 + $0x38] sm:$0xf]
        %v310 = vld [vmem:[%s212 + $0x3c] sm:$0xf]
        %v311 = vld [vmem:[%s212 + $0x40] sm:$0xf]
        %v312 = vld [vmem:[%s212 + $0x44] sm:$0xf]
        %v313 = vld [vmem:[%s212 + $0x48] sm:$0xf]
        %v314 = vld [vmem:[%s212 + $0x4c] sm:$0xf]
        %v315 = vld [vmem:[%s212 + $0x50] sm:$0xf]
        %v316 = vld [vmem:[%s212 + $0x54] sm:$0xf]
        %v317 = vld [vmem:[%s212 + $0x58] sm:$0xf]
        %v318 = vld [vmem:[%s212 + $0x5c] sm:$0xf]
        %v319 = vld [vmem:[%s212 + $0x60] sm:$0xf]
        %v320 = vld [vmem:[%s212 + $0x64] sm:$0xf]
        %v321 = vld [vmem:[%s212 + $0x68] sm:$0xf]
        %v322 = vld [vmem:[%s212 + $0x6c] sm:$0xf]
        %v323 = vld [vmem:[%s212 + $0x70] sm:$0xf]
        %v324 = vld [vmem:[%s212 + $0x74] sm:$0xf]
        %v325 = vld [vmem:[%s212 + $0x78] sm:$0xf]
        %v326 = vld [vmem:[%s212 + $0x7c] sm:$0xf]
        %v331 = vunpack.c.l.b16 %v291
        %v332 = vunpack.c.h.b16 %v291
        %v333 = vunpack.c.l.b16 %v292
        %v334 = vunpack.c.h.b16 %v292
        %v335 = vunpack.c.l.b16 %v293
        %v336 = vunpack.c.h.b16 %v293
        %v337 = vunpack.c.l.b16 %v294
        %v338 = vunpack.c.h.b16 %v294
        %v339 = vpack.c.b16 %v333, %v331
        %v340 = vpack.c.b16 %v334, %v332
        %v341 = vpack.c.b16 %v337, %v335
        %v342 = vpack.c.b16 %v338, %v336
        %v379 = vunpack.c.l.b16 %v295
        %v380 = vunpack.c.l.b16 %v296
        %v381 = vunpack.c.l.b16 %v297
        %v382 = vunpack.c.l.b16 %v298
        %v383 = vunpack.c.l.b16 %v299
        %v384 = vunpack.c.l.b16 %v300
        %v385 = vunpack.c.l.b16 %v301
        %v386 = vunpack.c.l.b16 %v302
        %v387 = vunpack.c.l.b16 %v303
        %v388 = vunpack.c.l.b16 %v304
        %v389 = vunpack.c.l.b16 %v305
        %v390 = vunpack.c.l.b16 %v306
        %v391 = vunpack.c.l.b16 %v307
        %v392 = vunpack.c.l.b16 %v308
        %v393 = vunpack.c.l.b16 %v309
        %v394 = vunpack.c.l.b16 %v310
        %v395 = vunpack.c.l.b16 %v311
        %v396 = vunpack.c.l.b16 %v312
        %v397 = vunpack.c.l.b16 %v313
        %v398 = vunpack.c.l.b16 %v314
        %v399 = vunpack.c.l.b16 %v315
        %v400 = vunpack.c.l.b16 %v316
        %v401 = vunpack.c.l.b16 %v317
        %v402 = vunpack.c.l.b16 %v318
        %v403 = vunpack.c.l.b16 %v319
        %v404 = vunpack.c.l.b16 %v320
        %v405 = vunpack.c.l.b16 %v321
        %v406 = vunpack.c.l.b16 %v322
        %v407 = vunpack.c.l.b16 %v323
        %v408 = vunpack.c.l.b16 %v324
        %v409 = vunpack.c.l.b16 %v325
        %v410 = vunpack.c.l.b16 %v326
        %v411 = vpack.c.b16 %v380, %v379
        %v412 = vpack.c.b16 %v382, %v381
        %v413 = vpack.c.b16 %v384, %v383
        %v414 = vpack.c.b16 %v386, %v385
        %v415 = vpack.c.b16 %v388, %v387
        %v416 = vpack.c.b16 %v390, %v389
        %v417 = vpack.c.b16 %v392, %v391
        %v418 = vpack.c.b16 %v394, %v393
        %v419 = vpack.c.b16 %v396, %v395
        %v420 = vpack.c.b16 %v398, %v397
        %v421 = vpack.c.b16 %v400, %v399
        %v422 = vpack.c.b16 %v402, %v401
        %v423 = vpack.c.b16 %v404, %v403
        %v424 = vpack.c.b16 %v406, %v405
        %v425 = vpack.c.b16 %v408, %v407
        %v426 = vpack.c.b16 %v410, %v409
        %443 = vmatprep.subr.bf16.mxu0 0
        %444 = vmatpush1.bf16.msra.mxu0 %v411
        %445 = vmatprep.subr.bf16.mxu0 0
        %446 = vmatpush1.bf16.msra.mxu0 %v412
        %447 = vmatprep.subr.bf16.mxu0 0
        %448 = vmatpush1.bf16.msra.mxu0 %v413
        %449 = vmatprep.subr.bf16.mxu0 0
        %450 = vmatpush1.bf16.msra.mxu0 %v414
        %451 = vmatprep.subr.bf16.mxu0 0
        %452 = vmatpush1.bf16.msra.mxu0 %v415
        %453 = vmatprep.subr.bf16.mxu0 0
        %454 = vmatpush1.bf16.msra.mxu0 %v416
        %455 = vmatprep.subr.bf16.mxu0 0
        %456 = vmatpush1.bf16.msra.mxu0 %v417
        %457 = vmatprep.subr.bf16.mxu0 0
        %458 = vmatpush1.bf16.msra.mxu0 %v418
        %459 = vmatprep.subr.bf16.mxu0 0
        %460 = vmatpush1.bf16.msra.mxu0 %v419
        %461 = vmatprep.subr.bf16.mxu0 0
        %462 = vmatpush1.bf16.msra.mxu0 %v420
        %463 = vmatprep.subr.bf16.mxu0 0
        %464 = vmatpush1.bf16.msra.mxu0 %v421
        %465 = vmatprep.subr.bf16.mxu0 0
        %466 = vmatpush1.bf16.msra.mxu0 %v422
        %467 = vmatprep.subr.bf16.mxu0 0
        %468 = vmatpush1.bf16.msra.mxu0 %v423
        %469 = vmatprep.subr.bf16.mxu0 0
        %470 = vmatpush1.bf16.msra.mxu0 %v424
        %471 = vmatprep.subr.bf16.mxu0 0
        %472 = vmatpush1.bf16.msra.mxu0 %v425
        %473 = vmatprep.subr.bf16.mxu0 0
        %474 = vmatpush1.bf16.msra.mxu0 %v426
        %475 = vmatprep.mubr.bf16.mxu0 %v340
        %476 = vmatmul.mubr.bf16.gmra.mrb[0].mxu0 %v339
        %v477 = vpop.f32.mrb[0].mxu0
        %v478 = vadd.f32 0.0, %v477
        %v479 = vpop.f32.mrb[0].mxu0
        %v480 = vpop.f32.mrb[0].mxu0
        %v481 = vadd.f32 0.0, %v480
        %v482 = vpop.f32.mrb[0].mxu0
        %483 = vmatprep.mubr.bf16.mxu0 %v342
        %484 = vmatmul.mubr.bf16.gmra.mrb[0].mxu0 %v341
        %v485 = vpop.f32.mrb[0].mxu0
        %v486 = vadd.f32 0.0, %v485
        %v487 = vpop.f32.mrb[0].mxu0
        %v488 = vpop.f32.mrb[0].mxu0
        %v489 = vadd.f32 0.0, %v488
        %v490 = vpop.f32.mrb[0].mxu0
        %491 = vdwg.mxu0
        %p492 = scmp.eq.s32.totalorder %s25, 0
        // Predicated region
        $region33: #{generator_forward.11} parent=27 // pred_check
          %p493 = pneg %p492
        $region34: #{generator_forward.11} parent=27 // pred_check_branch
          %495 = sbr.rel (%p493) target = $region36
        $region35: #{generator_forward.11} parent=27 // pred_region
          %496 = vst [vmem:[%s289] sm:$0x3] 0.0
        $region36: #{generator_forward.11} parent=27 // pred_fallthru
          _
        %v497 = vld [vmem:[%s289] sm:$0x3]
        %v498 = vadd.f32 %v478, %v481
        %v499 = vadd.f32 %v498, %v486
        %v500 = vadd.f32 %v499, %v489
        %v501 = vrot.slane %v500, 4
        %v502 = vadd.f32 %v500, %v501
        %v503 = vrot.slane %v502, 2
        %v504 = vadd.f32 %v502, %v503
        %v505 = vrot.slane %v504, 1
        %v506 = vadd.f32 %v504, %v505
        %v507 = vmul.f32 %v478, %v478
        %v508 = vmul.f32 %v481, %v481
        %v509 = vmul.f32 %v486, %v486
        %v510 = vmul.f32 %v489, %v489
        %v511 = vadd.f32 %v507, %v508
        %v512 = vadd.f32 %v511, %v509
        %v513 = vadd.f32 %v512, %v510
        %v514 = vrot.slane %v513, 4
        %v515 = vadd.f32 %v513, %v514
        %v516 = vrot.slane %v515, 2
        %v517 = vadd.f32 %v515, %v516
        %v518 = vrot.slane %v517, 1
        %v519 = vadd.f32 %v517, %v518
        %vm520 = vcmask 1040384
        %v521 = vsel %vm520, %v506, %v519
        %v522 = vadd.f32 %v497, %v521
        %523 = vst [vmem:[%s289] sm:$0x3] %v522
        %v524 = vpack.c.bf16 %v481, %v478
        %v525 = vpack.c.bf16 %v489, %v486
        %v528 = vunpack.c.l.b16 %v524
        %v529 = vunpack.c.h.b16 %v524
        %v530 = vunpack.c.l.b16 %v525
        %v531 = vunpack.c.h.b16 %v525
        %v532 = vpack.c.b16 %v528, %v528
        %v533 = vpack.c.b16 %v529, %v529
        %v534 = vpack.c.b16 %v530, %v530
        %v535 = vpack.c.b16 %v531, %v531
        %540 = vst [vmem:[%s281] sm:$0xf] %v532
        %541 = vst [vmem:[%s281 + $0x4] sm:$0xf] %v533
        %542 = vst [vmem:[%s281 + $0x8] sm:$0xf] %v534
        %543 = vst [vmem:[%s281 + $0xc] sm:$0xf] %v535
        %s544 = smul.u32 4, %s25
        %p545 = scmp.lt.s32.totalorder %s23, 3
        %s546 = scalar_select %p545, %s23, 3
        %p547 = scmp.lt.s32.totalorder %s544, 3
        %s548 = scalar_select %p547, %s544, 3
        %p549 = scmp.lt.s32.totalorder %s24, 0
        %s550 = scalar_select %p549, %s24, 0
        %s551 = sadd.s32 %s550, %s548
        %s552 = smul.addr %s546, 4
        %s553 = sadd.s32 %s551, %s552
        %s554 = smul.addr %s553, 4
        %s555 = scalar_lea.vmem %s2, %s554
        %p556 = scmp.lt.s32.totalorder %s23, 3
        %s557 = scalar_select %p556, %s23, 3
        %p558 = scmp.lt.s32.totalorder %s24, 0
        %s559 = scalar_select %p558, %s24, 0
        %s560 = sadd.s32 %s559, %s557
        %s561 = smul.addr %s560, 2
        %s562 = scalar_lea.vmem %s3, %s561
        // Predicated region
        $region37: #{generator_forward.11} parent=27 // pred_check
          %p563 = pneg %p115
        $region38: #{generator_forward.11} parent=27 // pred_check_branch
          %565 = sbr.rel (%p563) target = $region40
        $region39: #{generator_forward.11} parent=27 // pred_region
          %s566 = smul.u32 4, %s25
        $region40: #{generator_forward.11} parent=27 // pred_fallthru
          _
        // Predicated region
        $region41: #{generator_forward.11} parent=27 // pred_check
          %p567 = pneg %p143
        $region42: #{generator_forward.11} parent=27 // pred_check_branch
          %569 = sbr.rel (%p567) target = $region44
        $region43: #{generator_forward.11} parent=27 // pred_region
          _
        $region44: #{generator_forward.11} parent=27 // pred_fallthru
          _
      $region28: #{generator_forward.11} parent=5 // pred_fallthru
        _
      %p570 = scmp.le.s32.totalorder 2, %s13
      // Predicated region
      $region45: #{generator_forward.11} parent=5 // pred_check
        %p571 = pneg %p570
      $region46: #{generator_forward.11} parent=5 // pred_check_branch
        %573 = sbr.rel (%p571) target = $region48
      $region47: #{generator_forward.11} parent=5 // pred_region
        %s574 = ssub.s32 %s13, 2
        // Predicated region
        $region49: #{generator_forward.11} parent=47 // pred_check
          %p575 = pneg %p121
        $region50: #{generator_forward.11} parent=47 // pred_check_branch
          %577 = sbr.rel (%p575) target = $region52
        $region51: #{generator_forward.11} parent=47 // pred_region
          %s578 = smul.u32 4, %s28
          %p579 = scmp.lt.s32.totalorder %s26, 3
          %s580 = scalar_select %p579, %s26, 3
          %p581 = scmp.lt.s32.totalorder %s578, 3
          %s582 = scalar_select %p581, %s578, 3
          %p583 = scmp.lt.s32.totalorder %s27, 0
          %s584 = scalar_select %p583, %s27, 0
          %s585 = sadd.s32 %s584, %s582
          %s586 = smul.addr %s580, 4
          %s587 = sadd.s32 %s585, %s586
          %s588 = smul.addr %s587, 4
          %s589 = scalar_lea.vmem %s2, %s588
        $region52: #{generator_forward.11} parent=47 // pred_fallthru
          _
        // Predicated region
        $region53: #{generator_forward.11} parent=47 // pred_check
          %p590 = pneg %p149
        $region54: #{generator_forward.11} parent=47 // pred_check_branch
          %592 = sbr.rel (%p590) target = $region56
        $region55: #{generator_forward.11} parent=47 // pred_region
          %p593 = scmp.lt.s32.totalorder %s26, 3
          %s594 = scalar_select %p593, %s26, 3
          %p595 = scmp.lt.s32.totalorder %s27, 0
          %s596 = scalar_select %p595, %s27, 0
          %s597 = sadd.s32 %s596, %s594
          %s598 = smul.addr %s597, 2
          %s599 = scalar_lea.vmem %s3, %s598
        $region56: #{generator_forward.11} parent=47 // pred_fallthru
          _
      $region48: #{generator_forward.11} parent=5 // pred_fallthru
        _
    $region6: #{generator_forward.11} parent=1 // loop_footer
      %s17 = sadd.s32 1, %s13
    $region7: #{generator_forward.11} parent=1 // loop_footer_branch
      %12 = sbr.rel target = $region3
    $region8: #{generator_forward.11} parent=1 // loop_exit
      _
    %600 = vsyncpa [#allocation3], 1
    %s601 = scalar_lea.sflag [#allocation3], 1
    %602 = vsyncpa %s601, 1

// kernel: generator_forward.12
$region0: #{generator_forward.12}
  #allocation0 [shape = 'u32[]', space=smem, size = 0x4, offset = 0x4, fixed_abs, tag = 'smem constant byte address 0x4 - core index']
  #allocation1 [shape = 'u32[144,128]{1,0:T(1,128)}', space=vmem, size = 0x12000, scoped, tag = 'internal scratch']
  %s0 = inlined_call_operand.vmem [shape: bf16[4,32,128], index: 0, kind: input, shape index: {}]
  %s1 = inlined_call_operand.vmem [shape: f32[2,128], index: 1, kind: input, shape index: {}]
  %s2 = inlined_call_operand.vmem [shape: f32[1,128], index: 2, kind: input, shape index: {}]
  %s3 = inlined_call_operand.vmem [shape: f32[1,128], index: 3, kind: input, shape index: {}]
  %s4 = inlined_call_operand.vmem [shape: bf16[4,32,128], index: 4, kind: output, shape index: {}]
  %s5 = sld [smem:[#allocation0]]
  $region49: #{generator_forward.12} parent=0
    _
  %s7 = ssub.s32 1, %s5
  %s8 = scalar_select 0, %s7, %s5
  loop: start=0, step=1, limit=6
  $region2: #{generator_forward.12} parent=0 // loop_pre_header
    _
  $region3: #{generator_forward.12} parent=0 // loop_header
    %s10 = sphi 0, %s14
    %p11 = scmp.ge.s32.totalorder %s10, 6
    %s17 = sphi 0, %s29
    %s18 = sphi 0, %s25
    %s19 = sphi 0, %s17
    %s20 = sphi 0, %s18
    %s21 = sphi 0, %s19
    %s22 = sphi 0, %s20
    %s34 = sphi 0, %s36
    %s37 = sphi 0, %s34
    %s38 = sphi 0, %s37
    %s54 = sphi 0, %s38
    %s58 = sphi 0, %s58
    %s60 = sphi 0, %s58
    %s61 = sphi 0, %s60
    %s75 = sphi 0, %s61
    %s79 = sphi 0, %s79
    %s81 = sphi 0, %s79
    %s82 = sphi 0, %s81
    %s96 = sphi 0, %s82
    %s100 = sphi 0, %s100
    %s102 = sphi 0, %s100
    %s103 = sphi 0, %s102
    %s117 = sphi 0, %s103
    %s125 = sphi 0, %s127
    %s128 = sphi 0, %s125
    %s129 = sphi 0, %s128
    %s145 = sphi 0, %s129
  $region4: #{generator_forward.12} parent=0 // loop_header_branch
    %13 = sbr.rel (%p11) target = $region8
  $region5: #{generator_forward.12} parent=0 // loop_body
    %s15 = ssub.s32 %s10, 1
    %s16 = ssub.s32 %s10, 2
    %s23 = sadd.s32 1, %s18
    %p24 = scmp.ge.s32.totalorder %s23, 1
    %s25 = scalar_select %p24, 0, %s23
    %s26 = sadd.s32 1, %s17
    %s27 = scalar_select %p24, %s26, %s17
    %p28 = scmp.ge.s32.totalorder %s27, 4
    %s29 = scalar_select %p28, 0, %s27
    %s30 = ssub.s32 %s17, %s29
    %s31 = ssub.s32 %s18, %s25
    %s32 = sor.u32 %s30, %s31
    %p33 = scmp.eq.s32.totalorder %s32, 0
    %s35 = sadd.s32 %s34, 1
    %s36 = scalar_select %p33, %s34, %s35
    %p39 = pneg %p33
    %p40 = scmp.eq.s32.totalorder %s10, 3
    %p41 = por %p39, %p40
    %p42 = scmp.ne.s32.totalorder %s34, %s37
    %p43 = scmp.eq.s32.totalorder %s10, 0
    %p44 = por %p42, %p43
    %p45 = scmp.ne.s32.totalorder %s34, %s37
    %p46 = scmp.eq.s32.totalorder %s15, 3
    %p47 = por %p45, %p46
    %p48 = scmp.ne.s32.totalorder %s37, %s38
    %p49 = scmp.eq.s32.totalorder %s15, 0
    %p50 = por %p48, %p49
    %p51 = scmp.ne.s32.totalorder %s37, %s38
    %p52 = scmp.eq.s32.totalorder %s16, 3
    %p53 = por %p51, %p52
    %p55 = scmp.ne.s32.totalorder %s38, %s54
    %p56 = scmp.eq.s32.totalorder %s16, 0
    %p57 = por %p55, %p56
    %s59 = sadd.s32 %s58, 1
    %p62 = scmp.eq.s32.totalorder %s10, 3
    %p63 = scmp.ne.s32.totalorder %s58, %s60
    %p64 = scmp.eq.s32.totalorder %s10, 0
    %p65 = por %p63, %p64
    %p66 = scmp.ne.s32.totalorder %s58, %s60
    %p67 = scmp.eq.s32.totalorder %s15, 3
    %p68 = por %p66, %p67
    %p69 = scmp.ne.s32.totalorder %s60, %s61
    %p70 = scmp.eq.s32.totalorder %s15, 0
    %p71 = por %p69, %p70
    %p72 = scmp.ne.s32.totalorder %s60, %s61
    %p73 = scmp.eq.s32.totalorder %s16, 3
    %p74 = por %p72, %p73
    %p76 = scmp.ne.s32.totalorder %s61, %s75
    %p77 = scmp.eq.s32.totalorder %s16, 0
    %p78 = por %p76, %p77
    %s80 = sadd.s32 %s79, 1
    %p83 = scmp.eq.s32.totalorder %s10, 3
    %p84 = scmp.ne.s32.totalorder %s79, %s81
    %p85 = scmp.eq.s32.totalorder %s10, 0
    %p86 = por %p84, %p85
    %p87 = scmp.ne.s32.totalorder %s79, %s81
    %p88 = scmp.eq.s32.totalorder %s15, 3
    %p89 = por %p87, %p88
    %p90 = scmp.ne.s32.totalorder %s81, %s82
    %p91 = scmp.eq.s32.totalorder %s15, 0
    %p92 = por %p90, %p91
    %p93 = scmp.ne.s32.totalorder %s81, %s82
    %p94 = scmp.eq.s32.totalorder %s16, 3
    %p95 = por %p93, %p94
    %p97 = scmp.ne.s32.totalorder %s82, %s96
    %p98 = scmp.eq.s32.totalorder %s16, 0
    %p99 = por %p97, %p98
    %s101 = sadd.s32 %s100, 1
    %p104 = scmp.eq.s32.totalorder %s10, 3
    %p105 = scmp.ne.s32.totalorder %s100, %s102
    %p106 = scmp.eq.s32.totalorder %s10, 0
    %p107 = por %p105, %p106
    %p108 = scmp.ne.s32.totalorder %s100, %s102
    %p109 = scmp.eq.s32.totalorder %s15, 3
    %p110 = por %p108, %p109
    %p111 = scmp.ne.s32.totalorder %s102, %s103
    %p112 = scmp.eq.s32.totalorder %s15, 0
    %p113 = por %p111, %p112
    %p114 = scmp.ne.s32.totalorder %s102, %s103
    %p115 = scmp.eq.s32.totalorder %s16, 3
    %p116 = por %p114, %p115
    %p118 = scmp.ne.s32.totalorder %s103, %s117
    %p119 = scmp.eq.s32.totalorder %s16, 0
    %p120 = por %p118, %p119
    %s121 = ssub.s32 %s17, %s29
    %s122 = ssub.s32 %s18, %s25
    %s123 = sor.u32 %s121, %s122
    %p124 = scmp.eq.s32.totalorder %s123, 0
    %s126 = sadd.s32 %s125, 1
    %s127 = scalar_select %p124, %s125, %s126
    %p130 = pneg %p124
    %p131 = scmp.eq.s32.totalorder %s10, 3
    %p132 = por %p130, %p131
    %p133 = scmp.ne.s32.totalorder %s125, %s128
    %p134 = scmp.eq.s32.totalorder %s10, 0
    %p135 = por %p133, %p134
    %p136 = scmp.ne.s32.totalorder %s125, %s128
    %p137 = scmp.eq.s32.totalorder %s15, 3
    %p138 = por %p136, %p137
    %p139 = scmp.ne.s32.totalorder %s128, %s129
    %p140 = scmp.eq.s32.totalorder %s15, 0
    %p141 = por %p139, %p140
    %p142 = scmp.ne.s32.totalorder %s128, %s129
    %p143 = scmp.eq.s32.totalorder %s16, 3
    %p144 = por %p142, %p143
    %p146 = scmp.ne.s32.totalorder %s129, %s145
    %p147 = scmp.eq.s32.totalorder %s16, 0
    %p148 = por %p146, %p147
    %p149 = scmp.le.s32.totalorder 1, %s10
    %p150 = scmp.lt.s32.totalorder %s10, 5
    %p151 = pnand %p149, %p150
    %p152 = pneg %p151
    // Predicated region
    $region9: #{generator_forward.12} parent=5 // pred_check
      _
    $region10: #{generator_forward.12} parent=5 // pred_check_branch
      %154 = sbr.rel (%p151) target = $region12
    $region11: #{generator_forward.12} parent=5 // pred_region
      %s155 = ssub.s32 %s10, 1
      // Predicated region
      $region13: #{generator_forward.12} parent=11 // pred_check
        %p156 = pneg %p71
      $region14: #{generator_forward.12} parent=11 // pred_check_branch
        %158 = sbr.rel (%p156) target = $region16
      $region15: #{generator_forward.12} parent=11 // pred_region
        _
      $region16: #{generator_forward.12} parent=11 // pred_fallthru
        _
      // Predicated region
      $region17: #{generator_forward.12} parent=11 // pred_check
        %p159 = pneg %p92
      $region18: #{generator_forward.12} parent=11 // pred_check_branch
        %161 = sbr.rel (%p159) target = $region20
      $region19: #{generator_forward.12} parent=11 // pred_region
        _
      $region20: #{generator_forward.12} parent=11 // pred_fallthru
        _
      // Predicated region
      $region21: #{generator_forward.12} parent=11 // pred_check
        %p162 = pneg %p113
      $region22: #{generator_forward.12} parent=11 // pred_check_branch
        %164 = sbr.rel (%p162) target = $region24
      $region23: #{generator_forward.12} parent=11 // pred_region
        _
      $region24: #{generator_forward.12} parent=11 // pred_fallthru
        _
    $region12: #{generator_forward.12} parent=5 // pred_fallthru
      _
    %p165 = scmp.lt.s32.totalorder %s10, 4
    // Predicated region
    $region25: #{generator_forward.12} parent=5 // pred_check
      %p166 = pneg %p165
    $region26: #{generator_forward.12} parent=5 // pred_check_branch
      %168 = sbr.rel (%p166) target = $region28
    $region27: #{generator_forward.12} parent=5 // pred_region
      // Predicated region
      $region29: #{generator_forward.12} parent=27 // pred_check
        %p169 = pneg %p44
      $region30: #{generator_forward.12} parent=27 // pred_check_branch
        %171 = sbr.rel (%p169) target = $region32
      $region31: #{generator_forward.12} parent=27 // pred_region
        %s172 = smul.u32 4, %s18
        %p173 = scmp.lt.s32.totalorder %s17, 3
        %s174 = scalar_select %p173, %s17, 3
        %p175 = scmp.lt.s32.totalorder %s172, 3
        %s176 = scalar_select %p175, %s172, 3
        %s177 = smul.addr %s174, 4
        %s178 = sadd.s32 %s176, %s177
        %s179 = smul.addr %s178, 4
        %s180 = scalar_lea.vmem %s0, %s179
        %s181 = smul.u32 4, %s18
      $region32: #{generator_forward.12} parent=27 // pred_fallthru
        _
    $region28: #{generator_forward.12} parent=5 // pred_fallthru
      _
    %p182 = scmp.le.s32.totalorder 1, %s10
    %p183 = scmp.lt.s32.totalorder %s10, 5
    %p184 = pnand %p182, %p183
    %p185 = pneg %p184
    // Predicated region
    $region33: #{generator_forward.12} parent=5 // pred_check
      _
    $region34: #{generator_forward.12} parent=5 // pred_check_branch
      %187 = sbr.rel (%p184) target = $region36
    $region35: #{generator_forward.12} parent=5 // pred_region
      %s188 = ssub.s32 %s10, 1
      %s189 = smul.u32 4, %s20
      %p190 = scmp.lt.s32.totalorder %s19, 3
      %s191 = scalar_select %p190, %s19, 3
      %p192 = scmp.lt.s32.totalorder %s189, 3
      %s193 = scalar_select %p192, %s189, 3
      %s194 = smul.addr %s191, 4
      %s195 = sadd.s32 %s193, %s194
      %s196 = smul.addr %s195, 4
      %s197 = scalar_lea.vmem %s0, %s196
      %p198 = pneg %p50
      %p199 = pneg %p47
      %p200 = pneg %p71
      %p201 = pneg %p68
      %p202 = pneg %p92
      %p203 = pneg %p89
      %p204 = pneg %p113
      %p205 = pneg %p110
      %p206 = pneg %p141
      %p207 = pneg %p138
      %s208 = smul.u32 4, %s20
      %p209 = scmp.lt.s32.totalorder %s19, 3
      %s210 = scalar_select %p209, %s19, 3
      %p211 = scmp.lt.s32.totalorder %s208, 3
      %s212 = scalar_select %p211, %s208, 3
      %s213 = smul.addr %s210, 4
      %s214 = sadd.s32 %s212, %s213
      %s215 = smul.addr %s214, 4
      %s216 = scalar_lea.vmem %s4, %s215
      %s217 = smul.u32 4, %s20
      %p218 = scmp.lt.s32.totalorder %s19, 3
      %s219 = scalar_select %p218, %s19, 3
      %p220 = scmp.lt.s32.totalorder %s217, 3
      %s221 = scalar_select %p220, %s217, 3
      %s222 = smul.addr %s219, 4
      %s223 = sadd.s32 %s221, %s222
      %s224 = smul.addr %s223, 4
      %s225 = scalar_lea.vmem %s0, %s224
      %s226 = smul.u32 4, %s20
      %s227 = smul.u32 4, %s20
      %p228 = scmp.lt.s32.totalorder %s19, 3
      %s229 = scalar_select %p228, %s19, 3
      %p230 = scmp.lt.s32.totalorder %s227, 3
      %s231 = scalar_select %p230, %s227, 3
      %s232 = smul.addr %s229, 4
      %s233 = sadd.s32 %s231, %s232
      %s234 = smul.addr %s233, 4
      %s235 = scalar_lea.vmem %s4, %s234
      %s236 = smul.u32 4, %s20
      %v237 = vld [vmem:[%s225] sm:$0xf]
      %v238 = vld [vmem:[%s225 + $0x4] sm:$0xf]
      %v239 = vld [vmem:[%s225 + $0x8] sm:$0xf]
      %v240 = vld [vmem:[%s225 + $0xc] sm:$0xf]
      %v241 = vunpack.c.l.bf16 %v237
      %v242 = vunpack.c.l.bf16 %v238
      %v243 = vunpack.c.l.bf16 %v239
      %v244 = vunpack.c.l.bf16 %v240
      %v245 = vld [vmem:[%s1] sm:$0x3]
      %v246 = vmul.f32 %v245, 0.0078125
      %v247 = vmul.f32 %v246, %v246
      %v249 = vrot.slane %v247, 7
      %v251 = vsub.f32 %v246, %v249
      %v252 = vmax.f32 %v251, 0.0
      %v253 = vadd.f32 %v252, 1e-05
      %v254 = vrsqrt.pop %v253
      %v255 = vld [vmem:[%s2] sm:$0x1]
      %v257 = vlaneseq
      %v258 = vshrl.u32 %v257, 7
      %v259 = vsub.s32 0, %v258
      %v260 = vrot.slane %v255, %v259
      %v262 = vmul.f32 %v254, %v260
      %v263 = vld [vmem:[%s3] sm:$0x1]
      %v265 = vrot.slane %v262, 1
      %v267 = vmul.f32 %v246, %v265
      %v268 = vsub.f32 %v263, %v267
      %v269 = vlaneseq
      %v270 = vshrl.u32 %v269, 7
      %v271 = vsub.s32 1, %v270
      %v272 = vrot.slane %v262, %v271
      %v273 = vmul.f32 %v241, %v272
      %v274 = vmul.f32 %v242, %v272
      %v275 = vmul.f32 %v243, %v272
      %v276 = vmul.f32 %v244, %v272
      %v278 = vlaneseq
      %v279 = vshrl.u32 %v278, 7
      %v280 = vsub.s32 0, %v279
      %v281 = vrot.slane %v268, %v280
      %v283 = vadd.f32 %v273, %v281
      %v284 = vadd.f32 %v274, %v281
      %v285 = vadd.f32 %v275, %v281
      %v286 = vadd.f32 %v276, %v281
      %v287 = vmax.f32 %v283, 0.0
      %v288 = vmax.f32 %v284, 0.0
      %v289 = vmax.f32 %v285, 0.0
      %v290 = vmax.f32 %v286, 0.0
      %v291 = vpack.c.bf16 %v288, %v287
      %v292 = vpack.c.bf16 %v290, %v289
      %v295 = vunpack.c.l.b16 %v291
      %v296 = vunpack.c.h.b16 %v291
      %v297 = vunpack.c.l.b16 %v292
      %v298 = vunpack.c.h.b16 %v292
      %v299 = vpack.c.b16 %v295, %v295
      %v300 = vpack.c.b16 %v296, %v296
      %v301 = vpack.c.b16 %v297, %v297
      %v302 = vpack.c.b16 %v298, %v298
      %307 = vst [vmem:[%s235] sm:$0xf] %v299
      %308 = vst [vmem:[%s235 + $0x4] sm:$0xf] %v300
      %309 = vst [vmem:[%s235 + $0x8] sm:$0xf] %v301
      %310 = vst [vmem:[%s235 + $0xc] sm:$0xf] %v302
      %s311 = smul.u32 4, %s20
      %p312 = scmp.lt.s32.totalorder %s19, 3
      %s313 = scalar_select %p312, %s19, 3
      %p314 = scmp.lt.s32.totalorder %s311, 3
      %s315 = scalar_select %p314, %s311, 3
      %s316 = smul.addr %s313, 4
      %s317 = sadd.s32 %s315, %s316
      %s318 = smul.addr %s317, 4
      %s319 = scalar_lea.vmem %s4, %s318
      // Predicated region
      $region37: #{generator_forward.12} parent=35 // pred_check
        %p320 = pneg %p138
      $region38: #{generator_forward.12} parent=35 // pred_check_branch
        %322 = sbr.rel (%p320) target = $region40
      $region39: #{generator_forward.12} parent=35 // pred_region
        %s323 = smul.u32 4, %s20
      $region40: #{generator_forward.12} parent=35 // pred_fallthru
        _
    $region36: #{generator_forward.12} parent=5 // pred_fallthru
      _
    %p324 = scmp.le.s32.totalorder 2, %s10
    // Predicated region
    $region41: #{generator_forward.12} parent=5 // pred_check
      %p325 = pneg %p324
    $region42: #{generator_forward.12} parent=5 // pred_check_branch
      %327 = sbr.rel (%p325) target = $region44
    $region43: #{generator_forward.12} parent=5 // pred_region
      %s328 = ssub.s32 %s10, 2
      // Predicated region
      $region45: #{generator_forward.12} parent=43 // pred_check
        %p329 = pneg %p144
      $region46: #{generator_forward.12} parent=43 // pred_check_branch
        %331 = sbr.rel (%p329) target = $region48
      $region47: #{generator_forward.12} parent=43 // pred_region
        %s332 = smul.u32 4, %s22
        %p333 = scmp.lt.s32.totalorder %s21, 3
        %s334 = scalar_select %p333, %s21, 3
        %p335 = scmp.lt.s32.totalorder %s332, 3
        %s336 = scalar_select %p335, %s332, 3
        %s337 = smul.addr %s334, 4
        %s338 = sadd.s32 %s336, %s337
        %s339 = smul.addr %s338, 4
        %s340 = scalar_lea.vmem %s4, %s339
      $region48: #{generator_forward.12} parent=43 // pred_fallthru
        _
    $region44: #{generator_forward.12} parent=5 // pred_fallthru
      _
  $region6: #{generator_forward.12} parent=0 // loop_footer
    %s14 = sadd.s32 1, %s10
  $region7: #{generator_forward.12} parent=0 // loop_footer_branch
    %9 = sbr.rel target = $region3
  $region8: #{generator_forward.12} parent=0 // loop_exit
    _

// kernel: generator_forward.13
$region0: #{generator_forward.13}
  #allocation0 [shape = 'u32[]', space=smem, size = 0x4, offset = 0x4, fixed_abs, tag = 'smem constant byte address 0x4 - core index']
  #allocation1 [shape = 'u32[144,128]{1,0:T(1,128)}', space=vmem, size = 0x12000, scoped, tag = 'internal scratch']
  %s0 = inlined_call_operand.vmem [shape: bf16[4,128,128], index: 0, kind: input, shape index: {}]
  %s1 = inlined_call_operand.hbm [shape: bf16[4,128,128], index: 1, kind: input, shape index: {}]
  %s2 = inlined_call_operand.vmem [shape: bf16[4,128,128], index: 2, kind: output, shape index: {0}]
  %s3 = inlined_call_operand.vmem [shape: f32[4,2,128], index: 3, kind: output, shape index: {1}]
  %4 = xla_tuple %s2, %s3
  %s5 = sld [smem:[#allocation0]]
  $region57: #{generator_forward.13} parent=0
    _
  %s7 = ssub.s32 1, %s5
  %s8 = scalar_select 0, %s7, %s5
  $region1: #{generator_forward.13} parent=0
    #allocation2 [shape = 'u8[65536]{0}', space=vmem, size = 0x10000, scoped, tag = 'input window, operand 1']
    #allocation3 [shape = 's32[2]{0}', space=sflag, size = 0x8, scoped, tag = 'scoped memory for generator_forward.13']
    %9 = vsyncpa [#allocation3], 0
    %s10 = scalar_lea.sflag [#allocation3], 1
    %11 = vsyncpa %s10, 0
    loop: start=0, step=1, limit=6
    $region2: #{generator_forward.13} parent=1 // loop_pre_header
      _
    $region3: #{generator_forward.13} parent=1 // loop_header
      %s13 = sphi 0, %s17
      %p14 = scmp.ge.s32.totalorder %s13, 6
      %s20 = sphi 0, %s39
      %s21 = sphi 0, %s35
      %s22 = sphi 0, %s31
      %s23 = sphi 0, %s20
      %s24 = sphi 0, %s21
      %s25 = sphi 0, %s22
      %s26 = sphi 0, %s23
      %s27 = sphi 0, %s24
      %s28 = sphi 0, %s25
      %s44 = sphi 0, %s46
      %s47 = sphi 0, %s44
      %s48 = sphi 0, %s47
      %s64 = sphi 0, %s48
      %s72 = sphi 0, %s74
      %s75 = sphi 0, %s72
      %s76 = sphi 0, %s75
      %s92 = sphi 0, %s76
      %s102 = sphi 0, %s104
      %s105 = sphi 0, %s102
      %s106 = sphi 0, %s105
      %s122 = sphi 0, %s106
      %s130 = sphi 0, %s132
      %s133 = sphi 0, %s130
      %s134 = sphi 0, %s133
      %s150 = sphi 0, %s134
    $region4: #{generator_forward.13} parent=1 // loop_header_branch
      %16 = sbr.rel (%p14) target = $region8
    $region5: #{generator_forward.13} parent=1 // loop_body
      %s18 = ssub.s32 %s13, 1
      %s19 = ssub.s32 %s13, 2
      %s29 = sadd.s32 1, %s22
      %p30 = scmp.ge.s32.totalorder %s29, 1
      %s31 = scalar_select %p30, 0, %s29
      %s32 = sadd.s32 1, %s21
      %s33 = scalar_select %p30, %s32, %s21
      %p34 = scmp.ge.s32.totalorder %s33, 1
      %s35 = scalar_select %p34, 0, %s33
      %s36 = sadd.s32 1, %s20
      %s37 = scalar_select %p34, %s36, %s20
      %p38 = scmp.ge.s32.totalorder %s37, 4
      %s39 = scalar_select %p38, 0, %s37
      %s40 = ssub.s32 %s20, %s39
      %s41 = ssub.s32 %s22, %s31
      %s42 = sor.u32 %s40, %s41
      %p43 = scmp.eq.s32.totalorder %s42, 0
      %s45 = sadd.s32 %s44, 1
      %s46 = scalar_select %p43, %s44, %s45
      %p49 = pneg %p43
      %p50 = scmp.eq.s32.totalorder %s13, 3
      %p51 = por %p49, %p50
      %p52 = scmp.ne.s32.totalorder %s44, %s47
      %p53 = scmp.eq.s32.totalorder %s13, 0
      %p54 = por %p52, %p53
      %p55 = scmp.ne.s32.totalorder %s44, %s47
      %p56 = scmp.eq.s32.totalorder %s18, 3
      %p57 = por %p55, %p56
      %p58 = scmp.ne.s32.totalorder %s47, %s48
      %p59 = scmp.eq.s32.totalorder %s18, 0
      %p60 = por %p58, %p59
      %p61 = scmp.ne.s32.totalorder %s47, %s48
      %p62 = scmp.eq.s32.totalorder %s19, 3
      %p63 = por %p61, %p62
      %p65 = scmp.ne.s32.totalorder %s48, %s64
      %p66 = scmp.eq.s32.totalorder %s19, 0
      %p67 = por %p65, %p66
      %s68 = ssub.s32 %s20, %s39
      %s69 = ssub.s32 %s21, %s35
      %s70 = sor.u32 %s68, %s69
      %p71 = scmp.eq.s32.totalorder %s70, 0
      %s73 = sadd.s32 %s72, 1
      %s74 = scalar_select %p71, %s72, %s73
      %p77 = pneg %p71
      %p78 = scmp.eq.s32.totalorder %s13, 3
      %p79 = por %p77, %p78
      %p80 = scmp.ne.s32.totalorder %s72, %s75
      %p81 = scmp.eq.s32.totalorder %s13, 0
      %p82 = por %p80, %p81
      %p83 = scmp.ne.s32.totalorder %s72, %s75
      %p84 = scmp.eq.s32.totalorder %s18, 3
      %p85 = por %p83, %p84
      %p86 = scmp.ne.s32.totalorder %s75, %s76
      %p87 = scmp.eq.s32.totalorder %s18, 0
      %p88 = por %p86, %p87
      %p89 = scmp.ne.s32.totalorder %s75, %s76
      %p90 = scmp.eq.s32.totalorder %s19, 3
      %p91 = por %p89, %p90
      %p93 = scmp.ne.s32.totalorder %s76, %s92
      %p94 = scmp.eq.s32.totalorder %s19, 0
      %p95 = por %p93, %p94
      %s96 = ssub.s32 %s20, %s39
      %s97 = ssub.s32 %s22, %s31
      %s98 = sor.u32 %s96, %s97
      %s99 = ssub.s32 %s21, %s35
      %s100 = sor.u32 %s98, %s99
      %p101 = scmp.eq.s32.totalorder %s100, 0
      %s103 = sadd.s32 %s102, 1
      %s104 = scalar_select %p101, %s102, %s103
      %p107 = pneg %p101
      %p108 = scmp.eq.s32.totalorder %s13, 3
      %p109 = por %p107, %p108
      %p110 = scmp.ne.s32.totalorder %s102, %s105
      %p111 = scmp.eq.s32.totalorder %s13, 0
      %p112 = por %p110, %p111
      %p113 = scmp.ne.s32.totalorder %s102, %s105
      %p114 = scmp.eq.s32.totalorder %s18, 3
      %p115 = por %p113, %p114
      %p116 = scmp.ne.s32.totalorder %s105, %s106
      %p117 = scmp.eq.s32.totalorder %s18, 0
      %p118 = por %p116, %p117
      %p119 = scmp.ne.s32.totalorder %s105, %s106
      %p120 = scmp.eq.s32.totalorder %s19, 3
      %p121 = por %p119, %p120
      %p123 = scmp.ne.s32.totalorder %s106, %s122
      %p124 = scmp.eq.s32.totalorder %s19, 0
      %p125 = por %p123, %p124
      %s126 = ssub.s32 %s20, %s39
      %s127 = ssub.s32 %s21, %s35
      %s128 = sor.u32 %s126, %s127
      %p129 = scmp.eq.s32.totalorder %s128, 0
      %s131 = sadd.s32 %s130, 1
      %s132 = scalar_select %p129, %s130, %s131
      %p135 = pneg %p129
      %p136 = scmp.eq.s32.totalorder %s13, 3
      %p137 = por %p135, %p136
      %p138 = scmp.ne.s32.totalorder %s130, %s133
      %p139 = scmp.eq.s32.totalorder %s13, 0
      %p140 = por %p138, %p139
      %p141 = scmp.ne.s32.totalorder %s130, %s133
      %p142 = scmp.eq.s32.totalorder %s18, 3
      %p143 = por %p141, %p142
      %p144 = scmp.ne.s32.totalorder %s133, %s134
      %p145 = scmp.eq.s32.totalorder %s18, 0
      %p146 = por %p144, %p145
      %p147 = scmp.ne.s32.totalorder %s133, %s134
      %p148 = scmp.eq.s32.totalorder %s19, 3
      %p149 = por %p147, %p148
      %p151 = scmp.ne.s32.totalorder %s134, %s150
      %p152 = scmp.eq.s32.totalorder %s19, 0
      %p153 = por %p151, %p152
      %p154 = scmp.le.s32.totalorder 1, %s13
      %p155 = scmp.lt.s32.totalorder %s13, 5
      %p156 = pnand %p154, %p155
      %p157 = pneg %p156
      // Predicated region
      $region9: #{generator_forward.13} parent=5 // pred_check
        _
      $region10: #{generator_forward.13} parent=5 // pred_check_branch
        %159 = sbr.rel (%p156) target = $region12
      $region11: #{generator_forward.13} parent=5 // pred_region
        %s160 = ssub.s32 %s13, 1
      $region12: #{generator_forward.13} parent=5 // pred_fallthru
        _
      %p161 = scmp.lt.s32.totalorder %s13, 4
      // Predicated region
      $region13: #{generator_forward.13} parent=5 // pred_check
        %p162 = pneg %p161
      $region14: #{generator_forward.13} parent=5 // pred_check_branch
        %164 = sbr.rel (%p162) target = $region16
      $region15: #{generator_forward.13} parent=5 // pred_region
        // Predicated region
        $region17: #{generator_forward.13} parent=15 // pred_check
          %p165 = pneg %p54
        $region18: #{generator_forward.13} parent=15 // pred_check_branch
          %167 = sbr.rel (%p165) target = $region20
        $region19: #{generator_forward.13} parent=15 // pred_region
          %s168 = smul.u32 16, %s22
          %p169 = scmp.lt.s32.totalorder %s20, 3
          %s170 = scalar_select %p169, %s20, 3
          %p171 = scmp.lt.s32.totalorder %s168, 15
          %s172 = scalar_select %p171, %s168, 15
          %s173 = smul.addr %s170, 16
          %s174 = sadd.s32 %s172, %s173
          %s175 = smul.addr %s174, 4
          %s176 = scalar_lea.vmem %s0, %s175
          %s177 = smul.u32 16, %s22
        $region20: #{generator_forward.13} parent=15 // pred_fallthru
          _
        // Predicated region
        $region21: #{generator_forward.13} parent=15 // pred_check
          %p178 = pneg %p82
        $region22: #{generator_forward.13} parent=15 // pred_check_branch
          %180 = sbr.rel (%p178) target = $region24
        $region23: #{generator_forward.13} parent=15 // pred_region
          %s181 = sand.u32 %s72, 1
          %s182 = scalar_lea.sflag [#allocation3], %s181
          %s183 = sand.u32 %s72, 1
          %s184 = smul.addr %s183, 64
          %s185 = scalar_lea.vmem [#allocation2], %s184
          %s187 = ssub.s32 1024, 1024
          %188 = vsyncadd %s182, %s187
          %s189 = smul.addr %s20, 16
          %s190 = sadd.s32 %s21, %s189
          %s191 = smul.addr %s190, 64
          %s192 = scalar_lea.hbm %s1, %s191
          %s193 = sshll.u32 %s185, 4
          %s194 = int_to_ptr.vmem [resolvable:$true] %s193
          %199 = dma.hbm_to_vmem [thread:$0]  %s192, 1024, %s194, %s182, 64, 64, 4
        $region24: #{generator_forward.13} parent=15 // pred_fallthru
          _
      $region16: #{generator_forward.13} parent=5 // pred_fallthru
        _
      %p200 = scmp.le.s32.totalorder 1, %s13
      %p201 = scmp.lt.s32.totalorder %s13, 5
      %p202 = pnand %p200, %p201
      %p203 = pneg %p202
      // Predicated region
      $region25: #{generator_forward.13} parent=5 // pred_check
        _
      $region26: #{generator_forward.13} parent=5 // pred_check_branch
        %205 = sbr.rel (%p202) target = $region28
      $region27: #{generator_forward.13} parent=5 // pred_region
        %s206 = ssub.s32 %s13, 1
        %s207 = sand.u32 %s75, 1
        %s208 = scalar_lea.sflag [#allocation3], %s207
        %s209 = sand.u32 %s75, 1
        %s210 = smul.addr %s209, 64
        %s211 = scalar_lea.vmem [#allocation2], %s210
        // Predicated region
        $region29: #{generator_forward.13} parent=27 // pred_check
          %p212 = pneg %p88
        $region30: #{generator_forward.13} parent=27 // pred_check_branch
          %214 = sbr.rel (%p212) target = $region32
        $region31: #{generator_forward.13} parent=27 // pred_region
          %215 = dma.done %s208, 1024
        $region32: #{generator_forward.13} parent=27 // pred_fallthru
          _
        %s216 = smul.u32 16, %s25
        %p217 = scmp.lt.s32.totalorder %s23, 3
        %s218 = scalar_select %p217, %s23, 3
        %p219 = scmp.lt.s32.totalorder %s216, 15
        %s220 = scalar_select %p219, %s216, 15
        %s221 = smul.addr %s218, 16
        %s222 = sadd.s32 %s220, %s221
        %s223 = smul.addr %s222, 4
        %s224 = scalar_lea.vmem %s0, %s223
        %p225 = pneg %p60
        %p226 = pneg %p57
        %s227 = sand.u32 %s75, 1
        %s228 = scalar_lea.sflag [#allocation3], %s227
        %s229 = sand.u32 %s75, 1
        %s230 = smul.addr %s229, 64
        %s231 = scalar_lea.vmem [#allocation2], %s230
        %p232 = pneg %p88
        %p233 = pneg %p85
        %p234 = pneg %p118
        %p235 = pneg %p115
        %s236 = smul.u32 16, %s25
        %p237 = scmp.lt.s32.totalorder %s23, 3
        %s238 = scalar_select %p237, %s23, 3
        %p239 = scmp.lt.s32.totalorder %s236, 15
        %s240 = scalar_select %p239, %s236, 15
        %p241 = scmp.lt.s32.totalorder %s24, 0
        %s242 = scalar_select %p241, %s24, 0
        %s243 = sadd.s32 %s242, %s240
        %s244 = smul.addr %s238, 16
        %s245 = sadd.s32 %s243, %s244
        %s246 = smul.addr %s245, 4
        %s247 = scalar_lea.vmem %s2, %s246
        %p248 = pneg %p146
        %p249 = pneg %p143
        %p250 = scmp.lt.s32.totalorder %s23, 3
        %s251 = scalar_select %p250, %s23, 3
        %p252 = scmp.lt.s32.totalorder %s24, 0
        %s253 = scalar_select %p252, %s24, 0
        %s254 = sadd.s32 %s253, %s251
        %s255 = smul.addr %s254, 2
        %s256 = scalar_lea.vmem %s3, %s255
        %s257 = smul.u32 16, %s25
        %p258 = scmp.lt.s32.totalorder %s23, 3
        %s259 = scalar_select %p258, %s23, 3
        %p260 = scmp.lt.s32.totalorder %s257, 15
        %s261 = scalar_select %p260, %s257, 15
        %s262 = smul.addr %s259, 16
        %s263 = sadd.s32 %s261, %s262
        %s264 = smul.addr %s263, 4
        %s265 = scalar_lea.vmem %s0, %s264
        %s266 = smul.u32 16, %s25
        %s267 = smul.u32 16, %s25
        %p268 = scmp.lt.s32.totalorder %s23, 3
        %s269 = scalar_select %p268, %s23, 3
        %p270 = scmp.lt.s32.totalorder %s267, 15
        %s271 = scalar_select %p270, %s267, 15
        %p272 = scmp.lt.s32.totalorder %s24, 0
        %s273 = scalar_select %p272, %s24, 0
        %s274 = sadd.s32 %s273, %s271
        %s275 = smul.addr %s269, 16
        %s276 = sadd.s32 %s274, %s275
        %s277 = smul.addr %s276, 4
        %s278 = scalar_lea.vmem %s2, %s277
        %s279 = smul.u32 16, %s25
        %p280 = scmp.lt.s32.totalorder %s23, 3
        %s281 = scalar_select %p280, %s23, 3
        %p282 = scmp.lt.s32.totalorder %s24, 0
        %s283 = scalar_select %p282, %s24, 0
        %s284 = sadd.s32 %s283, %s281
        %s285 = smul.addr %s284, 2
        %s286 = scalar_lea.vmem %s3, %s285
        %v288 = vld [vmem:[%s265] sm:$0xf]
        %v289 = vld [vmem:[%s265 + $0x4] sm:$0xf]
        %v290 = vld [vmem:[%s265 + $0x8] sm:$0xf]
        %v291 = vld [vmem:[%s265 + $0xc] sm:$0xf]
        %v292 = vld [vmem:[%s265 + $0x10] sm:$0xf]
        %v293 = vld [vmem:[%s265 + $0x14] sm:$0xf]
        %v294 = vld [vmem:[%s265 + $0x18] sm:$0xf]
        %v295 = vld [vmem:[%s265 + $0x1c] sm:$0xf]
        %v296 = vld [vmem:[%s265 + $0x20] sm:$0xf]
        %v297 = vld [vmem:[%s265 + $0x24] sm:$0xf]
        %v298 = vld [vmem:[%s265 + $0x28] sm:$0xf]
        %v299 = vld [vmem:[%s265 + $0x2c] sm:$0xf]
        %v300 = vld [vmem:[%s265 + $0x30] sm:$0xf]
        %v301 = vld [vmem:[%s265 + $0x34] sm:$0xf]
        %v302 = vld [vmem:[%s265 + $0x38] sm:$0xf]
        %v303 = vld [vmem:[%s265 + $0x3c] sm:$0xf]
        %v304 = vld [vmem:[%s211] sm:$0xf]
        %v305 = vld [vmem:[%s211 + $0x4] sm:$0xf]
        %v306 = vld [vmem:[%s211 + $0x8] sm:$0xf]
        %v307 = vld [vmem:[%s211 + $0xc] sm:$0xf]
        %v308 = vld [vmem:[%s211 + $0x10] sm:$0xf]
        %v309 = vld [vmem:[%s211 + $0x14] sm:$0xf]
        %v310 = vld [vmem:[%s211 + $0x18] sm:$0xf]
        %v311 = vld [vmem:[%s211 + $0x1c] sm:$0xf]
        %v312 = vld [vmem:[%s211 + $0x20] sm:$0xf]
        %v313 = vld [vmem:[%s211 + $0x24] sm:$0xf]
        %v314 = vld [vmem:[%s211 + $0x28] sm:$0xf]
        %v315 = vld [vmem:[%s211 + $0x2c] sm:$0xf]
        %v316 = vld [vmem:[%s211 + $0x30] sm:$0xf]
        %v317 = vld [vmem:[%s211 + $0x34] sm:$0xf]
        %v318 = vld [vmem:[%s211 + $0x38] sm:$0xf]
        %v319 = vld [vmem:[%s211 + $0x3c] sm:$0xf]
        %v336 = vunpack.c.l.b16 %v288
        %v337 = vunpack.c.l.b16 %v289
        %v338 = vunpack.c.l.b16 %v290
        %v339 = vunpack.c.l.b16 %v291
        %v340 = vunpack.c.l.b16 %v292
        %v341 = vunpack.c.l.b16 %v293
        %v342 = vunpack.c.l.b16 %v294
        %v343 = vunpack.c.l.b16 %v295
        %v344 = vunpack.c.l.b16 %v296
        %v345 = vunpack.c.l.b16 %v297
        %v346 = vunpack.c.l.b16 %v298
        %v347 = vunpack.c.l.b16 %v299
        %v348 = vunpack.c.l.b16 %v300
        %v349 = vunpack.c.l.b16 %v301
        %v350 = vunpack.c.l.b16 %v302
        %v351 = vunpack.c.l.b16 %v303
        %v352 = vpack.c.b16 %v337, %v336
        %v353 = vpack.c.b16 %v339, %v338
        %v354 = vpack.c.b16 %v341, %v340
        %v355 = vpack.c.b16 %v343, %v342
        %v356 = vpack.c.b16 %v345, %v344
        %v357 = vpack.c.b16 %v347, %v346
        %v358 = vpack.c.b16 %v349, %v348
        %v359 = vpack.c.b16 %v351, %v350
        %v384 = vunpack.c.l.b16 %v304
        %v385 = vunpack.c.l.b16 %v305
        %v386 = vunpack.c.l.b16 %v306
        %v387 = vunpack.c.l.b16 %v307
        %v388 = vunpack.c.l.b16 %v308
        %v389 = vunpack.c.l.b16 %v309
        %v390 = vunpack.c.l.b16 %v310
        %v391 = vunpack.c.l.b16 %v311
        %v392 = vunpack.c.l.b16 %v312
        %v393 = vunpack.c.l.b16 %v313
        %v394 = vunpack.c.l.b16 %v314
        %v395 = vunpack.c.l.b16 %v315
        %v396 = vunpack.c.l.b16 %v316
        %v397 = vunpack.c.l.b16 %v317
        %v398 = vunpack.c.l.b16 %v318
        %v399 = vunpack.c.l.b16 %v319
        %v400 = vpack.c.b16 %v385, %v384
        %v401 = vpack.c.b16 %v387, %v386
        %v402 = vpack.c.b16 %v389, %v388
        %v403 = vpack.c.b16 %v391, %v390
        %v404 = vpack.c.b16 %v393, %v392
        %v405 = vpack.c.b16 %v395, %v394
        %v406 = vpack.c.b16 %v397, %v396
        %v407 = vpack.c.b16 %v399, %v398
        %416 = vmatprep.subr.bf16.mxu0 0
        %417 = vmatpush1.bf16.msra.mxu0 %v400
        %418 = vmatprep.subr.bf16.mxu0 0
        %419 = vmatpush1.bf16.msra.mxu0 %v401
        %420 = vmatprep.subr.bf16.mxu0 0
        %421 = vmatpush1.bf16.msra.mxu0 %v402
        %422 = vmatprep.subr.bf16.mxu0 0
        %423 = vmatpush1.bf16.msra.mxu0 %v403
        %424 = vmatprep.subr.bf16.mxu0 0
        %425 = vmatpush1.bf16.msra.mxu0 %v404
        %426 = vmatprep.subr.bf16.mxu0 0
        %427 = vmatpush1.bf16.msra.mxu0 %v405
        %428 = vmatprep.subr.bf16.mxu0 0
        %429 = vmatpush1.bf16.msra.mxu0 %v406
        %430 = vmatprep.subr.bf16.mxu0 0
        %431 = vmatpush1.bf16.msra.mxu0 %v407
        %432 = vmatprep.subr.bf16.mxu0 0
        %433 = vmatpush1.bf16.msra.mxu0 0
        %434 = vmatprep.subr.bf16.mxu0 0
        %435 = vmatpush1.bf16.msra.mxu0 0
        %436 = vmatprep.subr.bf16.mxu0 0
        %437 = vmatpush1.bf16.msra.mxu0 0
        %438 = vmatprep.subr.bf16.mxu0 0
        %439 = vmatpush1.bf16.msra.mxu0 0
        %440 = vmatprep.subr.bf16.mxu0 0
        %441 = vmatpush1.bf16.msra.mxu0 0
        %442 = vmatprep.subr.bf16.mxu0 0
        %443 = vmatpush1.bf16.msra.mxu0 0
        %444 = vmatprep.subr.bf16.mxu0 0
        %445 = vmatpush1.bf16.msra.mxu0 0
        %446 = vmatprep.subr.bf16.mxu0 0
        %447 = vmatpush1.bf16.msra.mxu0 0
        %448 = vmatprep.mubr.bf16.mxu0 0
        %449 = vmatmul.mubr.bf16.gmra.mrb[0].mxu0 %v352
        %v450 = vpop.f32.mrb[0].mxu0
        %v451 = vadd.f32 0.0, %v450
        %v452 = vpop.f32.mrb[0].mxu0
        %v453 = vpop.f32.mrb[0].mxu0
        %v454 = vadd.f32 0.0, %v453
        %v455 = vpop.f32.mrb[0].mxu0
        %456 = vmatprep.mubr.bf16.mxu0 0
        %457 = vmatmul.mubr.bf16.gmra.mrb[0].mxu0 %v353
        %v458 = vpop.f32.mrb[0].mxu0
        %v459 = vadd.f32 0.0, %v458
        %v460 = vpop.f32.mrb[0].mxu0
        %v461 = vpop.f32.mrb[0].mxu0
        %v462 = vadd.f32 0.0, %v461
        %v463 = vpop.f32.mrb[0].mxu0
        %464 = vmatprep.mubr.bf16.mxu0 0
        %465 = vmatmul.mubr.bf16.gmra.mrb[0].mxu0 %v354
        %v466 = vpop.f32.mrb[0].mxu0
        %v467 = vadd.f32 0.0, %v466
        %v468 = vpop.f32.mrb[0].mxu0
        %v469 = vpop.f32.mrb[0].mxu0
        %v470 = vadd.f32 0.0, %v469
        %v471 = vpop.f32.mrb[0].mxu0
        %472 = vmatprep.mubr.bf16.mxu0 0
        %473 = vmatmul.mubr.bf16.gmra.mrb[0].mxu0 %v355
        %v474 = vpop.f32.mrb[0].mxu0
        %v475 = vadd.f32 0.0, %v474
        %v476 = vpop.f32.mrb[0].mxu0
        %v477 = vpop.f32.mrb[0].mxu0
        %v478 = vadd.f32 0.0, %v477
        %v479 = vpop.f32.mrb[0].mxu0
        %480 = vmatprep.mubr.bf16.mxu0 0
        %481 = vmatmul.mubr.bf16.gmra.mrb[0].mxu0 %v356
        %v482 = vpop.f32.mrb[0].mxu0
        %v483 = vadd.f32 0.0, %v482
        %v484 = vpop.f32.mrb[0].mxu0
        %v485 = vpop.f32.mrb[0].mxu0
        %v486 = vadd.f32 0.0, %v485
        %v487 = vpop.f32.mrb[0].mxu0
        %488 = vmatprep.mubr.bf16.mxu0 0
        %489 = vmatmul.mubr.bf16.gmra.mrb[0].mxu0 %v357
        %v490 = vpop.f32.mrb[0].mxu0
        %v491 = vadd.f32 0.0, %v490
        %v492 = vpop.f32.mrb[0].mxu0
        %v493 = vpop.f32.mrb[0].mxu0
        %v494 = vadd.f32 0.0, %v493
        %v495 = vpop.f32.mrb[0].mxu0
        %496 = vmatprep.mubr.bf16.mxu0 0
        %497 = vmatmul.mubr.bf16.gmra.mrb[0].mxu0 %v358
        %v498 = vpop.f32.mrb[0].mxu0
        %v499 = vadd.f32 0.0, %v498
        %v500 = vpop.f32.mrb[0].mxu0
        %v501 = vpop.f32.mrb[0].mxu0
        %v502 = vadd.f32 0.0, %v501
        %v503 = vpop.f32.mrb[0].mxu0
        %504 = vmatprep.mubr.bf16.mxu0 0
        %505 = vmatmul.mubr.bf16.gmra.mrb[0].mxu0 %v359
        %v506 = vpop.f32.mrb[0].mxu0
        %v507 = vadd.f32 0.0, %v506
        %v508 = vpop.f32.mrb[0].mxu0
        %v509 = vpop.f32.mrb[0].mxu0
        %v510 = vadd.f32 0.0, %v509
        %v511 = vpop.f32.mrb[0].mxu0
        %512 = vdwg.mxu0
        %p513 = scmp.eq.s32.totalorder %s25, 0
        // Predicated region
        $region33: #{generator_forward.13} parent=27 // pred_check
          %p514 = pneg %p513
        $region34: #{generator_forward.13} parent=27 // pred_check_branch
          %516 = sbr.rel (%p514) target = $region36
        $region35: #{generator_forward.13} parent=27 // pred_region
          %517 = vst [vmem:[%s286] sm:$0x3] 0.0
        $region36: #{generator_forward.13} parent=27 // pred_fallthru
          _
        %v518 = vld [vmem:[%s286] sm:$0x3]
        %v519 = vadd.f32 %v451, %v454
        %v520 = vadd.f32 %v519, %v459
        %v521 = vadd.f32 %v520, %v462
        %v522 = vadd.f32 %v521, %v467
        %v523 = vadd.f32 %v522, %v470
        %v524 = vadd.f32 %v523, %v475
        %v525 = vadd.f32 %v524, %v478
        %v526 = vadd.f32 %v525, %v483
        %v527 = vadd.f32 %v526, %v486
        %v528 = vadd.f32 %v527, %v491
        %v529 = vadd.f32 %v528, %v494
        %v530 = vadd.f32 %v529, %v499
        %v531 = vadd.f32 %v530, %v502
        %v532 = vadd.f32 %v531, %v507
        %v533 = vadd.f32 %v532, %v510
        %v534 = vrot.slane %v533, 4
        %v535 = vadd.f32 %v533, %v534
        %v536 = vrot.slane %v535, 2
        %v537 = vadd.f32 %v535, %v536
        %v538 = vrot.slane %v537, 1
        %v539 = vadd.f32 %v537, %v538
        %v540 = vmul.f32 %v451, %v451
        %v541 = vmul.f32 %v454, %v454
        %v542 = vmul.f32 %v459, %v459
        %v543 = vmul.f32 %v462, %v462
        %v544 = vmul.f32 %v467, %v467
        %v545 = vmul.f32 %v470, %v470
        %v546 = vmul.f32 %v475, %v475
        %v547 = vmul.f32 %v478, %v478
        %v548 = vmul.f32 %v483, %v483
        %v549 = vmul.f32 %v486, %v486
        %v550 = vmul.f32 %v491, %v491
        %v551 = vmul.f32 %v494, %v494
        %v552 = vmul.f32 %v499, %v499
        %v553 = vmul.f32 %v502, %v502
        %v554 = vmul.f32 %v507, %v507
        %v555 = vmul.f32 %v510, %v510
        %v556 = vadd.f32 %v540, %v541
        %v557 = vadd.f32 %v556, %v542
        %v558 = vadd.f32 %v557, %v543
        %v559 = vadd.f32 %v558, %v544
        %v560 = vadd.f32 %v559, %v545
        %v561 = vadd.f32 %v560, %v546
        %v562 = vadd.f32 %v561, %v547
        %v563 = vadd.f32 %v562, %v548
        %v564 = vadd.f32 %v563, %v549
        %v565 = vadd.f32 %v564, %v550
        %v566 = vadd.f32 %v565, %v551
        %v567 = vadd.f32 %v566, %v552
        %v568 = vadd.f32 %v567, %v553
        %v569 = vadd.f32 %v568, %v554
        %v570 = vadd.f32 %v569, %v555
        %v571 = vrot.slane %v570, 4
        %v572 = vadd.f32 %v570, %v571
        %v573 = vrot.slane %v572, 2
        %v574 = vadd.f32 %v572, %v573
        %v575 = vrot.slane %v574, 1
        %v576 = vadd.f32 %v574, %v575
        %vm577 = vcmask 1040384
        %v578 = vsel %vm577, %v539, %v576
        %v579 = vadd.f32 %v518, %v578
        %580 = vst [vmem:[%s286] sm:$0x3] %v579
        %v581 = vpack.c.bf16 %v454, %v451
        %v582 = vpack.c.bf16 %v462, %v459
        %v583 = vpack.c.bf16 %v470, %v467
        %v584 = vpack.c.bf16 %v478, %v475
        %v585 = vpack.c.bf16 %v486, %v483
        %v586 = vpack.c.bf16 %v494, %v491
        %v587 = vpack.c.bf16 %v502, %v499
        %v588 = vpack.c.bf16 %v510, %v507
        %v597 = vunpack.c.l.b16 %v581
        %v598 = vunpack.c.h.b16 %v581
        %v599 = vunpack.c.l.b16 %v582
        %v600 = vunpack.c.h.b16 %v582
        %v601 = vunpack.c.l.b16 %v583
        %v602 = vunpack.c.h.b16 %v583
        %v603 = vunpack.c.l.b16 %v584
        %v604 = vunpack.c.h.b16 %v584
        %v605 = vunpack.c.l.b16 %v585
        %v606 = vunpack.c.h.b16 %v585
        %v607 = vunpack.c.l.b16 %v586
        %v608 = vunpack.c.h.b16 %v586
        %v609 = vunpack.c.l.b16 %v587
        %v610 = vunpack.c.h.b16 %v587
        %v611 = vunpack.c.l.b16 %v588
        %v612 = vunpack.c.h.b16 %v588
        %v613 = vpack.c.b16 %v597, %v597
        %v614 = vpack.c.b16 %v598, %v598
        %v615 = vpack.c.b16 %v599, %v599
        %v616 = vpack.c.b16 %v600, %v600
        %v617 = vpack.c.b16 %v601, %v601
        %v618 = vpack.c.b16 %v602, %v602
        %v619 = vpack.c.b16 %v603, %v603
        %v620 = vpack.c.b16 %v604, %v604
        %v621 = vpack.c.b16 %v605, %v605
        %v622 = vpack.c.b16 %v606, %v606
        %v623 = vpack.c.b16 %v607, %v607
        %v624 = vpack.c.b16 %v608, %v608
        %v625 = vpack.c.b16 %v609, %v609
        %v626 = vpack.c.b16 %v610, %v610
        %v627 = vpack.c.b16 %v611, %v611
        %v628 = vpack.c.b16 %v612, %v612
        %645 = vst [vmem:[%s278] sm:$0xf] %v613
        %646 = vst [vmem:[%s278 + $0x4] sm:$0xf] %v614
        %647 = vst [vmem:[%s278 + $0x8] sm:$0xf] %v615
        %648 = vst [vmem:[%s278 + $0xc] sm:$0xf] %v616
        %649 = vst [vmem:[%s278 + $0x10] sm:$0xf] %v617
        %650 = vst [vmem:[%s278 + $0x14] sm:$0xf] %v618
        %651 = vst [vmem:[%s278 + $0x18] sm:$0xf] %v619
        %652 = vst [vmem:[%s278 + $0x1c] sm:$0xf] %v620
        %653 = vst [vmem:[%s278 + $0x20] sm:$0xf] %v621
        %654 = vst [vmem:[%s278 + $0x24] sm:$0xf] %v622
        %655 = vst [vmem:[%s278 + $0x28] sm:$0xf] %v623
        %656 = vst [vmem:[%s278 + $0x2c] sm:$0xf] %v624
        %657 = vst [vmem:[%s278 + $0x30] sm:$0xf] %v625
        %658 = vst [vmem:[%s278 + $0x34] sm:$0xf] %v626
        %659 = vst [vmem:[%s278 + $0x38] sm:$0xf] %v627
        %660 = vst [vmem:[%s278 + $0x3c] sm:$0xf] %v628
        %s661 = smul.u32 16, %s25
        %p662 = scmp.lt.s32.totalorder %s23, 3
        %s663 = scalar_select %p662, %s23, 3
        %p664 = scmp.lt.s32.totalorder %s661, 15
        %s665 = scalar_select %p664, %s661, 15
        %p666 = scmp.lt.s32.totalorder %s24, 0
        %s667 = scalar_select %p666, %s24, 0
        %s668 = sadd.s32 %s667, %s665
        %s669 = smul.addr %s663, 16
        %s670 = sadd.s32 %s668, %s669
        %s671 = smul.addr %s670, 4
        %s672 = scalar_lea.vmem %s2, %s671
        %p673 = scmp.lt.s32.totalorder %s23, 3
        %s674 = scalar_select %p673, %s23, 3
        %p675 = scmp.lt.s32.totalorder %s24, 0
        %s676 = scalar_select %p675, %s24, 0
        %s677 = sadd.s32 %s676, %s674
        %s678 = smul.addr %s677, 2
        %s679 = scalar_lea.vmem %s3, %s678
        // Predicated region
        $region37: #{generator_forward.13} parent=27 // pred_check
          %p680 = pneg %p115
        $region38: #{generator_forward.13} parent=27 // pred_check_branch
          %682 = sbr.rel (%p680) target = $region40
        $region39: #{generator_forward.13} parent=27 // pred_region
          %s683 = smul.u32 16, %s25
        $region40: #{generator_forward.13} parent=27 // pred_fallthru
          _
        // Predicated region
        $region41: #{generator_forward.13} parent=27 // pred_check
          %p684 = pneg %p143
        $region42: #{generator_forward.13} parent=27 // pred_check_branch
          %686 = sbr.rel (%p684) target = $region44
        $region43: #{generator_forward.13} parent=27 // pred_region
          _
        $region44: #{generator_forward.13} parent=27 // pred_fallthru
          _
      $region28: #{generator_forward.13} parent=5 // pred_fallthru
        _
      %p687 = scmp.le.s32.totalorder 2, %s13
      // Predicated region
      $region45: #{generator_forward.13} parent=5 // pred_check
        %p688 = pneg %p687
      $region46: #{generator_forward.13} parent=5 // pred_check_branch
        %690 = sbr.rel (%p688) target = $region48
      $region47: #{generator_forward.13} parent=5 // pred_region
        %s691 = ssub.s32 %s13, 2
        // Predicated region
        $region49: #{generator_forward.13} parent=47 // pred_check
          %p692 = pneg %p121
        $region50: #{generator_forward.13} parent=47 // pred_check_branch
          %694 = sbr.rel (%p692) target = $region52
        $region51: #{generator_forward.13} parent=47 // pred_region
          %s695 = smul.u32 16, %s28
          %p696 = scmp.lt.s32.totalorder %s26, 3
          %s697 = scalar_select %p696, %s26, 3
          %p698 = scmp.lt.s32.totalorder %s695, 15
          %s699 = scalar_select %p698, %s695, 15
          %p700 = scmp.lt.s32.totalorder %s27, 0
          %s701 = scalar_select %p700, %s27, 0
          %s702 = sadd.s32 %s701, %s699
          %s703 = smul.addr %s697, 16
          %s704 = sadd.s32 %s702, %s703
          %s705 = smul.addr %s704, 4
          %s706 = scalar_lea.vmem %s2, %s705
        $region52: #{generator_forward.13} parent=47 // pred_fallthru
          _
        // Predicated region
        $region53: #{generator_forward.13} parent=47 // pred_check
          %p707 = pneg %p149
        $region54: #{generator_forward.13} parent=47 // pred_check_branch
          %709 = sbr.rel (%p707) target = $region56
        $region55: #{generator_forward.13} parent=47 // pred_region
          %p710 = scmp.lt.s32.totalorder %s26, 3
          %s711 = scalar_select %p710, %s26, 3
          %p712 = scmp.lt.s32.totalorder %s27, 0
          %s713 = scalar_select %p712, %s27, 0
          %s714 = sadd.s32 %s713, %s711
          %s715 = smul.addr %s714, 2
          %s716 = scalar_lea.vmem %s3, %s715
        $region56: #{generator_forward.13} parent=47 // pred_fallthru
          _
      $region48: #{generator_forward.13} parent=5 // pred_fallthru
        _
    $region6: #{generator_forward.13} parent=1 // loop_footer
      %s17 = sadd.s32 1, %s13
    $region7: #{generator_forward.13} parent=1 // loop_footer_branch
      %12 = sbr.rel target = $region3
    $region8: #{generator_forward.13} parent=1 // loop_exit
      _
    %717 = vsyncpa [#allocation3], 1
    %s718 = scalar_lea.sflag [#allocation3], 1
    %719 = vsyncpa %s718, 1

// kernel: generator_forward.14
$region0: #{generator_forward.14}
  #allocation0 [shape = 'u32[]', space=smem, size = 0x4, offset = 0x4, fixed_abs, tag = 'smem constant byte address 0x4 - core index']
  #allocation1 [shape = 'u32[144,128]{1,0:T(1,128)}', space=vmem, size = 0x12000, scoped, tag = 'internal scratch']
  %s0 = inlined_call_operand.vmem [shape: bf16[4,128,128], index: 0, kind: input, shape index: {}]
  %s1 = inlined_call_operand.vmem [shape: f32[2,128], index: 1, kind: input, shape index: {}]
  %s2 = inlined_call_operand.vmem [shape: f32[1,128], index: 2, kind: input, shape index: {}]
  %s3 = inlined_call_operand.vmem [shape: f32[1,128], index: 3, kind: input, shape index: {}]
  %s4 = inlined_call_operand.vmem [shape: bf16[4,128,128], index: 4, kind: output, shape index: {}]
  %s5 = sld [smem:[#allocation0]]
  $region49: #{generator_forward.14} parent=0
    _
  %s7 = ssub.s32 1, %s5
  %s8 = scalar_select 0, %s7, %s5
  loop: start=0, step=1, limit=6
  $region2: #{generator_forward.14} parent=0 // loop_pre_header
    _
  $region3: #{generator_forward.14} parent=0 // loop_header
    %s10 = sphi 0, %s14
    %p11 = scmp.ge.s32.totalorder %s10, 6
    %s17 = sphi 0, %s29
    %s18 = sphi 0, %s25
    %s19 = sphi 0, %s17
    %s20 = sphi 0, %s18
    %s21 = sphi 0, %s19
    %s22 = sphi 0, %s20
    %s34 = sphi 0, %s36
    %s37 = sphi 0, %s34
    %s38 = sphi 0, %s37
    %s54 = sphi 0, %s38
    %s58 = sphi 0, %s58
    %s60 = sphi 0, %s58
    %s61 = sphi 0, %s60
    %s75 = sphi 0, %s61
    %s79 = sphi 0, %s79
    %s81 = sphi 0, %s79
    %s82 = sphi 0, %s81
    %s96 = sphi 0, %s82
    %s100 = sphi 0, %s100
    %s102 = sphi 0, %s100
    %s103 = sphi 0, %s102
    %s117 = sphi 0, %s103
    %s125 = sphi 0, %s127
    %s128 = sphi 0, %s125
    %s129 = sphi 0, %s128
    %s145 = sphi 0, %s129
  $region4: #{generator_forward.14} parent=0 // loop_header_branch
    %13 = sbr.rel (%p11) target = $region8
  $region5: #{generator_forward.14} parent=0 // loop_body
    %s15 = ssub.s32 %s10, 1
    %s16 = ssub.s32 %s10, 2
    %s23 = sadd.s32 1, %s18
    %p24 = scmp.ge.s32.totalorder %s23, 1
    %s25 = scalar_select %p24, 0, %s23
    %s26 = sadd.s32 1, %s17
    %s27 = scalar_select %p24, %s26, %s17
    %p28 = scmp.ge.s32.totalorder %s27, 4
    %s29 = scalar_select %p28, 0, %s27
    %s30 = ssub.s32 %s17, %s29
    %s31 = ssub.s32 %s18, %s25
    %s32 = sor.u32 %s30, %s31
    %p33 = scmp.eq.s32.totalorder %s32, 0
    %s35 = sadd.s32 %s34, 1
    %s36 = scalar_select %p33, %s34, %s35
    %p39 = pneg %p33
    %p40 = scmp.eq.s32.totalorder %s10, 3
    %p41 = por %p39, %p40
    %p42 = scmp.ne.s32.totalorder %s34, %s37
    %p43 = scmp.eq.s32.totalorder %s10, 0
    %p44 = por %p42, %p43
    %p45 = scmp.ne.s32.totalorder %s34, %s37
    %p46 = scmp.eq.s32.totalorder %s15, 3
    %p47 = por %p45, %p46
    %p48 = scmp.ne.s32.totalorder %s37, %s38
    %p49 = scmp.eq.s32.totalorder %s15, 0
    %p50 = por %p48, %p49
    %p51 = scmp.ne.s32.totalorder %s37, %s38
    %p52 = scmp.eq.s32.totalorder %s16, 3
    %p53 = por %p51, %p52
    %p55 = scmp.ne.s32.totalorder %s38, %s54
    %p56 = scmp.eq.s32.totalorder %s16, 0
    %p57 = por %p55, %p56
    %s59 = sadd.s32 %s58, 1
    %p62 = scmp.eq.s32.totalorder %s10, 3
    %p63 = scmp.ne.s32.totalorder %s58, %s60
    %p64 = scmp.eq.s32.totalorder %s10, 0
    %p65 = por %p63, %p64
    %p66 = scmp.ne.s32.totalorder %s58, %s60
    %p67 = scmp.eq.s32.totalorder %s15, 3
    %p68 = por %p66, %p67
    %p69 = scmp.ne.s32.totalorder %s60, %s61
    %p70 = scmp.eq.s32.totalorder %s15, 0
    %p71 = por %p69, %p70
    %p72 = scmp.ne.s32.totalorder %s60, %s61
    %p73 = scmp.eq.s32.totalorder %s16, 3
    %p74 = por %p72, %p73
    %p76 = scmp.ne.s32.totalorder %s61, %s75
    %p77 = scmp.eq.s32.totalorder %s16, 0
    %p78 = por %p76, %p77
    %s80 = sadd.s32 %s79, 1
    %p83 = scmp.eq.s32.totalorder %s10, 3
    %p84 = scmp.ne.s32.totalorder %s79, %s81
    %p85 = scmp.eq.s32.totalorder %s10, 0
    %p86 = por %p84, %p85
    %p87 = scmp.ne.s32.totalorder %s79, %s81
    %p88 = scmp.eq.s32.totalorder %s15, 3
    %p89 = por %p87, %p88
    %p90 = scmp.ne.s32.totalorder %s81, %s82
    %p91 = scmp.eq.s32.totalorder %s15, 0
    %p92 = por %p90, %p91
    %p93 = scmp.ne.s32.totalorder %s81, %s82
    %p94 = scmp.eq.s32.totalorder %s16, 3
    %p95 = por %p93, %p94
    %p97 = scmp.ne.s32.totalorder %s82, %s96
    %p98 = scmp.eq.s32.totalorder %s16, 0
    %p99 = por %p97, %p98
    %s101 = sadd.s32 %s100, 1
    %p104 = scmp.eq.s32.totalorder %s10, 3
    %p105 = scmp.ne.s32.totalorder %s100, %s102
    %p106 = scmp.eq.s32.totalorder %s10, 0
    %p107 = por %p105, %p106
    %p108 = scmp.ne.s32.totalorder %s100, %s102
    %p109 = scmp.eq.s32.totalorder %s15, 3
    %p110 = por %p108, %p109
    %p111 = scmp.ne.s32.totalorder %s102, %s103
    %p112 = scmp.eq.s32.totalorder %s15, 0
    %p113 = por %p111, %p112
    %p114 = scmp.ne.s32.totalorder %s102, %s103
    %p115 = scmp.eq.s32.totalorder %s16, 3
    %p116 = por %p114, %p115
    %p118 = scmp.ne.s32.totalorder %s103, %s117
    %p119 = scmp.eq.s32.totalorder %s16, 0
    %p120 = por %p118, %p119
    %s121 = ssub.s32 %s17, %s29
    %s122 = ssub.s32 %s18, %s25
    %s123 = sor.u32 %s121, %s122
    %p124 = scmp.eq.s32.totalorder %s123, 0
    %s126 = sadd.s32 %s125, 1
    %s127 = scalar_select %p124, %s125, %s126
    %p130 = pneg %p124
    %p131 = scmp.eq.s32.totalorder %s10, 3
    %p132 = por %p130, %p131
    %p133 = scmp.ne.s32.totalorder %s125, %s128
    %p134 = scmp.eq.s32.totalorder %s10, 0
    %p135 = por %p133, %p134
    %p136 = scmp.ne.s32.totalorder %s125, %s128
    %p137 = scmp.eq.s32.totalorder %s15, 3
    %p138 = por %p136, %p137
    %p139 = scmp.ne.s32.totalorder %s128, %s129
    %p140 = scmp.eq.s32.totalorder %s15, 0
    %p141 = por %p139, %p140
    %p142 = scmp.ne.s32.totalorder %s128, %s129
    %p143 = scmp.eq.s32.totalorder %s16, 3
    %p144 = por %p142, %p143
    %p146 = scmp.ne.s32.totalorder %s129, %s145
    %p147 = scmp.eq.s32.totalorder %s16, 0
    %p148 = por %p146, %p147
    %p149 = scmp.le.s32.totalorder 1, %s10
    %p150 = scmp.lt.s32.totalorder %s10, 5
    %p151 = pnand %p149, %p150
    %p152 = pneg %p151
    // Predicated region
    $region9: #{generator_forward.14} parent=5 // pred_check
      _
    $region10: #{generator_forward.14} parent=5 // pred_check_branch
      %154 = sbr.rel (%p151) target = $region12
    $region11: #{generator_forward.14} parent=5 // pred_region
      %s155 = ssub.s32 %s10, 1
      // Predicated region
      $region13: #{generator_forward.14} parent=11 // pred_check
        %p156 = pneg %p71
      $region14: #{generator_forward.14} parent=11 // pred_check_branch
        %158 = sbr.rel (%p156) target = $region16
      $region15: #{generator_forward.14} parent=11 // pred_region
        _
      $region16: #{generator_forward.14} parent=11 // pred_fallthru
        _
      // Predicated region
      $region17: #{generator_forward.14} parent=11 // pred_check
        %p159 = pneg %p92
      $region18: #{generator_forward.14} parent=11 // pred_check_branch
        %161 = sbr.rel (%p159) target = $region20
      $region19: #{generator_forward.14} parent=11 // pred_region
        _
      $region20: #{generator_forward.14} parent=11 // pred_fallthru
        _
      // Predicated region
      $region21: #{generator_forward.14} parent=11 // pred_check
        %p162 = pneg %p113
      $region22: #{generator_forward.14} parent=11 // pred_check_branch
        %164 = sbr.rel (%p162) target = $region24
      $region23: #{generator_forward.14} parent=11 // pred_region
        _
      $region24: #{generator_forward.14} parent=11 // pred_fallthru
        _
    $region12: #{generator_forward.14} parent=5 // pred_fallthru
      _
    %p165 = scmp.lt.s32.totalorder %s10, 4
    // Predicated region
    $region25: #{generator_forward.14} parent=5 // pred_check
      %p166 = pneg %p165
    $region26: #{generator_forward.14} parent=5 // pred_check_branch
      %168 = sbr.rel (%p166) target = $region28
    $region27: #{generator_forward.14} parent=5 // pred_region
      // Predicated region
      $region29: #{generator_forward.14} parent=27 // pred_check
        %p169 = pneg %p44
      $region30: #{generator_forward.14} parent=27 // pred_check_branch
        %171 = sbr.rel (%p169) target = $region32
      $region31: #{generator_forward.14} parent=27 // pred_region
        %s172 = smul.u32 16, %s18
        %p173 = scmp.lt.s32.totalorder %s17, 3
        %s174 = scalar_select %p173, %s17, 3
        %p175 = scmp.lt.s32.totalorder %s172, 15
        %s176 = scalar_select %p175, %s172, 15
        %s177 = smul.addr %s174, 16
        %s178 = sadd.s32 %s176, %s177
        %s179 = smul.addr %s178, 4
        %s180 = scalar_lea.vmem %s0, %s179
        %s181 = smul.u32 16, %s18
      $region32: #{generator_forward.14} parent=27 // pred_fallthru
        _
    $region28: #{generator_forward.14} parent=5 // pred_fallthru
      _
    %p182 = scmp.le.s32.totalorder 1, %s10
    %p183 = scmp.lt.s32.totalorder %s10, 5
    %p184 = pnand %p182, %p183
    %p185 = pneg %p184
    // Predicated region
    $region33: #{generator_forward.14} parent=5 // pred_check
      _
    $region34: #{generator_forward.14} parent=5 // pred_check_branch
      %187 = sbr.rel (%p184) target = $region36
    $region35: #{generator_forward.14} parent=5 // pred_region
      %s188 = ssub.s32 %s10, 1
      %s189 = smul.u32 16, %s20
      %p190 = scmp.lt.s32.totalorder %s19, 3
      %s191 = scalar_select %p190, %s19, 3
      %p192 = scmp.lt.s32.totalorder %s189, 15
      %s193 = scalar_select %p192, %s189, 15
      %s194 = smul.addr %s191, 16
      %s195 = sadd.s32 %s193, %s194
      %s196 = smul.addr %s195, 4
      %s197 = scalar_lea.vmem %s0, %s196
      %p198 = pneg %p50
      %p199 = pneg %p47
      %p200 = pneg %p71
      %p201 = pneg %p68
      %p202 = pneg %p92
      %p203 = pneg %p89
      %p204 = pneg %p113
      %p205 = pneg %p110
      %p206 = pneg %p141
      %p207 = pneg %p138
      %s208 = smul.u32 16, %s20
      %p209 = scmp.lt.s32.totalorder %s19, 3
      %s210 = scalar_select %p209, %s19, 3
      %p211 = scmp.lt.s32.totalorder %s208, 15
      %s212 = scalar_select %p211, %s208, 15
      %s213 = smul.addr %s210, 16
      %s214 = sadd.s32 %s212, %s213
      %s215 = smul.addr %s214, 4
      %s216 = scalar_lea.vmem %s4, %s215
      %s217 = smul.u32 16, %s20
      %p218 = scmp.lt.s32.totalorder %s19, 3
      %s219 = scalar_select %p218, %s19, 3
      %p220 = scmp.lt.s32.totalorder %s217, 15
      %s221 = scalar_select %p220, %s217, 15
      %s222 = smul.addr %s219, 16
      %s223 = sadd.s32 %s221, %s222
      %s224 = smul.addr %s223, 4
      %s225 = scalar_lea.vmem %s0, %s224
      %s226 = smul.u32 16, %s20
      %s227 = smul.u32 16, %s20
      %p228 = scmp.lt.s32.totalorder %s19, 3
      %s229 = scalar_select %p228, %s19, 3
      %p230 = scmp.lt.s32.totalorder %s227, 15
      %s231 = scalar_select %p230, %s227, 15
      %s232 = smul.addr %s229, 16
      %s233 = sadd.s32 %s231, %s232
      %s234 = smul.addr %s233, 4
      %s235 = scalar_lea.vmem %s4, %s234
      %s236 = smul.u32 16, %s20
      %v237 = vld [vmem:[%s225] sm:$0xf]
      %v238 = vld [vmem:[%s225 + $0x4] sm:$0xf]
      %v239 = vld [vmem:[%s225 + $0x8] sm:$0xf]
      %v240 = vld [vmem:[%s225 + $0xc] sm:$0xf]
      %v241 = vld [vmem:[%s225 + $0x10] sm:$0xf]
      %v242 = vld [vmem:[%s225 + $0x14] sm:$0xf]
      %v243 = vld [vmem:[%s225 + $0x18] sm:$0xf]
      %v244 = vld [vmem:[%s225 + $0x1c] sm:$0xf]
      %v245 = vld [vmem:[%s225 + $0x20] sm:$0xf]
      %v246 = vld [vmem:[%s225 + $0x24] sm:$0xf]
      %v247 = vld [vmem:[%s225 + $0x28] sm:$0xf]
      %v248 = vld [vmem:[%s225 + $0x2c] sm:$0xf]
      %v249 = vld [vmem:[%s225 + $0x30] sm:$0xf]
      %v250 = vld [vmem:[%s225 + $0x34] sm:$0xf]
      %v251 = vld [vmem:[%s225 + $0x38] sm:$0xf]
      %v252 = vld [vmem:[%s225 + $0x3c] sm:$0xf]
      %v253 = vunpack.c.l.bf16 %v237
      %v254 = vunpack.c.l.bf16 %v238
      %v255 = vunpack.c.l.bf16 %v239
      %v256 = vunpack.c.l.bf16 %v240
      %v257 = vunpack.c.l.bf16 %v241
      %v258 = vunpack.c.l.bf16 %v242
      %v259 = vunpack.c.l.bf16 %v243
      %v260 = vunpack.c.l.bf16 %v244
      %v261 = vunpack.c.l.bf16 %v245
      %v262 = vunpack.c.l.bf16 %v246
      %v263 = vunpack.c.l.bf16 %v247
      %v264 = vunpack.c.l.bf16 %v248
      %v265 = vunpack.c.l.bf16 %v249
      %v266 = vunpack.c.l.bf16 %v250
      %v267 = vunpack.c.l.bf16 %v251
      %v268 = vunpack.c.l.bf16 %v252
      %v269 = vld [vmem:[%s1] sm:$0x3]
      %v270 = vmul.f32 %v269, 0.001953125
      %v271 = vmul.f32 %v270, %v270
      %v273 = vrot.slane %v271, 7
      %v275 = vsub.f32 %v270, %v273
      %v276 = vmax.f32 %v275, 0.0
      %v277 = vadd.f32 %v276, 1e-05
      %v278 = vrsqrt.pop %v277
      %v279 = vld [vmem:[%s2] sm:$0x1]
      %v281 = vlaneseq
      %v282 = vshrl.u32 %v281, 7
      %v283 = vsub.s32 0, %v282
      %v284 = vrot.slane %v279, %v283
      %v286 = vmul.f32 %v278, %v284
      %v287 = vld [vmem:[%s3] sm:$0x1]
      %v289 = vrot.slane %v286, 1
      %v291 = vmul.f32 %v270, %v289
      %v292 = vsub.f32 %v287, %v291
      %v293 = vlaneseq
      %v294 = vshrl.u32 %v293, 7
      %v295 = vsub.s32 1, %v294
      %v296 = vrot.slane %v286, %v295
      %v297 = vmul.f32 %v253, %v296
      %v298 = vmul.f32 %v254, %v296
      %v299 = vmul.f32 %v255, %v296
      %v300 = vmul.f32 %v256, %v296
      %v301 = vmul.f32 %v257, %v296
      %v302 = vmul.f32 %v258, %v296
      %v303 = vmul.f32 %v259, %v296
      %v304 = vmul.f32 %v260, %v296
      %v305 = vmul.f32 %v261, %v296
      %v306 = vmul.f32 %v262, %v296
      %v307 = vmul.f32 %v263, %v296
      %v308 = vmul.f32 %v264, %v296
      %v309 = vmul.f32 %v265, %v296
      %v310 = vmul.f32 %v266, %v296
      %v311 = vmul.f32 %v267, %v296
      %v312 = vmul.f32 %v268, %v296
      %v314 = vlaneseq
      %v315 = vshrl.u32 %v314, 7
      %v316 = vsub.s32 0, %v315
      %v317 = vrot.slane %v292, %v316
      %v319 = vadd.f32 %v297, %v317
      %v320 = vadd.f32 %v298, %v317
      %v321 = vadd.f32 %v299, %v317
      %v322 = vadd.f32 %v300, %v317
      %v323 = vadd.f32 %v301, %v317
      %v324 = vadd.f32 %v302, %v317
      %v325 = vadd.f32 %v303, %v317
      %v326 = vadd.f32 %v304, %v317
      %v327 = vadd.f32 %v305, %v317
      %v328 = vadd.f32 %v306, %v317
      %v329 = vadd.f32 %v307, %v317
      %v330 = vadd.f32 %v308, %v317
      %v331 = vadd.f32 %v309, %v317
      %v332 = vadd.f32 %v310, %v317
      %v333 = vadd.f32 %v311, %v317
      %v334 = vadd.f32 %v312, %v317
      %v335 = vmax.f32 %v319, 0.0
      %v336 = vmax.f32 %v320, 0.0
      %v337 = vmax.f32 %v321, 0.0
      %v338 = vmax.f32 %v322, 0.0
      %v339 = vmax.f32 %v323, 0.0
      %v340 = vmax.f32 %v324, 0.0
      %v341 = vmax.f32 %v325, 0.0
      %v342 = vmax.f32 %v326, 0.0
      %v343 = vmax.f32 %v327, 0.0
      %v344 = vmax.f32 %v328, 0.0
      %v345 = vmax.f32 %v329, 0.0
      %v346 = vmax.f32 %v330, 0.0
      %v347 = vmax.f32 %v331, 0.0
      %v348 = vmax.f32 %v332, 0.0
      %v349 = vmax.f32 %v333, 0.0
      %v350 = vmax.f32 %v334, 0.0
      %v351 = vpack.c.bf16 %v336, %v335
      %v352 = vpack.c.bf16 %v338, %v337
      %v353 = vpack.c.bf16 %v340, %v339
      %v354 = vpack.c.bf16 %v342, %v341
      %v355 = vpack.c.bf16 %v344, %v343
      %v356 = vpack.c.bf16 %v346, %v345
      %v357 = vpack.c.bf16 %v348, %v347
      %v358 = vpack.c.bf16 %v350, %v349
      %v367 = vunpack.c.l.b16 %v351
      %v368 = vunpack.c.h.b16 %v351
      %v369 = vunpack.c.l.b16 %v352
      %v370 = vunpack.c.h.b16 %v352
      %v371 = vunpack.c.l.b16 %v353
      %v372 = vunpack.c.h.b16 %v353
      %v373 = vunpack.c.l.b16 %v354
      %v374 = vunpack.c.h.b16 %v354
      %v375 = vunpack.c.l.b16 %v355
      %v376 = vunpack.c.h.b16 %v355
      %v377 = vunpack.c.l.b16 %v356
      %v378 = vunpack.c.h.b16 %v356
      %v379 = vunpack.c.l.b16 %v357
      %v380 = vunpack.c.h.b16 %v357
      %v381 = vunpack.c.l.b16 %v358
      %v382 = vunpack.c.h.b16 %v358
      %v383 = vpack.c.b16 %v367, %v367
      %v384 = vpack.c.b16 %v368, %v368
      %v385 = vpack.c.b16 %v369, %v369
      %v386 = vpack.c.b16 %v370, %v370
      %v387 = vpack.c.b16 %v371, %v371
      %v388 = vpack.c.b16 %v372, %v372
      %v389 = vpack.c.b16 %v373, %v373
      %v390 = vpack.c.b16 %v374, %v374
      %v391 = vpack.c.b16 %v375, %v375
      %v392 = vpack.c.b16 %v376, %v376
      %v393 = vpack.c.b16 %v377, %v377
      %v394 = vpack.c.b16 %v378, %v378
      %v395 = vpack.c.b16 %v379, %v379
      %v396 = vpack.c.b16 %v380, %v380
      %v397 = vpack.c.b16 %v381, %v381
      %v398 = vpack.c.b16 %v382, %v382
      %415 = vst [vmem:[%s235] sm:$0xf] %v383
      %416 = vst [vmem:[%s235 + $0x4] sm:$0xf] %v384
      %417 = vst [vmem:[%s235 + $0x8] sm:$0xf] %v385
      %418 = vst [vmem:[%s235 + $0xc] sm:$0xf] %v386
      %419 = vst [vmem:[%s235 + $0x10] sm:$0xf] %v387
      %420 = vst [vmem:[%s235 + $0x14] sm:$0xf] %v388
      %421 = vst [vmem:[%s235 + $0x18] sm:$0xf] %v389
      %422 = vst [vmem:[%s235 + $0x1c] sm:$0xf] %v390
      %423 = vst [vmem:[%s235 + $0x20] sm:$0xf] %v391
      %424 = vst [vmem:[%s235 + $0x24] sm:$0xf] %v392
      %425 = vst [vmem:[%s235 + $0x28] sm:$0xf] %v393
      %426 = vst [vmem:[%s235 + $0x2c] sm:$0xf] %v394
      %427 = vst [vmem:[%s235 + $0x30] sm:$0xf] %v395
      %428 = vst [vmem:[%s235 + $0x34] sm:$0xf] %v396
      %429 = vst [vmem:[%s235 + $0x38] sm:$0xf] %v397
      %430 = vst [vmem:[%s235 + $0x3c] sm:$0xf] %v398
      %s431 = smul.u32 16, %s20
      %p432 = scmp.lt.s32.totalorder %s19, 3
      %s433 = scalar_select %p432, %s19, 3
      %p434 = scmp.lt.s32.totalorder %s431, 15
      %s435 = scalar_select %p434, %s431, 15
      %s436 = smul.addr %s433, 16
      %s437 = sadd.s32 %s435, %s436
      %s438 = smul.addr %s437, 4
      %s439 = scalar_lea.vmem %s4, %s438
      // Predicated region
      $region37: #{generator_forward.14} parent=35 // pred_check
        %p440 = pneg %p138
      $region38: #{generator_forward.14} parent=35 // pred_check_branch
        %442 = sbr.rel (%p440) target = $region40
      $region39: #{generator_forward.14} parent=35 // pred_region
        %s443 = smul.u32 16, %s20
      $region40: #{generator_forward.14} parent=35 // pred_fallthru
        _
    $region36: #{generator_forward.14} parent=5 // pred_fallthru
      _
    %p444 = scmp.le.s32.totalorder 2, %s10
    // Predicated region
    $region41: #{generator_forward.14} parent=5 // pred_check
      %p445 = pneg %p444
    $region42: #{generator_forward.14} parent=5 // pred_check_branch
      %447 = sbr.rel (%p445) target = $region44
    $region43: #{generator_forward.14} parent=5 // pred_region
      %s448 = ssub.s32 %s10, 2
      // Predicated region
      $region45: #{generator_forward.14} parent=43 // pred_check
        %p449 = pneg %p144
      $region46: #{generator_forward.14} parent=43 // pred_check_branch
        %451 = sbr.rel (%p449) target = $region48
      $region47: #{generator_forward.14} parent=43 // pred_region
        %s452 = smul.u32 16, %s22
        %p453 = scmp.lt.s32.totalorder %s21, 3
        %s454 = scalar_select %p453, %s21, 3
        %p455 = scmp.lt.s32.totalorder %s452, 15
        %s456 = scalar_select %p455, %s452, 15
        %s457 = smul.addr %s454, 16
        %s458 = sadd.s32 %s456, %s457
        %s459 = smul.addr %s458, 4
        %s460 = scalar_lea.vmem %s4, %s459
      $region48: #{generator_forward.14} parent=43 // pred_fallthru
        _
    $region44: #{generator_forward.14} parent=5 // pred_fallthru
      _
  $region6: #{generator_forward.14} parent=0 // loop_footer
    %s14 = sadd.s32 1, %s10
  $region7: #{generator_forward.14} parent=0 // loop_footer_branch
    %9 = sbr.rel target = $region3
  $region8: #{generator_forward.14} parent=0 // loop_exit
    _

// kernel: generator_forward.15
$region0: #{generator_forward.15}
  #allocation0 [shape = 'u32[]', space=smem, size = 0x4, offset = 0x4, fixed_abs, tag = 'smem constant byte address 0x4 - core index']
  #allocation1 [shape = 'u32[144,128]{1,0:T(1,128)}', space=vmem, size = 0x12000, scoped, tag = 'internal scratch']
  %s0 = inlined_call_operand.vmem [shape: bf16[4,512,64], index: 0, kind: input, shape index: {}]
  %s1 = inlined_call_operand.vmem [shape: bf16[4,64,128], index: 1, kind: input, shape index: {}]
  %s2 = inlined_call_operand.vmem [shape: bf16[4,512,128], index: 2, kind: output, shape index: {0}]
  %s3 = inlined_call_operand.vmem [shape: f32[4,2,128], index: 3, kind: output, shape index: {1}]
  %4 = xla_tuple %s2, %s3
  %s5 = sld [smem:[#allocation0]]
  $region53: #{generator_forward.15} parent=0
    _
  %s7 = ssub.s32 1, %s5
  %s8 = scalar_select 0, %s7, %s5
  loop: start=0, step=1, limit=10
  $region2: #{generator_forward.15} parent=0 // loop_pre_header
    _
  $region3: #{generator_forward.15} parent=0 // loop_header
    %s10 = sphi 0, %s14
    %p11 = scmp.ge.s32.totalorder %s10, 10
    %s17 = sphi 0, %s36
    %s18 = sphi 0, %s32
    %s19 = sphi 0, %s28
    %s20 = sphi 0, %s17
    %s21 = sphi 0, %s18
    %s22 = sphi 0, %s19
    %s23 = sphi 0, %s20
    %s24 = sphi 0, %s21
    %s25 = sphi 0, %s22
    %s41 = sphi 0, %s43
    %s44 = sphi 0, %s41
    %s45 = sphi 0, %s44
    %s61 = sphi 0, %s45
    %s69 = sphi 0, %s71
    %s72 = sphi 0, %s69
    %s73 = sphi 0, %s72
    %s89 = sphi 0, %s73
    %s99 = sphi 0, %s101
    %s102 = sphi 0, %s99
    %s103 = sphi 0, %s102
    %s119 = sphi 0, %s103
    %s127 = sphi 0, %s129
    %s130 = sphi 0, %s127
    %s131 = sphi 0, %s130
    %s147 = sphi 0, %s131
  $region4: #{generator_forward.15} parent=0 // loop_header_branch
    %13 = sbr.rel (%p11) target = $region8
  $region5: #{generator_forward.15} parent=0 // loop_body
    %s15 = ssub.s32 %s10, 1
    %s16 = ssub.s32 %s10, 2
    %s26 = sadd.s32 1, %s19
    %p27 = scmp.ge.s32.totalorder %s26, 2
    %s28 = scalar_select %p27, 0, %s26
    %s29 = sadd.s32 1, %s18
    %s30 = scalar_select %p27, %s29, %s18
    %p31 = scmp.ge.s32.totalorder %s30, 1
    %s32 = scalar_select %p31, 0, %s30
    %s33 = sadd.s32 1, %s17
    %s34 = scalar_select %p31, %s33, %s17
    %p35 = scmp.ge.s32.totalorder %s34, 4
    %s36 = scalar_select %p35, 0, %s34
    %s37 = ssub.s32 %s17, %s36
    %s38 = ssub.s32 %s19, %s28
    %s39 = sor.u32 %s37, %s38
    %p40 = scmp.eq.s32.totalorder %s39, 0
    %s42 = sadd.s32 %s41, 1
    %s43 = scalar_select %p40, %s41, %s42
    %p46 = pneg %p40
    %p47 = scmp.eq.s32.totalorder %s10, 7
    %p48 = por %p46, %p47
    %p49 = scmp.ne.s32.totalorder %s41, %s44
    %p50 = scmp.eq.s32.totalorder %s10, 0
    %p51 = por %p49, %p50
    %p52 = scmp.ne.s32.totalorder %s41, %s44
    %p53 = scmp.eq.s32.totalorder %s15, 7
    %p54 = por %p52, %p53
    %p55 = scmp.ne.s32.totalorder %s44, %s45
    %p56 = scmp.eq.s32.totalorder %s15, 0
    %p57 = por %p55, %p56
    %p58 = scmp.ne.s32.totalorder %s44, %s45
    %p59 = scmp.eq.s32.totalorder %s16, 7
    %p60 = por %p58, %p59
    %p62 = scmp.ne.s32.totalorder %s45, %s61
    %p63 = scmp.eq.s32.totalorder %s16, 0
    %p64 = por %p62, %p63
    %s65 = ssub.s32 %s17, %s36
    %s66 = ssub.s32 %s18, %s32
    %s67 = sor.u32 %s65, %s66
    %p68 = scmp.eq.s32.totalorder %s67, 0
    %s70 = sadd.s32 %s69, 1
    %s71 = scalar_select %p68, %s69, %s70
    %p74 = pneg %p68
    %p75 = scmp.eq.s32.totalorder %s10, 7
    %p76 = por %p74, %p75
    %p77 = scmp.ne.s32.totalorder %s69, %s72
    %p78 = scmp.eq.s32.totalorder %s10, 0
    %p79 = por %p77, %p78
    %p80 = scmp.ne.s32.totalorder %s69, %s72
    %p81 = scmp.eq.s32.totalorder %s15, 7
    %p82 = por %p80, %p81
    %p83 = scmp.ne.s32.totalorder %s72, %s73
    %p84 = scmp.eq.s32.totalorder %s15, 0
    %p85 = por %p83, %p84
    %p86 = scmp.ne.s32.totalorder %s72, %s73
    %p87 = scmp.eq.s32.totalorder %s16, 7
    %p88 = por %p86, %p87
    %p90 = scmp.ne.s32.totalorder %s73, %s89
    %p91 = scmp.eq.s32.totalorder %s16, 0
    %p92 = por %p90, %p91
    %s93 = ssub.s32 %s17, %s36
    %s94 = ssub.s32 %s19, %s28
    %s95 = sor.u32 %s93, %s94
    %s96 = ssub.s32 %s18, %s32
    %s97 = sor.u32 %s95, %s96
    %p98 = scmp.eq.s32.totalorder %s97, 0
    %s100 = sadd.s32 %s99, 1
    %s101 = scalar_select %p98, %s99, %s100
    %p104 = pneg %p98
    %p105 = scmp.eq.s32.totalorder %s10, 7
    %p106 = por %p104, %p105
    %p107 = scmp.ne.s32.totalorder %s99, %s102
    %p108 = scmp.eq.s32.totalorder %s10, 0
    %p109 = por %p107, %p108
    %p110 = scmp.ne.s32.totalorder %s99, %s102
    %p111 = scmp.eq.s32.totalorder %s15, 7
    %p112 = por %p110, %p111
    %p113 = scmp.ne.s32.totalorder %s102, %s103
    %p114 = scmp.eq.s32.totalorder %s15, 0
    %p115 = por %p113, %p114
    %p116 = scmp.ne.s32.totalorder %s102, %s103
    %p117 = scmp.eq.s32.totalorder %s16, 7
    %p118 = por %p116, %p117
    %p120 = scmp.ne.s32.totalorder %s103, %s119
    %p121 = scmp.eq.s32.totalorder %s16, 0
    %p122 = por %p120, %p121
    %s123 = ssub.s32 %s17, %s36
    %s124 = ssub.s32 %s18, %s32
    %s125 = sor.u32 %s123, %s124
    %p126 = scmp.eq.s32.totalorder %s125, 0
    %s128 = sadd.s32 %s127, 1
    %s129 = scalar_select %p126, %s127, %s128
    %p132 = pneg %p126
    %p133 = scmp.eq.s32.totalorder %s10, 7
    %p134 = por %p132, %p133
    %p135 = scmp.ne.s32.totalorder %s127, %s130
    %p136 = scmp.eq.s32.totalorder %s10, 0
    %p137 = por %p135, %p136
    %p138 = scmp.ne.s32.totalorder %s127, %s130
    %p139 = scmp.eq.s32.totalorder %s15, 7
    %p140 = por %p138, %p139
    %p141 = scmp.ne.s32.totalorder %s130, %s131
    %p142 = scmp.eq.s32.totalorder %s15, 0
    %p143 = por %p141, %p142
    %p144 = scmp.ne.s32.totalorder %s130, %s131
    %p145 = scmp.eq.s32.totalorder %s16, 7
    %p146 = por %p144, %p145
    %p148 = scmp.ne.s32.totalorder %s131, %s147
    %p149 = scmp.eq.s32.totalorder %s16, 0
    %p150 = por %p148, %p149
    %p151 = scmp.le.s32.totalorder 1, %s10
    %p152 = scmp.lt.s32.totalorder %s10, 9
    %p153 = pnand %p151, %p152
    %p154 = pneg %p153
    // Predicated region
    $region9: #{generator_forward.15} parent=5 // pred_check
      _
    $region10: #{generator_forward.15} parent=5 // pred_check_branch
      %156 = sbr.rel (%p153) target = $region12
    $region11: #{generator_forward.15} parent=5 // pred_region
      %s157 = ssub.s32 %s10, 1
    $region12: #{generator_forward.15} parent=5 // pred_fallthru
      _
    %p158 = scmp.lt.s32.totalorder %s10, 8
    // Predicated region
    $region13: #{generator_forward.15} parent=5 // pred_check
      %p159 = pneg %p158
    $region14: #{generator_forward.15} parent=5 // pred_check_branch
      %161 = sbr.rel (%p159) target = $region16
    $region15: #{generator_forward.15} parent=5 // pred_region
      // Predicated region
      $region17: #{generator_forward.15} parent=15 // pred_check
        %p162 = pneg %p51
      $region18: #{generator_forward.15} parent=15 // pred_check_branch
        %164 = sbr.rel (%p162) target = $region20
      $region19: #{generator_forward.15} parent=15 // pred_region
        %s165 = smul.u32 32, %s19
        %p166 = scmp.lt.s32.totalorder %s17, 3
        %s167 = scalar_select %p166, %s17, 3
        %p168 = scmp.lt.s32.totalorder %s165, 63
        %s169 = scalar_select %p168, %s165, 63
        %s170 = smul.addr %s167, 64
        %s171 = sadd.s32 %s169, %s170
        %s172 = smul.addr %s171, 4
        %s173 = scalar_lea.vmem %s0, %s172
        %s174 = smul.u32 32, %s19
      $region20: #{generator_forward.15} parent=15 // pred_fallthru
        _
      // Predicated region
      $region21: #{generator_forward.15} parent=15 // pred_check
        %p175 = pneg %p79
      $region22: #{generator_forward.15} parent=15 // pred_check_branch
        %177 = sbr.rel (%p175) target = $region24
      $region23: #{generator_forward.15} parent=15 // pred_region
        %p178 = scmp.lt.s32.totalorder %s17, 3
        %s179 = scalar_select %p178, %s17, 3
        %p180 = scmp.lt.s32.totalorder %s18, 0
        %s181 = scalar_select %p180, %s18, 0
        %s182 = smul.addr %s179, 8
        %s183 = sadd.s32 %s181, %s182
        %s184 = smul.addr %s183, 4
        %s185 = scalar_lea.vmem %s1, %s184
      $region24: #{generator_forward.15} parent=15 // pred_fallthru
        _
    $region16: #{generator_forward.15} parent=5 // pred_fallthru
      _
    %p186 = scmp.le.s32.totalorder 1, %s10
    %p187 = scmp.lt.s32.totalorder %s10, 9
    %p188 = pnand %p186, %p187
    %p189 = pneg %p188
    // Predicated region
    $region25: #{generator_forward.15} parent=5 // pred_check
      _
    $region26: #{generator_forward.15} parent=5 // pred_check_branch
      %191 = sbr.rel (%p188) target = $region28
    $region27: #{generator_forward.15} parent=5 // pred_region
      %s192 = ssub.s32 %s10, 1
      %s193 = smul.u32 32, %s22
      %p194 = scmp.lt.s32.totalorder %s20, 3
      %s195 = scalar_select %p194, %s20, 3
      %p196 = scmp.lt.s32.totalorder %s193, 63
      %s197 = scalar_select %p196, %s193, 63
      %s198 = smul.addr %s195, 64
      %s199 = sadd.s32 %s197, %s198
      %s200 = smul.addr %s199, 4
      %s201 = scalar_lea.vmem %s0, %s200
      %p202 = pneg %p57
      %p203 = pneg %p54
      %p204 = scmp.lt.s32.totalorder %s20, 3
      %s205 = scalar_select %p204, %s20, 3
      %p206 = scmp.lt.s32.totalorder %s21, 0
      %s207 = scalar_select %p206, %s21, 0
      %s208 = smul.addr %s205, 8
      %s209 = sadd.s32 %s207, %s208
      %s210 = smul.addr %s209, 4
      %s211 = scalar_lea.vmem %s1, %s210
      %p212 = pneg %p85
      %p213 = pneg %p82
      %p214 = pneg %p115
      %p215 = pneg %p112
      %s216 = smul.u32 32, %s22
      %p217 = scmp.lt.s32.totalorder %s20, 3
      %s218 = scalar_select %p217, %s20, 3
      %p219 = scmp.lt.s32.totalorder %s216, 63
      %s220 = scalar_select %p219, %s216, 63
      %p221 = scmp.lt.s32.totalorder %s21, 0
      %s222 = scalar_select %p221, %s21, 0
      %s223 = sadd.s32 %s222, %s220
      %s224 = smul.addr %s218, 64
      %s225 = sadd.s32 %s223, %s224
      %s226 = smul.addr %s225, 4
      %s227 = scalar_lea.vmem %s2, %s226
      %p228 = pneg %p143
      %p229 = pneg %p140
      %p230 = scmp.lt.s32.totalorder %s20, 3
      %s231 = scalar_select %p230, %s20, 3
      %p232 = scmp.lt.s32.totalorder %s21, 0
      %s233 = scalar_select %p232, %s21, 0
      %s234 = sadd.s32 %s233, %s231
      %s235 = smul.addr %s234, 2
      %s236 = scalar_lea.vmem %s3, %s235
      %s237 = smul.u32 32, %s22
      %p238 = scmp.lt.s32.totalorder %s20, 3
      %s239 = scalar_select %p238, %s20, 3
      %p240 = scmp.lt.s32.totalorder %s237, 63
      %s241 = scalar_select %p240, %s237, 63
      %s242 = smul.addr %s239, 64
      %s243 = sadd.s32 %s241, %s242
      %s244 = smul.addr %s243, 4
      %s245 = scalar_lea.vmem %s0, %s244
      %s246 = smul.u32 32, %s22
      %p247 = scmp.lt.s32.totalorder %s20, 3
      %s248 = scalar_select %p247, %s20, 3
      %p249 = scmp.lt.s32.totalorder %s21, 0
      %s250 = scalar_select %p249, %s21, 0
      %s251 = smul.addr %s248, 8
      %s252 = sadd.s32 %s250, %s251
      %s253 = smul.addr %s252, 4
      %s254 = scalar_lea.vmem %s1, %s253
      %s255 = smul.u32 32, %s22
      %p256 = scmp.lt.s32.totalorder %s20, 3
      %s257 = scalar_select %p256, %s20, 3
      %p258 = scmp.lt.s32.totalorder %s255, 63
      %s259 = scalar_select %p258, %s255, 63
      %p260 = scmp.lt.s32.totalorder %s21, 0
      %s261 = scalar_select %p260, %s21, 0
      %s262 = sadd.s32 %s261, %s259
      %s263 = smul.addr %s257, 64
      %s264 = sadd.s32 %s262, %s263
      %s265 = smul.addr %s264, 4
      %s266 = scalar_lea.vmem %s2, %s265
      %s267 = smul.u32 32, %s22
      %p268 = scmp.lt.s32.totalorder %s20, 3
      %s269 = scalar_select %p268, %s20, 3
      %p270 = scmp.lt.s32.totalorder %s21, 0
      %s271 = scalar_select %p270, %s21, 0
      %s272 = sadd.s32 %s271, %s269
      %s273 = smul.addr %s272, 2
      %s274 = scalar_lea.vmem %s3, %s273
      %v276 = vld [vmem:[%s245] sm:$0xf]
      %v277 = vld [vmem:[%s245 + $0x4] sm:$0xf]
      %v278 = vld [vmem:[%s245 + $0x8] sm:$0xf]
      %v279 = vld [vmem:[%s245 + $0xc] sm:$0xf]
      %v280 = vld [vmem:[%s245 + $0x10] sm:$0xf]
      %v281 = vld [vmem:[%s245 + $0x14] sm:$0xf]
      %v282 = vld [vmem:[%s245 + $0x18] sm:$0xf]
      %v283 = vld [vmem:[%s245 + $0x1c] sm:$0xf]
      %v284 = vld [vmem:[%s245 + $0x20] sm:$0xf]
      %v285 = vld [vmem:[%s245 + $0x24] sm:$0xf]
      %v286 = vld [vmem:[%s245 + $0x28] sm:$0xf]
      %v287 = vld [vmem:[%s245 + $0x2c] sm:$0xf]
      %v288 = vld [vmem:[%s245 + $0x30] sm:$0xf]
      %v289 = vld [vmem:[%s245 + $0x34] sm:$0xf]
      %v290 = vld [vmem:[%s245 + $0x38] sm:$0xf]
      %v291 = vld [vmem:[%s245 + $0x3c] sm:$0xf]
      %v292 = vld [vmem:[%s245 + $0x40] sm:$0xf]
      %v293 = vld [vmem:[%s245 + $0x44] sm:$0xf]
      %v294 = vld [vmem:[%s245 + $0x48] sm:$0xf]
      %v295 = vld [vmem:[%s245 + $0x4c] sm:$0xf]
      %v296 = vld [vmem:[%s245 + $0x50] sm:$0xf]
      %v297 = vld [vmem:[%s245 + $0x54] sm:$0xf]
      %v298 = vld [vmem:[%s245 + $0x58] sm:$0xf]
      %v299 = vld [vmem:[%s245 + $0x5c] sm:$0xf]
      %v300 = vld [vmem:[%s245 + $0x60] sm:$0xf]
      %v301 = vld [vmem:[%s245 + $0x64] sm:$0xf]
      %v302 = vld [vmem:[%s245 + $0x68] sm:$0xf]
      %v303 = vld [vmem:[%s245 + $0x6c] sm:$0xf]
      %v304 = vld [vmem:[%s245 + $0x70] sm:$0xf]
      %v305 = vld [vmem:[%s245 + $0x74] sm:$0xf]
      %v306 = vld [vmem:[%s245 + $0x78] sm:$0xf]
      %v307 = vld [vmem:[%s245 + $0x7c] sm:$0xf]
      %v308 = vld [vmem:[%s254] sm:$0xf]
      %v309 = vld [vmem:[%s254 + $0x4] sm:$0xf]
      %v310 = vld [vmem:[%s254 + $0x8] sm:$0xf]
      %v311 = vld [vmem:[%s254 + $0xc] sm:$0xf]
      %v312 = vld [vmem:[%s254 + $0x10] sm:$0xf]
      %v313 = vld [vmem:[%s254 + $0x14] sm:$0xf]
      %v314 = vld [vmem:[%s254 + $0x18] sm:$0xf]
      %v315 = vld [vmem:[%s254 + $0x1c] sm:$0xf]
      %v348 = vunpack.c.l.b16 %v276
      %v349 = vunpack.c.l.b16 %v277
      %v350 = vunpack.c.l.b16 %v278
      %v351 = vunpack.c.l.b16 %v279
      %v352 = vunpack.c.l.b16 %v280
      %v353 = vunpack.c.l.b16 %v281
      %v354 = vunpack.c.l.b16 %v282
      %v355 = vunpack.c.l.b16 %v283
      %v356 = vunpack.c.l.b16 %v284
      %v357 = vunpack.c.l.b16 %v285
      %v358 = vunpack.c.l.b16 %v286
      %v359 = vunpack.c.l.b16 %v287
      %v360 = vunpack.c.l.b16 %v288
      %v361 = vunpack.c.l.b16 %v289
      %v362 = vunpack.c.l.b16 %v290
      %v363 = vunpack.c.l.b16 %v291
      %v364 = vunpack.c.l.b16 %v292
      %v365 = vunpack.c.l.b16 %v293
      %v366 = vunpack.c.l.b16 %v294
      %v367 = vunpack.c.l.b16 %v295
      %v368 = vunpack.c.l.b16 %v296
      %v369 = vunpack.c.l.b16 %v297
      %v370 = vunpack.c.l.b16 %v298
      %v371 = vunpack.c.l.b16 %v299
      %v372 = vunpack.c.l.b16 %v300
      %v373 = vunpack.c.l.b16 %v301
      %v374 = vunpack.c.l.b16 %v302
      %v375 = vunpack.c.l.b16 %v303
      %v376 = vunpack.c.l.b16 %v304
      %v377 = vunpack.c.l.b16 %v305
      %v378 = vunpack.c.l.b16 %v306
      %v379 = vunpack.c.l.b16 %v307
      %v380 = vpack.c.b16 %v349, %v348
      %v381 = vpack.c.b16 %v351, %v350
      %v382 = vpack.c.b16 %v353, %v352
      %v383 = vpack.c.b16 %v355, %v354
      %v384 = vpack.c.b16 %v357, %v356
      %v385 = vpack.c.b16 %v359, %v358
      %v386 = vpack.c.b16 %v361, %v360
      %v387 = vpack.c.b16 %v363, %v362
      %v388 = vpack.c.b16 %v365, %v364
      %v389 = vpack.c.b16 %v367, %v366
      %v390 = vpack.c.b16 %v369, %v368
      %v391 = vpack.c.b16 %v371, %v370
      %v392 = vpack.c.b16 %v373, %v372
      %v393 = vpack.c.b16 %v375, %v374
      %v394 = vpack.c.b16 %v377, %v376
      %v395 = vpack.c.b16 %v379, %v378
      %v404 = vunpack.c.l.b16 %v308
      %v405 = vunpack.c.l.b16 %v309
      %v406 = vunpack.c.l.b16 %v310
      %v407 = vunpack.c.l.b16 %v311
      %v408 = vunpack.c.l.b16 %v312
      %v409 = vunpack.c.l.b16 %v313
      %v410 = vunpack.c.l.b16 %v314
      %v411 = vunpack.c.l.b16 %v315
      %v412 = vpack.c.b16 %v405, %v404
      %v413 = vpack.c.b16 %v407, %v406
      %v414 = vpack.c.b16 %v409, %v408
      %v415 = vpack.c.b16 %v411, %v410
      %vm420 = vcmask 523264
      %v422 = vsel %vm420, %v380, 0
      %v425 = vsel %vm420, %v381, 0
      %v428 = vsel %vm420, %v382, 0
      %v431 = vsel %vm420, %v383, 0
      %v434 = vsel %vm420, %v384, 0
      %v437 = vsel %vm420, %v385, 0
      %v440 = vsel %vm420, %v386, 0
      %v443 = vsel %vm420, %v387, 0
      %v446 = vsel %vm420, %v388, 0
      %v449 = vsel %vm420, %v389, 0
      %v452 = vsel %vm420, %v390, 0
      %v455 = vsel %vm420, %v391, 0
      %v458 = vsel %vm420, %v392, 0
      %v461 = vsel %vm420, %v393, 0
      %v464 = vsel %vm420, %v394, 0
      %v467 = vsel %vm420, %v395, 0
      %469 = vmatprep.subr.bf16.mxu0 0
      %470 = vmatpush1.bf16.msra.mxu0 %v412
      %471 = vmatprep.subr.bf16.mxu0 0
      %472 = vmatpush1.bf16.msra.mxu0 %v413
      %473 = vmatprep.subr.bf16.mxu0 0
      %474 = vmatpush1.bf16.msra.mxu0 %v414
      %475 = vmatprep.subr.bf16.mxu0 0
      %476 = vmatpush1.bf16.msra.mxu0 %v415
      %477 = vmatprep.subr.bf16.mxu0 0
      %478 = vmatpush1.bf16.msra.mxu0 0
      %479 = vmatprep.subr.bf16.mxu0 0
      %480 = vmatpush1.bf16.msra.mxu0 0
      %481 = vmatprep.subr.bf16.mxu0 0
      %482 = vmatpush1.bf16.msra.mxu0 0
      %483 = vmatprep.subr.bf16.mxu0 0
      %484 = vmatpush1.bf16.msra.mxu0 0
      %485 = vmatprep.subr.bf16.mxu0 0
      %486 = vmatpush1.bf16.msra.mxu0 0
      %487 = vmatprep.subr.bf16.mxu0 0
      %488 = vmatpush1.bf16.msra.mxu0 0
      %489 = vmatprep.subr.bf16.mxu0 0
      %490 = vmatpush1.bf16.msra.mxu0 0
      %491 = vmatprep.subr.bf16.mxu0 0
      %492 = vmatpush1.bf16.msra.mxu0 0
      %493 = vmatprep.subr.bf16.mxu0 0
      %494 = vmatpush1.bf16.msra.mxu0 0
      %495 = vmatprep.subr.bf16.mxu0 0
      %496 = vmatpush1.bf16.msra.mxu0 0
      %497 = vmatprep.subr.bf16.mxu0 0
      %498 = vmatpush1.bf16.msra.mxu0 0
      %499 = vmatprep.subr.bf16.mxu0 0
      %500 = vmatpush1.bf16.msra.mxu0 0
      %501 = vmatprep.mubr.bf16.mxu0 0
      %502 = vmatmul.mubr.bf16.gmra.mrb[0].mxu0 %v422
      %v503 = vpop.f32.mrb[0].mxu0
      %v504 = vadd.f32 0.0, %v503
      %v505 = vpop.f32.mrb[0].mxu0
      %v506 = vpop.f32.mrb[0].mxu0
      %v507 = vadd.f32 0.0, %v506
      %v508 = vpop.f32.mrb[0].mxu0
      %509 = vmatprep.mubr.bf16.mxu0 0
      %510 = vmatmul.mubr.bf16.gmra.mrb[0].mxu0 %v425
      %v511 = vpop.f32.mrb[0].mxu0
      %v512 = vadd.f32 0.0, %v511
      %v513 = vpop.f32.mrb[0].mxu0
      %v514 = vpop.f32.mrb[0].mxu0
      %v515 = vadd.f32 0.0, %v514
      %v516 = vpop.f32.mrb[0].mxu0
      %517 = vmatprep.mubr.bf16.mxu0 0
      %518 = vmatmul.mubr.bf16.gmra.mrb[0].mxu0 %v428
      %v519 = vpop.f32.mrb[0].mxu0
      %v520 = vadd.f32 0.0, %v519
      %v521 = vpop.f32.mrb[0].mxu0
      %v522 = vpop.f32.mrb[0].mxu0
      %v523 = vadd.f32 0.0, %v522
      %v524 = vpop.f32.mrb[0].mxu0
      %525 = vmatprep.mubr.bf16.mxu0 0
      %526 = vmatmul.mubr.bf16.gmra.mrb[0].mxu0 %v431
      %v527 = vpop.f32.mrb[0].mxu0
      %v528 = vadd.f32 0.0, %v527
      %v529 = vpop.f32.mrb[0].mxu0
      %v530 = vpop.f32.mrb[0].mxu0
      %v531 = vadd.f32 0.0, %v530
      %v532 = vpop.f32.mrb[0].mxu0
      %533 = vmatprep.mubr.bf16.mxu0 0
      %534 = vmatmul.mubr.bf16.gmra.mrb[0].mxu0 %v434
      %v535 = vpop.f32.mrb[0].mxu0
      %v536 = vadd.f32 0.0, %v535
      %v537 = vpop.f32.mrb[0].mxu0
      %v538 = vpop.f32.mrb[0].mxu0
      %v539 = vadd.f32 0.0, %v538
      %v540 = vpop.f32.mrb[0].mxu0
      %541 = vmatprep.mubr.bf16.mxu0 0
      %542 = vmatmul.mubr.bf16.gmra.mrb[0].mxu0 %v437
      %v543 = vpop.f32.mrb[0].mxu0
      %v544 = vadd.f32 0.0, %v543
      %v545 = vpop.f32.mrb[0].mxu0
      %v546 = vpop.f32.mrb[0].mxu0
      %v547 = vadd.f32 0.0, %v546
      %v548 = vpop.f32.mrb[0].mxu0
      %549 = vmatprep.mubr.bf16.mxu0 0
      %550 = vmatmul.mubr.bf16.gmra.mrb[0].mxu0 %v440
      %v551 = vpop.f32.mrb[0].mxu0
      %v552 = vadd.f32 0.0, %v551
      %v553 = vpop.f32.mrb[0].mxu0
      %v554 = vpop.f32.mrb[0].mxu0
      %v555 = vadd.f32 0.0, %v554
      %v556 = vpop.f32.mrb[0].mxu0
      %557 = vmatprep.mubr.bf16.mxu0 0
      %558 = vmatmul.mubr.bf16.gmra.mrb[0].mxu0 %v443
      %v559 = vpop.f32.mrb[0].mxu0
      %v560 = vadd.f32 0.0, %v559
      %v561 = vpop.f32.mrb[0].mxu0
      %v562 = vpop.f32.mrb[0].mxu0
      %v563 = vadd.f32 0.0, %v562
      %v564 = vpop.f32.mrb[0].mxu0
      %565 = vmatprep.mubr.bf16.mxu0 0
      %566 = vmatmul.mubr.bf16.gmra.mrb[0].mxu0 %v446
      %v567 = vpop.f32.mrb[0].mxu0
      %v568 = vadd.f32 0.0, %v567
      %v569 = vpop.f32.mrb[0].mxu0
      %v570 = vpop.f32.mrb[0].mxu0
      %v571 = vadd.f32 0.0, %v570
      %v572 = vpop.f32.mrb[0].mxu0
      %573 = vmatprep.mubr.bf16.mxu0 0
      %574 = vmatmul.mubr.bf16.gmra.mrb[0].mxu0 %v449
      %v575 = vpop.f32.mrb[0].mxu0
      %v576 = vadd.f32 0.0, %v575
      %v577 = vpop.f32.mrb[0].mxu0
      %v578 = vpop.f32.mrb[0].mxu0
      %v579 = vadd.f32 0.0, %v578
      %v580 = vpop.f32.mrb[0].mxu0
      %581 = vmatprep.mubr.bf16.mxu0 0
      %582 = vmatmul.mubr.bf16.gmra.mrb[0].mxu0 %v452
      %v583 = vpop.f32.mrb[0].mxu0
      %v584 = vadd.f32 0.0, %v583
      %v585 = vpop.f32.mrb[0].mxu0
      %v586 = vpop.f32.mrb[0].mxu0
      %v587 = vadd.f32 0.0, %v586
      %v588 = vpop.f32.mrb[0].mxu0
      %589 = vmatprep.mubr.bf16.mxu0 0
      %590 = vmatmul.mubr.bf16.gmra.mrb[0].mxu0 %v455
      %v591 = vpop.f32.mrb[0].mxu0
      %v592 = vadd.f32 0.0, %v591
      %v593 = vpop.f32.mrb[0].mxu0
      %v594 = vpop.f32.mrb[0].mxu0
      %v595 = vadd.f32 0.0, %v594
      %v596 = vpop.f32.mrb[0].mxu0
      %597 = vmatprep.mubr.bf16.mxu0 0
      %598 = vmatmul.mubr.bf16.gmra.mrb[0].mxu0 %v458
      %v599 = vpop.f32.mrb[0].mxu0
      %v600 = vadd.f32 0.0, %v599
      %v601 = vpop.f32.mrb[0].mxu0
      %v602 = vpop.f32.mrb[0].mxu0
      %v603 = vadd.f32 0.0, %v602
      %v604 = vpop.f32.mrb[0].mxu0
      %605 = vmatprep.mubr.bf16.mxu0 0
      %606 = vmatmul.mubr.bf16.gmra.mrb[0].mxu0 %v461
      %v607 = vpop.f32.mrb[0].mxu0
      %v608 = vadd.f32 0.0, %v607
      %v609 = vpop.f32.mrb[0].mxu0
      %v610 = vpop.f32.mrb[0].mxu0
      %v611 = vadd.f32 0.0, %v610
      %v612 = vpop.f32.mrb[0].mxu0
      %613 = vmatprep.mubr.bf16.mxu0 0
      %614 = vmatmul.mubr.bf16.gmra.mrb[0].mxu0 %v464
      %v615 = vpop.f32.mrb[0].mxu0
      %v616 = vadd.f32 0.0, %v615
      %v617 = vpop.f32.mrb[0].mxu0
      %v618 = vpop.f32.mrb[0].mxu0
      %v619 = vadd.f32 0.0, %v618
      %v620 = vpop.f32.mrb[0].mxu0
      %621 = vmatprep.mubr.bf16.mxu0 0
      %622 = vmatmul.mubr.bf16.gmra.mrb[0].mxu0 %v467
      %v623 = vpop.f32.mrb[0].mxu0
      %v624 = vadd.f32 0.0, %v623
      %v625 = vpop.f32.mrb[0].mxu0
      %v626 = vpop.f32.mrb[0].mxu0
      %v627 = vadd.f32 0.0, %v626
      %v628 = vpop.f32.mrb[0].mxu0
      %629 = vdwg.mxu0
      %p630 = scmp.eq.s32.totalorder %s22, 0
      // Predicated region
      $region29: #{generator_forward.15} parent=27 // pred_check
        %p631 = pneg %p630
      $region30: #{generator_forward.15} parent=27 // pred_check_branch
        %633 = sbr.rel (%p631) target = $region32
      $region31: #{generator_forward.15} parent=27 // pred_region
        %634 = vst [vmem:[%s274] sm:$0x3] 0.0
      $region32: #{generator_forward.15} parent=27 // pred_fallthru
        _
      %v635 = vld [vmem:[%s274] sm:$0x3]
      %v636 = vadd.f32 %v504, %v507
      %v637 = vadd.f32 %v636, %v512
      %v638 = vadd.f32 %v637, %v515
      %v639 = vadd.f32 %v638, %v520
      %v640 = vadd.f32 %v639, %v523
      %v641 = vadd.f32 %v640, %v528
      %v642 = vadd.f32 %v641, %v531
      %v643 = vadd.f32 %v642, %v536
      %v644 = vadd.f32 %v643, %v539
      %v645 = vadd.f32 %v644, %v544
      %v646 = vadd.f32 %v645, %v547
      %v647 = vadd.f32 %v646, %v552
      %v648 = vadd.f32 %v647, %v555
      %v649 = vadd.f32 %v648, %v560
      %v650 = vadd.f32 %v649, %v563
      %v651 = vadd.f32 %v650, %v568
      %v652 = vadd.f32 %v651, %v571
      %v653 = vadd.f32 %v652, %v576
      %v654 = vadd.f32 %v653, %v579
      %v655 = vadd.f32 %v654, %v584
      %v656 = vadd.f32 %v655, %v587
      %v657 = vadd.f32 %v656, %v592
      %v658 = vadd.f32 %v657, %v595
      %v659 = vadd.f32 %v658, %v600
      %v660 = vadd.f32 %v659, %v603
      %v661 = vadd.f32 %v660, %v608
      %v662 = vadd.f32 %v661, %v611
      %v663 = vadd.f32 %v662, %v616
      %v664 = vadd.f32 %v663, %v619
      %v665 = vadd.f32 %v664, %v624
      %v666 = vadd.f32 %v665, %v627
      %v667 = vrot.slane %v666, 4
      %v668 = vadd.f32 %v666, %v667
      %v669 = vrot.slane %v668, 2
      %v670 = vadd.f32 %v668, %v669
      %v671 = vrot.slane %v670, 1
      %v672 = vadd.f32 %v670, %v671
      %v673 = vmul.f32 %v504, %v504
      %v674 = vmul.f32 %v507, %v507
      %v675 = vmul.f32 %v512, %v512
      %v676 = vmul.f32 %v515, %v515
      %v677 = vmul.f32 %v520, %v520
      %v678 = vmul.f32 %v523, %v523
      %v679 = vmul.f32 %v528, %v528
      %v680 = vmul.f32 %v531, %v531
      %v681 = vmul.f32 %v536, %v536
      %v682 = vmul.f32 %v539, %v539
      %v683 = vmul.f32 %v544, %v544
      %v684 = vmul.f32 %v547, %v547
      %v685 = vmul.f32 %v552, %v552
      %v686 = vmul.f32 %v555, %v555
      %v687 = vmul.f32 %v560, %v560
      %v688 = vmul.f32 %v563, %v563
      %v689 = vmul.f32 %v568, %v568
      %v690 = vmul.f32 %v571, %v571
      %v691 = vmul.f32 %v576, %v576
      %v692 = vmul.f32 %v579, %v579
      %v693 = vmul.f32 %v584, %v584
      %v694 = vmul.f32 %v587, %v587
      %v695 = vmul.f32 %v592, %v592
      %v696 = vmul.f32 %v595, %v595
      %v697 = vmul.f32 %v600, %v600
      %v698 = vmul.f32 %v603, %v603
      %v699 = vmul.f32 %v608, %v608
      %v700 = vmul.f32 %v611, %v611
      %v701 = vmul.f32 %v616, %v616
      %v702 = vmul.f32 %v619, %v619
      %v703 = vmul.f32 %v624, %v624
      %v704 = vmul.f32 %v627, %v627
      %v705 = vadd.f32 %v673, %v674
      %v706 = vadd.f32 %v705, %v675
      %v707 = vadd.f32 %v706, %v676
      %v708 = vadd.f32 %v707, %v677
      %v709 = vadd.f32 %v708, %v678
      %v710 = vadd.f32 %v709, %v679
      %v711 = vadd.f32 %v710, %v680
      %v712 = vadd.f32 %v711, %v681
      %v713 = vadd.f32 %v712, %v682
      %v714 = vadd.f32 %v713, %v683
      %v715 = vadd.f32 %v714, %v684
      %v716 = vadd.f32 %v715, %v685
      %v717 = vadd.f32 %v716, %v686
      %v718 = vadd.f32 %v717, %v687
      %v719 = vadd.f32 %v718, %v688
      %v720 = vadd.f32 %v719, %v689
      %v721 = vadd.f32 %v720, %v690
      %v722 = vadd.f32 %v721, %v691
      %v723 = vadd.f32 %v722, %v692
      %v724 = vadd.f32 %v723, %v693
      %v725 = vadd.f32 %v724, %v694
      %v726 = vadd.f32 %v725, %v695
      %v727 = vadd.f32 %v726, %v696
      %v728 = vadd.f32 %v727, %v697
      %v729 = vadd.f32 %v728, %v698
      %v730 = vadd.f32 %v729, %v699
      %v731 = vadd.f32 %v730, %v700
      %v732 = vadd.f32 %v731, %v701
      %v733 = vadd.f32 %v732, %v702
      %v734 = vadd.f32 %v733, %v703
      %v735 = vadd.f32 %v734, %v704
      %v736 = vrot.slane %v735, 4
      %v737 = vadd.f32 %v735, %v736
      %v738 = vrot.slane %v737, 2
      %v739 = vadd.f32 %v737, %v738
      %v740 = vrot.slane %v739, 1
      %v741 = vadd.f32 %v739, %v740
      %vm742 = vcmask 1040384
      %v743 = vsel %vm742, %v672, %v741
      %v744 = vadd.f32 %v635, %v743
      %745 = vst [vmem:[%s274] sm:$0x3] %v744
      %v746 = vpack.c.bf16 %v507, %v504
      %v747 = vpack.c.bf16 %v515, %v512
      %v748 = vpack.c.bf16 %v523, %v520
      %v749 = vpack.c.bf16 %v531, %v528
      %v750 = vpack.c.bf16 %v539, %v536
      %v751 = vpack.c.bf16 %v547, %v544
      %v752 = vpack.c.bf16 %v555, %v552
      %v753 = vpack.c.bf16 %v563, %v560
      %v754 = vpack.c.bf16 %v571, %v568
      %v755 = vpack.c.bf16 %v579, %v576
      %v756 = vpack.c.bf16 %v587, %v584
      %v757 = vpack.c.bf16 %v595, %v592
      %v758 = vpack.c.bf16 %v603, %v600
      %v759 = vpack.c.bf16 %v611, %v608
      %v760 = vpack.c.bf16 %v619, %v616
      %v761 = vpack.c.bf16 %v627, %v624
      %v778 = vunpack.c.l.b16 %v746
      %v779 = vunpack.c.h.b16 %v746
      %v780 = vunpack.c.l.b16 %v747
      %v781 = vunpack.c.h.b16 %v747
      %v782 = vunpack.c.l.b16 %v748
      %v783 = vunpack.c.h.b16 %v748
      %v784 = vunpack.c.l.b16 %v749
      %v785 = vunpack.c.h.b16 %v749
      %v786 = vunpack.c.l.b16 %v750
      %v787 = vunpack.c.h.b16 %v750
      %v788 = vunpack.c.l.b16 %v751
      %v789 = vunpack.c.h.b16 %v751
      %v790 = vunpack.c.l.b16 %v752
      %v791 = vunpack.c.h.b16 %v752
      %v792 = vunpack.c.l.b16 %v753
      %v793 = vunpack.c.h.b16 %v753
      %v794 = vunpack.c.l.b16 %v754
      %v795 = vunpack.c.h.b16 %v754
      %v796 = vunpack.c.l.b16 %v755
      %v797 = vunpack.c.h.b16 %v755
      %v798 = vunpack.c.l.b16 %v756
      %v799 = vunpack.c.h.b16 %v756
      %v800 = vunpack.c.l.b16 %v757
      %v801 = vunpack.c.h.b16 %v757
      %v802 = vunpack.c.l.b16 %v758
      %v803 = vunpack.c.h.b16 %v758
      %v804 = vunpack.c.l.b16 %v759
      %v805 = vunpack.c.h.b16 %v759
      %v806 = vunpack.c.l.b16 %v760
      %v807 = vunpack.c.h.b16 %v760
      %v808 = vunpack.c.l.b16 %v761
      %v809 = vunpack.c.h.b16 %v761
      %v810 = vpack.c.b16 %v778, %v778
      %v811 = vpack.c.b16 %v779, %v779
      %v812 = vpack.c.b16 %v780, %v780
      %v813 = vpack.c.b16 %v781, %v781
      %v814 = vpack.c.b16 %v782, %v782
      %v815 = vpack.c.b16 %v783, %v783
      %v816 = vpack.c.b16 %v784, %v784
      %v817 = vpack.c.b16 %v785, %v785
      %v818 = vpack.c.b16 %v786, %v786
      %v819 = vpack.c.b16 %v787, %v787
      %v820 = vpack.c.b16 %v788, %v788
      %v821 = vpack.c.b16 %v789, %v789
      %v822 = vpack.c.b16 %v790, %v790
      %v823 = vpack.c.b16 %v791, %v791
      %v824 = vpack.c.b16 %v792, %v792
      %v825 = vpack.c.b16 %v793, %v793
      %v826 = vpack.c.b16 %v794, %v794
      %v827 = vpack.c.b16 %v795, %v795
      %v828 = vpack.c.b16 %v796, %v796
      %v829 = vpack.c.b16 %v797, %v797
      %v830 = vpack.c.b16 %v798, %v798
      %v831 = vpack.c.b16 %v799, %v799
      %v832 = vpack.c.b16 %v800, %v800
      %v833 = vpack.c.b16 %v801, %v801
      %v834 = vpack.c.b16 %v802, %v802
      %v835 = vpack.c.b16 %v803, %v803
      %v836 = vpack.c.b16 %v804, %v804
      %v837 = vpack.c.b16 %v805, %v805
      %v838 = vpack.c.b16 %v806, %v806
      %v839 = vpack.c.b16 %v807, %v807
      %v840 = vpack.c.b16 %v808, %v808
      %v841 = vpack.c.b16 %v809, %v809
      %874 = vst [vmem:[%s266] sm:$0xf] %v810
      %875 = vst [vmem:[%s266 + $0x4] sm:$0xf] %v811
      %876 = vst [vmem:[%s266 + $0x8] sm:$0xf] %v812
      %877 = vst [vmem:[%s266 + $0xc] sm:$0xf] %v813
      %878 = vst [vmem:[%s266 + $0x10] sm:$0xf] %v814
      %879 = vst [vmem:[%s266 + $0x14] sm:$0xf] %v815
      %880 = vst [vmem:[%s266 + $0x18] sm:$0xf] %v816
      %881 = vst [vmem:[%s266 + $0x1c] sm:$0xf] %v817
      %882 = vst [vmem:[%s266 + $0x20] sm:$0xf] %v818
      %883 = vst [vmem:[%s266 + $0x24] sm:$0xf] %v819
      %884 = vst [vmem:[%s266 + $0x28] sm:$0xf] %v820
      %885 = vst [vmem:[%s266 + $0x2c] sm:$0xf] %v821
      %886 = vst [vmem:[%s266 + $0x30] sm:$0xf] %v822
      %887 = vst [vmem:[%s266 + $0x34] sm:$0xf] %v823
      %888 = vst [vmem:[%s266 + $0x38] sm:$0xf] %v824
      %889 = vst [vmem:[%s266 + $0x3c] sm:$0xf] %v825
      %890 = vst [vmem:[%s266 + $0x40] sm:$0xf] %v826
      %891 = vst [vmem:[%s266 + $0x44] sm:$0xf] %v827
      %892 = vst [vmem:[%s266 + $0x48] sm:$0xf] %v828
      %893 = vst [vmem:[%s266 + $0x4c] sm:$0xf] %v829
      %894 = vst [vmem:[%s266 + $0x50] sm:$0xf] %v830
      %895 = vst [vmem:[%s266 + $0x54] sm:$0xf] %v831
      %896 = vst [vmem:[%s266 + $0x58] sm:$0xf] %v832
      %897 = vst [vmem:[%s266 + $0x5c] sm:$0xf] %v833
      %898 = vst [vmem:[%s266 + $0x60] sm:$0xf] %v834
      %899 = vst [vmem:[%s266 + $0x64] sm:$0xf] %v835
      %900 = vst [vmem:[%s266 + $0x68] sm:$0xf] %v836
      %901 = vst [vmem:[%s266 + $0x6c] sm:$0xf] %v837
      %902 = vst [vmem:[%s266 + $0x70] sm:$0xf] %v838
      %903 = vst [vmem:[%s266 + $0x74] sm:$0xf] %v839
      %904 = vst [vmem:[%s266 + $0x78] sm:$0xf] %v840
      %905 = vst [vmem:[%s266 + $0x7c] sm:$0xf] %v841
      %s906 = smul.u32 32, %s22
      %p907 = scmp.lt.s32.totalorder %s20, 3
      %s908 = scalar_select %p907, %s20, 3
      %p909 = scmp.lt.s32.totalorder %s906, 63
      %s910 = scalar_select %p909, %s906, 63
      %p911 = scmp.lt.s32.totalorder %s21, 0
      %s912 = scalar_select %p911, %s21, 0
      %s913 = sadd.s32 %s912, %s910
      %s914 = smul.addr %s908, 64
      %s915 = sadd.s32 %s913, %s914
      %s916 = smul.addr %s915, 4
      %s917 = scalar_lea.vmem %s2, %s916
      %p918 = scmp.lt.s32.totalorder %s20, 3
      %s919 = scalar_select %p918, %s20, 3
      %p920 = scmp.lt.s32.totalorder %s21, 0
      %s921 = scalar_select %p920, %s21, 0
      %s922 = sadd.s32 %s921, %s919
      %s923 = smul.addr %s922, 2
      %s924 = scalar_lea.vmem %s3, %s923
      // Predicated region
      $region33: #{generator_forward.15} parent=27 // pred_check
        %p925 = pneg %p112
      $region34: #{generator_forward.15} parent=27 // pred_check_branch
        %927 = sbr.rel (%p925) target = $region36
      $region35: #{generator_forward.15} parent=27 // pred_region
        %s928 = smul.u32 32, %s22
      $region36: #{generator_forward.15} parent=27 // pred_fallthru
        _
      // Predicated region
      $region37: #{generator_forward.15} parent=27 // pred_check
        %p929 = pneg %p140
      $region38: #{generator_forward.15} parent=27 // pred_check_branch
        %931 = sbr.rel (%p929) target = $region40
      $region39: #{generator_forward.15} parent=27 // pred_region
        _
      $region40: #{generator_forward.15} parent=27 // pred_fallthru
        _
    $region28: #{generator_forward.15} parent=5 // pred_fallthru
      _
    %p932 = scmp.le.s32.totalorder 2, %s10
    // Predicated region
    $region41: #{generator_forward.15} parent=5 // pred_check
      %p933 = pneg %p932
    $region42: #{generator_forward.15} parent=5 // pred_check_branch
      %935 = sbr.rel (%p933) target = $region44
    $region43: #{generator_forward.15} parent=5 // pred_region
      %s936 = ssub.s32 %s10, 2
      // Predicated region
      $region45: #{generator_forward.15} parent=43 // pred_check
        %p937 = pneg %p118
      $region46: #{generator_forward.15} parent=43 // pred_check_branch
        %939 = sbr.rel (%p937) target = $region48
      $region47: #{generator_forward.15} parent=43 // pred_region
        %s940 = smul.u32 32, %s25
        %p941 = scmp.lt.s32.totalorder %s23, 3
        %s942 = scalar_select %p941, %s23, 3
        %p943 = scmp.lt.s32.totalorder %s940, 63
        %s944 = scalar_select %p943, %s940, 63
        %p945 = scmp.lt.s32.totalorder %s24, 0
        %s946 = scalar_select %p945, %s24, 0
        %s947 = sadd.s32 %s946, %s944
        %s948 = smul.addr %s942, 64
        %s949 = sadd.s32 %s947, %s948
        %s950 = smul.addr %s949, 4
        %s951 = scalar_lea.vmem %s2, %s950
      $region48: #{generator_forward.15} parent=43 // pred_fallthru
        _
      // Predicated region
      $region49: #{generator_forward.15} parent=43 // pred_check
        %p952 = pneg %p146
      $region50: #{generator_forward.15} parent=43 // pred_check_branch
        %954 = sbr.rel (%p952) target = $region52
      $region51: #{generator_forward.15} parent=43 // pred_region
        %p955 = scmp.lt.s32.totalorder %s23, 3
        %s956 = scalar_select %p955, %s23, 3
        %p957 = scmp.lt.s32.totalorder %s24, 0
        %s958 = scalar_select %p957, %s24, 0
        %s959 = sadd.s32 %s958, %s956
        %s960 = smul.addr %s959, 2
        %s961 = scalar_lea.vmem %s3, %s960
      $region52: #{generator_forward.15} parent=43 // pred_fallthru
        _
    $region44: #{generator_forward.15} parent=5 // pred_fallthru
      _
  $region6: #{generator_forward.15} parent=0 // loop_footer
    %s14 = sadd.s32 1, %s10
  $region7: #{generator_forward.15} parent=0 // loop_footer_branch
    %9 = sbr.rel target = $region3
  $region8: #{generator_forward.15} parent=0 // loop_exit
    _

// kernel: generator_forward.16
$region0: #{generator_forward.16}
  #allocation0 [shape = 'u32[]', space=smem, size = 0x4, offset = 0x4, fixed_abs, tag = 'smem constant byte address 0x4 - core index']
  #allocation1 [shape = 'u32[144,128]{1,0:T(1,128)}', space=vmem, size = 0x12000, scoped, tag = 'internal scratch']
  %s0 = inlined_call_operand.vmem [shape: bf16[4,512,128], index: 0, kind: input, shape index: {}]
  %s1 = inlined_call_operand.vmem [shape: f32[2,128], index: 1, kind: input, shape index: {}]
  %s2 = inlined_call_operand.vmem [shape: f32[1,128], index: 2, kind: input, shape index: {}]
  %s3 = inlined_call_operand.vmem [shape: f32[1,128], index: 3, kind: input, shape index: {}]
  %s4 = inlined_call_operand.vmem [shape: bf16[4,512,128], index: 4, kind: output, shape index: {}]
  %s5 = sld [smem:[#allocation0]]
  $region49: #{generator_forward.16} parent=0
    _
  %s7 = ssub.s32 1, %s5
  %s8 = scalar_select 0, %s7, %s5
  loop: start=0, step=1, limit=6
  $region2: #{generator_forward.16} parent=0 // loop_pre_header
    _
  $region3: #{generator_forward.16} parent=0 // loop_header
    %s10 = sphi 0, %s14
    %p11 = scmp.ge.s32.totalorder %s10, 6
    %s17 = sphi 0, %s29
    %s18 = sphi 0, %s25
    %s19 = sphi 0, %s17
    %s20 = sphi 0, %s18
    %s21 = sphi 0, %s19
    %s22 = sphi 0, %s20
    %s34 = sphi 0, %s36
    %s37 = sphi 0, %s34
    %s38 = sphi 0, %s37
    %s54 = sphi 0, %s38
    %s58 = sphi 0, %s58
    %s60 = sphi 0, %s58
    %s61 = sphi 0, %s60
    %s75 = sphi 0, %s61
    %s79 = sphi 0, %s79
    %s81 = sphi 0, %s79
    %s82 = sphi 0, %s81
    %s96 = sphi 0, %s82
    %s100 = sphi 0, %s100
    %s102 = sphi 0, %s100
    %s103 = sphi 0, %s102
    %s117 = sphi 0, %s103
    %s125 = sphi 0, %s127
    %s128 = sphi 0, %s125
    %s129 = sphi 0, %s128
    %s145 = sphi 0, %s129
  $region4: #{generator_forward.16} parent=0 // loop_header_branch
    %13 = sbr.rel (%p11) target = $region8
  $region5: #{generator_forward.16} parent=0 // loop_body
    %s15 = ssub.s32 %s10, 1
    %s16 = ssub.s32 %s10, 2
    %s23 = sadd.s32 1, %s18
    %p24 = scmp.ge.s32.totalorder %s23, 1
    %s25 = scalar_select %p24, 0, %s23
    %s26 = sadd.s32 1, %s17
    %s27 = scalar_select %p24, %s26, %s17
    %p28 = scmp.ge.s32.totalorder %s27, 4
    %s29 = scalar_select %p28, 0, %s27
    %s30 = ssub.s32 %s17, %s29
    %s31 = ssub.s32 %s18, %s25
    %s32 = sor.u32 %s30, %s31
    %p33 = scmp.eq.s32.totalorder %s32, 0
    %s35 = sadd.s32 %s34, 1
    %s36 = scalar_select %p33, %s34, %s35
    %p39 = pneg %p33
    %p40 = scmp.eq.s32.totalorder %s10, 3
    %p41 = por %p39, %p40
    %p42 = scmp.ne.s32.totalorder %s34, %s37
    %p43 = scmp.eq.s32.totalorder %s10, 0
    %p44 = por %p42, %p43
    %p45 = scmp.ne.s32.totalorder %s34, %s37
    %p46 = scmp.eq.s32.totalorder %s15, 3
    %p47 = por %p45, %p46
    %p48 = scmp.ne.s32.totalorder %s37, %s38
    %p49 = scmp.eq.s32.totalorder %s15, 0
    %p50 = por %p48, %p49
    %p51 = scmp.ne.s32.totalorder %s37, %s38
    %p52 = scmp.eq.s32.totalorder %s16, 3
    %p53 = por %p51, %p52
    %p55 = scmp.ne.s32.totalorder %s38, %s54
    %p56 = scmp.eq.s32.totalorder %s16, 0
    %p57 = por %p55, %p56
    %s59 = sadd.s32 %s58, 1
    %p62 = scmp.eq.s32.totalorder %s10, 3
    %p63 = scmp.ne.s32.totalorder %s58, %s60
    %p64 = scmp.eq.s32.totalorder %s10, 0
    %p65 = por %p63, %p64
    %p66 = scmp.ne.s32.totalorder %s58, %s60
    %p67 = scmp.eq.s32.totalorder %s15, 3
    %p68 = por %p66, %p67
    %p69 = scmp.ne.s32.totalorder %s60, %s61
    %p70 = scmp.eq.s32.totalorder %s15, 0
    %p71 = por %p69, %p70
    %p72 = scmp.ne.s32.totalorder %s60, %s61
    %p73 = scmp.eq.s32.totalorder %s16, 3
    %p74 = por %p72, %p73
    %p76 = scmp.ne.s32.totalorder %s61, %s75
    %p77 = scmp.eq.s32.totalorder %s16, 0
    %p78 = por %p76, %p77
    %s80 = sadd.s32 %s79, 1
    %p83 = scmp.eq.s32.totalorder %s10, 3
    %p84 = scmp.ne.s32.totalorder %s79, %s81
    %p85 = scmp.eq.s32.totalorder %s10, 0
    %p86 = por %p84, %p85
    %p87 = scmp.ne.s32.totalorder %s79, %s81
    %p88 = scmp.eq.s32.totalorder %s15, 3
    %p89 = por %p87, %p88
    %p90 = scmp.ne.s32.totalorder %s81, %s82
    %p91 = scmp.eq.s32.totalorder %s15, 0
    %p92 = por %p90, %p91
    %p93 = scmp.ne.s32.totalorder %s81, %s82
    %p94 = scmp.eq.s32.totalorder %s16, 3
    %p95 = por %p93, %p94
    %p97 = scmp.ne.s32.totalorder %s82, %s96
    %p98 = scmp.eq.s32.totalorder %s16, 0
    %p99 = por %p97, %p98
    %s101 = sadd.s32 %s100, 1
    %p104 = scmp.eq.s32.totalorder %s10, 3
    %p105 = scmp.ne.s32.totalorder %s100, %s102
    %p106 = scmp.eq.s32.totalorder %s10, 0
    %p107 = por %p105, %p106
    %p108 = scmp.ne.s32.totalorder %s100, %s102
    %p109 = scmp.eq.s32.totalorder %s15, 3
    %p110 = por %p108, %p109
    %p111 = scmp.ne.s32.totalorder %s102, %s103
    %p112 = scmp.eq.s32.totalorder %s15, 0
    %p113 = por %p111, %p112
    %p114 = scmp.ne.s32.totalorder %s102, %s103
    %p115 = scmp.eq.s32.totalorder %s16, 3
    %p116 = por %p114, %p115
    %p118 = scmp.ne.s32.totalorder %s103, %s117
    %p119 = scmp.eq.s32.totalorder %s16, 0
    %p120 = por %p118, %p119
    %s121 = ssub.s32 %s17, %s29
    %s122 = ssub.s32 %s18, %s25
    %s123 = sor.u32 %s121, %s122
    %p124 = scmp.eq.s32.totalorder %s123, 0
    %s126 = sadd.s32 %s125, 1
    %s127 = scalar_select %p124, %s125, %s126
    %p130 = pneg %p124
    %p131 = scmp.eq.s32.totalorder %s10, 3
    %p132 = por %p130, %p131
    %p133 = scmp.ne.s32.totalorder %s125, %s128
    %p134 = scmp.eq.s32.totalorder %s10, 0
    %p135 = por %p133, %p134
    %p136 = scmp.ne.s32.totalorder %s125, %s128
    %p137 = scmp.eq.s32.totalorder %s15, 3
    %p138 = por %p136, %p137
    %p139 = scmp.ne.s32.totalorder %s128, %s129
    %p140 = scmp.eq.s32.totalorder %s15, 0
    %p141 = por %p139, %p140
    %p142 = scmp.ne.s32.totalorder %s128, %s129
    %p143 = scmp.eq.s32.totalorder %s16, 3
    %p144 = por %p142, %p143
    %p146 = scmp.ne.s32.totalorder %s129, %s145
    %p147 = scmp.eq.s32.totalorder %s16, 0
    %p148 = por %p146, %p147
    %p149 = scmp.le.s32.totalorder 1, %s10
    %p150 = scmp.lt.s32.totalorder %s10, 5
    %p151 = pnand %p149, %p150
    %p152 = pneg %p151
    // Predicated region
    $region9: #{generator_forward.16} parent=5 // pred_check
      _
    $region10: #{generator_forward.16} parent=5 // pred_check_branch
      %154 = sbr.rel (%p151) target = $region12
    $region11: #{generator_forward.16} parent=5 // pred_region
      %s155 = ssub.s32 %s10, 1
      // Predicated region
      $region13: #{generator_forward.16} parent=11 // pred_check
        %p156 = pneg %p71
      $region14: #{generator_forward.16} parent=11 // pred_check_branch
        %158 = sbr.rel (%p156) target = $region16
      $region15: #{generator_forward.16} parent=11 // pred_region
        _
      $region16: #{generator_forward.16} parent=11 // pred_fallthru
        _
      // Predicated region
      $region17: #{generator_forward.16} parent=11 // pred_check
        %p159 = pneg %p92
      $region18: #{generator_forward.16} parent=11 // pred_check_branch
        %161 = sbr.rel (%p159) target = $region20
      $region19: #{generator_forward.16} parent=11 // pred_region
        _
      $region20: #{generator_forward.16} parent=11 // pred_fallthru
        _
      // Predicated region
      $region21: #{generator_forward.16} parent=11 // pred_check
        %p162 = pneg %p113
      $region22: #{generator_forward.16} parent=11 // pred_check_branch
        %164 = sbr.rel (%p162) target = $region24
      $region23: #{generator_forward.16} parent=11 // pred_region
        _
      $region24: #{generator_forward.16} parent=11 // pred_fallthru
        _
    $region12: #{generator_forward.16} parent=5 // pred_fallthru
      _
    %p165 = scmp.lt.s32.totalorder %s10, 4
    // Predicated region
    $region25: #{generator_forward.16} parent=5 // pred_check
      %p166 = pneg %p165
    $region26: #{generator_forward.16} parent=5 // pred_check_branch
      %168 = sbr.rel (%p166) target = $region28
    $region27: #{generator_forward.16} parent=5 // pred_region
      // Predicated region
      $region29: #{generator_forward.16} parent=27 // pred_check
        %p169 = pneg %p44
      $region30: #{generator_forward.16} parent=27 // pred_check_branch
        %171 = sbr.rel (%p169) target = $region32
      $region31: #{generator_forward.16} parent=27 // pred_region
        %s172 = smul.u32 64, %s18
        %p173 = scmp.lt.s32.totalorder %s17, 3
        %s174 = scalar_select %p173, %s17, 3
        %p175 = scmp.lt.s32.totalorder %s172, 63
        %s176 = scalar_select %p175, %s172, 63
        %s177 = smul.addr %s174, 64
        %s178 = sadd.s32 %s176, %s177
        %s179 = smul.addr %s178, 4
        %s180 = scalar_lea.vmem %s0, %s179
        %s181 = smul.u32 64, %s18
      $region32: #{generator_forward.16} parent=27 // pred_fallthru
        _
    $region28: #{generator_forward.16} parent=5 // pred_fallthru
      _
    %p182 = scmp.le.s32.totalorder 1, %s10
    %p183 = scmp.lt.s32.totalorder %s10, 5
    %p184 = pnand %p182, %p183
    %p185 = pneg %p184
    // Predicated region
    $region33: #{generator_forward.16} parent=5 // pred_check
      _
    $region34: #{generator_forward.16} parent=5 // pred_check_branch
      %187 = sbr.rel (%p184) target = $region36
    $region35: #{generator_forward.16} parent=5 // pred_region
      %s188 = ssub.s32 %s10, 1
      %s189 = smul.u32 64, %s20
      %p190 = scmp.lt.s32.totalorder %s19, 3
      %s191 = scalar_select %p190, %s19, 3
      %p192 = scmp.lt.s32.totalorder %s189, 63
      %s193 = scalar_select %p192, %s189, 63
      %s194 = smul.addr %s191, 64
      %s195 = sadd.s32 %s193, %s194
      %s196 = smul.addr %s195, 4
      %s197 = scalar_lea.vmem %s0, %s196
      %p198 = pneg %p50
      %p199 = pneg %p47
      %p200 = pneg %p71
      %p201 = pneg %p68
      %p202 = pneg %p92
      %p203 = pneg %p89
      %p204 = pneg %p113
      %p205 = pneg %p110
      %p206 = pneg %p141
      %p207 = pneg %p138
      %s208 = smul.u32 64, %s20
      %p209 = scmp.lt.s32.totalorder %s19, 3
      %s210 = scalar_select %p209, %s19, 3
      %p211 = scmp.lt.s32.totalorder %s208, 63
      %s212 = scalar_select %p211, %s208, 63
      %s213 = smul.addr %s210, 64
      %s214 = sadd.s32 %s212, %s213
      %s215 = smul.addr %s214, 4
      %s216 = scalar_lea.vmem %s4, %s215
      %s217 = smul.u32 64, %s20
      %p218 = scmp.lt.s32.totalorder %s19, 3
      %s219 = scalar_select %p218, %s19, 3
      %p220 = scmp.lt.s32.totalorder %s217, 63
      %s221 = scalar_select %p220, %s217, 63
      %s222 = smul.addr %s219, 64
      %s223 = sadd.s32 %s221, %s222
      %s224 = smul.addr %s223, 4
      %s225 = scalar_lea.vmem %s0, %s224
      %s226 = smul.u32 64, %s20
      %s227 = smul.u32 64, %s20
      %p228 = scmp.lt.s32.totalorder %s19, 3
      %s229 = scalar_select %p228, %s19, 3
      %p230 = scmp.lt.s32.totalorder %s227, 63
      %s231 = scalar_select %p230, %s227, 63
      %s232 = smul.addr %s229, 64
      %s233 = sadd.s32 %s231, %s232
      %s234 = smul.addr %s233, 4
      %s235 = scalar_lea.vmem %s4, %s234
      %s236 = smul.u32 64, %s20
      %v237 = vld [vmem:[%s225] sm:$0xf]
      %v238 = vld [vmem:[%s225 + $0x4] sm:$0xf]
      %v239 = vld [vmem:[%s225 + $0x8] sm:$0xf]
      %v240 = vld [vmem:[%s225 + $0xc] sm:$0xf]
      %v241 = vld [vmem:[%s225 + $0x10] sm:$0xf]
      %v242 = vld [vmem:[%s225 + $0x14] sm:$0xf]
      %v243 = vld [vmem:[%s225 + $0x18] sm:$0xf]
      %v244 = vld [vmem:[%s225 + $0x1c] sm:$0xf]
      %v245 = vld [vmem:[%s225 + $0x20] sm:$0xf]
      %v246 = vld [vmem:[%s225 + $0x24] sm:$0xf]
      %v247 = vld [vmem:[%s225 + $0x28] sm:$0xf]
      %v248 = vld [vmem:[%s225 + $0x2c] sm:$0xf]
      %v249 = vld [vmem:[%s225 + $0x30] sm:$0xf]
      %v250 = vld [vmem:[%s225 + $0x34] sm:$0xf]
      %v251 = vld [vmem:[%s225 + $0x38] sm:$0xf]
      %v252 = vld [vmem:[%s225 + $0x3c] sm:$0xf]
      %v253 = vld [vmem:[%s225 + $0x40] sm:$0xf]
      %v254 = vld [vmem:[%s225 + $0x44] sm:$0xf]
      %v255 = vld [vmem:[%s225 + $0x48] sm:$0xf]
      %v256 = vld [vmem:[%s225 + $0x4c] sm:$0xf]
      %v257 = vld [vmem:[%s225 + $0x50] sm:$0xf]
      %v258 = vld [vmem:[%s225 + $0x54] sm:$0xf]
      %v259 = vld [vmem:[%s225 + $0x58] sm:$0xf]
      %v260 = vld [vmem:[%s225 + $0x5c] sm:$0xf]
      %v261 = vld [vmem:[%s225 + $0x60] sm:$0xf]
      %v262 = vld [vmem:[%s225 + $0x64] sm:$0xf]
      %v263 = vld [vmem:[%s225 + $0x68] sm:$0xf]
      %v264 = vld [vmem:[%s225 + $0x6c] sm:$0xf]
      %v265 = vld [vmem:[%s225 + $0x70] sm:$0xf]
      %v266 = vld [vmem:[%s225 + $0x74] sm:$0xf]
      %v267 = vld [vmem:[%s225 + $0x78] sm:$0xf]
      %v268 = vld [vmem:[%s225 + $0x7c] sm:$0xf]
      %v269 = vld [vmem:[%s225 + $0x80] sm:$0xf]
      %v270 = vld [vmem:[%s225 + $0x84] sm:$0xf]
      %v271 = vld [vmem:[%s225 + $0x88] sm:$0xf]
      %v272 = vld [vmem:[%s225 + $0x8c] sm:$0xf]
      %v273 = vld [vmem:[%s225 + $0x90] sm:$0xf]
      %v274 = vld [vmem:[%s225 + $0x94] sm:$0xf]
      %v275 = vld [vmem:[%s225 + $0x98] sm:$0xf]
      %v276 = vld [vmem:[%s225 + $0x9c] sm:$0xf]
      %v277 = vld [vmem:[%s225 + $0xa0] sm:$0xf]
      %v278 = vld [vmem:[%s225 + $0xa4] sm:$0xf]
      %v279 = vld [vmem:[%s225 + $0xa8] sm:$0xf]
      %v280 = vld [vmem:[%s225 + $0xac] sm:$0xf]
      %v281 = vld [vmem:[%s225 + $0xb0] sm:$0xf]
      %v282 = vld [vmem:[%s225 + $0xb4] sm:$0xf]
      %v283 = vld [vmem:[%s225 + $0xb8] sm:$0xf]
      %v284 = vld [vmem:[%s225 + $0xbc] sm:$0xf]
      %v285 = vld [vmem:[%s225 + $0xc0] sm:$0xf]
      %v286 = vld [vmem:[%s225 + $0xc4] sm:$0xf]
      %v287 = vld [vmem:[%s225 + $0xc8] sm:$0xf]
      %v288 = vld [vmem:[%s225 + $0xcc] sm:$0xf]
      %v289 = vld [vmem:[%s225 + $0xd0] sm:$0xf]
      %v290 = vld [vmem:[%s225 + $0xd4] sm:$0xf]
      %v291 = vld [vmem:[%s225 + $0xd8] sm:$0xf]
      %v292 = vld [vmem:[%s225 + $0xdc] sm:$0xf]
      %v293 = vld [vmem:[%s225 + $0xe0] sm:$0xf]
      %v294 = vld [vmem:[%s225 + $0xe4] sm:$0xf]
      %v295 = vld [vmem:[%s225 + $0xe8] sm:$0xf]
      %v296 = vld [vmem:[%s225 + $0xec] sm:$0xf]
      %v297 = vld [vmem:[%s225 + $0xf0] sm:$0xf]
      %v298 = vld [vmem:[%s225 + $0xf4] sm:$0xf]
      %v299 = vld [vmem:[%s225 + $0xf8] sm:$0xf]
      %v300 = vld [vmem:[%s225 + $0xfc] sm:$0xf]
      %v301 = vunpack.c.l.bf16 %v237
      %v302 = vunpack.c.l.bf16 %v238
      %v303 = vunpack.c.l.bf16 %v239
      %v304 = vunpack.c.l.bf16 %v240
      %v305 = vunpack.c.l.bf16 %v241
      %v306 = vunpack.c.l.bf16 %v242
      %v307 = vunpack.c.l.bf16 %v243
      %v308 = vunpack.c.l.bf16 %v244
      %v309 = vunpack.c.l.bf16 %v245
      %v310 = vunpack.c.l.bf16 %v246
      %v311 = vunpack.c.l.bf16 %v247
      %v312 = vunpack.c.l.bf16 %v248
      %v313 = vunpack.c.l.bf16 %v249
      %v314 = vunpack.c.l.bf16 %v250
      %v315 = vunpack.c.l.bf16 %v251
      %v316 = vunpack.c.l.bf16 %v252
      %v317 = vunpack.c.l.bf16 %v253
      %v318 = vunpack.c.l.bf16 %v254
      %v319 = vunpack.c.l.bf16 %v255
      %v320 = vunpack.c.l.bf16 %v256
      %v321 = vunpack.c.l.bf16 %v257
      %v322 = vunpack.c.l.bf16 %v258
      %v323 = vunpack.c.l.bf16 %v259
      %v324 = vunpack.c.l.bf16 %v260
      %v325 = vunpack.c.l.bf16 %v261
      %v326 = vunpack.c.l.bf16 %v262
      %v327 = vunpack.c.l.bf16 %v263
      %v328 = vunpack.c.l.bf16 %v264
      %v329 = vunpack.c.l.bf16 %v265
      %v330 = vunpack.c.l.bf16 %v266
      %v331 = vunpack.c.l.bf16 %v267
      %v332 = vunpack.c.l.bf16 %v268
      %v333 = vunpack.c.l.bf16 %v269
      %v334 = vunpack.c.l.bf16 %v270
      %v335 = vunpack.c.l.bf16 %v271
      %v336 = vunpack.c.l.bf16 %v272
      %v337 = vunpack.c.l.bf16 %v273
      %v338 = vunpack.c.l.bf16 %v274
      %v339 = vunpack.c.l.bf16 %v275
      %v340 = vunpack.c.l.bf16 %v276
      %v341 = vunpack.c.l.bf16 %v277
      %v342 = vunpack.c.l.bf16 %v278
      %v343 = vunpack.c.l.bf16 %v279
      %v344 = vunpack.c.l.bf16 %v280
      %v345 = vunpack.c.l.bf16 %v281
      %v346 = vunpack.c.l.bf16 %v282
      %v347 = vunpack.c.l.bf16 %v283
      %v348 = vunpack.c.l.bf16 %v284
      %v349 = vunpack.c.l.bf16 %v285
      %v350 = vunpack.c.l.bf16 %v286
      %v351 = vunpack.c.l.bf16 %v287
      %v352 = vunpack.c.l.bf16 %v288
      %v353 = vunpack.c.l.bf16 %v289
      %v354 = vunpack.c.l.bf16 %v290
      %v355 = vunpack.c.l.bf16 %v291
      %v356 = vunpack.c.l.bf16 %v292
      %v357 = vunpack.c.l.bf16 %v293
      %v358 = vunpack.c.l.bf16 %v294
      %v359 = vunpack.c.l.bf16 %v295
      %v360 = vunpack.c.l.bf16 %v296
      %v361 = vunpack.c.l.bf16 %v297
      %v362 = vunpack.c.l.bf16 %v298
      %v363 = vunpack.c.l.bf16 %v299
      %v364 = vunpack.c.l.bf16 %v300
      %v365 = vld [vmem:[%s1] sm:$0x3]
      %v366 = vmul.f32 %v365, 0.00048828125
      %v367 = vmul.f32 %v366, %v366
      %v369 = vrot.slane %v367, 7
      %v371 = vsub.f32 %v366, %v369
      %v372 = vmax.f32 %v371, 0.0
      %v373 = vadd.f32 %v372, 1e-05
      %v374 = vrsqrt.pop %v373
      %v375 = vld [vmem:[%s2] sm:$0x1]
      %v377 = vlaneseq
      %v378 = vshrl.u32 %v377, 7
      %v379 = vsub.s32 0, %v378
      %v380 = vrot.slane %v375, %v379
      %v382 = vmul.f32 %v374, %v380
      %v383 = vld [vmem:[%s3] sm:$0x1]
      %v385 = vrot.slane %v382, 1
      %v387 = vmul.f32 %v366, %v385
      %v388 = vsub.f32 %v383, %v387
      %v389 = vlaneseq
      %v390 = vshrl.u32 %v389, 7
      %v391 = vsub.s32 1, %v390
      %v392 = vrot.slane %v382, %v391
      %v393 = vmul.f32 %v301, %v392
      %v394 = vmul.f32 %v302, %v392
      %v395 = vmul.f32 %v303, %v392
      %v396 = vmul.f32 %v304, %v392
      %v397 = vmul.f32 %v305, %v392
      %v398 = vmul.f32 %v306, %v392
      %v399 = vmul.f32 %v307, %v392
      %v400 = vmul.f32 %v308, %v392
      %v401 = vmul.f32 %v309, %v392
      %v402 = vmul.f32 %v310, %v392
      %v403 = vmul.f32 %v311, %v392
      %v404 = vmul.f32 %v312, %v392
      %v405 = vmul.f32 %v313, %v392
      %v406 = vmul.f32 %v314, %v392
      %v407 = vmul.f32 %v315, %v392
      %v408 = vmul.f32 %v316, %v392
      %v409 = vmul.f32 %v317, %v392
      %v410 = vmul.f32 %v318, %v392
      %v411 = vmul.f32 %v319, %v392
      %v412 = vmul.f32 %v320, %v392
      %v413 = vmul.f32 %v321, %v392
      %v414 = vmul.f32 %v322, %v392
      %v415 = vmul.f32 %v323, %v392
      %v416 = vmul.f32 %v324, %v392
      %v417 = vmul.f32 %v325, %v392
      %v418 = vmul.f32 %v326, %v392
      %v419 = vmul.f32 %v327, %v392
      %v420 = vmul.f32 %v328, %v392
      %v421 = vmul.f32 %v329, %v392
      %v422 = vmul.f32 %v330, %v392
      %v423 = vmul.f32 %v331, %v392
      %v424 = vmul.f32 %v332, %v392
      %v425 = vmul.f32 %v333, %v392
      %v426 = vmul.f32 %v334, %v392
      %v427 = vmul.f32 %v335, %v392
      %v428 = vmul.f32 %v336, %v392
      %v429 = vmul.f32 %v337, %v392
      %v430 = vmul.f32 %v338, %v392
      %v431 = vmul.f32 %v339, %v392
      %v432 = vmul.f32 %v340, %v392
      %v433 = vmul.f32 %v341, %v392
      %v434 = vmul.f32 %v342, %v392
      %v435 = vmul.f32 %v343, %v392
      %v436 = vmul.f32 %v344, %v392
      %v437 = vmul.f32 %v345, %v392
      %v438 = vmul.f32 %v346, %v392
      %v439 = vmul.f32 %v347, %v392
      %v440 = vmul.f32 %v348, %v392
      %v441 = vmul.f32 %v349, %v392
      %v442 = vmul.f32 %v350, %v392
      %v443 = vmul.f32 %v351, %v392
      %v444 = vmul.f32 %v352, %v392
      %v445 = vmul.f32 %v353, %v392
      %v446 = vmul.f32 %v354, %v392
      %v447 = vmul.f32 %v355, %v392
      %v448 = vmul.f32 %v356, %v392
      %v449 = vmul.f32 %v357, %v392
      %v450 = vmul.f32 %v358, %v392
      %v451 = vmul.f32 %v359, %v392
      %v452 = vmul.f32 %v360, %v392
      %v453 = vmul.f32 %v361, %v392
      %v454 = vmul.f32 %v362, %v392
      %v455 = vmul.f32 %v363, %v392
      %v456 = vmul.f32 %v364, %v392
      %v458 = vlaneseq
      %v459 = vshrl.u32 %v458, 7
      %v460 = vsub.s32 0, %v459
      %v461 = vrot.slane %v388, %v460
      %v463 = vadd.f32 %v393, %v461
      %v464 = vadd.f32 %v394, %v461
      %v465 = vadd.f32 %v395, %v461
      %v466 = vadd.f32 %v396, %v461
      %v467 = vadd.f32 %v397, %v461
      %v468 = vadd.f32 %v398, %v461
      %v469 = vadd.f32 %v399, %v461
      %v470 = vadd.f32 %v400, %v461
      %v471 = vadd.f32 %v401, %v461
      %v472 = vadd.f32 %v402, %v461
      %v473 = vadd.f32 %v403, %v461
      %v474 = vadd.f32 %v404, %v461
      %v475 = vadd.f32 %v405, %v461
      %v476 = vadd.f32 %v406, %v461
      %v477 = vadd.f32 %v407, %v461
      %v478 = vadd.f32 %v408, %v461
      %v479 = vadd.f32 %v409, %v461
      %v480 = vadd.f32 %v410, %v461
      %v481 = vadd.f32 %v411, %v461
      %v482 = vadd.f32 %v412, %v461
      %v483 = vadd.f32 %v413, %v461
      %v484 = vadd.f32 %v414, %v461
      %v485 = vadd.f32 %v415, %v461
      %v486 = vadd.f32 %v416, %v461
      %v487 = vadd.f32 %v417, %v461
      %v488 = vadd.f32 %v418, %v461
      %v489 = vadd.f32 %v419, %v461
      %v490 = vadd.f32 %v420, %v461
      %v491 = vadd.f32 %v421, %v461
      %v492 = vadd.f32 %v422, %v461
      %v493 = vadd.f32 %v423, %v461
      %v494 = vadd.f32 %v424, %v461
      %v495 = vadd.f32 %v425, %v461
      %v496 = vadd.f32 %v426, %v461
      %v497 = vadd.f32 %v427, %v461
      %v498 = vadd.f32 %v428, %v461
      %v499 = vadd.f32 %v429, %v461
      %v500 = vadd.f32 %v430, %v461
      %v501 = vadd.f32 %v431, %v461
      %v502 = vadd.f32 %v432, %v461
      %v503 = vadd.f32 %v433, %v461
      %v504 = vadd.f32 %v434, %v461
      %v505 = vadd.f32 %v435, %v461
      %v506 = vadd.f32 %v436, %v461
      %v507 = vadd.f32 %v437, %v461
      %v508 = vadd.f32 %v438, %v461
      %v509 = vadd.f32 %v439, %v461
      %v510 = vadd.f32 %v440, %v461
      %v511 = vadd.f32 %v441, %v461
      %v512 = vadd.f32 %v442, %v461
      %v513 = vadd.f32 %v443, %v461
      %v514 = vadd.f32 %v444, %v461
      %v515 = vadd.f32 %v445, %v461
      %v516 = vadd.f32 %v446, %v461
      %v517 = vadd.f32 %v447, %v461
      %v518 = vadd.f32 %v448, %v461
      %v519 = vadd.f32 %v449, %v461
      %v520 = vadd.f32 %v450, %v461
      %v521 = vadd.f32 %v451, %v461
      %v522 = vadd.f32 %v452, %v461
      %v523 = vadd.f32 %v453, %v461
      %v524 = vadd.f32 %v454, %v461
      %v525 = vadd.f32 %v455, %v461
      %v526 = vadd.f32 %v456, %v461
      %v527 = vmax.f32 %v463, 0.0
      %v528 = vmax.f32 %v464, 0.0
      %v529 = vmax.f32 %v465, 0.0
      %v530 = vmax.f32 %v466, 0.0
      %v531 = vmax.f32 %v467, 0.0
      %v532 = vmax.f32 %v468, 0.0
      %v533 = vmax.f32 %v469, 0.0
      %v534 = vmax.f32 %v470, 0.0
      %v535 = vmax.f32 %v471, 0.0
      %v536 = vmax.f32 %v472, 0.0
      %v537 = vmax.f32 %v473, 0.0
      %v538 = vmax.f32 %v474, 0.0
      %v539 = vmax.f32 %v475, 0.0
      %v540 = vmax.f32 %v476, 0.0
      %v541 = vmax.f32 %v477, 0.0
      %v542 = vmax.f32 %v478, 0.0
      %v543 = vmax.f32 %v479, 0.0
      %v544 = vmax.f32 %v480, 0.0
      %v545 = vmax.f32 %v481, 0.0
      %v546 = vmax.f32 %v482, 0.0
      %v547 = vmax.f32 %v483, 0.0
      %v548 = vmax.f32 %v484, 0.0
      %v549 = vmax.f32 %v485, 0.0
      %v550 = vmax.f32 %v486, 0.0
      %v551 = vmax.f32 %v487, 0.0
      %v552 = vmax.f32 %v488, 0.0
      %v553 = vmax.f32 %v489, 0.0
      %v554 = vmax.f32 %v490, 0.0
      %v555 = vmax.f32 %v491, 0.0
      %v556 = vmax.f32 %v492, 0.0
      %v557 = vmax.f32 %v493, 0.0
      %v558 = vmax.f32 %v494, 0.0
      %v559 = vmax.f32 %v495, 0.0
      %v560 = vmax.f32 %v496, 0.0
      %v561 = vmax.f32 %v497, 0.0
      %v562 = vmax.f32 %v498, 0.0
      %v563 = vmax.f32 %v499, 0.0
      %v564 = vmax.f32 %v500, 0.0
      %v565 = vmax.f32 %v501, 0.0
      %v566 = vmax.f32 %v502, 0.0
      %v567 = vmax.f32 %v503, 0.0
      %v568 = vmax.f32 %v504, 0.0
      %v569 = vmax.f32 %v505, 0.0
      %v570 = vmax.f32 %v506, 0.0
      %v571 = vmax.f32 %v507, 0.0
      %v572 = vmax.f32 %v508, 0.0
      %v573 = vmax.f32 %v509, 0.0
      %v574 = vmax.f32 %v510, 0.0
      %v575 = vmax.f32 %v511, 0.0
      %v576 = vmax.f32 %v512, 0.0
      %v577 = vmax.f32 %v513, 0.0
      %v578 = vmax.f32 %v514, 0.0
      %v579 = vmax.f32 %v515, 0.0
      %v580 = vmax.f32 %v516, 0.0
      %v581 = vmax.f32 %v517, 0.0
      %v582 = vmax.f32 %v518, 0.0
      %v583 = vmax.f32 %v519, 0.0
      %v584 = vmax.f32 %v520, 0.0
      %v585 = vmax.f32 %v521, 0.0
      %v586 = vmax.f32 %v522, 0.0
      %v587 = vmax.f32 %v523, 0.0
      %v588 = vmax.f32 %v524, 0.0
      %v589 = vmax.f32 %v525, 0.0
      %v590 = vmax.f32 %v526, 0.0
      %v591 = vpack.c.bf16 %v528, %v527
      %v592 = vpack.c.bf16 %v530, %v529
      %v593 = vpack.c.bf16 %v532, %v531
      %v594 = vpack.c.bf16 %v534, %v533
      %v595 = vpack.c.bf16 %v536, %v535
      %v596 = vpack.c.bf16 %v538, %v537
      %v597 = vpack.c.bf16 %v540, %v539
      %v598 = vpack.c.bf16 %v542, %v541
      %v599 = vpack.c.bf16 %v544, %v543
      %v600 = vpack.c.bf16 %v546, %v545
      %v601 = vpack.c.bf16 %v548, %v547
      %v602 = vpack.c.bf16 %v550, %v549
      %v603 = vpack.c.bf16 %v552, %v551
      %v604 = vpack.c.bf16 %v554, %v553
      %v605 = vpack.c.bf16 %v556, %v555
      %v606 = vpack.c.bf16 %v558, %v557
      %v607 = vpack.c.bf16 %v560, %v559
      %v608 = vpack.c.bf16 %v562, %v561
      %v609 = vpack.c.bf16 %v564, %v563
      %v610 = vpack.c.bf16 %v566, %v565
      %v611 = vpack.c.bf16 %v568, %v567
      %v612 = vpack.c.bf16 %v570, %v569
      %v613 = vpack.c.bf16 %v572, %v571
      %v614 = vpack.c.bf16 %v574, %v573
      %v615 = vpack.c.bf16 %v576, %v575
      %v616 = vpack.c.bf16 %v578, %v577
      %v617 = vpack.c.bf16 %v580, %v579
      %v618 = vpack.c.bf16 %v582, %v581
      %v619 = vpack.c.bf16 %v584, %v583
      %v620 = vpack.c.bf16 %v586, %v585
      %v621 = vpack.c.bf16 %v588, %v587
      %v622 = vpack.c.bf16 %v590, %v589
      %v655 = vunpack.c.l.b16 %v591
      %v656 = vunpack.c.h.b16 %v591
      %v657 = vunpack.c.l.b16 %v592
      %v658 = vunpack.c.h.b16 %v592
      %v659 = vunpack.c.l.b16 %v593
      %v660 = vunpack.c.h.b16 %v593
      %v661 = vunpack.c.l.b16 %v594
      %v662 = vunpack.c.h.b16 %v594
      %v663 = vunpack.c.l.b16 %v595
      %v664 = vunpack.c.h.b16 %v595
      %v665 = vunpack.c.l.b16 %v596
      %v666 = vunpack.c.h.b16 %v596
      %v667 = vunpack.c.l.b16 %v597
      %v668 = vunpack.c.h.b16 %v597
      %v669 = vunpack.c.l.b16 %v598
      %v670 = vunpack.c.h.b16 %v598
      %v671 = vunpack.c.l.b16 %v599
      %v672 = vunpack.c.h.b16 %v599
      %v673 = vunpack.c.l.b16 %v600
      %v674 = vunpack.c.h.b16 %v600
      %v675 = vunpack.c.l.b16 %v601
      %v676 = vunpack.c.h.b16 %v601
      %v677 = vunpack.c.l.b16 %v602
      %v678 = vunpack.c.h.b16 %v602
      %v679 = vunpack.c.l.b16 %v603
      %v680 = vunpack.c.h.b16 %v603
      %v681 = vunpack.c.l.b16 %v604
      %v682 = vunpack.c.h.b16 %v604
      %v683 = vunpack.c.l.b16 %v605
      %v684 = vunpack.c.h.b16 %v605
      %v685 = vunpack.c.l.b16 %v606
      %v686 = vunpack.c.h.b16 %v606
      %v687 = vunpack.c.l.b16 %v607
      %v688 = vunpack.c.h.b16 %v607
      %v689 = vunpack.c.l.b16 %v608
      %v690 = vunpack.c.h.b16 %v608
      %v691 = vunpack.c.l.b16 %v609
      %v692 = vunpack.c.h.b16 %v609
      %v693 = vunpack.c.l.b16 %v610
      %v694 = vunpack.c.h.b16 %v610
      %v695 = vunpack.c.l.b16 %v611
      %v696 = vunpack.c.h.b16 %v611
      %v697 = vunpack.c.l.b16 %v612
      %v698 = vunpack.c.h.b16 %v612
      %v699 = vunpack.c.l.b16 %v613
      %v700 = vunpack.c.h.b16 %v613
      %v701 = vunpack.c.l.b16 %v614
      %v702 = vunpack.c.h.b16 %v614
      %v703 = vunpack.c.l.b16 %v615
      %v704 = vunpack.c.h.b16 %v615
      %v705 = vunpack.c.l.b16 %v616
      %v706 = vunpack.c.h.b16 %v616
      %v707 = vunpack.c.l.b16 %v617
      %v708 = vunpack.c.h.b16 %v617
      %v709 = vunpack.c.l.b16 %v618
      %v710 = vunpack.c.h.b16 %v618
      %v711 = vunpack.c.l.b16 %v619
      %v712 = vunpack.c.h.b16 %v619
      %v713 = vunpack.c.l.b16 %v620
      %v714 = vunpack.c.h.b16 %v620
      %v715 = vunpack.c.l.b16 %v621
      %v716 = vunpack.c.h.b16 %v621
      %v717 = vunpack.c.l.b16 %v622
      %v718 = vunpack.c.h.b16 %v622
      %v719 = vpack.c.b16 %v655, %v655
      %v720 = vpack.c.b16 %v656, %v656
      %v721 = vpack.c.b16 %v657, %v657
      %v722 = vpack.c.b16 %v658, %v658
      %v723 = vpack.c.b16 %v659, %v659
      %v724 = vpack.c.b16 %v660, %v660
      %v725 = vpack.c.b16 %v661, %v661
      %v726 = vpack.c.b16 %v662, %v662
      %v727 = vpack.c.b16 %v663, %v663
      %v728 = vpack.c.b16 %v664, %v664
      %v729 = vpack.c.b16 %v665, %v665
      %v730 = vpack.c.b16 %v666, %v666
      %v731 = vpack.c.b16 %v667, %v667
      %v732 = vpack.c.b16 %v668, %v668
      %v733 = vpack.c.b16 %v669, %v669
      %v734 = vpack.c.b16 %v670, %v670
      %v735 = vpack.c.b16 %v671, %v671
      %v736 = vpack.c.b16 %v672, %v672
      %v737 = vpack.c.b16 %v673, %v673
      %v738 = vpack.c.b16 %v674, %v674
      %v739 = vpack.c.b16 %v675, %v675
      %v740 = vpack.c.b16 %v676, %v676
      %v741 = vpack.c.b16 %v677, %v677
      %v742 = vpack.c.b16 %v678, %v678
      %v743 = vpack.c.b16 %v679, %v679
      %v744 = vpack.c.b16 %v680, %v680
      %v745 = vpack.c.b16 %v681, %v681
      %v746 = vpack.c.b16 %v682, %v682
      %v747 = vpack.c.b16 %v683, %v683
      %v748 = vpack.c.b16 %v684, %v684
      %v749 = vpack.c.b16 %v685, %v685
      %v750 = vpack.c.b16 %v686, %v686
      %v751 = vpack.c.b16 %v687, %v687
      %v752 = vpack.c.b16 %v688, %v688
      %v753 = vpack.c.b16 %v689, %v689
      %v754 = vpack.c.b16 %v690, %v690
      %v755 = vpack.c.b16 %v691, %v691
      %v756 = vpack.c.b16 %v692, %v692
      %v757 = vpack.c.b16 %v693, %v693
      %v758 = vpack.c.b16 %v694, %v694
      %v759 = vpack.c.b16 %v695, %v695
      %v760 = vpack.c.b16 %v696, %v696
      %v761 = vpack.c.b16 %v697, %v697
      %v762 = vpack.c.b16 %v698, %v698
      %v763 = vpack.c.b16 %v699, %v699
      %v764 = vpack.c.b16 %v700, %v700
      %v765 = vpack.c.b16 %v701, %v701
      %v766 = vpack.c.b16 %v702, %v702
      %v767 = vpack.c.b16 %v703, %v703
      %v768 = vpack.c.b16 %v704, %v704
      %v769 = vpack.c.b16 %v705, %v705
      %v770 = vpack.c.b16 %v706, %v706
      %v771 = vpack.c.b16 %v707, %v707
      %v772 = vpack.c.b16 %v708, %v708
      %v773 = vpack.c.b16 %v709, %v709
      %v774 = vpack.c.b16 %v710, %v710
      %v775 = vpack.c.b16 %v711, %v711
      %v776 = vpack.c.b16 %v712, %v712
      %v777 = vpack.c.b16 %v713, %v713
      %v778 = vpack.c.b16 %v714, %v714
      %v779 = vpack.c.b16 %v715, %v715
      %v780 = vpack.c.b16 %v716, %v716
      %v781 = vpack.c.b16 %v717, %v717
      %v782 = vpack.c.b16 %v718, %v718
      %847 = vst [vmem:[%s235] sm:$0xf] %v719
      %848 = vst [vmem:[%s235 + $0x4] sm:$0xf] %v720
      %849 = vst [vmem:[%s235 + $0x8] sm:$0xf] %v721
      %850 = vst [vmem:[%s235 + $0xc] sm:$0xf] %v722
      %851 = vst [vmem:[%s235 + $0x10] sm:$0xf] %v723
      %852 = vst [vmem:[%s235 + $0x14] sm:$0xf] %v724
      %853 = vst [vmem:[%s235 + $0x18] sm:$0xf] %v725
      %854 = vst [vmem:[%s235 + $0x1c] sm:$0xf] %v726
      %855 = vst [vmem:[%s235 + $0x20] sm:$0xf] %v727
      %856 = vst [vmem:[%s235 + $0x24] sm:$0xf] %v728
      %857 = vst [vmem:[%s235 + $0x28] sm:$0xf] %v729
      %858 = vst [vmem:[%s235 + $0x2c] sm:$0xf] %v730
      %859 = vst [vmem:[%s235 + $0x30] sm:$0xf] %v731
      %860 = vst [vmem:[%s235 + $0x34] sm:$0xf] %v732
      %861 = vst [vmem:[%s235 + $0x38] sm:$0xf] %v733
      %862 = vst [vmem:[%s235 + $0x3c] sm:$0xf] %v734
      %863 = vst [vmem:[%s235 + $0x40] sm:$0xf] %v735
      %864 = vst [vmem:[%s235 + $0x44] sm:$0xf] %v736
      %865 = vst [vmem:[%s235 + $0x48] sm:$0xf] %v737
      %866 = vst [vmem:[%s235 + $0x4c] sm:$0xf] %v738
      %867 = vst [vmem:[%s235 + $0x50] sm:$0xf] %v739
      %868 = vst [vmem:[%s235 + $0x54] sm:$0xf] %v740
      %869 = vst [vmem:[%s235 + $0x58] sm:$0xf] %v741
      %870 = vst [vmem:[%s235 + $0x5c] sm:$0xf] %v742
      %871 = vst [vmem:[%s235 + $0x60] sm:$0xf] %v743
      %872 = vst [vmem:[%s235 + $0x64] sm:$0xf] %v744
      %873 = vst [vmem:[%s235 + $0x68] sm:$0xf] %v745
      %874 = vst [vmem:[%s235 + $0x6c] sm:$0xf] %v746
      %875 = vst [vmem:[%s235 + $0x70] sm:$0xf] %v747
      %876 = vst [vmem:[%s235 + $0x74] sm:$0xf] %v748
      %877 = vst [vmem:[%s235 + $0x78] sm:$0xf] %v749
      %878 = vst [vmem:[%s235 + $0x7c] sm:$0xf] %v750
      %879 = vst [vmem:[%s235 + $0x80] sm:$0xf] %v751
      %880 = vst [vmem:[%s235 + $0x84] sm:$0xf] %v752
      %881 = vst [vmem:[%s235 + $0x88] sm:$0xf] %v753
      %882 = vst [vmem:[%s235 + $0x8c] sm:$0xf] %v754
      %883 = vst [vmem:[%s235 + $0x90] sm:$0xf] %v755
      %884 = vst [vmem:[%s235 + $0x94] sm:$0xf] %v756
      %885 = vst [vmem:[%s235 + $0x98] sm:$0xf] %v757
      %886 = vst [vmem:[%s235 + $0x9c] sm:$0xf] %v758
      %887 = vst [vmem:[%s235 + $0xa0] sm:$0xf] %v759
      %888 = vst [vmem:[%s235 + $0xa4] sm:$0xf] %v760
      %889 = vst [vmem:[%s235 + $0xa8] sm:$0xf] %v761
      %890 = vst [vmem:[%s235 + $0xac] sm:$0xf] %v762
      %891 = vst [vmem:[%s235 + $0xb0] sm:$0xf] %v763
      %892 = vst [vmem:[%s235 + $0xb4] sm:$0xf] %v764
      %893 = vst [vmem:[%s235 + $0xb8] sm:$0xf] %v765
      %894 = vst [vmem:[%s235 + $0xbc] sm:$0xf] %v766
      %895 = vst [vmem:[%s235 + $0xc0] sm:$0xf] %v767
      %896 = vst [vmem:[%s235 + $0xc4] sm:$0xf] %v768
      %897 = vst [vmem:[%s235 + $0xc8] sm:$0xf] %v769
      %898 = vst [vmem:[%s235 + $0xcc] sm:$0xf] %v770
      %899 = vst [vmem:[%s235 + $0xd0] sm:$0xf] %v771
      %900 = vst [vmem:[%s235 + $0xd4] sm:$0xf] %v772
      %901 = vst [vmem:[%s235 + $0xd8] sm:$0xf] %v773
      %902 = vst [vmem:[%s235 + $0xdc] sm:$0xf] %v774
      %903 = vst [vmem:[%s235 + $0xe0] sm:$0xf] %v775
      %904 = vst [vmem:[%s235 + $0xe4] sm:$0xf] %v776
      %905 = vst [vmem:[%s235 + $0xe8] sm:$0xf] %v777
      %906 = vst [vmem:[%s235 + $0xec] sm:$0xf] %v778
      %907 = vst [vmem:[%s235 + $0xf0] sm:$0xf] %v779
      %908 = vst [vmem:[%s235 + $0xf4] sm:$0xf] %v780
      %909 = vst [vmem:[%s235 + $0xf8] sm:$0xf] %v781
      %910 = vst [vmem:[%s235 + $0xfc] sm:$0xf] %v782
      %s911 = smul.u32 64, %s20
      %p912 = scmp.lt.s32.totalorder %s19, 3
      %s913 = scalar_select %p912, %s19, 3
      %p914 = scmp.lt.s32.totalorder %s911, 63
      %s915 = scalar_select %p914, %s911, 63
      %s916 = smul.addr %s913, 64
      %s917 = sadd.s32 %s915, %s916
      %s918 = smul.addr %s917, 4
      %s919 = scalar_lea.vmem %s4, %s918
      // Predicated region
      $region37: #{generator_forward.16} parent=35 // pred_check
        %p920 = pneg %p138
      $region38: #{generator_forward.16} parent=35 // pred_check_branch
        %922 = sbr.rel (%p920) target = $region40
      $region39: #{generator_forward.16} parent=35 // pred_region
        %s923 = smul.u32 64, %s20
      $region40: #{generator_forward.16} parent=35 // pred_fallthru
        _
    $region36: #{generator_forward.16} parent=5 // pred_fallthru
      _
    %p924 = scmp.le.s32.totalorder 2, %s10
    // Predicated region
    $region41: #{generator_forward.16} parent=5 // pred_check
      %p925 = pneg %p924
    $region42: #{generator_forward.16} parent=5 // pred_check_branch
      %927 = sbr.rel (%p925) target = $region44
    $region43: #{generator_forward.16} parent=5 // pred_region
      %s928 = ssub.s32 %s10, 2
      // Predicated region
      $region45: #{generator_forward.16} parent=43 // pred_check
        %p929 = pneg %p144
      $region46: #{generator_forward.16} parent=43 // pred_check_branch
        %931 = sbr.rel (%p929) target = $region48
      $region47: #{generator_forward.16} parent=43 // pred_region
        %s932 = smul.u32 64, %s22
        %p933 = scmp.lt.s32.totalorder %s21, 3
        %s934 = scalar_select %p933, %s21, 3
        %p935 = scmp.lt.s32.totalorder %s932, 63
        %s936 = scalar_select %p935, %s932, 63
        %s937 = smul.addr %s934, 64
        %s938 = sadd.s32 %s936, %s937
        %s939 = smul.addr %s938, 4
        %s940 = scalar_lea.vmem %s4, %s939
      $region48: #{generator_forward.16} parent=43 // pred_fallthru
        _
    $region44: #{generator_forward.16} parent=5 // pred_fallthru
      _
  $region6: #{generator_forward.16} parent=0 // loop_footer
    %s14 = sadd.s32 1, %s10
  $region7: #{generator_forward.16} parent=0 // loop_footer_branch
    %9 = sbr.rel target = $region3
  $region8: #{generator_forward.16} parent=0 // loop_exit
    _

// kernel: generator_forward.17
$region0: #{generator_forward.17}
  #allocation0 [shape = 'u32[]', space=smem, size = 0x4, offset = 0x4, fixed_abs, tag = 'smem constant byte address 0x4 - core index']
  #allocation1 [shape = 'u32[144,128]{1,0:T(1,128)}', space=vmem, size = 0x12000, scoped, tag = 'internal scratch']
  %s0 = inlined_call_operand.vmem [shape: bf16[4,8,32], index: 0, kind: input, shape index: {}]
  %s1 = inlined_call_operand.vmem [shape: bf16[4,32,2048], index: 1, kind: input, shape index: {}]
  %s2 = inlined_call_operand.vmem [shape: f32[4,8,2048], index: 2, kind: output, shape index: {}]
  %s3 = sld [smem:[#allocation0]]
  $region64: #{generator_forward.17} parent=0
    _
  %s5 = ssub.s32 1, %s3
  %s6 = scalar_select 0, %s5, %s3
  $region1: #{generator_forward.17} parent=0
    #allocation2 [shape = 'u8[65536]{0}', space=vmem, size = 0x10000, scoped, tag = 'input window, operand 1']
    loop: start=0, step=1, limit=18
    $region2: #{generator_forward.17} parent=1 // loop_pre_header
      _
    $region3: #{generator_forward.17} parent=1 // loop_header
      %s8 = sphi 0, %s12
      %p9 = scmp.ge.s32.totalorder %s8, 18
      %s15 = sphi 0, %s27
      %s16 = sphi 0, %s23
      %s17 = sphi 0, %s15
      %s18 = sphi 0, %s16
      %s19 = sphi 0, %s17
      %s20 = sphi 0, %s18
      %s30 = sphi 0, %s32
      %s33 = sphi 0, %s30
      %s34 = sphi 0, %s33
      %s50 = sphi 0, %s34
      %s58 = sphi 0, %s60
      %s61 = sphi 0, %s58
      %s62 = sphi 0, %s61
      %s78 = sphi 0, %s62
      %s86 = sphi 0, %s88
      %s89 = sphi 0, %s86
      %s90 = sphi 0, %s89
      %s106 = sphi 0, %s90
    $region4: #{generator_forward.17} parent=1 // loop_header_branch
      %11 = sbr.rel (%p9) target = $region8
    $region5: #{generator_forward.17} parent=1 // loop_body
      %s13 = ssub.s32 %s8, 1
      %s14 = ssub.s32 %s8, 2
      %s21 = sadd.s32 1, %s16
      %p22 = scmp.ge.s32.totalorder %s21, 4
      %s23 = scalar_select %p22, 0, %s21
      %s24 = sadd.s32 1, %s15
      %s25 = scalar_select %p22, %s24, %s15
      %p26 = scmp.ge.s32.totalorder %s25, 4
      %s27 = scalar_select %p26, 0, %s25
      %s28 = ssub.s32 %s15, %s27
      %p29 = scmp.eq.s32.totalorder %s28, 0
      %s31 = sadd.s32 %s30, 1
      %s32 = scalar_select %p29, %s30, %s31
      %p35 = pneg %p29
      %p36 = scmp.eq.s32.totalorder %s8, 15
      %p37 = por %p35, %p36
      %p38 = scmp.ne.s32.totalorder %s30, %s33
      %p39 = scmp.eq.s32.totalorder %s8, 0
      %p40 = por %p38, %p39
      %p41 = scmp.ne.s32.totalorder %s30, %s33
      %p42 = scmp.eq.s32.totalorder %s13, 15
      %p43 = por %p41, %p42
      %p44 = scmp.ne.s32.totalorder %s33, %s34
      %p45 = scmp.eq.s32.totalorder %s13, 0
      %p46 = por %p44, %p45
      %p47 = scmp.ne.s32.totalorder %s33, %s34
      %p48 = scmp.eq.s32.totalorder %s14, 15
      %p49 = por %p47, %p48
      %p51 = scmp.ne.s32.totalorder %s34, %s50
      %p52 = scmp.eq.s32.totalorder %s14, 0
      %p53 = por %p51, %p52
      %s54 = ssub.s32 %s15, %s27
      %s55 = ssub.s32 %s16, %s23
      %s56 = sor.u32 %s54, %s55
      %p57 = scmp.eq.s32.totalorder %s56, 0
      %s59 = sadd.s32 %s58, 1
      %s60 = scalar_select %p57, %s58, %s59
      %p63 = pneg %p57
      %p64 = scmp.eq.s32.totalorder %s8, 15
      %p65 = por %p63, %p64
      %p66 = scmp.ne.s32.totalorder %s58, %s61
      %p67 = scmp.eq.s32.totalorder %s8, 0
      %p68 = por %p66, %p67
      %p69 = scmp.ne.s32.totalorder %s58, %s61
      %p70 = scmp.eq.s32.totalorder %s13, 15
      %p71 = por %p69, %p70
      %p72 = scmp.ne.s32.totalorder %s61, %s62
      %p73 = scmp.eq.s32.totalorder %s13, 0
      %p74 = por %p72, %p73
      %p75 = scmp.ne.s32.totalorder %s61, %s62
      %p76 = scmp.eq.s32.totalorder %s14, 15
      %p77 = por %p75, %p76
      %p79 = scmp.ne.s32.totalorder %s62, %s78
      %p80 = scmp.eq.s32.totalorder %s14, 0
      %p81 = por %p79, %p80
      %s82 = ssub.s32 %s15, %s27
      %s83 = ssub.s32 %s16, %s23
      %s84 = sor.u32 %s82, %s83
      %p85 = scmp.eq.s32.totalorder %s84, 0
      %s87 = sadd.s32 %s86, 1
      %s88 = scalar_select %p85, %s86, %s87
      %p91 = pneg %p85
      %p92 = scmp.eq.s32.totalorder %s8, 15
      %p93 = por %p91, %p92
      %p94 = scmp.ne.s32.totalorder %s86, %s89
      %p95 = scmp.eq.s32.totalorder %s8, 0
      %p96 = por %p94, %p95
      %p97 = scmp.ne.s32.totalorder %s86, %s89
      %p98 = scmp.eq.s32.totalorder %s13, 15
      %p99 = por %p97, %p98
      %p100 = scmp.ne.s32.totalorder %s89, %s90
      %p101 = scmp.eq.s32.totalorder %s13, 0
      %p102 = por %p100, %p101
      %p103 = scmp.ne.s32.totalorder %s89, %s90
      %p104 = scmp.eq.s32.totalorder %s14, 15
      %p105 = por %p103, %p104
      %p107 = scmp.ne.s32.totalorder %s90, %s106
      %p108 = scmp.eq.s32.totalorder %s14, 0
      %p109 = por %p107, %p108
      %p110 = scmp.le.s32.totalorder 1, %s8
      %p111 = scmp.lt.s32.totalorder %s8, 17
      %p112 = pnand %p110, %p111
      %p113 = pneg %p112
      // Predicated region
      $region9: #{generator_forward.17} parent=5 // pred_check
        _
      $region10: #{generator_forward.17} parent=5 // pred_check_branch
        %115 = sbr.rel (%p112) target = $region12
      $region11: #{generator_forward.17} parent=5 // pred_region
        %s116 = ssub.s32 %s8, 1
      $region12: #{generator_forward.17} parent=5 // pred_fallthru
        _
      %p117 = scmp.lt.s32.totalorder %s8, 16
      // Predicated region
      $region13: #{generator_forward.17} parent=5 // pred_check
        %p118 = pneg %p117
      $region14: #{generator_forward.17} parent=5 // pred_check_branch
        %120 = sbr.rel (%p118) target = $region16
      $region15: #{generator_forward.17} parent=5 // pred_region
        // Predicated region
        $region17: #{generator_forward.17} parent=15 // pred_check
          %p121 = pneg %p40
        $region18: #{generator_forward.17} parent=15 // pred_check_branch
          %123 = sbr.rel (%p121) target = $region20
        $region19: #{generator_forward.17} parent=15 // pred_region
          %p124 = scmp.lt.s32.totalorder %s15, 3
          %s125 = scalar_select %p124, %s15, 3
          %s126 = smul.addr %s125, 4
          %s127 = scalar_lea.vmem %s0, %s126
        $region20: #{generator_forward.17} parent=15 // pred_fallthru
          _
        // Predicated region
        $region21: #{generator_forward.17} parent=15 // pred_check
          %p128 = pneg %p68
        $region22: #{generator_forward.17} parent=15 // pred_check_branch
          %130 = sbr.rel (%p128) target = $region24
        $region23: #{generator_forward.17} parent=15 // pred_region
          %s131 = sand.u32 %s58, 1
          %s132 = sand.u32 %s58, 1
          %s133 = smul.addr %s132, 64
          %s134 = scalar_lea.vmem [#allocation2], %s133
          %s135 = smul.u32 4, %s16
          %s136 = smul.addr %s15, 64
          %s137 = sadd.s32 %s135, %s136
          %s138 = smul.addr %s137, 4
          %s139 = scalar_lea.vmem %s1, %s138
          // Predicated region
          $region25: #{generator_forward.17} parent=23 // pred_check
            _
          $region26: #{generator_forward.17} parent=23 // pred_check_branch
            %141 = sbr.rel (0) target = $region28
          $region27: #{generator_forward.17} parent=23 // pred_region
            // Predicated region
            $region29: #{generator_forward.17} parent=27 // pred_check
              _
            $region30: #{generator_forward.17} parent=27 // pred_check_branch
              %143 = sbr.rel (0) target = $region32
            $region31: #{generator_forward.17} parent=27 // pred_region
              loop: start=0, step=1, limit=1
              $region33: #{generator_forward.17} parent=31 // loop_pre_header
                _
              $region34: #{generator_forward.17} parent=31 // loop_header
                %s145 = sphi 0, %s149
                %p146 = scmp.ge.s32.totalorder %s145, 1
                %s150 = sphi %s139, %s139
                %s151 = sphi %s134, %s134
              $region35: #{generator_forward.17} parent=31 // loop_header_branch
                %148 = sbr.rel (%p146) target = $region39
              $region36: #{generator_forward.17} parent=31 // loop_body
                %v152 = vld [vmem:[%s150] sm:$0xff]
                %153 = vst [vmem:[%s151] sm:$0xff] %v152
                %v154 = vld [vmem:[%s150 + $0x8] sm:$0xff]
                %155 = vst [vmem:[%s151 + $0x8] sm:$0xff] %v154
                %v156 = vld [vmem:[%s150 + $0x40] sm:$0xff]
                %157 = vst [vmem:[%s151 + $0x10] sm:$0xff] %v156
                %v158 = vld [vmem:[%s150 + $0x48] sm:$0xff]
                %159 = vst [vmem:[%s151 + $0x18] sm:$0xff] %v158
                %v160 = vld [vmem:[%s150 + $0x80] sm:$0xff]
                %161 = vst [vmem:[%s151 + $0x20] sm:$0xff] %v160
                %v162 = vld [vmem:[%s150 + $0x88] sm:$0xff]
                %163 = vst [vmem:[%s151 + $0x28] sm:$0xff] %v162
                %v164 = vld [vmem:[%s150 + $0xc0] sm:$0xff]
                %165 = vst [vmem:[%s151 + $0x30] sm:$0xff] %v164
                %v166 = vld [vmem:[%s150 + $0xc8] sm:$0xff]
                %167 = vst [vmem:[%s151 + $0x38] sm:$0xff] %v166
              $region37: #{generator_forward.17} parent=31 // loop_footer
                %s149 = sadd.s32 1, %s145
              $region38: #{generator_forward.17} parent=31 // loop_footer_branch
                %144 = sbr.rel target = $region34
              $region39: #{generator_forward.17} parent=31 // loop_exit
                _
            $region32: #{generator_forward.17} parent=27 // pred_fallthru
              _
            // Predicated region
            $region40: #{generator_forward.17} parent=27 // pred_check
              _
            $region41: #{generator_forward.17} parent=27 // pred_check_branch
              %169 = sbr.rel target = $region43
            $region42: #{generator_forward.17} parent=27 // pred_region
              _
            $region43: #{generator_forward.17} parent=27 // pred_fallthru
              _
          $region28: #{generator_forward.17} parent=23 // pred_fallthru
            _
          %170 = vnop
        $region24: #{generator_forward.17} parent=15 // pred_fallthru
          _
      $region16: #{generator_forward.17} parent=5 // pred_fallthru
        _
      %p171 = scmp.le.s32.totalorder 1, %s8
      %p172 = scmp.lt.s32.totalorder %s8, 17
      %p173 = pnand %p171, %p172
      %p174 = pneg %p173
      // Predicated region
      $region44: #{generator_forward.17} parent=5 // pred_check
        _
      $region45: #{generator_forward.17} parent=5 // pred_check_branch
        %176 = sbr.rel (%p173) target = $region47
      $region46: #{generator_forward.17} parent=5 // pred_region
        %s177 = ssub.s32 %s8, 1
        %s178 = sand.u32 %s61, 1
        %s179 = sand.u32 %s61, 1
        %s180 = smul.addr %s179, 64
        %s181 = scalar_lea.vmem [#allocation2], %s180
        // Predicated region
        $region48: #{generator_forward.17} parent=46 // pred_check
          %p182 = pneg %p74
        $region49: #{generator_forward.17} parent=46 // pred_check_branch
          %184 = sbr.rel (%p182) target = $region51
        $region50: #{generator_forward.17} parent=46 // pred_region
          _
        $region51: #{generator_forward.17} parent=46 // pred_fallthru
          _
        %p185 = scmp.lt.s32.totalorder %s17, 3
        %s186 = scalar_select %p185, %s17, 3
        %s187 = smul.addr %s186, 4
        %s188 = scalar_lea.vmem %s0, %s187
        %p189 = pneg %p46
        %p190 = pneg %p43
        %s191 = sand.u32 %s61, 1
        %s192 = sand.u32 %s61, 1
        %s193 = smul.addr %s192, 64
        %s194 = scalar_lea.vmem [#allocation2], %s193
        %p195 = pneg %p74
        %p196 = pneg %p71
        %p197 = pneg %p102
        %p198 = pneg %p99
        %s199 = smul.u32 4, %s18
        %p200 = scmp.lt.s32.totalorder %s17, 3
        %s201 = scalar_select %p200, %s17, 3
        %p202 = scmp.lt.s32.totalorder %s199, 15
        %s203 = scalar_select %p202, %s199, 15
        %s204 = smul.addr %s201, 16
        %s205 = sadd.s32 %s203, %s204
        %s206 = smul.addr %s205, 8
        %s207 = scalar_lea.vmem %s2, %s206
        %p208 = scmp.lt.s32.totalorder %s17, 3
        %s209 = scalar_select %p208, %s17, 3
        %s210 = smul.addr %s209, 4
        %s211 = scalar_lea.vmem %s0, %s210
        %s212 = smul.u32 4, %s18
        %s213 = smul.u32 4, %s18
        %p214 = scmp.lt.s32.totalorder %s17, 3
        %s215 = scalar_select %p214, %s17, 3
        %p216 = scmp.lt.s32.totalorder %s213, 15
        %s217 = scalar_select %p216, %s213, 15
        %s218 = smul.addr %s215, 16
        %s219 = sadd.s32 %s217, %s218
        %s220 = smul.addr %s219, 8
        %s221 = scalar_lea.vmem %s2, %s220
        %s222 = smul.u32 4, %s18
        %v224 = vld [vmem:[%s211] sm:$0xf]
        %v225 = vld [vmem:[%s181] sm:$0xff]
        %v226 = vld [vmem:[%s181 + $0x8] sm:$0xff]
        %v227 = vld [vmem:[%s181 + $0x10] sm:$0xff]
        %v228 = vld [vmem:[%s181 + $0x18] sm:$0xff]
        %v229 = vld [vmem:[%s181 + $0x20] sm:$0xff]
        %v230 = vld [vmem:[%s181 + $0x28] sm:$0xff]
        %v231 = vld [vmem:[%s181 + $0x30] sm:$0xff]
        %v232 = vld [vmem:[%s181 + $0x38] sm:$0xff]
        %v241 = vunpack.c.l.b16 %v225
        %v242 = vunpack.c.h.b16 %v225
        %v243 = vunpack.c.l.b16 %v226
        %v244 = vunpack.c.h.b16 %v226
        %v245 = vunpack.c.l.b16 %v227
        %v246 = vunpack.c.h.b16 %v227
        %v247 = vunpack.c.l.b16 %v228
        %v248 = vunpack.c.h.b16 %v228
        %v249 = vunpack.c.l.b16 %v229
        %v250 = vunpack.c.h.b16 %v229
        %v251 = vunpack.c.l.b16 %v230
        %v252 = vunpack.c.h.b16 %v230
        %v253 = vunpack.c.l.b16 %v231
        %v254 = vunpack.c.h.b16 %v231
        %v255 = vunpack.c.l.b16 %v232
        %v256 = vunpack.c.h.b16 %v232
        %v257 = vpack.c.b16 %v245, %v241
        %v258 = vpack.c.b16 %v246, %v242
        %v259 = vpack.c.b16 %v247, %v243
        %v260 = vpack.c.b16 %v248, %v244
        %v261 = vpack.c.b16 %v253, %v249
        %v262 = vpack.c.b16 %v254, %v250
        %v263 = vpack.c.b16 %v255, %v251
        %v264 = vpack.c.b16 %v256, %v252
        %vm273 = vcmask 261120
        %v275 = vsel %vm273, %v224, 0
        %277 = vmatprep.subr.bf16.mxu0 %v258
        %278 = vmatpush1.bf16.msra.mxu0 %v257
        %279 = vmatprep.subr.bf16.mxu0 %v262
        %280 = vmatpush1.bf16.msra.mxu0 %v261
        %281 = vmatprep.subr.bf16.mxu0 0
        %282 = vmatpush1.bf16.msra.mxu0 0
        %283 = vmatprep.subr.bf16.mxu0 0
        %284 = vmatpush1.bf16.msra.mxu0 0
        %285 = vmatprep.subr.bf16.mxu0 0
        %286 = vmatpush1.bf16.msra.mxu0 0
        %287 = vmatprep.subr.bf16.mxu0 0
        %288 = vmatpush1.bf16.msra.mxu0 0
        %289 = vmatprep.subr.bf16.mxu0 0
        %290 = vmatpush1.bf16.msra.mxu0 0
        %291 = vmatprep.subr.bf16.mxu0 0
        %292 = vmatpush1.bf16.msra.mxu0 0
        %293 = vmatprep.subr.bf16.mxu0 0
        %294 = vmatpush1.bf16.msra.mxu0 0
        %295 = vmatprep.subr.bf16.mxu0 0
        %296 = vmatpush1.bf16.msra.mxu0 0
        %297 = vmatprep.subr.bf16.mxu0 0
        %298 = vmatpush1.bf16.msra.mxu0 0
        %299 = vmatprep.subr.bf16.mxu0 0
        %300 = vmatpush1.bf16.msra.mxu0 0
        %301 = vmatprep.subr.bf16.mxu0 0
        %302 = vmatpush1.bf16.msra.mxu0 0
        %303 = vmatprep.subr.bf16.mxu0 0
        %304 = vmatpush1.bf16.msra.mxu0 0
        %305 = vmatprep.subr.bf16.mxu0 0
        %306 = vmatpush1.bf16.msra.mxu0 0
        %307 = vmatprep.subr.bf16.mxu0 0
        %308 = vmatpush1.bf16.msra.mxu0 0
        %309 = vmatprep.mubr.bf16.mxu0 0
        %310 = vmatmul.mubr.bf16.gmra.mrb[0].mxu0 %v275
        %v311 = vpop.f32.mrb[0].mxu0
        %v312 = vadd.f32 0.0, %v311
        %v313 = vpop.f32.mrb[0].mxu0
        %v314 = vadd.f32 0.0, %v313
        %v315 = vpop.f32.mrb[0].mxu0
        %v316 = vpop.f32.mrb[0].mxu0
        %317 = vdwg.mxu0
        %318 = vmatprep.subr.bf16.mxu0 %v260
        %319 = vmatpush1.bf16.msra.mxu0 %v259
        %320 = vmatprep.subr.bf16.mxu0 %v264
        %321 = vmatpush1.bf16.msra.mxu0 %v263
        %322 = vmatprep.subr.bf16.mxu0 0
        %323 = vmatpush1.bf16.msra.mxu0 0
        %324 = vmatprep.subr.bf16.mxu0 0
        %325 = vmatpush1.bf16.msra.mxu0 0
        %326 = vmatprep.subr.bf16.mxu0 0
        %327 = vmatpush1.bf16.msra.mxu0 0
        %328 = vmatprep.subr.bf16.mxu0 0
        %329 = vmatpush1.bf16.msra.mxu0 0
        %330 = vmatprep.subr.bf16.mxu0 0
        %331 = vmatpush1.bf16.msra.mxu0 0
        %332 = vmatprep.subr.bf16.mxu0 0
        %333 = vmatpush1.bf16.msra.mxu0 0
        %334 = vmatprep.subr.bf16.mxu0 0
        %335 = vmatpush1.bf16.msra.mxu0 0
        %336 = vmatprep.subr.bf16.mxu0 0
        %337 = vmatpush1.bf16.msra.mxu0 0
        %338 = vmatprep.subr.bf16.mxu0 0
        %339 = vmatpush1.bf16.msra.mxu0 0
        %340 = vmatprep.subr.bf16.mxu0 0
        %341 = vmatpush1.bf16.msra.mxu0 0
        %342 = vmatprep.subr.bf16.mxu0 0
        %343 = vmatpush1.bf16.msra.mxu0 0
        %344 = vmatprep.subr.bf16.mxu0 0
        %345 = vmatpush1.bf16.msra.mxu0 0
        %346 = vmatprep.subr.bf16.mxu0 0
        %347 = vmatpush1.bf16.msra.mxu0 0
        %348 = vmatprep.subr.bf16.mxu0 0
        %349 = vmatpush1.bf16.msra.mxu0 0
        %350 = vmatprep.mubr.bf16.mxu0 0
        %351 = vmatmul.mubr.bf16.gmra.mrb[0].mxu0 %v275
        %v352 = vpop.f32.mrb[0].mxu0
        %v353 = vadd.f32 0.0, %v352
        %v354 = vpop.f32.mrb[0].mxu0
        %v355 = vadd.f32 0.0, %v354
        %v356 = vpop.f32.mrb[0].mxu0
        %v357 = vpop.f32.mrb[0].mxu0
        %358 = vdwg.mxu0
        %v359 = vtanh.pop %v312
        %v360 = vtanh.pop %v314
        %v361 = vtanh.pop %v353
        %v362 = vtanh.pop %v355
        %363 = vst [vmem:[%s221] sm:$0xff] %v359
        %364 = vst [vmem:[%s221 + $0x8] sm:$0xff] %v360
        %365 = vst [vmem:[%s221 + $0x10] sm:$0xff] %v361
        %366 = vst [vmem:[%s221 + $0x18] sm:$0xff] %v362
        %s367 = smul.u32 4, %s18
        %p368 = scmp.lt.s32.totalorder %s17, 3
        %s369 = scalar_select %p368, %s17, 3
        %p370 = scmp.lt.s32.totalorder %s367, 15
        %s371 = scalar_select %p370, %s367, 15
        %s372 = smul.addr %s369, 16
        %s373 = sadd.s32 %s371, %s372
        %s374 = smul.addr %s373, 8
        %s375 = scalar_lea.vmem %s2, %s374
        // Predicated region
        $region52: #{generator_forward.17} parent=46 // pred_check
          %p376 = pneg %p99
        $region53: #{generator_forward.17} parent=46 // pred_check_branch
          %378 = sbr.rel (%p376) target = $region55
        $region54: #{generator_forward.17} parent=46 // pred_region
          %s379 = smul.u32 4, %s18
        $region55: #{generator_forward.17} parent=46 // pred_fallthru
          _
      $region47: #{generator_forward.17} parent=5 // pred_fallthru
        _
      %p380 = scmp.le.s32.totalorder 2, %s8
      // Predicated region
      $region56: #{generator_forward.17} parent=5 // pred_check
        %p381 = pneg %p380
      $region57: #{generator_forward.17} parent=5 // pred_check_branch
        %383 = sbr.rel (%p381) target = $region59
      $region58: #{generator_forward.17} parent=5 // pred_region
        %s384 = ssub.s32 %s8, 2
        // Predicated region
        $region60: #{generator_forward.17} parent=58 // pred_check
          %p385 = pneg %p105
        $region61: #{generator_forward.17} parent=58 // pred_check_branch
          %387 = sbr.rel (%p385) target = $region63
        $region62: #{generator_forward.17} parent=58 // pred_region
          %s388 = smul.u32 4, %s20
          %p389 = scmp.lt.s32.totalorder %s19, 3
          %s390 = scalar_select %p389, %s19, 3
          %p391 = scmp.lt.s32.totalorder %s388, 15
          %s392 = scalar_select %p391, %s388, 15
          %s393 = smul.addr %s390, 16
          %s394 = sadd.s32 %s392, %s393
          %s395 = smul.addr %s394, 8
          %s396 = scalar_lea.vmem %s2, %s395
        $region63: #{generator_forward.17} parent=58 // pred_fallthru
          _
      $region59: #{generator_forward.17} parent=5 // pred_fallthru
        _
    $region6: #{generator_forward.17} parent=1 // loop_footer
      %s12 = sadd.s32 1, %s8
    $region7: #{generator_forward.17} parent=1 // loop_footer_branch
      %7 = sbr.rel target = $region3
    $region8: #{generator_forward.17} parent=1 // loop_exit
      _

</llo_original>
